<compile_context>
chip_gen: v7x
topology: tpu7x:2x2x1
jax: 0.10.0
libtpu: 0.0.40
codegen_flags: <defaults>
</compile_context>

<pallas_src>
import jax
import jax.numpy as jnp
from jax.experimental import pallas as pl
from jax.experimental.pallas import tpu as pltpu

_SMEM = pl.BlockSpec(memory_space=pltpu.MemorySpace.SMEM)


def _round_up(x, m):
    return (x + m - 1) // m * m


# ---------------------------------------------------------------------------
# Pallas kernels
# ---------------------------------------------------------------------------
def _conv_relu_pool_kernel(p_ref, w_ref, s_ref, o_ref):
    """patches (4, Rblk, K) @ w (K, C) -> 2x2 max-pool -> ReLU -> scale.

    The four members of every 2x2 pool window share a row index across the
    four parity slabs p_ref[0..3]; pooling is a 4-way elementwise max of the
    four per-parity matmul results.  relu(maxpool(conv*s)) == s*relu(max(...))
    for s > 0, so the dequant scale is a single scalar multiply at the end.
    """
    w = w_ref[...]
    a0 = jnp.dot(p_ref[0], w, preferred_element_type=jnp.float32)
    a1 = jnp.dot(p_ref[1], w, preferred_element_type=jnp.float32)
    a2 = jnp.dot(p_ref[2], w, preferred_element_type=jnp.float32)
    a3 = jnp.dot(p_ref[3], w, preferred_element_type=jnp.float32)
    m = jnp.maximum(jnp.maximum(a0, a1), jnp.maximum(a2, a3))
    m = jnp.maximum(m, 0.0) * s_ref[0]            # ReLU then per-tensor scale
    o_ref[...] = m.astype(o_ref.dtype)


def _fc_fused_kernel(x_ref, w1_ref, w2_ref, s1_ref, s2_ref, o_ref):
    """fc1 column block (int8 weights, in-kernel dequant) + its fc2 share.

    Linear->dropout(identity)->linear, so per-block fc2 contributions are
    exact; caller sums the n_blocks partials.
    """
    # int8 -> f32 -> bf16: values are exact integers (|q| <= 127).
    w1 = w1_ref[...].astype(jnp.float32).astype(jnp.bfloat16)
    y1 = jnp.dot(x_ref[...], w1, preferred_element_type=jnp.float32)
    y1 = (y1 * s1_ref[0]).astype(jnp.bfloat16)        # fc1 scale after the dot
    w2 = w2_ref[...].astype(jnp.float32).astype(jnp.bfloat16)
    y2 = jnp.dot(y1, w2, preferred_element_type=jnp.float32)
    o_ref[0] = y2 * s2_ref[0]                          # fc2 scale after the dot


# ---------------------------------------------------------------------------
# pallas_call wrappers
# ---------------------------------------------------------------------------
def conv_relu_pool(patches, w, scale, row_block=512):
    """patches (4, Mp, K) bf16, w (K, C) int-valued bf16, scale (1,) f32
    -> (Mp, C) bf16, grid-tiled over pooled rows."""
    _, mp, k = patches.shape
    c = w.shape[1]
    rblk = mp if mp <= row_block else row_block
    rblk = _round_up(rblk, 16)                     # bf16 sublane tile alignment
    mp_pad = _round_up(mp, rblk)
    if mp_pad != mp:
        patches = jnp.pad(patches, ((0, 0), (0, mp_pad - mp), (0, 0)))
    out = pl.pallas_call(
        _conv_relu_pool_kernel,
        out_shape=jax.ShapeDtypeStruct((mp_pad, c), jnp.bfloat16),
        grid=(mp_pad // rblk,),
        in_specs=[
            pl.BlockSpec((4, rblk, k), lambda r: (0, r, 0)),
            pl.BlockSpec((k, c), lambda r: (0, 0)),
            _SMEM,
        ],
        out_specs=pl.BlockSpec((rblk, c), lambda r: (r, 0)),
        compiler_params=pltpu.CompilerParams(
            dimension_semantics=("parallel",)),
    )(patches, w, scale)
    return out[:mp] if mp_pad != mp else out


def fc_fused(x, w1q, w2q, s1, s2, n_blocks=2):
    """x (B, K) bf16, w1q (K, Np) int8, w2q (Np, 128) int8 -> (n_blocks, B, 128) f32.

    Grid over fc1 output-column blocks ("parallel": pipelined int8 weight DMA,
    megacore-shardable on v7x).  Caller sums partials over axis 0.
    """
    b, k = x.shape
    n_pad, o = w1q.shape[1], w2q.shape[1]
    assert n_pad % n_blocks == 0
    blk = n_pad // n_blocks
    return pl.pallas_call(
        _fc_fused_kernel,
        out_shape=jax.ShapeDtypeStruct((n_blocks, b, o), jnp.float32),
        grid=(n_blocks,),
        in_specs=[
            pl.BlockSpec((b, k), lambda j: (0, 0)),
            pl.BlockSpec((k, blk), lambda j: (0, j)),
            pl.BlockSpec((blk, o), lambda j: (j, 0)),
            _SMEM,
            _SMEM,
        ],
        out_specs=pl.BlockSpec((1, b, o), lambda j: (j, 0, 0)),
        compiler_params=pltpu.CompilerParams(
            dimension_semantics=("parallel",)),
    )(x, w1q, w2q, s1, s2)


# ---------------------------------------------------------------------------
# One-time parameter preparation (hoisted out of the forward pass)
# ---------------------------------------------------------------------------
def _quantize_int8(w):
    """Symmetric per-tensor int8 quant: returns (integer values f32, scale)."""
    scale = jnp.maximum(jnp.max(jnp.abs(w)), 1e-8) / 127.0
    q = jnp.clip(jnp.round(w / scale), -127.0, 127.0)
    return q, scale.astype(jnp.float32)


def init_params(key):
    k1, k2, k3, k4 = jax.random.split(key, 4)
    # PyTorch layouts: conv (O, I, kH, kW); linear (out, in). bias=False everywhere.
    w1 = jax.random.normal(k1, (32, 1, 3, 3), jnp.float32) * 0.1
    w2 = jax.random.normal(k2, (64, 32, 3, 3), jnp.float32) * 0.05
    wfc1 = jax.random.normal(k3, (1000, 64 * 6 * 6), jnp.float32) * 0.02
    wfc2 = jax.random.normal(k4, (10, 1000), jnp.float32) * 0.05
    return dict(w1=w1, w2=w2, wfc1=wfc1, wfc2=wfc2)


def prepare_params(params):
    """Run ONCE: int8 quant + reshape/permute/pad all weights; keep scales."""
    q1, s1 = _quantize_int8(params["w1"])       # (32, 1, 3, 3)
    q2, s2 = _quantize_int8(params["w2"])       # (64, 32, 3, 3)
    qf1, sf1 = _quantize_int8(params["wfc1"])   # (1000, 2304), in idx = c*36+h*6+w
    qf2, sf2 = _quantize_int8(params["wfc2"])   # (10, 1000)

    # conv weights -> (9*Cin, Cout), rows ordered (dy, dx, cin) to match the
    # patch tap order.  Integer values are exact in bf16; scale applied in-kernel.
    w1m = jnp.transpose(q1, (2, 3, 1, 0)).reshape(9, 32).astype(jnp.bfloat16)
    w2m = jnp.transpose(q2, (2, 3, 1, 0)).reshape(9 * 32, 64).astype(jnp.bfloat16)

    # fc1: permute input rows from NCHW-flatten (c,h,w) to NHWC-flatten (h,w,c)
    # so activations stay NHWC end to end; pad out columns 1000 -> 1024 so they
    # split into lane-aligned blocks.  Stored as int8 (exact), dequant in-kernel.
    n_pad = 1024
    wfc1m = jnp.transpose(qf1.reshape(1000, 64, 6, 6), (2, 3, 1, 0))
    wfc1m = wfc1m.reshape(2304, 1000)
    wfc1m = jnp.pad(wfc1m, ((0, 0), (0, n_pad - 1000))).astype(jnp.int8)
    # fc2: transpose, pad rows 1000 -> 1024 and output cols 10 -> 128 (lane-dense).
    wfc2m = jnp.pad(qf2.T, ((0, n_pad - 1000), (0, 128 - 10))).astype(jnp.int8)

    return dict(
        w1m=w1m, w2m=w2m, wfc1m=wfc1m, wfc2m=wfc2m,
        s1=jnp.reshape(s1, (1,)), s2=jnp.reshape(s2, (1,)),
        sfc1=jnp.reshape(sf1, (1,)), sfc2=jnp.reshape(sf2, (1,)),
    )


# ---------------------------------------------------------------------------
# Cheap XLA glue (small tensors): patch extraction + pool-parity grouping
# ---------------------------------------------------------------------------
def _pool_ordered_patches(taps, ho, wo):
    """taps (N, Ho, Wo, F) -> (4, N*(Ho/2)*(Wo/2), F): leading axis is the 2x2
    pool parity, rows within each parity ordered (n, i/2, j/2)."""
    n, _, _, f = taps.shape
    t = taps.reshape(n, ho // 2, 2, wo // 2, 2, f)
    t = jnp.transpose(t, (2, 4, 0, 1, 3, 5))
    return t.reshape(4, n * (ho // 2) * (wo // 2), f)


# ---------------------------------------------------------------------------
# Forward pass (expects prepare_params() output)
# ---------------------------------------------------------------------------
def quantized_cnn_forward(x_nchw, p, n_blocks=2):
    n = x_nchw.shape[0]
    assert x_nchw.shape[1:] == (1, 28, 28)

    # layer1: QuantConv2d(1->32, k=3, pad=1) + ReLU + MaxPool2d(2,2)
    x = x_nchw.reshape(n, 28, 28)                               # C_in = 1
    xpad = jnp.pad(x, ((0, 0), (1, 1), (1, 1)))                 # (N, 30, 30)
    taps1 = jnp.stack([xpad[:, dy:dy + 28, dx:dx + 28]
                       for dy in range(3) for dx in range(3)], axis=-1)
    p1 = _pool_ordered_patches(taps1, 28, 28).astype(jnp.bfloat16)  # (4, N*196, 9)
    h1 = conv_relu_pool(p1, p["w1m"], p["s1"])                  # (N*196, 32) bf16

    # layer2: QuantConv2d(32->64, k=3, no pad) + ReLU + MaxPool2d(2)
    y1 = h1.reshape(n, 14, 14, 32)                              # NHWC, bf16
    taps2 = jnp.concatenate([y1[:, dy:dy + 12, dx:dx + 12, :]
                             for dy in range(3) for dx in range(3)], axis=-1)
    p2 = _pool_ordered_patches(taps2, 12, 12)                   # (4, N*36, 288)
    h2 = conv_relu_pool(p2, p["w2m"], p["s2"])                  # (N*36, 64) bf16

    # flatten (NHWC order; wfc1 rows were permuted at prep time to match)
    xf = h2.reshape(n, 6 * 6 * 64)                              # (N, 2304) bf16

    # fc1 -> dropout(identity, inference) -> fc2, fused & column-tiled
    partial = fc_fused(xf, p["wfc1m"], p["wfc2m"],
                       p["sfc1"], p["sfc2"], n_blocks=n_blocks)  # (nb, N, 128)
    return partial.sum(axis=0)[:, :10]                           # (N, 10) f32


if __name__ == "__main__":
    key = jax.random.PRNGKey(0)
    kx, kp = jax.random.split(key)
    # Input must be (N, 1, 28, 28) so the flatten matches fc1's 64*6*6.
    x = jax.random.normal(kx, (2, 1, 28, 28), jnp.float32)
    params = init_params(kp)
    prepped = prepare_params(params)          # one-time weight prep (hoisted)

    fwd = jax.jit(quantized_cnn_forward)
    out = jax.block_until_ready(fwd(x, prepped))
    assert out.shape == (2, 10) and out.dtype == jnp.float32
    assert bool(jnp.all(jnp.isfinite(out)))
    print("KERNEL_OK")
</pallas_src>

<mosaic_0001>
module attributes {stable_mosaic.version = 11 : i64} {
  func.func @_conv_relu_pool_kernel(%arg0: i32, %arg1: memref<4x400x9xbf16, #tpu.memory_space<vmem>>, %arg2: memref<9x32xbf16, #tpu.memory_space<vmem>>, %arg3: memref<1xf32, #tpu.memory_space<smem>>, %arg4: memref<400x32xbf16, #tpu.memory_space<vmem>>) attributes {dimension_semantics = [#tpu.dimension_semantics<parallel>], iteration_bounds = array<i64: 1>, scalar_prefetch = 0 : i64, scratch_operands = 0 : i64, tpu.core_type = #tpu.core_type<tc>, window_params = [{transform_indices = @transform_0, window_bounds = array<i64: 4, 400, 9>}, {pipeline_mode = #tpu.pipeline_mode<synchronous>, transform_indices = @transform_1, window_bounds = array<i64: 9, 32>}, {transform_indices = @transform_2, window_bounds = array<i64: 1>}, {transform_indices = @transform_3, window_bounds = array<i64: 400, 32>}]} {
    %c0 = arith.constant 0 : index
    %c0_0 = arith.constant 0 : index
    %0 = vector.load %arg2[%c0, %c0_0] : memref<9x32xbf16, #tpu.memory_space<vmem>>, vector<9x32xbf16>
    %c0_1 = arith.constant 0 : index
    %c0_2 = arith.constant 0 : index
    %c0_3 = arith.constant 0 : index
    %1 = vector.load %arg1[%c0_1, %c0_2, %c0_3] : memref<4x400x9xbf16, #tpu.memory_space<vmem>>, vector<1x400x9xbf16>
    %2 = vector.shape_cast %1 : vector<1x400x9xbf16> to vector<400x9xbf16>
    %cst = arith.constant dense<0.000000e+00> : vector<400x32xf32>
    %3 = tpu.matmul %2, %0, %cst {dimension_numbers = #tpu.dot_dimension_numbers<[1], [0], [0], [1], [0, 0, 1, 1], [], []>} : vector<400x9xbf16>, vector<9x32xbf16>, vector<400x32xf32> -> vector<400x32xf32>
    %c1 = arith.constant 1 : index
    %c0_4 = arith.constant 0 : index
    %c0_5 = arith.constant 0 : index
    %4 = vector.load %arg1[%c1, %c0_4, %c0_5] : memref<4x400x9xbf16, #tpu.memory_space<vmem>>, vector<1x400x9xbf16>
    %5 = vector.shape_cast %4 : vector<1x400x9xbf16> to vector<400x9xbf16>
    %cst_6 = arith.constant dense<0.000000e+00> : vector<400x32xf32>
    %6 = tpu.matmul %5, %0, %cst_6 {dimension_numbers = #tpu.dot_dimension_numbers<[1], [0], [0], [1], [0, 0, 1, 1], [], []>} : vector<400x9xbf16>, vector<9x32xbf16>, vector<400x32xf32> -> vector<400x32xf32>
    %c2 = arith.constant 2 : index
    %c0_7 = arith.constant 0 : index
    %c0_8 = arith.constant 0 : index
    %7 = vector.load %arg1[%c2, %c0_7, %c0_8] : memref<4x400x9xbf16, #tpu.memory_space<vmem>>, vector<1x400x9xbf16>
    %8 = vector.shape_cast %7 : vector<1x400x9xbf16> to vector<400x9xbf16>
    %cst_9 = arith.constant dense<0.000000e+00> : vector<400x32xf32>
    %9 = tpu.matmul %8, %0, %cst_9 {dimension_numbers = #tpu.dot_dimension_numbers<[1], [0], [0], [1], [0, 0, 1, 1], [], []>} : vector<400x9xbf16>, vector<9x32xbf16>, vector<400x32xf32> -> vector<400x32xf32>
    %c3 = arith.constant 3 : index
    %c0_10 = arith.constant 0 : index
    %c0_11 = arith.constant 0 : index
    %10 = vector.load %arg1[%c3, %c0_10, %c0_11] : memref<4x400x9xbf16, #tpu.memory_space<vmem>>, vector<1x400x9xbf16>
    %11 = vector.shape_cast %10 : vector<1x400x9xbf16> to vector<400x9xbf16>
    %cst_12 = arith.constant dense<0.000000e+00> : vector<400x32xf32>
    %12 = tpu.matmul %11, %0, %cst_12 {dimension_numbers = #tpu.dot_dimension_numbers<[1], [0], [0], [1], [0, 0, 1, 1], [], []>} : vector<400x9xbf16>, vector<9x32xbf16>, vector<400x32xf32> -> vector<400x32xf32>
    %13 = arith.maximumf %3, %6 : vector<400x32xf32>
    %14 = arith.maximumf %9, %12 : vector<400x32xf32>
    %15 = arith.maximumf %13, %14 : vector<400x32xf32>
    %cst_13 = arith.constant 0.000000e+00 : f32
    %16 = vector.broadcast %cst_13 : f32 to vector<400x32xf32>
    %17 = arith.maximumf %15, %16 : vector<400x32xf32>
    %c0_14 = arith.constant 0 : index
    %18 = memref.load %arg3[%c0_14] : memref<1xf32, #tpu.memory_space<smem>>
    %19 = vector.broadcast %18 : f32 to vector<400x32xf32>
    %20 = arith.mulf %17, %19 : vector<400x32xf32>
    %21 = arith.truncf %20 : vector<400x32xf32> to vector<400x32xbf16>
    %c0_15 = arith.constant 0 : index
    %c0_16 = arith.constant 0 : index
    %22 = vector.load %arg4[%c0_15, %c0_16] : memref<400x32xbf16, #tpu.memory_space<vmem>>, vector<400x32xbf16>
    tpu.vector_store %arg4[%c0_15, %c0_16], %21 {strides = array<i32>} : memref<400x32xbf16, #tpu.memory_space<vmem>>, vector<400x32xbf16>,
    return
  }
  func.func @transform_0(%arg0: i32) -> (i32, i32, i32) {
    %c0_i32 = arith.constant 0 : i32
    %c0_i32_0 = arith.constant 0 : i32
    %c0_i32_1 = arith.constant 0 : i32
    return %c0_i32, %arg0, %c0_i32_0 : i32, i32, i32
  }
  func.func @transform_1(%arg0: i32) -> (i32, i32) {
    %c0_i32 = arith.constant 0 : i32
    %c0_i32_0 = arith.constant 0 : i32
    %c0_i32_1 = arith.constant 0 : i32
    return %c0_i32, %c0_i32_0 : i32, i32
  }
  func.func @transform_2(%arg0: i32) -> i32 {
    %c0_i32 = arith.constant 0 : i32
    %c0_i32_0 = arith.constant 0 : i32
    return %c0_i32 : i32
  }
  func.func @transform_3(%arg0: i32) -> (i32, i32) {
    %c0_i32 = arith.constant 0 : i32
    %c0_i32_0 = arith.constant 0 : i32
    return %arg0, %c0_i32 : i32, i32
  }
}

module attributes {stable_mosaic.version = 11 : i64} {
  func.func @_conv_relu_pool_kernel(%arg0: i32, %arg1: memref<4x80x288xbf16, #tpu.memory_space<vmem>>, %arg2: memref<288x64xbf16, #tpu.memory_space<vmem>>, %arg3: memref<1xf32, #tpu.memory_space<smem>>, %arg4: memref<80x64xbf16, #tpu.memory_space<vmem>>) attributes {dimension_semantics = [#tpu.dimension_semantics<parallel>], iteration_bounds = array<i64: 1>, scalar_prefetch = 0 : i64, scratch_operands = 0 : i64, tpu.core_type = #tpu.core_type<tc>, window_params = [{transform_indices = @transform_0, window_bounds = array<i64: 4, 80, 288>}, {pipeline_mode = #tpu.pipeline_mode<synchronous>, transform_indices = @transform_1, window_bounds = array<i64: 288, 64>}, {transform_indices = @transform_2, window_bounds = array<i64: 1>}, {transform_indices = @transform_3, window_bounds = array<i64: 80, 64>}]} {
    %c0 = arith.constant 0 : index
    %c0_0 = arith.constant 0 : index
    %0 = vector.load %arg2[%c0, %c0_0] : memref<288x64xbf16, #tpu.memory_space<vmem>>, vector<288x64xbf16>
    %c0_1 = arith.constant 0 : index
    %c0_2 = arith.constant 0 : index
    %c0_3 = arith.constant 0 : index
    %1 = vector.load %arg1[%c0_1, %c0_2, %c0_3] : memref<4x80x288xbf16, #tpu.memory_space<vmem>>, vector<1x80x288xbf16>
    %2 = vector.shape_cast %1 : vector<1x80x288xbf16> to vector<80x288xbf16>
    %cst = arith.constant dense<0.000000e+00> : vector<80x64xf32>
    %3 = tpu.matmul %2, %0, %cst {dimension_numbers = #tpu.dot_dimension_numbers<[1], [0], [0], [1], [0, 0, 1, 1], [], []>} : vector<80x288xbf16>, vector<288x64xbf16>, vector<80x64xf32> -> vector<80x64xf32>
    %c1 = arith.constant 1 : index
    %c0_4 = arith.constant 0 : index
    %c0_5 = arith.constant 0 : index
    %4 = vector.load %arg1[%c1, %c0_4, %c0_5] : memref<4x80x288xbf16, #tpu.memory_space<vmem>>, vector<1x80x288xbf16>
    %5 = vector.shape_cast %4 : vector<1x80x288xbf16> to vector<80x288xbf16>
    %cst_6 = arith.constant dense<0.000000e+00> : vector<80x64xf32>
    %6 = tpu.matmul %5, %0, %cst_6 {dimension_numbers = #tpu.dot_dimension_numbers<[1], [0], [0], [1], [0, 0, 1, 1], [], []>} : vector<80x288xbf16>, vector<288x64xbf16>, vector<80x64xf32> -> vector<80x64xf32>
    %c2 = arith.constant 2 : index
    %c0_7 = arith.constant 0 : index
    %c0_8 = arith.constant 0 : index
    %7 = vector.load %arg1[%c2, %c0_7, %c0_8] : memref<4x80x288xbf16, #tpu.memory_space<vmem>>, vector<1x80x288xbf16>
    %8 = vector.shape_cast %7 : vector<1x80x288xbf16> to vector<80x288xbf16>
    %cst_9 = arith.constant dense<0.000000e+00> : vector<80x64xf32>
    %9 = tpu.matmul %8, %0, %cst_9 {dimension_numbers = #tpu.dot_dimension_numbers<[1], [0], [0], [1], [0, 0, 1, 1], [], []>} : vector<80x288xbf16>, vector<288x64xbf16>, vector<80x64xf32> -> vector<80x64xf32>
    %c3 = arith.constant 3 : index
    %c0_10 = arith.constant 0 : index
    %c0_11 = arith.constant 0 : index
    %10 = vector.load %arg1[%c3, %c0_10, %c0_11] : memref<4x80x288xbf16, #tpu.memory_space<vmem>>, vector<1x80x288xbf16>
    %11 = vector.shape_cast %10 : vector<1x80x288xbf16> to vector<80x288xbf16>
    %cst_12 = arith.constant dense<0.000000e+00> : vector<80x64xf32>
    %12 = tpu.matmul %11, %0, %cst_12 {dimension_numbers = #tpu.dot_dimension_numbers<[1], [0], [0], [1], [0, 0, 1, 1], [], []>} : vector<80x288xbf16>, vector<288x64xbf16>, vector<80x64xf32> -> vector<80x64xf32>
    %13 = arith.maximumf %3, %6 : vector<80x64xf32>
    %14 = arith.maximumf %9, %12 : vector<80x64xf32>
    %15 = arith.maximumf %13, %14 : vector<80x64xf32>
    %cst_13 = arith.constant 0.000000e+00 : f32
    %16 = vector.broadcast %cst_13 : f32 to vector<80x64xf32>
    %17 = arith.maximumf %15, %16 : vector<80x64xf32>
    %c0_14 = arith.constant 0 : index
    %18 = memref.load %arg3[%c0_14] : memref<1xf32, #tpu.memory_space<smem>>
    %19 = vector.broadcast %18 : f32 to vector<80x64xf32>
    %20 = arith.mulf %17, %19 : vector<80x64xf32>
    %21 = arith.truncf %20 : vector<80x64xf32> to vector<80x64xbf16>
    %c0_15 = arith.constant 0 : index
    %c0_16 = arith.constant 0 : index
    %22 = vector.load %arg4[%c0_15, %c0_16] : memref<80x64xbf16, #tpu.memory_space<vmem>>, vector<80x64xbf16>
    tpu.vector_store %arg4[%c0_15, %c0_16], %21 {strides = array<i32>} : memref<80x64xbf16, #tpu.memory_space<vmem>>, vector<80x64xbf16>,
    return
  }
  func.func @transform_0(%arg0: i32) -> (i32, i32, i32) {
    %c0_i32 = arith.constant 0 : i32
    %c0_i32_0 = arith.constant 0 : i32
    %c0_i32_1 = arith.constant 0 : i32
    return %c0_i32, %arg0, %c0_i32_0 : i32, i32, i32
  }
  func.func @transform_1(%arg0: i32) -> (i32, i32) {
    %c0_i32 = arith.constant 0 : i32
    %c0_i32_0 = arith.constant 0 : i32
    %c0_i32_1 = arith.constant 0 : i32
    return %c0_i32, %c0_i32_0 : i32, i32
  }
  func.func @transform_2(%arg0: i32) -> i32 {
    %c0_i32 = arith.constant 0 : i32
    %c0_i32_0 = arith.constant 0 : i32
    return %c0_i32 : i32
  }
  func.func @transform_3(%arg0: i32) -> (i32, i32) {
    %c0_i32 = arith.constant 0 : i32
    %c0_i32_0 = arith.constant 0 : i32
    return %arg0, %c0_i32 : i32, i32
  }
}

module attributes {stable_mosaic.version = 11 : i64} {
  func.func @_fc_fused_kernel(%arg0: i32, %arg1: memref<2x2304xbf16, #tpu.memory_space<vmem>>, %arg2: memref<2304x512xi8, #tpu.memory_space<vmem>>, %arg3: memref<512x128xi8, #tpu.memory_space<vmem>>, %arg4: memref<1xf32, #tpu.memory_space<smem>>, %arg5: memref<1xf32, #tpu.memory_space<smem>>, %arg6: memref<1x2x128xf32, #tpu.memory_space<vmem>>) attributes {dimension_semantics = [#tpu.dimension_semantics<parallel>], iteration_bounds = array<i64: 2>, scalar_prefetch = 0 : i64, scratch_operands = 0 : i64, tpu.core_type = #tpu.core_type<tc>, window_params = [{pipeline_mode = #tpu.pipeline_mode<synchronous>, transform_indices = @transform_0, window_bounds = array<i64: 2, 2304>}, {transform_indices = @transform_1, window_bounds = array<i64: 2304, 512>}, {transform_indices = @transform_2, window_bounds = array<i64: 512, 128>}, {transform_indices = @transform_3, window_bounds = array<i64: 1>}, {transform_indices = @transform_4, window_bounds = array<i64: 1>}, {transform_indices = @transform_5, window_bounds = array<i64: 1, 2, 128>}]} {
    %c0 = arith.constant 0 : index
    %c0_0 = arith.constant 0 : index
    %0 = vector.load %arg2[%c0, %c0_0] : memref<2304x512xi8, #tpu.memory_space<vmem>>, vector<2304x512xi8>
    %1 = arith.sitofp %0 : vector<2304x512xi8> to vector<2304x512xf32>
    %2 = arith.truncf %1 : vector<2304x512xf32> to vector<2304x512xbf16>
    %c0_1 = arith.constant 0 : index
    %c0_2 = arith.constant 0 : index
    %3 = vector.load %arg1[%c0_1, %c0_2] : memref<2x2304xbf16, #tpu.memory_space<vmem>>, vector<2x2304xbf16>
    %cst = arith.constant dense<0.000000e+00> : vector<2x512xf32>
    %4 = tpu.matmul %3, %2, %cst {dimension_numbers = #tpu.dot_dimension_numbers<[1], [0], [0], [1], [0, 0, 1, 1], [], []>} : vector<2x2304xbf16>, vector<2304x512xbf16>, vector<2x512xf32> -> vector<2x512xf32>
    %c0_3 = arith.constant 0 : index
    %5 = memref.load %arg4[%c0_3] : memref<1xf32, #tpu.memory_space<smem>>
    %6 = vector.broadcast %5 : f32 to vector<2x512xf32>
    %7 = arith.mulf %4, %6 : vector<2x512xf32>
    %8 = arith.truncf %7 : vector<2x512xf32> to vector<2x512xbf16>
    %c0_4 = arith.constant 0 : index
    %c0_5 = arith.constant 0 : index
    %9 = vector.load %arg3[%c0_4, %c0_5] : memref<512x128xi8, #tpu.memory_space<vmem>>, vector<512x128xi8>
    %10 = arith.sitofp %9 : vector<512x128xi8> to vector<512x128xf32>
    %11 = arith.truncf %10 : vector<512x128xf32> to vector<512x128xbf16>
    %cst_6 = arith.constant dense<0.000000e+00> : vector<2x128xf32>
    %12 = tpu.matmul %8, %11, %cst_6 {dimension_numbers = #tpu.dot_dimension_numbers<[1], [0], [0], [1], [0, 0, 1, 1], [], []>} : vector<2x512xbf16>, vector<512x128xbf16>, vector<2x128xf32> -> vector<2x128xf32>
    %c0_7 = arith.constant 0 : index
    %13 = memref.load %arg5[%c0_7] : memref<1xf32, #tpu.memory_space<smem>>
    %14 = vector.broadcast %13 : f32 to vector<2x128xf32>
    %15 = arith.mulf %12, %14 : vector<2x128xf32>
    %c0_8 = arith.constant 0 : index
    %c0_9 = arith.constant 0 : index
    %c0_10 = arith.constant 0 : index
    %16 = vector.load %arg6[%c0_8, %c0_9, %c0_10] : memref<1x2x128xf32, #tpu.memory_space<vmem>>, vector<1x2x128xf32>
    %17 = vector.shape_cast %16 : vector<1x2x128xf32> to vector<2x128xf32>
    %18 = vector.shape_cast %15 : vector<2x128xf32> to vector<1x2x128xf32>
    tpu.vector_store %arg6[%c0_8, %c0_9, %c0_10], %18 {strides = array<i32>} : memref<1x2x128xf32, #tpu.memory_space<vmem>>, vector<1x2x128xf32>,
    return
  }
  func.func @transform_0(%arg0: i32) -> (i32, i32) {
    %c0_i32 = arith.constant 0 : i32
    %c0_i32_0 = arith.constant 0 : i32
    %c0_i32_1 = arith.constant 0 : i32
    return %c0_i32, %c0_i32_0 : i32, i32
  }
  func.func @transform_1(%arg0: i32) -> (i32, i32) {
    %c0_i32 = arith.constant 0 : i32
    %c0_i32_0 = arith.constant 0 : i32
    return %c0_i32, %arg0 : i32, i32
  }
  func.func @transform_2(%arg0: i32) -> (i32, i32) {
    %c0_i32 = arith.constant 0 : i32
    %c0_i32_0 = arith.constant 0 : i32
    return %arg0, %c0_i32 : i32, i32
  }
  func.func @transform_3(%arg0: i32) -> i32 {
    %c0_i32 = arith.constant 0 : i32
    %c0_i32_0 = arith.constant 0 : i32
    return %c0_i32 : i32
  }
  func.func @transform_4(%arg0: i32) -> i32 {
    %c0_i32 = arith.constant 0 : i32
    %c0_i32_0 = arith.constant 0 : i32
    return %c0_i32 : i32
  }
  func.func @transform_5(%arg0: i32) -> (i32, i32, i32) {
    %c0_i32 = arith.constant 0 : i32
    %c0_i32_0 = arith.constant 0 : i32
    %c0_i32_1 = arith.constant 0 : i32
    return %arg0, %c0_i32, %c0_i32_0 : i32, i32, i32
  }
}

</mosaic_0001>

<llo_original>
// kernel: quantized_cnn_forward.3
$region0: #{quantized_cnn_forward.3}
  #allocation0 [shape = 'u32[]', space=smem, size = 0x4, offset = 0x4, fixed_abs, tag = 'smem constant byte address 0x4 - core index']
  #allocation1 [shape = 'u32[144,128]{1,0:T(1,128)}', space=vmem, size = 0x12000, scoped, tag = 'internal scratch']
  #allocation2 [shape = 'f32[1]{0:T(128)S(6)}', space=smem, size = 0x200, scoped, tag = 'scoped memory for quantized_cnn_forward.3']
  %s0 = inlined_call_operand.vmem [shape: bf16[4,400,9], index: 0, kind: input, shape index: {}]
  %s1 = inlined_call_operand.vmem [shape: bf16[9,32], index: 1, kind: input, shape index: {}]
  %s2 = inlined_call_operand.<no memory space> [shape: f32[1], index: 2, kind: input, shape index: {}]
  %s3 = inlined_call_operand.vmem [shape: bf16[400,32], index: 3, kind: output, shape index: {}]
  %s4 = sld [smem:[#allocation0]]
  $region22: #{quantized_cnn_forward.3} parent=0
    _
  %s6 = ssub.s32 1, %s4
  %s7 = scalar_select 0, %s6, %s4
  %8 = sst [smem:[#allocation2]] %s2
  // Predicated region
  $region2: #{quantized_cnn_forward.3} parent=0 // pred_check
    _
  $region3: #{quantized_cnn_forward.3} parent=0 // pred_check_branch
    %10 = sbr.rel (0) target = $region5
  $region4: #{quantized_cnn_forward.3} parent=0 // pred_region
    _
  $region5: #{quantized_cnn_forward.3} parent=0 // pred_fallthru
    _
  // Predicated region
  $region6: #{quantized_cnn_forward.3} parent=0 // pred_check
    _
  $region7: #{quantized_cnn_forward.3} parent=0 // pred_check_branch
    %12 = sbr.rel (0) target = $region9
  $region8: #{quantized_cnn_forward.3} parent=0 // pred_region
    _
  $region9: #{quantized_cnn_forward.3} parent=0 // pred_fallthru
    _
  // Predicated region
  $region10: #{quantized_cnn_forward.3} parent=0 // pred_check
    _
  $region11: #{quantized_cnn_forward.3} parent=0 // pred_check_branch
    %14 = sbr.rel (0) target = $region13
  $region12: #{quantized_cnn_forward.3} parent=0 // pred_region
    _
  $region13: #{quantized_cnn_forward.3} parent=0 // pred_fallthru
    _
  %v16 = vld [vmem:[%s1] sm:$0xf]
  %v17 = vld [vmem:[%s1 + $0x4] sm:$0x1]
  %v18 = vld [vmem:[%s0] sm:$0xf]
  %v19 = vld [vmem:[%s0 + $0x4] sm:$0xf]
  %v20 = vld [vmem:[%s0 + $0x8] sm:$0xf]
  %v21 = vld [vmem:[%s0 + $0xc] sm:$0xf]
  %v22 = vld [vmem:[%s0 + $0x10] sm:$0xf]
  %v23 = vld [vmem:[%s0 + $0x14] sm:$0xf]
  %v24 = vld [vmem:[%s0 + $0x18] sm:$0xf]
  %v25 = vld [vmem:[%s0 + $0x1c] sm:$0xf]
  %v26 = vld [vmem:[%s0 + $0x20] sm:$0xf]
  %v27 = vld [vmem:[%s0 + $0x24] sm:$0xf]
  %v28 = vld [vmem:[%s0 + $0x28] sm:$0xf]
  %v29 = vld [vmem:[%s0 + $0x2c] sm:$0xf]
  %v30 = vld [vmem:[%s0 + $0x30] sm:$0xf]
  %v31 = vld [vmem:[%s0 + $0x34] sm:$0xf]
  %v32 = vld [vmem:[%s0 + $0x38] sm:$0xf]
  %v33 = vld [vmem:[%s0 + $0x3c] sm:$0xf]
  %v34 = vld [vmem:[%s0 + $0x40] sm:$0xf]
  %v35 = vld [vmem:[%s0 + $0x44] sm:$0xf]
  %v36 = vld [vmem:[%s0 + $0x48] sm:$0xf]
  %v37 = vld [vmem:[%s0 + $0x4c] sm:$0xf]
  %v38 = vld [vmem:[%s0 + $0x50] sm:$0xf]
  %v39 = vld [vmem:[%s0 + $0x54] sm:$0xf]
  %v40 = vld [vmem:[%s0 + $0x58] sm:$0xf]
  %v41 = vld [vmem:[%s0 + $0x5c] sm:$0xf]
  %v42 = vld [vmem:[%s0 + $0x60] sm:$0xf]
  %v43 = vld [vmem:[%s0 + $0x64] sm:$0xf]
  %v44 = vld [vmem:[%s0 + $0x68] sm:$0xf]
  %v45 = vld [vmem:[%s0 + $0x6c] sm:$0xf]
  %v46 = vld [vmem:[%s0 + $0x70] sm:$0xf]
  %v47 = vld [vmem:[%s0 + $0x74] sm:$0xf]
  %v48 = vld [vmem:[%s0 + $0x78] sm:$0xf]
  %v49 = vld [vmem:[%s0 + $0x7c] sm:$0xf]
  %v50 = vld [vmem:[%s0 + $0x80] sm:$0xf]
  %v51 = vld [vmem:[%s0 + $0x84] sm:$0xf]
  %v52 = vld [vmem:[%s0 + $0x88] sm:$0xf]
  %v53 = vld [vmem:[%s0 + $0x8c] sm:$0xf]
  %v54 = vld [vmem:[%s0 + $0x90] sm:$0xf]
  %v55 = vld [vmem:[%s0 + $0x94] sm:$0xf]
  %v56 = vld [vmem:[%s0 + $0x98] sm:$0xf]
  %v57 = vld [vmem:[%s0 + $0x9c] sm:$0xf]
  %v58 = vld [vmem:[%s0 + $0xa0] sm:$0xf]
  %v59 = vld [vmem:[%s0 + $0xa4] sm:$0xf]
  %v60 = vld [vmem:[%s0 + $0xa8] sm:$0xf]
  %v61 = vld [vmem:[%s0 + $0xac] sm:$0xf]
  %v62 = vld [vmem:[%s0 + $0xb0] sm:$0xf]
  %v63 = vld [vmem:[%s0 + $0xb4] sm:$0xf]
  %v64 = vld [vmem:[%s0 + $0xb8] sm:$0xf]
  %v65 = vld [vmem:[%s0 + $0xbc] sm:$0xf]
  %v66 = vld [vmem:[%s0 + $0xc0] sm:$0xf]
  %v67 = vld [vmem:[%s0 + $0xc4] sm:$0xf]
  %v118 = vunpack.c.l.b16 %v18
  %v119 = vunpack.c.l.b16 %v19
  %v120 = vunpack.c.l.b16 %v20
  %v121 = vunpack.c.l.b16 %v21
  %v122 = vunpack.c.l.b16 %v22
  %v123 = vunpack.c.l.b16 %v23
  %v124 = vunpack.c.l.b16 %v24
  %v125 = vunpack.c.l.b16 %v25
  %v126 = vunpack.c.l.b16 %v26
  %v127 = vunpack.c.l.b16 %v27
  %v128 = vunpack.c.l.b16 %v28
  %v129 = vunpack.c.l.b16 %v29
  %v130 = vunpack.c.l.b16 %v30
  %v131 = vunpack.c.l.b16 %v31
  %v132 = vunpack.c.l.b16 %v32
  %v133 = vunpack.c.l.b16 %v33
  %v134 = vunpack.c.l.b16 %v34
  %v135 = vunpack.c.l.b16 %v35
  %v136 = vunpack.c.l.b16 %v36
  %v137 = vunpack.c.l.b16 %v37
  %v138 = vunpack.c.l.b16 %v38
  %v139 = vunpack.c.l.b16 %v39
  %v140 = vunpack.c.l.b16 %v40
  %v141 = vunpack.c.l.b16 %v41
  %v142 = vunpack.c.l.b16 %v42
  %v143 = vunpack.c.l.b16 %v43
  %v144 = vunpack.c.l.b16 %v44
  %v145 = vunpack.c.l.b16 %v45
  %v146 = vunpack.c.l.b16 %v46
  %v147 = vunpack.c.l.b16 %v47
  %v148 = vunpack.c.l.b16 %v48
  %v149 = vunpack.c.l.b16 %v49
  %v150 = vunpack.c.l.b16 %v50
  %v151 = vunpack.c.l.b16 %v51
  %v152 = vunpack.c.l.b16 %v52
  %v153 = vunpack.c.l.b16 %v53
  %v154 = vunpack.c.l.b16 %v54
  %v155 = vunpack.c.l.b16 %v55
  %v156 = vunpack.c.l.b16 %v56
  %v157 = vunpack.c.l.b16 %v57
  %v158 = vunpack.c.l.b16 %v58
  %v159 = vunpack.c.l.b16 %v59
  %v160 = vunpack.c.l.b16 %v60
  %v161 = vunpack.c.l.b16 %v61
  %v162 = vunpack.c.l.b16 %v62
  %v163 = vunpack.c.l.b16 %v63
  %v164 = vunpack.c.l.b16 %v64
  %v165 = vunpack.c.l.b16 %v65
  %v166 = vunpack.c.l.b16 %v66
  %v167 = vunpack.c.l.b16 %v67
  %v168 = vpack.c.b16 %v119, %v118
  %v169 = vpack.c.b16 %v121, %v120
  %v170 = vpack.c.b16 %v123, %v122
  %v171 = vpack.c.b16 %v125, %v124
  %v172 = vpack.c.b16 %v127, %v126
  %v173 = vpack.c.b16 %v129, %v128
  %v174 = vpack.c.b16 %v131, %v130
  %v175 = vpack.c.b16 %v133, %v132
  %v176 = vpack.c.b16 %v135, %v134
  %v177 = vpack.c.b16 %v137, %v136
  %v178 = vpack.c.b16 %v139, %v138
  %v179 = vpack.c.b16 %v141, %v140
  %v180 = vpack.c.b16 %v143, %v142
  %v181 = vpack.c.b16 %v145, %v144
  %v182 = vpack.c.b16 %v147, %v146
  %v183 = vpack.c.b16 %v149, %v148
  %v184 = vpack.c.b16 %v151, %v150
  %v185 = vpack.c.b16 %v153, %v152
  %v186 = vpack.c.b16 %v155, %v154
  %v187 = vpack.c.b16 %v157, %v156
  %v188 = vpack.c.b16 %v159, %v158
  %v189 = vpack.c.b16 %v161, %v160
  %v190 = vpack.c.b16 %v163, %v162
  %v191 = vpack.c.b16 %v165, %v164
  %v192 = vpack.c.b16 %v167, %v166
  %v195 = vunpack.c.l.b16 %v16
  %v196 = vunpack.c.l.b16 %v17
  %v197 = vpack.c.b16 %v196, %v195
  %vm198 = vcmask 72704
  %v200 = vsel %vm198, %v168, 0
  %v203 = vsel %vm198, %v169, 0
  %v206 = vsel %vm198, %v170, 0
  %v209 = vsel %vm198, %v171, 0
  %v212 = vsel %vm198, %v172, 0
  %v215 = vsel %vm198, %v173, 0
  %v218 = vsel %vm198, %v174, 0
  %v221 = vsel %vm198, %v175, 0
  %v224 = vsel %vm198, %v176, 0
  %v227 = vsel %vm198, %v177, 0
  %v230 = vsel %vm198, %v178, 0
  %v233 = vsel %vm198, %v179, 0
  %v236 = vsel %vm198, %v180, 0
  %v239 = vsel %vm198, %v181, 0
  %v242 = vsel %vm198, %v182, 0
  %v245 = vsel %vm198, %v183, 0
  %v248 = vsel %vm198, %v184, 0
  %v251 = vsel %vm198, %v185, 0
  %v254 = vsel %vm198, %v186, 0
  %v257 = vsel %vm198, %v187, 0
  %v260 = vsel %vm198, %v188, 0
  %v263 = vsel %vm198, %v189, 0
  %v266 = vsel %vm198, %v190, 0
  %v269 = vsel %vm198, %v191, 0
  %v272 = vsel %vm198, %v192, 0
  %vm274 = vcmask 1043456
  %vm275 = vcmask 1044480
  %v276 = vsel %vm274, 4294967295, 65535
  %v277 = vsel %vm275, %v276, 0
  %v279 = vand.u32 %v197, %v277
  %281 = vmatprep.subr.bf16.mxu0 0
  %282 = vmatpush1.bf16.msra.mxu0 %v279
  %283 = vmatprep.subr.bf16.mxu0 0
  %284 = vmatpush1.bf16.msra.mxu0 0
  %285 = vmatprep.subr.bf16.mxu0 0
  %286 = vmatpush1.bf16.msra.mxu0 0
  %287 = vmatprep.subr.bf16.mxu0 0
  %288 = vmatpush1.bf16.msra.mxu0 0
  %289 = vmatprep.subr.bf16.mxu0 0
  %290 = vmatpush1.bf16.msra.mxu0 0
  %291 = vmatprep.subr.bf16.mxu0 0
  %292 = vmatpush1.bf16.msra.mxu0 0
  %293 = vmatprep.subr.bf16.mxu0 0
  %294 = vmatpush1.bf16.msra.mxu0 0
  %295 = vmatprep.subr.bf16.mxu0 0
  %296 = vmatpush1.bf16.msra.mxu0 0
  %297 = vmatprep.subr.bf16.mxu0 0
  %298 = vmatpush1.bf16.msra.mxu0 0
  %299 = vmatprep.subr.bf16.mxu0 0
  %300 = vmatpush1.bf16.msra.mxu0 0
  %301 = vmatprep.subr.bf16.mxu0 0
  %302 = vmatpush1.bf16.msra.mxu0 0
  %303 = vmatprep.subr.bf16.mxu0 0
  %304 = vmatpush1.bf16.msra.mxu0 0
  %305 = vmatprep.subr.bf16.mxu0 0
  %306 = vmatpush1.bf16.msra.mxu0 0
  %307 = vmatprep.subr.bf16.mxu0 0
  %308 = vmatpush1.bf16.msra.mxu0 0
  %309 = vmatprep.subr.bf16.mxu0 0
  %310 = vmatpush1.bf16.msra.mxu0 0
  %311 = vmatprep.subr.bf16.mxu0 0
  %312 = vmatpush1.bf16.msra.mxu0 0
  %313 = vmatprep.mubr.bf16.mxu0 0
  %314 = vmatmul.mubr.bf16.gmra.mrb[0].mxu0 %v200
  %v315 = vpop.f32.mrb[0].mxu0
  %v316 = vadd.f32 0.0, %v315
  %v317 = vpop.f32.mrb[0].mxu0
  %v318 = vpop.f32.mrb[0].mxu0
  %v319 = vadd.f32 0.0, %v318
  %v320 = vpop.f32.mrb[0].mxu0
  %321 = vmatprep.mubr.bf16.mxu0 0
  %322 = vmatmul.mubr.bf16.gmra.mrb[0].mxu0 %v203
  %v323 = vpop.f32.mrb[0].mxu0
  %v324 = vadd.f32 0.0, %v323
  %v325 = vpop.f32.mrb[0].mxu0
  %v326 = vpop.f32.mrb[0].mxu0
  %v327 = vadd.f32 0.0, %v326
  %v328 = vpop.f32.mrb[0].mxu0
  %329 = vmatprep.mubr.bf16.mxu0 0
  %330 = vmatmul.mubr.bf16.gmra.mrb[0].mxu0 %v206
  %v331 = vpop.f32.mrb[0].mxu0
  %v332 = vadd.f32 0.0, %v331
  %v333 = vpop.f32.mrb[0].mxu0
  %v334 = vpop.f32.mrb[0].mxu0
  %v335 = vadd.f32 0.0, %v334
  %v336 = vpop.f32.mrb[0].mxu0
  %337 = vmatprep.mubr.bf16.mxu0 0
  %338 = vmatmul.mubr.bf16.gmra.mrb[0].mxu0 %v209
  %v339 = vpop.f32.mrb[0].mxu0
  %v340 = vadd.f32 0.0, %v339
  %v341 = vpop.f32.mrb[0].mxu0
  %v342 = vpop.f32.mrb[0].mxu0
  %v343 = vadd.f32 0.0, %v342
  %v344 = vpop.f32.mrb[0].mxu0
  %345 = vmatprep.mubr.bf16.mxu0 0
  %346 = vmatmul.mubr.bf16.gmra.mrb[0].mxu0 %v212
  %v347 = vpop.f32.mrb[0].mxu0
  %v348 = vadd.f32 0.0, %v347
  %v349 = vpop.f32.mrb[0].mxu0
  %v350 = vpop.f32.mrb[0].mxu0
  %v351 = vadd.f32 0.0, %v350
  %v352 = vpop.f32.mrb[0].mxu0
  %353 = vmatprep.mubr.bf16.mxu0 0
  %354 = vmatmul.mubr.bf16.gmra.mrb[0].mxu0 %v215
  %v355 = vpop.f32.mrb[0].mxu0
  %v356 = vadd.f32 0.0, %v355
  %v357 = vpop.f32.mrb[0].mxu0
  %v358 = vpop.f32.mrb[0].mxu0
  %v359 = vadd.f32 0.0, %v358
  %v360 = vpop.f32.mrb[0].mxu0
  %361 = vmatprep.mubr.bf16.mxu0 0
  %362 = vmatmul.mubr.bf16.gmra.mrb[0].mxu0 %v218
  %v363 = vpop.f32.mrb[0].mxu0
  %v364 = vadd.f32 0.0, %v363
  %v365 = vpop.f32.mrb[0].mxu0
  %v366 = vpop.f32.mrb[0].mxu0
  %v367 = vadd.f32 0.0, %v366
  %v368 = vpop.f32.mrb[0].mxu0
  %369 = vmatprep.mubr.bf16.mxu0 0
  %370 = vmatmul.mubr.bf16.gmra.mrb[0].mxu0 %v221
  %v371 = vpop.f32.mrb[0].mxu0
  %v372 = vadd.f32 0.0, %v371
  %v373 = vpop.f32.mrb[0].mxu0
  %v374 = vpop.f32.mrb[0].mxu0
  %v375 = vadd.f32 0.0, %v374
  %v376 = vpop.f32.mrb[0].mxu0
  %377 = vmatprep.mubr.bf16.mxu0 0
  %378 = vmatmul.mubr.bf16.gmra.mrb[0].mxu0 %v224
  %v379 = vpop.f32.mrb[0].mxu0
  %v380 = vadd.f32 0.0, %v379
  %v381 = vpop.f32.mrb[0].mxu0
  %v382 = vpop.f32.mrb[0].mxu0
  %v383 = vadd.f32 0.0, %v382
  %v384 = vpop.f32.mrb[0].mxu0
  %385 = vmatprep.mubr.bf16.mxu0 0
  %386 = vmatmul.mubr.bf16.gmra.mrb[0].mxu0 %v227
  %v387 = vpop.f32.mrb[0].mxu0
  %v388 = vadd.f32 0.0, %v387
  %v389 = vpop.f32.mrb[0].mxu0
  %v390 = vpop.f32.mrb[0].mxu0
  %v391 = vadd.f32 0.0, %v390
  %v392 = vpop.f32.mrb[0].mxu0
  %393 = vmatprep.mubr.bf16.mxu0 0
  %394 = vmatmul.mubr.bf16.gmra.mrb[0].mxu0 %v230
  %v395 = vpop.f32.mrb[0].mxu0
  %v396 = vadd.f32 0.0, %v395
  %v397 = vpop.f32.mrb[0].mxu0
  %v398 = vpop.f32.mrb[0].mxu0
  %v399 = vadd.f32 0.0, %v398
  %v400 = vpop.f32.mrb[0].mxu0
  %401 = vmatprep.mubr.bf16.mxu0 0
  %402 = vmatmul.mubr.bf16.gmra.mrb[0].mxu0 %v233
  %v403 = vpop.f32.mrb[0].mxu0
  %v404 = vadd.f32 0.0, %v403
  %v405 = vpop.f32.mrb[0].mxu0
  %v406 = vpop.f32.mrb[0].mxu0
  %v407 = vadd.f32 0.0, %v406
  %v408 = vpop.f32.mrb[0].mxu0
  %409 = vmatprep.mubr.bf16.mxu0 0
  %410 = vmatmul.mubr.bf16.gmra.mrb[0].mxu0 %v236
  %v411 = vpop.f32.mrb[0].mxu0
  %v412 = vadd.f32 0.0, %v411
  %v413 = vpop.f32.mrb[0].mxu0
  %v414 = vpop.f32.mrb[0].mxu0
  %v415 = vadd.f32 0.0, %v414
  %v416 = vpop.f32.mrb[0].mxu0
  %417 = vmatprep.mubr.bf16.mxu0 0
  %418 = vmatmul.mubr.bf16.gmra.mrb[0].mxu0 %v239
  %v419 = vpop.f32.mrb[0].mxu0
  %v420 = vadd.f32 0.0, %v419
  %v421 = vpop.f32.mrb[0].mxu0
  %v422 = vpop.f32.mrb[0].mxu0
  %v423 = vadd.f32 0.0, %v422
  %v424 = vpop.f32.mrb[0].mxu0
  %425 = vmatprep.mubr.bf16.mxu0 0
  %426 = vmatmul.mubr.bf16.gmra.mrb[0].mxu0 %v242
  %v427 = vpop.f32.mrb[0].mxu0
  %v428 = vadd.f32 0.0, %v427
  %v429 = vpop.f32.mrb[0].mxu0
  %v430 = vpop.f32.mrb[0].mxu0
  %v431 = vadd.f32 0.0, %v430
  %v432 = vpop.f32.mrb[0].mxu0
  %433 = vmatprep.mubr.bf16.mxu0 0
  %434 = vmatmul.mubr.bf16.gmra.mrb[0].mxu0 %v245
  %v435 = vpop.f32.mrb[0].mxu0
  %v436 = vadd.f32 0.0, %v435
  %v437 = vpop.f32.mrb[0].mxu0
  %v438 = vpop.f32.mrb[0].mxu0
  %v439 = vadd.f32 0.0, %v438
  %v440 = vpop.f32.mrb[0].mxu0
  %441 = vmatprep.mubr.bf16.mxu0 0
  %442 = vmatmul.mubr.bf16.gmra.mrb[0].mxu0 %v248
  %v443 = vpop.f32.mrb[0].mxu0
  %v444 = vadd.f32 0.0, %v443
  %v445 = vpop.f32.mrb[0].mxu0
  %v446 = vpop.f32.mrb[0].mxu0
  %v447 = vadd.f32 0.0, %v446
  %v448 = vpop.f32.mrb[0].mxu0
  %449 = vmatprep.mubr.bf16.mxu0 0
  %450 = vmatmul.mubr.bf16.gmra.mrb[0].mxu0 %v251
  %v451 = vpop.f32.mrb[0].mxu0
  %v452 = vadd.f32 0.0, %v451
  %v453 = vpop.f32.mrb[0].mxu0
  %v454 = vpop.f32.mrb[0].mxu0
  %v455 = vadd.f32 0.0, %v454
  %v456 = vpop.f32.mrb[0].mxu0
  %457 = vmatprep.mubr.bf16.mxu0 0
  %458 = vmatmul.mubr.bf16.gmra.mrb[0].mxu0 %v254
  %v459 = vpop.f32.mrb[0].mxu0
  %v460 = vadd.f32 0.0, %v459
  %v461 = vpop.f32.mrb[0].mxu0
  %v462 = vpop.f32.mrb[0].mxu0
  %v463 = vadd.f32 0.0, %v462
  %v464 = vpop.f32.mrb[0].mxu0
  %465 = vmatprep.mubr.bf16.mxu0 0
  %466 = vmatmul.mubr.bf16.gmra.mrb[0].mxu0 %v257
  %v467 = vpop.f32.mrb[0].mxu0
  %v468 = vadd.f32 0.0, %v467
  %v469 = vpop.f32.mrb[0].mxu0
  %v470 = vpop.f32.mrb[0].mxu0
  %v471 = vadd.f32 0.0, %v470
  %v472 = vpop.f32.mrb[0].mxu0
  %473 = vmatprep.mubr.bf16.mxu0 0
  %474 = vmatmul.mubr.bf16.gmra.mrb[0].mxu0 %v260
  %v475 = vpop.f32.mrb[0].mxu0
  %v476 = vadd.f32 0.0, %v475
  %v477 = vpop.f32.mrb[0].mxu0
  %v478 = vpop.f32.mrb[0].mxu0
  %v479 = vadd.f32 0.0, %v478
  %v480 = vpop.f32.mrb[0].mxu0
  %481 = vmatprep.mubr.bf16.mxu0 0
  %482 = vmatmul.mubr.bf16.gmra.mrb[0].mxu0 %v263
  %v483 = vpop.f32.mrb[0].mxu0
  %v484 = vadd.f32 0.0, %v483
  %v485 = vpop.f32.mrb[0].mxu0
  %v486 = vpop.f32.mrb[0].mxu0
  %v487 = vadd.f32 0.0, %v486
  %v488 = vpop.f32.mrb[0].mxu0
  %489 = vmatprep.mubr.bf16.mxu0 0
  %490 = vmatmul.mubr.bf16.gmra.mrb[0].mxu0 %v266
  %v491 = vpop.f32.mrb[0].mxu0
  %v492 = vadd.f32 0.0, %v491
  %v493 = vpop.f32.mrb[0].mxu0
  %v494 = vpop.f32.mrb[0].mxu0
  %v495 = vadd.f32 0.0, %v494
  %v496 = vpop.f32.mrb[0].mxu0
  %497 = vmatprep.mubr.bf16.mxu0 0
  %498 = vmatmul.mubr.bf16.gmra.mrb[0].mxu0 %v269
  %v499 = vpop.f32.mrb[0].mxu0
  %v500 = vadd.f32 0.0, %v499
  %v501 = vpop.f32.mrb[0].mxu0
  %v502 = vpop.f32.mrb[0].mxu0
  %v503 = vadd.f32 0.0, %v502
  %v504 = vpop.f32.mrb[0].mxu0
  %505 = vmatprep.mubr.bf16.mxu0 0
  %506 = vmatmul.mubr.bf16.gmra.mrb[0].mxu0 %v272
  %v507 = vpop.f32.mrb[0].mxu0
  %v508 = vadd.f32 0.0, %v507
  %v509 = vpop.f32.mrb[0].mxu0
  %v510 = vpop.f32.mrb[0].mxu0
  %v511 = vadd.f32 0.0, %v510
  %v512 = vpop.f32.mrb[0].mxu0
  %513 = vdwg.mxu0
  %s514 = scalar_lea.vmem %s0, 200
  %v515 = vld [vmem:[%s514] sm:$0xf]
  %v516 = vld [vmem:[%s514 + $0x4] sm:$0xf]
  %v517 = vld [vmem:[%s514 + $0x8] sm:$0xf]
  %v518 = vld [vmem:[%s514 + $0xc] sm:$0xf]
  %v519 = vld [vmem:[%s514 + $0x10] sm:$0xf]
  %v520 = vld [vmem:[%s514 + $0x14] sm:$0xf]
  %v521 = vld [vmem:[%s514 + $0x18] sm:$0xf]
  %v522 = vld [vmem:[%s514 + $0x1c] sm:$0xf]
  %v523 = vld [vmem:[%s514 + $0x20] sm:$0xf]
  %v524 = vld [vmem:[%s514 + $0x24] sm:$0xf]
  %v525 = vld [vmem:[%s514 + $0x28] sm:$0xf]
  %v526 = vld [vmem:[%s514 + $0x2c] sm:$0xf]
  %v527 = vld [vmem:[%s514 + $0x30] sm:$0xf]
  %v528 = vld [vmem:[%s514 + $0x34] sm:$0xf]
  %v529 = vld [vmem:[%s514 + $0x38] sm:$0xf]
  %v530 = vld [vmem:[%s514 + $0x3c] sm:$0xf]
  %v531 = vld [vmem:[%s514 + $0x40] sm:$0xf]
  %v532 = vld [vmem:[%s514 + $0x44] sm:$0xf]
  %v533 = vld [vmem:[%s514 + $0x48] sm:$0xf]
  %v534 = vld [vmem:[%s514 + $0x4c] sm:$0xf]
  %v535 = vld [vmem:[%s514 + $0x50] sm:$0xf]
  %v536 = vld [vmem:[%s514 + $0x54] sm:$0xf]
  %v537 = vld [vmem:[%s514 + $0x58] sm:$0xf]
  %v538 = vld [vmem:[%s514 + $0x5c] sm:$0xf]
  %v539 = vld [vmem:[%s514 + $0x60] sm:$0xf]
  %v540 = vld [vmem:[%s514 + $0x64] sm:$0xf]
  %v541 = vld [vmem:[%s514 + $0x68] sm:$0xf]
  %v542 = vld [vmem:[%s514 + $0x6c] sm:$0xf]
  %v543 = vld [vmem:[%s514 + $0x70] sm:$0xf]
  %v544 = vld [vmem:[%s514 + $0x74] sm:$0xf]
  %v545 = vld [vmem:[%s514 + $0x78] sm:$0xf]
  %v546 = vld [vmem:[%s514 + $0x7c] sm:$0xf]
  %v547 = vld [vmem:[%s514 + $0x80] sm:$0xf]
  %v548 = vld [vmem:[%s514 + $0x84] sm:$0xf]
  %v549 = vld [vmem:[%s514 + $0x88] sm:$0xf]
  %v550 = vld [vmem:[%s514 + $0x8c] sm:$0xf]
  %v551 = vld [vmem:[%s514 + $0x90] sm:$0xf]
  %v552 = vld [vmem:[%s514 + $0x94] sm:$0xf]
  %v553 = vld [vmem:[%s514 + $0x98] sm:$0xf]
  %v554 = vld [vmem:[%s514 + $0x9c] sm:$0xf]
  %v555 = vld [vmem:[%s514 + $0xa0] sm:$0xf]
  %v556 = vld [vmem:[%s514 + $0xa4] sm:$0xf]
  %v557 = vld [vmem:[%s514 + $0xa8] sm:$0xf]
  %v558 = vld [vmem:[%s514 + $0xac] sm:$0xf]
  %v559 = vld [vmem:[%s514 + $0xb0] sm:$0xf]
  %v560 = vld [vmem:[%s514 + $0xb4] sm:$0xf]
  %v561 = vld [vmem:[%s514 + $0xb8] sm:$0xf]
  %v562 = vld [vmem:[%s514 + $0xbc] sm:$0xf]
  %v563 = vld [vmem:[%s514 + $0xc0] sm:$0xf]
  %v564 = vld [vmem:[%s514 + $0xc4] sm:$0xf]
  %v615 = vunpack.c.l.b16 %v515
  %v616 = vunpack.c.l.b16 %v516
  %v617 = vunpack.c.l.b16 %v517
  %v618 = vunpack.c.l.b16 %v518
  %v619 = vunpack.c.l.b16 %v519
  %v620 = vunpack.c.l.b16 %v520
  %v621 = vunpack.c.l.b16 %v521
  %v622 = vunpack.c.l.b16 %v522
  %v623 = vunpack.c.l.b16 %v523
  %v624 = vunpack.c.l.b16 %v524
  %v625 = vunpack.c.l.b16 %v525
  %v626 = vunpack.c.l.b16 %v526
  %v627 = vunpack.c.l.b16 %v527
  %v628 = vunpack.c.l.b16 %v528
  %v629 = vunpack.c.l.b16 %v529
  %v630 = vunpack.c.l.b16 %v530
  %v631 = vunpack.c.l.b16 %v531
  %v632 = vunpack.c.l.b16 %v532
  %v633 = vunpack.c.l.b16 %v533
  %v634 = vunpack.c.l.b16 %v534
  %v635 = vunpack.c.l.b16 %v535
  %v636 = vunpack.c.l.b16 %v536
  %v637 = vunpack.c.l.b16 %v537
  %v638 = vunpack.c.l.b16 %v538
  %v639 = vunpack.c.l.b16 %v539
  %v640 = vunpack.c.l.b16 %v540
  %v641 = vunpack.c.l.b16 %v541
  %v642 = vunpack.c.l.b16 %v542
  %v643 = vunpack.c.l.b16 %v543
  %v644 = vunpack.c.l.b16 %v544
  %v645 = vunpack.c.l.b16 %v545
  %v646 = vunpack.c.l.b16 %v546
  %v647 = vunpack.c.l.b16 %v547
  %v648 = vunpack.c.l.b16 %v548
  %v649 = vunpack.c.l.b16 %v549
  %v650 = vunpack.c.l.b16 %v550
  %v651 = vunpack.c.l.b16 %v551
  %v652 = vunpack.c.l.b16 %v552
  %v653 = vunpack.c.l.b16 %v553
  %v654 = vunpack.c.l.b16 %v554
  %v655 = vunpack.c.l.b16 %v555
  %v656 = vunpack.c.l.b16 %v556
  %v657 = vunpack.c.l.b16 %v557
  %v658 = vunpack.c.l.b16 %v558
  %v659 = vunpack.c.l.b16 %v559
  %v660 = vunpack.c.l.b16 %v560
  %v661 = vunpack.c.l.b16 %v561
  %v662 = vunpack.c.l.b16 %v562
  %v663 = vunpack.c.l.b16 %v563
  %v664 = vunpack.c.l.b16 %v564
  %v665 = vpack.c.b16 %v616, %v615
  %v666 = vpack.c.b16 %v618, %v617
  %v667 = vpack.c.b16 %v620, %v619
  %v668 = vpack.c.b16 %v622, %v621
  %v669 = vpack.c.b16 %v624, %v623
  %v670 = vpack.c.b16 %v626, %v625
  %v671 = vpack.c.b16 %v628, %v627
  %v672 = vpack.c.b16 %v630, %v629
  %v673 = vpack.c.b16 %v632, %v631
  %v674 = vpack.c.b16 %v634, %v633
  %v675 = vpack.c.b16 %v636, %v635
  %v676 = vpack.c.b16 %v638, %v637
  %v677 = vpack.c.b16 %v640, %v639
  %v678 = vpack.c.b16 %v642, %v641
  %v679 = vpack.c.b16 %v644, %v643
  %v680 = vpack.c.b16 %v646, %v645
  %v681 = vpack.c.b16 %v648, %v647
  %v682 = vpack.c.b16 %v650, %v649
  %v683 = vpack.c.b16 %v652, %v651
  %v684 = vpack.c.b16 %v654, %v653
  %v685 = vpack.c.b16 %v656, %v655
  %v686 = vpack.c.b16 %v658, %v657
  %v687 = vpack.c.b16 %v660, %v659
  %v688 = vpack.c.b16 %v662, %v661
  %v689 = vpack.c.b16 %v664, %v663
  %v691 = vsel %vm198, %v665, 0
  %v694 = vsel %vm198, %v666, 0
  %v697 = vsel %vm198, %v667, 0
  %v700 = vsel %vm198, %v668, 0
  %v703 = vsel %vm198, %v669, 0
  %v706 = vsel %vm198, %v670, 0
  %v709 = vsel %vm198, %v671, 0
  %v712 = vsel %vm198, %v672, 0
  %v715 = vsel %vm198, %v673, 0
  %v718 = vsel %vm198, %v674, 0
  %v721 = vsel %vm198, %v675, 0
  %v724 = vsel %vm198, %v676, 0
  %v727 = vsel %vm198, %v677, 0
  %v730 = vsel %vm198, %v678, 0
  %v733 = vsel %vm198, %v679, 0
  %v736 = vsel %vm198, %v680, 0
  %v739 = vsel %vm198, %v681, 0
  %v742 = vsel %vm198, %v682, 0
  %v745 = vsel %vm198, %v683, 0
  %v748 = vsel %vm198, %v684, 0
  %v751 = vsel %vm198, %v685, 0
  %v754 = vsel %vm198, %v686, 0
  %v757 = vsel %vm198, %v687, 0
  %v760 = vsel %vm198, %v688, 0
  %v763 = vsel %vm198, %v689, 0
  %765 = vmatprep.subr.bf16.mxu0 0
  %766 = vmatpush1.bf16.msra.mxu0 %v279
  %767 = vmatprep.subr.bf16.mxu0 0
  %768 = vmatpush1.bf16.msra.mxu0 0
  %769 = vmatprep.subr.bf16.mxu0 0
  %770 = vmatpush1.bf16.msra.mxu0 0
  %771 = vmatprep.subr.bf16.mxu0 0
  %772 = vmatpush1.bf16.msra.mxu0 0
  %773 = vmatprep.subr.bf16.mxu0 0
  %774 = vmatpush1.bf16.msra.mxu0 0
  %775 = vmatprep.subr.bf16.mxu0 0
  %776 = vmatpush1.bf16.msra.mxu0 0
  %777 = vmatprep.subr.bf16.mxu0 0
  %778 = vmatpush1.bf16.msra.mxu0 0
  %779 = vmatprep.subr.bf16.mxu0 0
  %780 = vmatpush1.bf16.msra.mxu0 0
  %781 = vmatprep.subr.bf16.mxu0 0
  %782 = vmatpush1.bf16.msra.mxu0 0
  %783 = vmatprep.subr.bf16.mxu0 0
  %784 = vmatpush1.bf16.msra.mxu0 0
  %785 = vmatprep.subr.bf16.mxu0 0
  %786 = vmatpush1.bf16.msra.mxu0 0
  %787 = vmatprep.subr.bf16.mxu0 0
  %788 = vmatpush1.bf16.msra.mxu0 0
  %789 = vmatprep.subr.bf16.mxu0 0
  %790 = vmatpush1.bf16.msra.mxu0 0
  %791 = vmatprep.subr.bf16.mxu0 0
  %792 = vmatpush1.bf16.msra.mxu0 0
  %793 = vmatprep.subr.bf16.mxu0 0
  %794 = vmatpush1.bf16.msra.mxu0 0
  %795 = vmatprep.subr.bf16.mxu0 0
  %796 = vmatpush1.bf16.msra.mxu0 0
  %797 = vmatprep.mubr.bf16.mxu0 0
  %798 = vmatmul.mubr.bf16.gmra.mrb[0].mxu0 %v691
  %v799 = vpop.f32.mrb[0].mxu0
  %v800 = vadd.f32 0.0, %v799
  %v801 = vpop.f32.mrb[0].mxu0
  %v802 = vpop.f32.mrb[0].mxu0
  %v803 = vadd.f32 0.0, %v802
  %v804 = vpop.f32.mrb[0].mxu0
  %805 = vmatprep.mubr.bf16.mxu0 0
  %806 = vmatmul.mubr.bf16.gmra.mrb[0].mxu0 %v694
  %v807 = vpop.f32.mrb[0].mxu0
  %v808 = vadd.f32 0.0, %v807
  %v809 = vpop.f32.mrb[0].mxu0
  %v810 = vpop.f32.mrb[0].mxu0
  %v811 = vadd.f32 0.0, %v810
  %v812 = vpop.f32.mrb[0].mxu0
  %813 = vmatprep.mubr.bf16.mxu0 0
  %814 = vmatmul.mubr.bf16.gmra.mrb[0].mxu0 %v697
  %v815 = vpop.f32.mrb[0].mxu0
  %v816 = vadd.f32 0.0, %v815
  %v817 = vpop.f32.mrb[0].mxu0
  %v818 = vpop.f32.mrb[0].mxu0
  %v819 = vadd.f32 0.0, %v818
  %v820 = vpop.f32.mrb[0].mxu0
  %821 = vmatprep.mubr.bf16.mxu0 0
  %822 = vmatmul.mubr.bf16.gmra.mrb[0].mxu0 %v700
  %v823 = vpop.f32.mrb[0].mxu0
  %v824 = vadd.f32 0.0, %v823
  %v825 = vpop.f32.mrb[0].mxu0
  %v826 = vpop.f32.mrb[0].mxu0
  %v827 = vadd.f32 0.0, %v826
  %v828 = vpop.f32.mrb[0].mxu0
  %829 = vmatprep.mubr.bf16.mxu0 0
  %830 = vmatmul.mubr.bf16.gmra.mrb[0].mxu0 %v703
  %v831 = vpop.f32.mrb[0].mxu0
  %v832 = vadd.f32 0.0, %v831
  %v833 = vpop.f32.mrb[0].mxu0
  %v834 = vpop.f32.mrb[0].mxu0
  %v835 = vadd.f32 0.0, %v834
  %v836 = vpop.f32.mrb[0].mxu0
  %837 = vmatprep.mubr.bf16.mxu0 0
  %838 = vmatmul.mubr.bf16.gmra.mrb[0].mxu0 %v706
  %v839 = vpop.f32.mrb[0].mxu0
  %v840 = vadd.f32 0.0, %v839
  %v841 = vpop.f32.mrb[0].mxu0
  %v842 = vpop.f32.mrb[0].mxu0
  %v843 = vadd.f32 0.0, %v842
  %v844 = vpop.f32.mrb[0].mxu0
  %845 = vmatprep.mubr.bf16.mxu0 0
  %846 = vmatmul.mubr.bf16.gmra.mrb[0].mxu0 %v709
  %v847 = vpop.f32.mrb[0].mxu0
  %v848 = vadd.f32 0.0, %v847
  %v849 = vpop.f32.mrb[0].mxu0
  %v850 = vpop.f32.mrb[0].mxu0
  %v851 = vadd.f32 0.0, %v850
  %v852 = vpop.f32.mrb[0].mxu0
  %853 = vmatprep.mubr.bf16.mxu0 0
  %854 = vmatmul.mubr.bf16.gmra.mrb[0].mxu0 %v712
  %v855 = vpop.f32.mrb[0].mxu0
  %v856 = vadd.f32 0.0, %v855
  %v857 = vpop.f32.mrb[0].mxu0
  %v858 = vpop.f32.mrb[0].mxu0
  %v859 = vadd.f32 0.0, %v858
  %v860 = vpop.f32.mrb[0].mxu0
  %861 = vmatprep.mubr.bf16.mxu0 0
  %862 = vmatmul.mubr.bf16.gmra.mrb[0].mxu0 %v715
  %v863 = vpop.f32.mrb[0].mxu0
  %v864 = vadd.f32 0.0, %v863
  %v865 = vpop.f32.mrb[0].mxu0
  %v866 = vpop.f32.mrb[0].mxu0
  %v867 = vadd.f32 0.0, %v866
  %v868 = vpop.f32.mrb[0].mxu0
  %869 = vmatprep.mubr.bf16.mxu0 0
  %870 = vmatmul.mubr.bf16.gmra.mrb[0].mxu0 %v718
  %v871 = vpop.f32.mrb[0].mxu0
  %v872 = vadd.f32 0.0, %v871
  %v873 = vpop.f32.mrb[0].mxu0
  %v874 = vpop.f32.mrb[0].mxu0
  %v875 = vadd.f32 0.0, %v874
  %v876 = vpop.f32.mrb[0].mxu0
  %877 = vmatprep.mubr.bf16.mxu0 0
  %878 = vmatmul.mubr.bf16.gmra.mrb[0].mxu0 %v721
  %v879 = vpop.f32.mrb[0].mxu0
  %v880 = vadd.f32 0.0, %v879
  %v881 = vpop.f32.mrb[0].mxu0
  %v882 = vpop.f32.mrb[0].mxu0
  %v883 = vadd.f32 0.0, %v882
  %v884 = vpop.f32.mrb[0].mxu0
  %885 = vmatprep.mubr.bf16.mxu0 0
  %886 = vmatmul.mubr.bf16.gmra.mrb[0].mxu0 %v724
  %v887 = vpop.f32.mrb[0].mxu0
  %v888 = vadd.f32 0.0, %v887
  %v889 = vpop.f32.mrb[0].mxu0
  %v890 = vpop.f32.mrb[0].mxu0
  %v891 = vadd.f32 0.0, %v890
  %v892 = vpop.f32.mrb[0].mxu0
  %893 = vmatprep.mubr.bf16.mxu0 0
  %894 = vmatmul.mubr.bf16.gmra.mrb[0].mxu0 %v727
  %v895 = vpop.f32.mrb[0].mxu0
  %v896 = vadd.f32 0.0, %v895
  %v897 = vpop.f32.mrb[0].mxu0
  %v898 = vpop.f32.mrb[0].mxu0
  %v899 = vadd.f32 0.0, %v898
  %v900 = vpop.f32.mrb[0].mxu0
  %901 = vmatprep.mubr.bf16.mxu0 0
  %902 = vmatmul.mubr.bf16.gmra.mrb[0].mxu0 %v730
  %v903 = vpop.f32.mrb[0].mxu0
  %v904 = vadd.f32 0.0, %v903
  %v905 = vpop.f32.mrb[0].mxu0
  %v906 = vpop.f32.mrb[0].mxu0
  %v907 = vadd.f32 0.0, %v906
  %v908 = vpop.f32.mrb[0].mxu0
  %909 = vmatprep.mubr.bf16.mxu0 0
  %910 = vmatmul.mubr.bf16.gmra.mrb[0].mxu0 %v733
  %v911 = vpop.f32.mrb[0].mxu0
  %v912 = vadd.f32 0.0, %v911
  %v913 = vpop.f32.mrb[0].mxu0
  %v914 = vpop.f32.mrb[0].mxu0
  %v915 = vadd.f32 0.0, %v914
  %v916 = vpop.f32.mrb[0].mxu0
  %917 = vmatprep.mubr.bf16.mxu0 0
  %918 = vmatmul.mubr.bf16.gmra.mrb[0].mxu0 %v736
  %v919 = vpop.f32.mrb[0].mxu0
  %v920 = vadd.f32 0.0, %v919
  %v921 = vpop.f32.mrb[0].mxu0
  %v922 = vpop.f32.mrb[0].mxu0
  %v923 = vadd.f32 0.0, %v922
  %v924 = vpop.f32.mrb[0].mxu0
  %925 = vmatprep.mubr.bf16.mxu0 0
  %926 = vmatmul.mubr.bf16.gmra.mrb[0].mxu0 %v739
  %v927 = vpop.f32.mrb[0].mxu0
  %v928 = vadd.f32 0.0, %v927
  %v929 = vpop.f32.mrb[0].mxu0
  %v930 = vpop.f32.mrb[0].mxu0
  %v931 = vadd.f32 0.0, %v930
  %v932 = vpop.f32.mrb[0].mxu0
  %933 = vmatprep.mubr.bf16.mxu0 0
  %934 = vmatmul.mubr.bf16.gmra.mrb[0].mxu0 %v742
  %v935 = vpop.f32.mrb[0].mxu0
  %v936 = vadd.f32 0.0, %v935
  %v937 = vpop.f32.mrb[0].mxu0
  %v938 = vpop.f32.mrb[0].mxu0
  %v939 = vadd.f32 0.0, %v938
  %v940 = vpop.f32.mrb[0].mxu0
  %941 = vmatprep.mubr.bf16.mxu0 0
  %942 = vmatmul.mubr.bf16.gmra.mrb[0].mxu0 %v745
  %v943 = vpop.f32.mrb[0].mxu0
  %v944 = vadd.f32 0.0, %v943
  %v945 = vpop.f32.mrb[0].mxu0
  %v946 = vpop.f32.mrb[0].mxu0
  %v947 = vadd.f32 0.0, %v946
  %v948 = vpop.f32.mrb[0].mxu0
  %949 = vmatprep.mubr.bf16.mxu0 0
  %950 = vmatmul.mubr.bf16.gmra.mrb[0].mxu0 %v748
  %v951 = vpop.f32.mrb[0].mxu0
  %v952 = vadd.f32 0.0, %v951
  %v953 = vpop.f32.mrb[0].mxu0
  %v954 = vpop.f32.mrb[0].mxu0
  %v955 = vadd.f32 0.0, %v954
  %v956 = vpop.f32.mrb[0].mxu0
  %957 = vmatprep.mubr.bf16.mxu0 0
  %958 = vmatmul.mubr.bf16.gmra.mrb[0].mxu0 %v751
  %v959 = vpop.f32.mrb[0].mxu0
  %v960 = vadd.f32 0.0, %v959
  %v961 = vpop.f32.mrb[0].mxu0
  %v962 = vpop.f32.mrb[0].mxu0
  %v963 = vadd.f32 0.0, %v962
  %v964 = vpop.f32.mrb[0].mxu0
  %965 = vmatprep.mubr.bf16.mxu0 0
  %966 = vmatmul.mubr.bf16.gmra.mrb[0].mxu0 %v754
  %v967 = vpop.f32.mrb[0].mxu0
  %v968 = vadd.f32 0.0, %v967
  %v969 = vpop.f32.mrb[0].mxu0
  %v970 = vpop.f32.mrb[0].mxu0
  %v971 = vadd.f32 0.0, %v970
  %v972 = vpop.f32.mrb[0].mxu0
  %973 = vmatprep.mubr.bf16.mxu0 0
  %974 = vmatmul.mubr.bf16.gmra.mrb[0].mxu0 %v757
  %v975 = vpop.f32.mrb[0].mxu0
  %v976 = vadd.f32 0.0, %v975
  %v977 = vpop.f32.mrb[0].mxu0
  %v978 = vpop.f32.mrb[0].mxu0
  %v979 = vadd.f32 0.0, %v978
  %v980 = vpop.f32.mrb[0].mxu0
  %981 = vmatprep.mubr.bf16.mxu0 0
  %982 = vmatmul.mubr.bf16.gmra.mrb[0].mxu0 %v760
  %v983 = vpop.f32.mrb[0].mxu0
  %v984 = vadd.f32 0.0, %v983
  %v985 = vpop.f32.mrb[0].mxu0
  %v986 = vpop.f32.mrb[0].mxu0
  %v987 = vadd.f32 0.0, %v986
  %v988 = vpop.f32.mrb[0].mxu0
  %989 = vmatprep.mubr.bf16.mxu0 0
  %990 = vmatmul.mubr.bf16.gmra.mrb[0].mxu0 %v763
  %v991 = vpop.f32.mrb[0].mxu0
  %v992 = vadd.f32 0.0, %v991
  %v993 = vpop.f32.mrb[0].mxu0
  %v994 = vpop.f32.mrb[0].mxu0
  %v995 = vadd.f32 0.0, %v994
  %v996 = vpop.f32.mrb[0].mxu0
  %997 = vdwg.mxu0
  %s998 = scalar_lea.vmem %s0, 400
  %v999 = vld [vmem:[%s998] sm:$0xf]
  %v1000 = vld [vmem:[%s998 + $0x4] sm:$0xf]
  %v1001 = vld [vmem:[%s998 + $0x8] sm:$0xf]
  %v1002 = vld [vmem:[%s998 + $0xc] sm:$0xf]
  %v1003 = vld [vmem:[%s998 + $0x10] sm:$0xf]
  %v1004 = vld [vmem:[%s998 + $0x14] sm:$0xf]
  %v1005 = vld [vmem:[%s998 + $0x18] sm:$0xf]
  %v1006 = vld [vmem:[%s998 + $0x1c] sm:$0xf]
  %v1007 = vld [vmem:[%s998 + $0x20] sm:$0xf]
  %v1008 = vld [vmem:[%s998 + $0x24] sm:$0xf]
  %v1009 = vld [vmem:[%s998 + $0x28] sm:$0xf]
  %v1010 = vld [vmem:[%s998 + $0x2c] sm:$0xf]
  %v1011 = vld [vmem:[%s998 + $0x30] sm:$0xf]
  %v1012 = vld [vmem:[%s998 + $0x34] sm:$0xf]
  %v1013 = vld [vmem:[%s998 + $0x38] sm:$0xf]
  %v1014 = vld [vmem:[%s998 + $0x3c] sm:$0xf]
  %v1015 = vld [vmem:[%s998 + $0x40] sm:$0xf]
  %v1016 = vld [vmem:[%s998 + $0x44] sm:$0xf]
  %v1017 = vld [vmem:[%s998 + $0x48] sm:$0xf]
  %v1018 = vld [vmem:[%s998 + $0x4c] sm:$0xf]
  %v1019 = vld [vmem:[%s998 + $0x50] sm:$0xf]
  %v1020 = vld [vmem:[%s998 + $0x54] sm:$0xf]
  %v1021 = vld [vmem:[%s998 + $0x58] sm:$0xf]
  %v1022 = vld [vmem:[%s998 + $0x5c] sm:$0xf]
  %v1023 = vld [vmem:[%s998 + $0x60] sm:$0xf]
  %v1024 = vld [vmem:[%s998 + $0x64] sm:$0xf]
  %v1025 = vld [vmem:[%s998 + $0x68] sm:$0xf]
  %v1026 = vld [vmem:[%s998 + $0x6c] sm:$0xf]
  %v1027 = vld [vmem:[%s998 + $0x70] sm:$0xf]
  %v1028 = vld [vmem:[%s998 + $0x74] sm:$0xf]
  %v1029 = vld [vmem:[%s998 + $0x78] sm:$0xf]
  %v1030 = vld [vmem:[%s998 + $0x7c] sm:$0xf]
  %v1031 = vld [vmem:[%s998 + $0x80] sm:$0xf]
  %v1032 = vld [vmem:[%s998 + $0x84] sm:$0xf]
  %v1033 = vld [vmem:[%s998 + $0x88] sm:$0xf]
  %v1034 = vld [vmem:[%s998 + $0x8c] sm:$0xf]
  %v1035 = vld [vmem:[%s998 + $0x90] sm:$0xf]
  %v1036 = vld [vmem:[%s998 + $0x94] sm:$0xf]
  %v1037 = vld [vmem:[%s998 + $0x98] sm:$0xf]
  %v1038 = vld [vmem:[%s998 + $0x9c] sm:$0xf]
  %v1039 = vld [vmem:[%s998 + $0xa0] sm:$0xf]
  %v1040 = vld [vmem:[%s998 + $0xa4] sm:$0xf]
  %v1041 = vld [vmem:[%s998 + $0xa8] sm:$0xf]
  %v1042 = vld [vmem:[%s998 + $0xac] sm:$0xf]
  %v1043 = vld [vmem:[%s998 + $0xb0] sm:$0xf]
  %v1044 = vld [vmem:[%s998 + $0xb4] sm:$0xf]
  %v1045 = vld [vmem:[%s998 + $0xb8] sm:$0xf]
  %v1046 = vld [vmem:[%s998 + $0xbc] sm:$0xf]
  %v1047 = vld [vmem:[%s998 + $0xc0] sm:$0xf]
  %v1048 = vld [vmem:[%s998 + $0xc4] sm:$0xf]
  %v1099 = vunpack.c.l.b16 %v999
  %v1100 = vunpack.c.l.b16 %v1000
  %v1101 = vunpack.c.l.b16 %v1001
  %v1102 = vunpack.c.l.b16 %v1002
  %v1103 = vunpack.c.l.b16 %v1003
  %v1104 = vunpack.c.l.b16 %v1004
  %v1105 = vunpack.c.l.b16 %v1005
  %v1106 = vunpack.c.l.b16 %v1006
  %v1107 = vunpack.c.l.b16 %v1007
  %v1108 = vunpack.c.l.b16 %v1008
  %v1109 = vunpack.c.l.b16 %v1009
  %v1110 = vunpack.c.l.b16 %v1010
  %v1111 = vunpack.c.l.b16 %v1011
  %v1112 = vunpack.c.l.b16 %v1012
  %v1113 = vunpack.c.l.b16 %v1013
  %v1114 = vunpack.c.l.b16 %v1014
  %v1115 = vunpack.c.l.b16 %v1015
  %v1116 = vunpack.c.l.b16 %v1016
  %v1117 = vunpack.c.l.b16 %v1017
  %v1118 = vunpack.c.l.b16 %v1018
  %v1119 = vunpack.c.l.b16 %v1019
  %v1120 = vunpack.c.l.b16 %v1020
  %v1121 = vunpack.c.l.b16 %v1021
  %v1122 = vunpack.c.l.b16 %v1022
  %v1123 = vunpack.c.l.b16 %v1023
  %v1124 = vunpack.c.l.b16 %v1024
  %v1125 = vunpack.c.l.b16 %v1025
  %v1126 = vunpack.c.l.b16 %v1026
  %v1127 = vunpack.c.l.b16 %v1027
  %v1128 = vunpack.c.l.b16 %v1028
  %v1129 = vunpack.c.l.b16 %v1029
  %v1130 = vunpack.c.l.b16 %v1030
  %v1131 = vunpack.c.l.b16 %v1031
  %v1132 = vunpack.c.l.b16 %v1032
  %v1133 = vunpack.c.l.b16 %v1033
  %v1134 = vunpack.c.l.b16 %v1034
  %v1135 = vunpack.c.l.b16 %v1035
  %v1136 = vunpack.c.l.b16 %v1036
  %v1137 = vunpack.c.l.b16 %v1037
  %v1138 = vunpack.c.l.b16 %v1038
  %v1139 = vunpack.c.l.b16 %v1039
  %v1140 = vunpack.c.l.b16 %v1040
  %v1141 = vunpack.c.l.b16 %v1041
  %v1142 = vunpack.c.l.b16 %v1042
  %v1143 = vunpack.c.l.b16 %v1043
  %v1144 = vunpack.c.l.b16 %v1044
  %v1145 = vunpack.c.l.b16 %v1045
  %v1146 = vunpack.c.l.b16 %v1046
  %v1147 = vunpack.c.l.b16 %v1047
  %v1148 = vunpack.c.l.b16 %v1048
  %v1149 = vpack.c.b16 %v1100, %v1099
  %v1150 = vpack.c.b16 %v1102, %v1101
  %v1151 = vpack.c.b16 %v1104, %v1103
  %v1152 = vpack.c.b16 %v1106, %v1105
  %v1153 = vpack.c.b16 %v1108, %v1107
  %v1154 = vpack.c.b16 %v1110, %v1109
  %v1155 = vpack.c.b16 %v1112, %v1111
  %v1156 = vpack.c.b16 %v1114, %v1113
  %v1157 = vpack.c.b16 %v1116, %v1115
  %v1158 = vpack.c.b16 %v1118, %v1117
  %v1159 = vpack.c.b16 %v1120, %v1119
  %v1160 = vpack.c.b16 %v1122, %v1121
  %v1161 = vpack.c.b16 %v1124, %v1123
  %v1162 = vpack.c.b16 %v1126, %v1125
  %v1163 = vpack.c.b16 %v1128, %v1127
  %v1164 = vpack.c.b16 %v1130, %v1129
  %v1165 = vpack.c.b16 %v1132, %v1131
  %v1166 = vpack.c.b16 %v1134, %v1133
  %v1167 = vpack.c.b16 %v1136, %v1135
  %v1168 = vpack.c.b16 %v1138, %v1137
  %v1169 = vpack.c.b16 %v1140, %v1139
  %v1170 = vpack.c.b16 %v1142, %v1141
  %v1171 = vpack.c.b16 %v1144, %v1143
  %v1172 = vpack.c.b16 %v1146, %v1145
  %v1173 = vpack.c.b16 %v1148, %v1147
  %v1175 = vsel %vm198, %v1149, 0
  %v1178 = vsel %vm198, %v1150, 0
  %v1181 = vsel %vm198, %v1151, 0
  %v1184 = vsel %vm198, %v1152, 0
  %v1187 = vsel %vm198, %v1153, 0
  %v1190 = vsel %vm198, %v1154, 0
  %v1193 = vsel %vm198, %v1155, 0
  %v1196 = vsel %vm198, %v1156, 0
  %v1199 = vsel %vm198, %v1157, 0
  %v1202 = vsel %vm198, %v1158, 0
  %v1205 = vsel %vm198, %v1159, 0
  %v1208 = vsel %vm198, %v1160, 0
  %v1211 = vsel %vm198, %v1161, 0
  %v1214 = vsel %vm198, %v1162, 0
  %v1217 = vsel %vm198, %v1163, 0
  %v1220 = vsel %vm198, %v1164, 0
  %v1223 = vsel %vm198, %v1165, 0
  %v1226 = vsel %vm198, %v1166, 0
  %v1229 = vsel %vm198, %v1167, 0
  %v1232 = vsel %vm198, %v1168, 0
  %v1235 = vsel %vm198, %v1169, 0
  %v1238 = vsel %vm198, %v1170, 0
  %v1241 = vsel %vm198, %v1171, 0
  %v1244 = vsel %vm198, %v1172, 0
  %v1247 = vsel %vm198, %v1173, 0
  %1249 = vmatprep.subr.bf16.mxu0 0
  %1250 = vmatpush1.bf16.msra.mxu0 %v279
  %1251 = vmatprep.subr.bf16.mxu0 0
  %1252 = vmatpush1.bf16.msra.mxu0 0
  %1253 = vmatprep.subr.bf16.mxu0 0
  %1254 = vmatpush1.bf16.msra.mxu0 0
  %1255 = vmatprep.subr.bf16.mxu0 0
  %1256 = vmatpush1.bf16.msra.mxu0 0
  %1257 = vmatprep.subr.bf16.mxu0 0
  %1258 = vmatpush1.bf16.msra.mxu0 0
  %1259 = vmatprep.subr.bf16.mxu0 0
  %1260 = vmatpush1.bf16.msra.mxu0 0
  %1261 = vmatprep.subr.bf16.mxu0 0
  %1262 = vmatpush1.bf16.msra.mxu0 0
  %1263 = vmatprep.subr.bf16.mxu0 0
  %1264 = vmatpush1.bf16.msra.mxu0 0
  %1265 = vmatprep.subr.bf16.mxu0 0
  %1266 = vmatpush1.bf16.msra.mxu0 0
  %1267 = vmatprep.subr.bf16.mxu0 0
  %1268 = vmatpush1.bf16.msra.mxu0 0
  %1269 = vmatprep.subr.bf16.mxu0 0
  %1270 = vmatpush1.bf16.msra.mxu0 0
  %1271 = vmatprep.subr.bf16.mxu0 0
  %1272 = vmatpush1.bf16.msra.mxu0 0
  %1273 = vmatprep.subr.bf16.mxu0 0
  %1274 = vmatpush1.bf16.msra.mxu0 0
  %1275 = vmatprep.subr.bf16.mxu0 0
  %1276 = vmatpush1.bf16.msra.mxu0 0
  %1277 = vmatprep.subr.bf16.mxu0 0
  %1278 = vmatpush1.bf16.msra.mxu0 0
  %1279 = vmatprep.subr.bf16.mxu0 0
  %1280 = vmatpush1.bf16.msra.mxu0 0
  %1281 = vmatprep.mubr.bf16.mxu0 0
  %1282 = vmatmul.mubr.bf16.gmra.mrb[0].mxu0 %v1175
  %v1283 = vpop.f32.mrb[0].mxu0
  %v1284 = vadd.f32 0.0, %v1283
  %v1285 = vpop.f32.mrb[0].mxu0
  %v1286 = vpop.f32.mrb[0].mxu0
  %v1287 = vadd.f32 0.0, %v1286
  %v1288 = vpop.f32.mrb[0].mxu0
  %1289 = vmatprep.mubr.bf16.mxu0 0
  %1290 = vmatmul.mubr.bf16.gmra.mrb[0].mxu0 %v1178
  %v1291 = vpop.f32.mrb[0].mxu0
  %v1292 = vadd.f32 0.0, %v1291
  %v1293 = vpop.f32.mrb[0].mxu0
  %v1294 = vpop.f32.mrb[0].mxu0
  %v1295 = vadd.f32 0.0, %v1294
  %v1296 = vpop.f32.mrb[0].mxu0
  %1297 = vmatprep.mubr.bf16.mxu0 0
  %1298 = vmatmul.mubr.bf16.gmra.mrb[0].mxu0 %v1181
  %v1299 = vpop.f32.mrb[0].mxu0
  %v1300 = vadd.f32 0.0, %v1299
  %v1301 = vpop.f32.mrb[0].mxu0
  %v1302 = vpop.f32.mrb[0].mxu0
  %v1303 = vadd.f32 0.0, %v1302
  %v1304 = vpop.f32.mrb[0].mxu0
  %1305 = vmatprep.mubr.bf16.mxu0 0
  %1306 = vmatmul.mubr.bf16.gmra.mrb[0].mxu0 %v1184
  %v1307 = vpop.f32.mrb[0].mxu0
  %v1308 = vadd.f32 0.0, %v1307
  %v1309 = vpop.f32.mrb[0].mxu0
  %v1310 = vpop.f32.mrb[0].mxu0
  %v1311 = vadd.f32 0.0, %v1310
  %v1312 = vpop.f32.mrb[0].mxu0
  %1313 = vmatprep.mubr.bf16.mxu0 0
  %1314 = vmatmul.mubr.bf16.gmra.mrb[0].mxu0 %v1187
  %v1315 = vpop.f32.mrb[0].mxu0
  %v1316 = vadd.f32 0.0, %v1315
  %v1317 = vpop.f32.mrb[0].mxu0
  %v1318 = vpop.f32.mrb[0].mxu0
  %v1319 = vadd.f32 0.0, %v1318
  %v1320 = vpop.f32.mrb[0].mxu0
  %1321 = vmatprep.mubr.bf16.mxu0 0
  %1322 = vmatmul.mubr.bf16.gmra.mrb[0].mxu0 %v1190
  %v1323 = vpop.f32.mrb[0].mxu0
  %v1324 = vadd.f32 0.0, %v1323
  %v1325 = vpop.f32.mrb[0].mxu0
  %v1326 = vpop.f32.mrb[0].mxu0
  %v1327 = vadd.f32 0.0, %v1326
  %v1328 = vpop.f32.mrb[0].mxu0
  %1329 = vmatprep.mubr.bf16.mxu0 0
  %1330 = vmatmul.mubr.bf16.gmra.mrb[0].mxu0 %v1193
  %v1331 = vpop.f32.mrb[0].mxu0
  %v1332 = vadd.f32 0.0, %v1331
  %v1333 = vpop.f32.mrb[0].mxu0
  %v1334 = vpop.f32.mrb[0].mxu0
  %v1335 = vadd.f32 0.0, %v1334
  %v1336 = vpop.f32.mrb[0].mxu0
  %1337 = vmatprep.mubr.bf16.mxu0 0
  %1338 = vmatmul.mubr.bf16.gmra.mrb[0].mxu0 %v1196
  %v1339 = vpop.f32.mrb[0].mxu0
  %v1340 = vadd.f32 0.0, %v1339
  %v1341 = vpop.f32.mrb[0].mxu0
  %v1342 = vpop.f32.mrb[0].mxu0
  %v1343 = vadd.f32 0.0, %v1342
  %v1344 = vpop.f32.mrb[0].mxu0
  %1345 = vmatprep.mubr.bf16.mxu0 0
  %1346 = vmatmul.mubr.bf16.gmra.mrb[0].mxu0 %v1199
  %v1347 = vpop.f32.mrb[0].mxu0
  %v1348 = vadd.f32 0.0, %v1347
  %v1349 = vpop.f32.mrb[0].mxu0
  %v1350 = vpop.f32.mrb[0].mxu0
  %v1351 = vadd.f32 0.0, %v1350
  %v1352 = vpop.f32.mrb[0].mxu0
  %1353 = vmatprep.mubr.bf16.mxu0 0
  %1354 = vmatmul.mubr.bf16.gmra.mrb[0].mxu0 %v1202
  %v1355 = vpop.f32.mrb[0].mxu0
  %v1356 = vadd.f32 0.0, %v1355
  %v1357 = vpop.f32.mrb[0].mxu0
  %v1358 = vpop.f32.mrb[0].mxu0
  %v1359 = vadd.f32 0.0, %v1358
  %v1360 = vpop.f32.mrb[0].mxu0
  %1361 = vmatprep.mubr.bf16.mxu0 0
  %1362 = vmatmul.mubr.bf16.gmra.mrb[0].mxu0 %v1205
  %v1363 = vpop.f32.mrb[0].mxu0
  %v1364 = vadd.f32 0.0, %v1363
  %v1365 = vpop.f32.mrb[0].mxu0
  %v1366 = vpop.f32.mrb[0].mxu0
  %v1367 = vadd.f32 0.0, %v1366
  %v1368 = vpop.f32.mrb[0].mxu0
  %1369 = vmatprep.mubr.bf16.mxu0 0
  %1370 = vmatmul.mubr.bf16.gmra.mrb[0].mxu0 %v1208
  %v1371 = vpop.f32.mrb[0].mxu0
  %v1372 = vadd.f32 0.0, %v1371
  %v1373 = vpop.f32.mrb[0].mxu0
  %v1374 = vpop.f32.mrb[0].mxu0
  %v1375 = vadd.f32 0.0, %v1374
  %v1376 = vpop.f32.mrb[0].mxu0
  %1377 = vmatprep.mubr.bf16.mxu0 0
  %1378 = vmatmul.mubr.bf16.gmra.mrb[0].mxu0 %v1211
  %v1379 = vpop.f32.mrb[0].mxu0
  %v1380 = vadd.f32 0.0, %v1379
  %v1381 = vpop.f32.mrb[0].mxu0
  %v1382 = vpop.f32.mrb[0].mxu0
  %v1383 = vadd.f32 0.0, %v1382
  %v1384 = vpop.f32.mrb[0].mxu0
  %1385 = vmatprep.mubr.bf16.mxu0 0
  %1386 = vmatmul.mubr.bf16.gmra.mrb[0].mxu0 %v1214
  %v1387 = vpop.f32.mrb[0].mxu0
  %v1388 = vadd.f32 0.0, %v1387
  %v1389 = vpop.f32.mrb[0].mxu0
  %v1390 = vpop.f32.mrb[0].mxu0
  %v1391 = vadd.f32 0.0, %v1390
  %v1392 = vpop.f32.mrb[0].mxu0
  %1393 = vmatprep.mubr.bf16.mxu0 0
  %1394 = vmatmul.mubr.bf16.gmra.mrb[0].mxu0 %v1217
  %v1395 = vpop.f32.mrb[0].mxu0
  %v1396 = vadd.f32 0.0, %v1395
  %v1397 = vpop.f32.mrb[0].mxu0
  %v1398 = vpop.f32.mrb[0].mxu0
  %v1399 = vadd.f32 0.0, %v1398
  %v1400 = vpop.f32.mrb[0].mxu0
  %1401 = vmatprep.mubr.bf16.mxu0 0
  %1402 = vmatmul.mubr.bf16.gmra.mrb[0].mxu0 %v1220
  %v1403 = vpop.f32.mrb[0].mxu0
  %v1404 = vadd.f32 0.0, %v1403
  %v1405 = vpop.f32.mrb[0].mxu0
  %v1406 = vpop.f32.mrb[0].mxu0
  %v1407 = vadd.f32 0.0, %v1406
  %v1408 = vpop.f32.mrb[0].mxu0
  %1409 = vmatprep.mubr.bf16.mxu0 0
  %1410 = vmatmul.mubr.bf16.gmra.mrb[0].mxu0 %v1223
  %v1411 = vpop.f32.mrb[0].mxu0
  %v1412 = vadd.f32 0.0, %v1411
  %v1413 = vpop.f32.mrb[0].mxu0
  %v1414 = vpop.f32.mrb[0].mxu0
  %v1415 = vadd.f32 0.0, %v1414
  %v1416 = vpop.f32.mrb[0].mxu0
  %1417 = vmatprep.mubr.bf16.mxu0 0
  %1418 = vmatmul.mubr.bf16.gmra.mrb[0].mxu0 %v1226
  %v1419 = vpop.f32.mrb[0].mxu0
  %v1420 = vadd.f32 0.0, %v1419
  %v1421 = vpop.f32.mrb[0].mxu0
  %v1422 = vpop.f32.mrb[0].mxu0
  %v1423 = vadd.f32 0.0, %v1422
  %v1424 = vpop.f32.mrb[0].mxu0
  %1425 = vmatprep.mubr.bf16.mxu0 0
  %1426 = vmatmul.mubr.bf16.gmra.mrb[0].mxu0 %v1229
  %v1427 = vpop.f32.mrb[0].mxu0
  %v1428 = vadd.f32 0.0, %v1427
  %v1429 = vpop.f32.mrb[0].mxu0
  %v1430 = vpop.f32.mrb[0].mxu0
  %v1431 = vadd.f32 0.0, %v1430
  %v1432 = vpop.f32.mrb[0].mxu0
  %1433 = vmatprep.mubr.bf16.mxu0 0
  %1434 = vmatmul.mubr.bf16.gmra.mrb[0].mxu0 %v1232
  %v1435 = vpop.f32.mrb[0].mxu0
  %v1436 = vadd.f32 0.0, %v1435
  %v1437 = vpop.f32.mrb[0].mxu0
  %v1438 = vpop.f32.mrb[0].mxu0
  %v1439 = vadd.f32 0.0, %v1438
  %v1440 = vpop.f32.mrb[0].mxu0
  %1441 = vmatprep.mubr.bf16.mxu0 0
  %1442 = vmatmul.mubr.bf16.gmra.mrb[0].mxu0 %v1235
  %v1443 = vpop.f32.mrb[0].mxu0
  %v1444 = vadd.f32 0.0, %v1443
  %v1445 = vpop.f32.mrb[0].mxu0
  %v1446 = vpop.f32.mrb[0].mxu0
  %v1447 = vadd.f32 0.0, %v1446
  %v1448 = vpop.f32.mrb[0].mxu0
  %1449 = vmatprep.mubr.bf16.mxu0 0
  %1450 = vmatmul.mubr.bf16.gmra.mrb[0].mxu0 %v1238
  %v1451 = vpop.f32.mrb[0].mxu0
  %v1452 = vadd.f32 0.0, %v1451
  %v1453 = vpop.f32.mrb[0].mxu0
  %v1454 = vpop.f32.mrb[0].mxu0
  %v1455 = vadd.f32 0.0, %v1454
  %v1456 = vpop.f32.mrb[0].mxu0
  %1457 = vmatprep.mubr.bf16.mxu0 0
  %1458 = vmatmul.mubr.bf16.gmra.mrb[0].mxu0 %v1241
  %v1459 = vpop.f32.mrb[0].mxu0
  %v1460 = vadd.f32 0.0, %v1459
  %v1461 = vpop.f32.mrb[0].mxu0
  %v1462 = vpop.f32.mrb[0].mxu0
  %v1463 = vadd.f32 0.0, %v1462
  %v1464 = vpop.f32.mrb[0].mxu0
  %1465 = vmatprep.mubr.bf16.mxu0 0
  %1466 = vmatmul.mubr.bf16.gmra.mrb[0].mxu0 %v1244
  %v1467 = vpop.f32.mrb[0].mxu0
  %v1468 = vadd.f32 0.0, %v1467
  %v1469 = vpop.f32.mrb[0].mxu0
  %v1470 = vpop.f32.mrb[0].mxu0
  %v1471 = vadd.f32 0.0, %v1470
  %v1472 = vpop.f32.mrb[0].mxu0
  %1473 = vmatprep.mubr.bf16.mxu0 0
  %1474 = vmatmul.mubr.bf16.gmra.mrb[0].mxu0 %v1247
  %v1475 = vpop.f32.mrb[0].mxu0
  %v1476 = vadd.f32 0.0, %v1475
  %v1477 = vpop.f32.mrb[0].mxu0
  %v1478 = vpop.f32.mrb[0].mxu0
  %v1479 = vadd.f32 0.0, %v1478
  %v1480 = vpop.f32.mrb[0].mxu0
  %1481 = vdwg.mxu0
  %s1482 = scalar_lea.vmem %s0, 600
  %v1483 = vld [vmem:[%s1482] sm:$0xf]
  %v1484 = vld [vmem:[%s1482 + $0x4] sm:$0xf]
  %v1485 = vld [vmem:[%s1482 + $0x8] sm:$0xf]
  %v1486 = vld [vmem:[%s1482 + $0xc] sm:$0xf]
  %v1487 = vld [vmem:[%s1482 + $0x10] sm:$0xf]
  %v1488 = vld [vmem:[%s1482 + $0x14] sm:$0xf]
  %v1489 = vld [vmem:[%s1482 + $0x18] sm:$0xf]
  %v1490 = vld [vmem:[%s1482 + $0x1c] sm:$0xf]
  %v1491 = vld [vmem:[%s1482 + $0x20] sm:$0xf]
  %v1492 = vld [vmem:[%s1482 + $0x24] sm:$0xf]
  %v1493 = vld [vmem:[%s1482 + $0x28] sm:$0xf]
  %v1494 = vld [vmem:[%s1482 + $0x2c] sm:$0xf]
  %v1495 = vld [vmem:[%s1482 + $0x30] sm:$0xf]
  %v1496 = vld [vmem:[%s1482 + $0x34] sm:$0xf]
  %v1497 = vld [vmem:[%s1482 + $0x38] sm:$0xf]
  %v1498 = vld [vmem:[%s1482 + $0x3c] sm:$0xf]
  %v1499 = vld [vmem:[%s1482 + $0x40] sm:$0xf]
  %v1500 = vld [vmem:[%s1482 + $0x44] sm:$0xf]
  %v1501 = vld [vmem:[%s1482 + $0x48] sm:$0xf]
  %v1502 = vld [vmem:[%s1482 + $0x4c] sm:$0xf]
  %v1503 = vld [vmem:[%s1482 + $0x50] sm:$0xf]
  %v1504 = vld [vmem:[%s1482 + $0x54] sm:$0xf]
  %v1505 = vld [vmem:[%s1482 + $0x58] sm:$0xf]
  %v1506 = vld [vmem:[%s1482 + $0x5c] sm:$0xf]
  %v1507 = vld [vmem:[%s1482 + $0x60] sm:$0xf]
  %v1508 = vld [vmem:[%s1482 + $0x64] sm:$0xf]
  %v1509 = vld [vmem:[%s1482 + $0x68] sm:$0xf]
  %v1510 = vld [vmem:[%s1482 + $0x6c] sm:$0xf]
  %v1511 = vld [vmem:[%s1482 + $0x70] sm:$0xf]
  %v1512 = vld [vmem:[%s1482 + $0x74] sm:$0xf]
  %v1513 = vld [vmem:[%s1482 + $0x78] sm:$0xf]
  %v1514 = vld [vmem:[%s1482 + $0x7c] sm:$0xf]
  %v1515 = vld [vmem:[%s1482 + $0x80] sm:$0xf]
  %v1516 = vld [vmem:[%s1482 + $0x84] sm:$0xf]
  %v1517 = vld [vmem:[%s1482 + $0x88] sm:$0xf]
  %v1518 = vld [vmem:[%s1482 + $0x8c] sm:$0xf]
  %v1519 = vld [vmem:[%s1482 + $0x90] sm:$0xf]
  %v1520 = vld [vmem:[%s1482 + $0x94] sm:$0xf]
  %v1521 = vld [vmem:[%s1482 + $0x98] sm:$0xf]
  %v1522 = vld [vmem:[%s1482 + $0x9c] sm:$0xf]
  %v1523 = vld [vmem:[%s1482 + $0xa0] sm:$0xf]
  %v1524 = vld [vmem:[%s1482 + $0xa4] sm:$0xf]
  %v1525 = vld [vmem:[%s1482 + $0xa8] sm:$0xf]
  %v1526 = vld [vmem:[%s1482 + $0xac] sm:$0xf]
  %v1527 = vld [vmem:[%s1482 + $0xb0] sm:$0xf]
  %v1528 = vld [vmem:[%s1482 + $0xb4] sm:$0xf]
  %v1529 = vld [vmem:[%s1482 + $0xb8] sm:$0xf]
  %v1530 = vld [vmem:[%s1482 + $0xbc] sm:$0xf]
  %v1531 = vld [vmem:[%s1482 + $0xc0] sm:$0xf]
  %v1532 = vld [vmem:[%s1482 + $0xc4] sm:$0xf]
  %v1583 = vunpack.c.l.b16 %v1483
  %v1584 = vunpack.c.l.b16 %v1484
  %v1585 = vunpack.c.l.b16 %v1485
  %v1586 = vunpack.c.l.b16 %v1486
  %v1587 = vunpack.c.l.b16 %v1487
  %v1588 = vunpack.c.l.b16 %v1488
  %v1589 = vunpack.c.l.b16 %v1489
  %v1590 = vunpack.c.l.b16 %v1490
  %v1591 = vunpack.c.l.b16 %v1491
  %v1592 = vunpack.c.l.b16 %v1492
  %v1593 = vunpack.c.l.b16 %v1493
  %v1594 = vunpack.c.l.b16 %v1494
  %v1595 = vunpack.c.l.b16 %v1495
  %v1596 = vunpack.c.l.b16 %v1496
  %v1597 = vunpack.c.l.b16 %v1497
  %v1598 = vunpack.c.l.b16 %v1498
  %v1599 = vunpack.c.l.b16 %v1499
  %v1600 = vunpack.c.l.b16 %v1500
  %v1601 = vunpack.c.l.b16 %v1501
  %v1602 = vunpack.c.l.b16 %v1502
  %v1603 = vunpack.c.l.b16 %v1503
  %v1604 = vunpack.c.l.b16 %v1504
  %v1605 = vunpack.c.l.b16 %v1505
  %v1606 = vunpack.c.l.b16 %v1506
  %v1607 = vunpack.c.l.b16 %v1507
  %v1608 = vunpack.c.l.b16 %v1508
  %v1609 = vunpack.c.l.b16 %v1509
  %v1610 = vunpack.c.l.b16 %v1510
  %v1611 = vunpack.c.l.b16 %v1511
  %v1612 = vunpack.c.l.b16 %v1512
  %v1613 = vunpack.c.l.b16 %v1513
  %v1614 = vunpack.c.l.b16 %v1514
  %v1615 = vunpack.c.l.b16 %v1515
  %v1616 = vunpack.c.l.b16 %v1516
  %v1617 = vunpack.c.l.b16 %v1517
  %v1618 = vunpack.c.l.b16 %v1518
  %v1619 = vunpack.c.l.b16 %v1519
  %v1620 = vunpack.c.l.b16 %v1520
  %v1621 = vunpack.c.l.b16 %v1521
  %v1622 = vunpack.c.l.b16 %v1522
  %v1623 = vunpack.c.l.b16 %v1523
  %v1624 = vunpack.c.l.b16 %v1524
  %v1625 = vunpack.c.l.b16 %v1525
  %v1626 = vunpack.c.l.b16 %v1526
  %v1627 = vunpack.c.l.b16 %v1527
  %v1628 = vunpack.c.l.b16 %v1528
  %v1629 = vunpack.c.l.b16 %v1529
  %v1630 = vunpack.c.l.b16 %v1530
  %v1631 = vunpack.c.l.b16 %v1531
  %v1632 = vunpack.c.l.b16 %v1532
  %v1633 = vpack.c.b16 %v1584, %v1583
  %v1634 = vpack.c.b16 %v1586, %v1585
  %v1635 = vpack.c.b16 %v1588, %v1587
  %v1636 = vpack.c.b16 %v1590, %v1589
  %v1637 = vpack.c.b16 %v1592, %v1591
  %v1638 = vpack.c.b16 %v1594, %v1593
  %v1639 = vpack.c.b16 %v1596, %v1595
  %v1640 = vpack.c.b16 %v1598, %v1597
  %v1641 = vpack.c.b16 %v1600, %v1599
  %v1642 = vpack.c.b16 %v1602, %v1601
  %v1643 = vpack.c.b16 %v1604, %v1603
  %v1644 = vpack.c.b16 %v1606, %v1605
  %v1645 = vpack.c.b16 %v1608, %v1607
  %v1646 = vpack.c.b16 %v1610, %v1609
  %v1647 = vpack.c.b16 %v1612, %v1611
  %v1648 = vpack.c.b16 %v1614, %v1613
  %v1649 = vpack.c.b16 %v1616, %v1615
  %v1650 = vpack.c.b16 %v1618, %v1617
  %v1651 = vpack.c.b16 %v1620, %v1619
  %v1652 = vpack.c.b16 %v1622, %v1621
  %v1653 = vpack.c.b16 %v1624, %v1623
  %v1654 = vpack.c.b16 %v1626, %v1625
  %v1655 = vpack.c.b16 %v1628, %v1627
  %v1656 = vpack.c.b16 %v1630, %v1629
  %v1657 = vpack.c.b16 %v1632, %v1631
  %v1659 = vsel %vm198, %v1633, 0
  %v1662 = vsel %vm198, %v1634, 0
  %v1665 = vsel %vm198, %v1635, 0
  %v1668 = vsel %vm198, %v1636, 0
  %v1671 = vsel %vm198, %v1637, 0
  %v1674 = vsel %vm198, %v1638, 0
  %v1677 = vsel %vm198, %v1639, 0
  %v1680 = vsel %vm198, %v1640, 0
  %v1683 = vsel %vm198, %v1641, 0
  %v1686 = vsel %vm198, %v1642, 0
  %v1689 = vsel %vm198, %v1643, 0
  %v1692 = vsel %vm198, %v1644, 0
  %v1695 = vsel %vm198, %v1645, 0
  %v1698 = vsel %vm198, %v1646, 0
  %v1701 = vsel %vm198, %v1647, 0
  %v1704 = vsel %vm198, %v1648, 0
  %v1707 = vsel %vm198, %v1649, 0
  %v1710 = vsel %vm198, %v1650, 0
  %v1713 = vsel %vm198, %v1651, 0
  %v1716 = vsel %vm198, %v1652, 0
  %v1719 = vsel %vm198, %v1653, 0
  %v1722 = vsel %vm198, %v1654, 0
  %v1725 = vsel %vm198, %v1655, 0
  %v1728 = vsel %vm198, %v1656, 0
  %v1731 = vsel %vm198, %v1657, 0
  %1733 = vmatprep.subr.bf16.mxu0 0
  %1734 = vmatpush1.bf16.msra.mxu0 %v279
  %1735 = vmatprep.subr.bf16.mxu0 0
  %1736 = vmatpush1.bf16.msra.mxu0 0
  %1737 = vmatprep.subr.bf16.mxu0 0
  %1738 = vmatpush1.bf16.msra.mxu0 0
  %1739 = vmatprep.subr.bf16.mxu0 0
  %1740 = vmatpush1.bf16.msra.mxu0 0
  %1741 = vmatprep.subr.bf16.mxu0 0
  %1742 = vmatpush1.bf16.msra.mxu0 0
  %1743 = vmatprep.subr.bf16.mxu0 0
  %1744 = vmatpush1.bf16.msra.mxu0 0
  %1745 = vmatprep.subr.bf16.mxu0 0
  %1746 = vmatpush1.bf16.msra.mxu0 0
  %1747 = vmatprep.subr.bf16.mxu0 0
  %1748 = vmatpush1.bf16.msra.mxu0 0
  %1749 = vmatprep.subr.bf16.mxu0 0
  %1750 = vmatpush1.bf16.msra.mxu0 0
  %1751 = vmatprep.subr.bf16.mxu0 0
  %1752 = vmatpush1.bf16.msra.mxu0 0
  %1753 = vmatprep.subr.bf16.mxu0 0
  %1754 = vmatpush1.bf16.msra.mxu0 0
  %1755 = vmatprep.subr.bf16.mxu0 0
  %1756 = vmatpush1.bf16.msra.mxu0 0
  %1757 = vmatprep.subr.bf16.mxu0 0
  %1758 = vmatpush1.bf16.msra.mxu0 0
  %1759 = vmatprep.subr.bf16.mxu0 0
  %1760 = vmatpush1.bf16.msra.mxu0 0
  %1761 = vmatprep.subr.bf16.mxu0 0
  %1762 = vmatpush1.bf16.msra.mxu0 0
  %1763 = vmatprep.subr.bf16.mxu0 0
  %1764 = vmatpush1.bf16.msra.mxu0 0
  %1765 = vmatprep.mubr.bf16.mxu0 0
  %1766 = vmatmul.mubr.bf16.gmra.mrb[0].mxu0 %v1659
  %v1767 = vpop.f32.mrb[0].mxu0
  %v1768 = vadd.f32 0.0, %v1767
  %v1769 = vpop.f32.mrb[0].mxu0
  %v1770 = vpop.f32.mrb[0].mxu0
  %v1771 = vadd.f32 0.0, %v1770
  %v1772 = vpop.f32.mrb[0].mxu0
  %1773 = vmatprep.mubr.bf16.mxu0 0
  %1774 = vmatmul.mubr.bf16.gmra.mrb[0].mxu0 %v1662
  %v1775 = vpop.f32.mrb[0].mxu0
  %v1776 = vadd.f32 0.0, %v1775
  %v1777 = vpop.f32.mrb[0].mxu0
  %v1778 = vpop.f32.mrb[0].mxu0
  %v1779 = vadd.f32 0.0, %v1778
  %v1780 = vpop.f32.mrb[0].mxu0
  %1781 = vmatprep.mubr.bf16.mxu0 0
  %1782 = vmatmul.mubr.bf16.gmra.mrb[0].mxu0 %v1665
  %v1783 = vpop.f32.mrb[0].mxu0
  %v1784 = vadd.f32 0.0, %v1783
  %v1785 = vpop.f32.mrb[0].mxu0
  %v1786 = vpop.f32.mrb[0].mxu0
  %v1787 = vadd.f32 0.0, %v1786
  %v1788 = vpop.f32.mrb[0].mxu0
  %1789 = vmatprep.mubr.bf16.mxu0 0
  %1790 = vmatmul.mubr.bf16.gmra.mrb[0].mxu0 %v1668
  %v1791 = vpop.f32.mrb[0].mxu0
  %v1792 = vadd.f32 0.0, %v1791
  %v1793 = vpop.f32.mrb[0].mxu0
  %v1794 = vpop.f32.mrb[0].mxu0
  %v1795 = vadd.f32 0.0, %v1794
  %v1796 = vpop.f32.mrb[0].mxu0
  %1797 = vmatprep.mubr.bf16.mxu0 0
  %1798 = vmatmul.mubr.bf16.gmra.mrb[0].mxu0 %v1671
  %v1799 = vpop.f32.mrb[0].mxu0
  %v1800 = vadd.f32 0.0, %v1799
  %v1801 = vpop.f32.mrb[0].mxu0
  %v1802 = vpop.f32.mrb[0].mxu0
  %v1803 = vadd.f32 0.0, %v1802
  %v1804 = vpop.f32.mrb[0].mxu0
  %1805 = vmatprep.mubr.bf16.mxu0 0
  %1806 = vmatmul.mubr.bf16.gmra.mrb[0].mxu0 %v1674
  %v1807 = vpop.f32.mrb[0].mxu0
  %v1808 = vadd.f32 0.0, %v1807
  %v1809 = vpop.f32.mrb[0].mxu0
  %v1810 = vpop.f32.mrb[0].mxu0
  %v1811 = vadd.f32 0.0, %v1810
  %v1812 = vpop.f32.mrb[0].mxu0
  %1813 = vmatprep.mubr.bf16.mxu0 0
  %1814 = vmatmul.mubr.bf16.gmra.mrb[0].mxu0 %v1677
  %v1815 = vpop.f32.mrb[0].mxu0
  %v1816 = vadd.f32 0.0, %v1815
  %v1817 = vpop.f32.mrb[0].mxu0
  %v1818 = vpop.f32.mrb[0].mxu0
  %v1819 = vadd.f32 0.0, %v1818
  %v1820 = vpop.f32.mrb[0].mxu0
  %1821 = vmatprep.mubr.bf16.mxu0 0
  %1822 = vmatmul.mubr.bf16.gmra.mrb[0].mxu0 %v1680
  %v1823 = vpop.f32.mrb[0].mxu0
  %v1824 = vadd.f32 0.0, %v1823
  %v1825 = vpop.f32.mrb[0].mxu0
  %v1826 = vpop.f32.mrb[0].mxu0
  %v1827 = vadd.f32 0.0, %v1826
  %v1828 = vpop.f32.mrb[0].mxu0
  %1829 = vmatprep.mubr.bf16.mxu0 0
  %1830 = vmatmul.mubr.bf16.gmra.mrb[0].mxu0 %v1683
  %v1831 = vpop.f32.mrb[0].mxu0
  %v1832 = vadd.f32 0.0, %v1831
  %v1833 = vpop.f32.mrb[0].mxu0
  %v1834 = vpop.f32.mrb[0].mxu0
  %v1835 = vadd.f32 0.0, %v1834
  %v1836 = vpop.f32.mrb[0].mxu0
  %1837 = vmatprep.mubr.bf16.mxu0 0
  %1838 = vmatmul.mubr.bf16.gmra.mrb[0].mxu0 %v1686
  %v1839 = vpop.f32.mrb[0].mxu0
  %v1840 = vadd.f32 0.0, %v1839
  %v1841 = vpop.f32.mrb[0].mxu0
  %v1842 = vpop.f32.mrb[0].mxu0
  %v1843 = vadd.f32 0.0, %v1842
  %v1844 = vpop.f32.mrb[0].mxu0
  %1845 = vmatprep.mubr.bf16.mxu0 0
  %1846 = vmatmul.mubr.bf16.gmra.mrb[0].mxu0 %v1689
  %v1847 = vpop.f32.mrb[0].mxu0
  %v1848 = vadd.f32 0.0, %v1847
  %v1849 = vpop.f32.mrb[0].mxu0
  %v1850 = vpop.f32.mrb[0].mxu0
  %v1851 = vadd.f32 0.0, %v1850
  %v1852 = vpop.f32.mrb[0].mxu0
  %1853 = vmatprep.mubr.bf16.mxu0 0
  %1854 = vmatmul.mubr.bf16.gmra.mrb[0].mxu0 %v1692
  %v1855 = vpop.f32.mrb[0].mxu0
  %v1856 = vadd.f32 0.0, %v1855
  %v1857 = vpop.f32.mrb[0].mxu0
  %v1858 = vpop.f32.mrb[0].mxu0
  %v1859 = vadd.f32 0.0, %v1858
  %v1860 = vpop.f32.mrb[0].mxu0
  %1861 = vmatprep.mubr.bf16.mxu0 0
  %1862 = vmatmul.mubr.bf16.gmra.mrb[0].mxu0 %v1695
  %v1863 = vpop.f32.mrb[0].mxu0
  %v1864 = vadd.f32 0.0, %v1863
  %v1865 = vpop.f32.mrb[0].mxu0
  %v1866 = vpop.f32.mrb[0].mxu0
  %v1867 = vadd.f32 0.0, %v1866
  %v1868 = vpop.f32.mrb[0].mxu0
  %1869 = vmatprep.mubr.bf16.mxu0 0
  %1870 = vmatmul.mubr.bf16.gmra.mrb[0].mxu0 %v1698
  %v1871 = vpop.f32.mrb[0].mxu0
  %v1872 = vadd.f32 0.0, %v1871
  %v1873 = vpop.f32.mrb[0].mxu0
  %v1874 = vpop.f32.mrb[0].mxu0
  %v1875 = vadd.f32 0.0, %v1874
  %v1876 = vpop.f32.mrb[0].mxu0
  %1877 = vmatprep.mubr.bf16.mxu0 0
  %1878 = vmatmul.mubr.bf16.gmra.mrb[0].mxu0 %v1701
  %v1879 = vpop.f32.mrb[0].mxu0
  %v1880 = vadd.f32 0.0, %v1879
  %v1881 = vpop.f32.mrb[0].mxu0
  %v1882 = vpop.f32.mrb[0].mxu0
  %v1883 = vadd.f32 0.0, %v1882
  %v1884 = vpop.f32.mrb[0].mxu0
  %1885 = vmatprep.mubr.bf16.mxu0 0
  %1886 = vmatmul.mubr.bf16.gmra.mrb[0].mxu0 %v1704
  %v1887 = vpop.f32.mrb[0].mxu0
  %v1888 = vadd.f32 0.0, %v1887
  %v1889 = vpop.f32.mrb[0].mxu0
  %v1890 = vpop.f32.mrb[0].mxu0
  %v1891 = vadd.f32 0.0, %v1890
  %v1892 = vpop.f32.mrb[0].mxu0
  %1893 = vmatprep.mubr.bf16.mxu0 0
  %1894 = vmatmul.mubr.bf16.gmra.mrb[0].mxu0 %v1707
  %v1895 = vpop.f32.mrb[0].mxu0
  %v1896 = vadd.f32 0.0, %v1895
  %v1897 = vpop.f32.mrb[0].mxu0
  %v1898 = vpop.f32.mrb[0].mxu0
  %v1899 = vadd.f32 0.0, %v1898
  %v1900 = vpop.f32.mrb[0].mxu0
  %1901 = vmatprep.mubr.bf16.mxu0 0
  %1902 = vmatmul.mubr.bf16.gmra.mrb[0].mxu0 %v1710
  %v1903 = vpop.f32.mrb[0].mxu0
  %v1904 = vadd.f32 0.0, %v1903
  %v1905 = vpop.f32.mrb[0].mxu0
  %v1906 = vpop.f32.mrb[0].mxu0
  %v1907 = vadd.f32 0.0, %v1906
  %v1908 = vpop.f32.mrb[0].mxu0
  %1909 = vmatprep.mubr.bf16.mxu0 0
  %1910 = vmatmul.mubr.bf16.gmra.mrb[0].mxu0 %v1713
  %v1911 = vpop.f32.mrb[0].mxu0
  %v1912 = vadd.f32 0.0, %v1911
  %v1913 = vpop.f32.mrb[0].mxu0
  %v1914 = vpop.f32.mrb[0].mxu0
  %v1915 = vadd.f32 0.0, %v1914
  %v1916 = vpop.f32.mrb[0].mxu0
  %1917 = vmatprep.mubr.bf16.mxu0 0
  %1918 = vmatmul.mubr.bf16.gmra.mrb[0].mxu0 %v1716
  %v1919 = vpop.f32.mrb[0].mxu0
  %v1920 = vadd.f32 0.0, %v1919
  %v1921 = vpop.f32.mrb[0].mxu0
  %v1922 = vpop.f32.mrb[0].mxu0
  %v1923 = vadd.f32 0.0, %v1922
  %v1924 = vpop.f32.mrb[0].mxu0
  %1925 = vmatprep.mubr.bf16.mxu0 0
  %1926 = vmatmul.mubr.bf16.gmra.mrb[0].mxu0 %v1719
  %v1927 = vpop.f32.mrb[0].mxu0
  %v1928 = vadd.f32 0.0, %v1927
  %v1929 = vpop.f32.mrb[0].mxu0
  %v1930 = vpop.f32.mrb[0].mxu0
  %v1931 = vadd.f32 0.0, %v1930
  %v1932 = vpop.f32.mrb[0].mxu0
  %1933 = vmatprep.mubr.bf16.mxu0 0
  %1934 = vmatmul.mubr.bf16.gmra.mrb[0].mxu0 %v1722
  %v1935 = vpop.f32.mrb[0].mxu0
  %v1936 = vadd.f32 0.0, %v1935
  %v1937 = vpop.f32.mrb[0].mxu0
  %v1938 = vpop.f32.mrb[0].mxu0
  %v1939 = vadd.f32 0.0, %v1938
  %v1940 = vpop.f32.mrb[0].mxu0
  %1941 = vmatprep.mubr.bf16.mxu0 0
  %1942 = vmatmul.mubr.bf16.gmra.mrb[0].mxu0 %v1725
  %v1943 = vpop.f32.mrb[0].mxu0
  %v1944 = vadd.f32 0.0, %v1943
  %v1945 = vpop.f32.mrb[0].mxu0
  %v1946 = vpop.f32.mrb[0].mxu0
  %v1947 = vadd.f32 0.0, %v1946
  %v1948 = vpop.f32.mrb[0].mxu0
  %1949 = vmatprep.mubr.bf16.mxu0 0
  %1950 = vmatmul.mubr.bf16.gmra.mrb[0].mxu0 %v1728
  %v1951 = vpop.f32.mrb[0].mxu0
  %v1952 = vadd.f32 0.0, %v1951
  %v1953 = vpop.f32.mrb[0].mxu0
  %v1954 = vpop.f32.mrb[0].mxu0
  %v1955 = vadd.f32 0.0, %v1954
  %v1956 = vpop.f32.mrb[0].mxu0
  %1957 = vmatprep.mubr.bf16.mxu0 0
  %1958 = vmatmul.mubr.bf16.gmra.mrb[0].mxu0 %v1731
  %v1959 = vpop.f32.mrb[0].mxu0
  %v1960 = vadd.f32 0.0, %v1959
  %v1961 = vpop.f32.mrb[0].mxu0
  %v1962 = vpop.f32.mrb[0].mxu0
  %v1963 = vadd.f32 0.0, %v1962
  %v1964 = vpop.f32.mrb[0].mxu0
  %1965 = vdwg.mxu0
  %v1966 = vmax.f32 %v316, %v800
  %v1967 = vmax.f32 %v319, %v803
  %v1968 = vmax.f32 %v324, %v808
  %v1969 = vmax.f32 %v327, %v811
  %v1970 = vmax.f32 %v332, %v816
  %v1971 = vmax.f32 %v335, %v819
  %v1972 = vmax.f32 %v340, %v824
  %v1973 = vmax.f32 %v343, %v827
  %v1974 = vmax.f32 %v348, %v832
  %v1975 = vmax.f32 %v351, %v835
  %v1976 = vmax.f32 %v356, %v840
  %v1977 = vmax.f32 %v359, %v843
  %v1978 = vmax.f32 %v364, %v848
  %v1979 = vmax.f32 %v367, %v851
  %v1980 = vmax.f32 %v372, %v856
  %v1981 = vmax.f32 %v375, %v859
  %v1982 = vmax.f32 %v380, %v864
  %v1983 = vmax.f32 %v383, %v867
  %v1984 = vmax.f32 %v388, %v872
  %v1985 = vmax.f32 %v391, %v875
  %v1986 = vmax.f32 %v396, %v880
  %v1987 = vmax.f32 %v399, %v883
  %v1988 = vmax.f32 %v404, %v888
  %v1989 = vmax.f32 %v407, %v891
  %v1990 = vmax.f32 %v412, %v896
  %v1991 = vmax.f32 %v415, %v899
  %v1992 = vmax.f32 %v420, %v904
  %v1993 = vmax.f32 %v423, %v907
  %v1994 = vmax.f32 %v428, %v912
  %v1995 = vmax.f32 %v431, %v915
  %v1996 = vmax.f32 %v436, %v920
  %v1997 = vmax.f32 %v439, %v923
  %v1998 = vmax.f32 %v444, %v928
  %v1999 = vmax.f32 %v447, %v931
  %v2000 = vmax.f32 %v452, %v936
  %v2001 = vmax.f32 %v455, %v939
  %v2002 = vmax.f32 %v460, %v944
  %v2003 = vmax.f32 %v463, %v947
  %v2004 = vmax.f32 %v468, %v952
  %v2005 = vmax.f32 %v471, %v955
  %v2006 = vmax.f32 %v476, %v960
  %v2007 = vmax.f32 %v479, %v963
  %v2008 = vmax.f32 %v484, %v968
  %v2009 = vmax.f32 %v487, %v971
  %v2010 = vmax.f32 %v492, %v976
  %v2011 = vmax.f32 %v495, %v979
  %v2012 = vmax.f32 %v500, %v984
  %v2013 = vmax.f32 %v503, %v987
  %v2014 = vmax.f32 %v508, %v992
  %v2015 = vmax.f32 %v511, %v995
  %v2016 = vmax.f32 %v1284, %v1768
  %v2017 = vmax.f32 %v1287, %v1771
  %v2018 = vmax.f32 %v1292, %v1776
  %v2019 = vmax.f32 %v1295, %v1779
  %v2020 = vmax.f32 %v1300, %v1784
  %v2021 = vmax.f32 %v1303, %v1787
  %v2022 = vmax.f32 %v1308, %v1792
  %v2023 = vmax.f32 %v1311, %v1795
  %v2024 = vmax.f32 %v1316, %v1800
  %v2025 = vmax.f32 %v1319, %v1803
  %v2026 = vmax.f32 %v1324, %v1808
  %v2027 = vmax.f32 %v1327, %v1811
  %v2028 = vmax.f32 %v1332, %v1816
  %v2029 = vmax.f32 %v1335, %v1819
  %v2030 = vmax.f32 %v1340, %v1824
  %v2031 = vmax.f32 %v1343, %v1827
  %v2032 = vmax.f32 %v1348, %v1832
  %v2033 = vmax.f32 %v1351, %v1835
  %v2034 = vmax.f32 %v1356, %v1840
  %v2035 = vmax.f32 %v1359, %v1843
  %v2036 = vmax.f32 %v1364, %v1848
  %v2037 = vmax.f32 %v1367, %v1851
  %v2038 = vmax.f32 %v1372, %v1856
  %v2039 = vmax.f32 %v1375, %v1859
  %v2040 = vmax.f32 %v1380, %v1864
  %v2041 = vmax.f32 %v1383, %v1867
  %v2042 = vmax.f32 %v1388, %v1872
  %v2043 = vmax.f32 %v1391, %v1875
  %v2044 = vmax.f32 %v1396, %v1880
  %v2045 = vmax.f32 %v1399, %v1883
  %v2046 = vmax.f32 %v1404, %v1888
  %v2047 = vmax.f32 %v1407, %v1891
  %v2048 = vmax.f32 %v1412, %v1896
  %v2049 = vmax.f32 %v1415, %v1899
  %v2050 = vmax.f32 %v1420, %v1904
  %v2051 = vmax.f32 %v1423, %v1907
  %v2052 = vmax.f32 %v1428, %v1912
  %v2053 = vmax.f32 %v1431, %v1915
  %v2054 = vmax.f32 %v1436, %v1920
  %v2055 = vmax.f32 %v1439, %v1923
  %v2056 = vmax.f32 %v1444, %v1928
  %v2057 = vmax.f32 %v1447, %v1931
  %v2058 = vmax.f32 %v1452, %v1936
  %v2059 = vmax.f32 %v1455, %v1939
  %v2060 = vmax.f32 %v1460, %v1944
  %v2061 = vmax.f32 %v1463, %v1947
  %v2062 = vmax.f32 %v1468, %v1952
  %v2063 = vmax.f32 %v1471, %v1955
  %v2064 = vmax.f32 %v1476, %v1960
  %v2065 = vmax.f32 %v1479, %v1963
  %v2066 = vmax.f32 %v1966, %v2016
  %v2067 = vmax.f32 %v1967, %v2017
  %v2068 = vmax.f32 %v1968, %v2018
  %v2069 = vmax.f32 %v1969, %v2019
  %v2070 = vmax.f32 %v1970, %v2020
  %v2071 = vmax.f32 %v1971, %v2021
  %v2072 = vmax.f32 %v1972, %v2022
  %v2073 = vmax.f32 %v1973, %v2023
  %v2074 = vmax.f32 %v1974, %v2024
  %v2075 = vmax.f32 %v1975, %v2025
  %v2076 = vmax.f32 %v1976, %v2026
  %v2077 = vmax.f32 %v1977, %v2027
  %v2078 = vmax.f32 %v1978, %v2028
  %v2079 = vmax.f32 %v1979, %v2029
  %v2080 = vmax.f32 %v1980, %v2030
  %v2081 = vmax.f32 %v1981, %v2031
  %v2082 = vmax.f32 %v1982, %v2032
  %v2083 = vmax.f32 %v1983, %v2033
  %v2084 = vmax.f32 %v1984, %v2034
  %v2085 = vmax.f32 %v1985, %v2035
  %v2086 = vmax.f32 %v1986, %v2036
  %v2087 = vmax.f32 %v1987, %v2037
  %v2088 = vmax.f32 %v1988, %v2038
  %v2089 = vmax.f32 %v1989, %v2039
  %v2090 = vmax.f32 %v1990, %v2040
  %v2091 = vmax.f32 %v1991, %v2041
  %v2092 = vmax.f32 %v1992, %v2042
  %v2093 = vmax.f32 %v1993, %v2043
  %v2094 = vmax.f32 %v1994, %v2044
  %v2095 = vmax.f32 %v1995, %v2045
  %v2096 = vmax.f32 %v1996, %v2046
  %v2097 = vmax.f32 %v1997, %v2047
  %v2098 = vmax.f32 %v1998, %v2048
  %v2099 = vmax.f32 %v1999, %v2049
  %v2100 = vmax.f32 %v2000, %v2050
  %v2101 = vmax.f32 %v2001, %v2051
  %v2102 = vmax.f32 %v2002, %v2052
  %v2103 = vmax.f32 %v2003, %v2053
  %v2104 = vmax.f32 %v2004, %v2054
  %v2105 = vmax.f32 %v2005, %v2055
  %v2106 = vmax.f32 %v2006, %v2056
  %v2107 = vmax.f32 %v2007, %v2057
  %v2108 = vmax.f32 %v2008, %v2058
  %v2109 = vmax.f32 %v2009, %v2059
  %v2110 = vmax.f32 %v2010, %v2060
  %v2111 = vmax.f32 %v2011, %v2061
  %v2112 = vmax.f32 %v2012, %v2062
  %v2113 = vmax.f32 %v2013, %v2063
  %v2114 = vmax.f32 %v2014, %v2064
  %v2115 = vmax.f32 %v2015, %v2065
  %v2116 = vmax.f32 %v2066, 0.0
  %v2117 = vmax.f32 %v2067, 0.0
  %v2118 = vmax.f32 %v2068, 0.0
  %v2119 = vmax.f32 %v2069, 0.0
  %v2120 = vmax.f32 %v2070, 0.0
  %v2121 = vmax.f32 %v2071, 0.0
  %v2122 = vmax.f32 %v2072, 0.0
  %v2123 = vmax.f32 %v2073, 0.0
  %v2124 = vmax.f32 %v2074, 0.0
  %v2125 = vmax.f32 %v2075, 0.0
  %v2126 = vmax.f32 %v2076, 0.0
  %v2127 = vmax.f32 %v2077, 0.0
  %v2128 = vmax.f32 %v2078, 0.0
  %v2129 = vmax.f32 %v2079, 0.0
  %v2130 = vmax.f32 %v2080, 0.0
  %v2131 = vmax.f32 %v2081, 0.0
  %v2132 = vmax.f32 %v2082, 0.0
  %v2133 = vmax.f32 %v2083, 0.0
  %v2134 = vmax.f32 %v2084, 0.0
  %v2135 = vmax.f32 %v2085, 0.0
  %v2136 = vmax.f32 %v2086, 0.0
  %v2137 = vmax.f32 %v2087, 0.0
  %v2138 = vmax.f32 %v2088, 0.0
  %v2139 = vmax.f32 %v2089, 0.0
  %v2140 = vmax.f32 %v2090, 0.0
  %v2141 = vmax.f32 %v2091, 0.0
  %v2142 = vmax.f32 %v2092, 0.0
  %v2143 = vmax.f32 %v2093, 0.0
  %v2144 = vmax.f32 %v2094, 0.0
  %v2145 = vmax.f32 %v2095, 0.0
  %v2146 = vmax.f32 %v2096, 0.0
  %v2147 = vmax.f32 %v2097, 0.0
  %v2148 = vmax.f32 %v2098, 0.0
  %v2149 = vmax.f32 %v2099, 0.0
  %v2150 = vmax.f32 %v2100, 0.0
  %v2151 = vmax.f32 %v2101, 0.0
  %v2152 = vmax.f32 %v2102, 0.0
  %v2153 = vmax.f32 %v2103, 0.0
  %v2154 = vmax.f32 %v2104, 0.0
  %v2155 = vmax.f32 %v2105, 0.0
  %v2156 = vmax.f32 %v2106, 0.0
  %v2157 = vmax.f32 %v2107, 0.0
  %v2158 = vmax.f32 %v2108, 0.0
  %v2159 = vmax.f32 %v2109, 0.0
  %v2160 = vmax.f32 %v2110, 0.0
  %v2161 = vmax.f32 %v2111, 0.0
  %v2162 = vmax.f32 %v2112, 0.0
  %v2163 = vmax.f32 %v2113, 0.0
  %v2164 = vmax.f32 %v2114, 0.0
  %v2165 = vmax.f32 %v2115, 0.0
  %s2166 = sld [smem:[#allocation2]]
  %v2167 = vstv %s2166
  %v2168 = vmul.f32 %v2116, %v2167
  %v2169 = vmul.f32 %v2117, %v2167
  %v2170 = vmul.f32 %v2118, %v2167
  %v2171 = vmul.f32 %v2119, %v2167
  %v2172 = vmul.f32 %v2120, %v2167
  %v2173 = vmul.f32 %v2121, %v2167
  %v2174 = vmul.f32 %v2122, %v2167
  %v2175 = vmul.f32 %v2123, %v2167
  %v2176 = vmul.f32 %v2124, %v2167
  %v2177 = vmul.f32 %v2125, %v2167
  %v2178 = vmul.f32 %v2126, %v2167
  %v2179 = vmul.f32 %v2127, %v2167
  %v2180 = vmul.f32 %v2128, %v2167
  %v2181 = vmul.f32 %v2129, %v2167
  %v2182 = vmul.f32 %v2130, %v2167
  %v2183 = vmul.f32 %v2131, %v2167
  %v2184 = vmul.f32 %v2132, %v2167
  %v2185 = vmul.f32 %v2133, %v2167
  %v2186 = vmul.f32 %v2134, %v2167
  %v2187 = vmul.f32 %v2135, %v2167
  %v2188 = vmul.f32 %v2136, %v2167
  %v2189 = vmul.f32 %v2137, %v2167
  %v2190 = vmul.f32 %v2138, %v2167
  %v2191 = vmul.f32 %v2139, %v2167
  %v2192 = vmul.f32 %v2140, %v2167
  %v2193 = vmul.f32 %v2141, %v2167
  %v2194 = vmul.f32 %v2142, %v2167
  %v2195 = vmul.f32 %v2143, %v2167
  %v2196 = vmul.f32 %v2144, %v2167
  %v2197 = vmul.f32 %v2145, %v2167
  %v2198 = vmul.f32 %v2146, %v2167
  %v2199 = vmul.f32 %v2147, %v2167
  %v2200 = vmul.f32 %v2148, %v2167
  %v2201 = vmul.f32 %v2149, %v2167
  %v2202 = vmul.f32 %v2150, %v2167
  %v2203 = vmul.f32 %v2151, %v2167
  %v2204 = vmul.f32 %v2152, %v2167
  %v2205 = vmul.f32 %v2153, %v2167
  %v2206 = vmul.f32 %v2154, %v2167
  %v2207 = vmul.f32 %v2155, %v2167
  %v2208 = vmul.f32 %v2156, %v2167
  %v2209 = vmul.f32 %v2157, %v2167
  %v2210 = vmul.f32 %v2158, %v2167
  %v2211 = vmul.f32 %v2159, %v2167
  %v2212 = vmul.f32 %v2160, %v2167
  %v2213 = vmul.f32 %v2161, %v2167
  %v2214 = vmul.f32 %v2162, %v2167
  %v2215 = vmul.f32 %v2163, %v2167
  %v2216 = vmul.f32 %v2164, %v2167
  %v2217 = vmul.f32 %v2165, %v2167
  %v2218 = vpack.c.bf16 %v2169, %v2168
  %v2219 = vpack.c.bf16 %v2171, %v2170
  %v2220 = vpack.c.bf16 %v2173, %v2172
  %v2221 = vpack.c.bf16 %v2175, %v2174
  %v2222 = vpack.c.bf16 %v2177, %v2176
  %v2223 = vpack.c.bf16 %v2179, %v2178
  %v2224 = vpack.c.bf16 %v2181, %v2180
  %v2225 = vpack.c.bf16 %v2183, %v2182
  %v2226 = vpack.c.bf16 %v2185, %v2184
  %v2227 = vpack.c.bf16 %v2187, %v2186
  %v2228 = vpack.c.bf16 %v2189, %v2188
  %v2229 = vpack.c.bf16 %v2191, %v2190
  %v2230 = vpack.c.bf16 %v2193, %v2192
  %v2231 = vpack.c.bf16 %v2195, %v2194
  %v2232 = vpack.c.bf16 %v2197, %v2196
  %v2233 = vpack.c.bf16 %v2199, %v2198
  %v2234 = vpack.c.bf16 %v2201, %v2200
  %v2235 = vpack.c.bf16 %v2203, %v2202
  %v2236 = vpack.c.bf16 %v2205, %v2204
  %v2237 = vpack.c.bf16 %v2207, %v2206
  %v2238 = vpack.c.bf16 %v2209, %v2208
  %v2239 = vpack.c.bf16 %v2211, %v2210
  %v2240 = vpack.c.bf16 %v2213, %v2212
  %v2241 = vpack.c.bf16 %v2215, %v2214
  %v2242 = vpack.c.bf16 %v2217, %v2216
  %v2268 = vunpack.c.l.b16 %v2218
  %v2269 = vunpack.c.h.b16 %v2218
  %v2270 = vunpack.c.l.b16 %v2219
  %v2271 = vunpack.c.h.b16 %v2219
  %v2272 = vunpack.c.l.b16 %v2220
  %v2273 = vunpack.c.h.b16 %v2220
  %v2274 = vunpack.c.l.b16 %v2221
  %v2275 = vunpack.c.h.b16 %v2221
  %v2276 = vunpack.c.l.b16 %v2222
  %v2277 = vunpack.c.h.b16 %v2222
  %v2278 = vunpack.c.l.b16 %v2223
  %v2279 = vunpack.c.h.b16 %v2223
  %v2280 = vunpack.c.l.b16 %v2224
  %v2281 = vunpack.c.h.b16 %v2224
  %v2282 = vunpack.c.l.b16 %v2225
  %v2283 = vunpack.c.h.b16 %v2225
  %v2284 = vunpack.c.l.b16 %v2226
  %v2285 = vunpack.c.h.b16 %v2226
  %v2286 = vunpack.c.l.b16 %v2227
  %v2287 = vunpack.c.h.b16 %v2227
  %v2288 = vunpack.c.l.b16 %v2228
  %v2289 = vunpack.c.h.b16 %v2228
  %v2290 = vunpack.c.l.b16 %v2229
  %v2291 = vunpack.c.h.b16 %v2229
  %v2292 = vunpack.c.l.b16 %v2230
  %v2293 = vunpack.c.h.b16 %v2230
  %v2294 = vunpack.c.l.b16 %v2231
  %v2295 = vunpack.c.h.b16 %v2231
  %v2296 = vunpack.c.l.b16 %v2232
  %v2297 = vunpack.c.h.b16 %v2232
  %v2298 = vunpack.c.l.b16 %v2233
  %v2299 = vunpack.c.h.b16 %v2233
  %v2300 = vunpack.c.l.b16 %v2234
  %v2301 = vunpack.c.h.b16 %v2234
  %v2302 = vunpack.c.l.b16 %v2235
  %v2303 = vunpack.c.h.b16 %v2235
  %v2304 = vunpack.c.l.b16 %v2236
  %v2305 = vunpack.c.h.b16 %v2236
  %v2306 = vunpack.c.l.b16 %v2237
  %v2307 = vunpack.c.h.b16 %v2237
  %v2308 = vunpack.c.l.b16 %v2238
  %v2309 = vunpack.c.h.b16 %v2238
  %v2310 = vunpack.c.l.b16 %v2239
  %v2311 = vunpack.c.h.b16 %v2239
  %v2312 = vunpack.c.l.b16 %v2240
  %v2313 = vunpack.c.h.b16 %v2240
  %v2314 = vunpack.c.l.b16 %v2241
  %v2315 = vunpack.c.h.b16 %v2241
  %v2316 = vunpack.c.l.b16 %v2242
  %v2317 = vunpack.c.h.b16 %v2242
  %v2318 = vpack.c.b16 %v2268, %v2268
  %v2319 = vpack.c.b16 %v2269, %v2269
  %v2320 = vpack.c.b16 %v2270, %v2270
  %v2321 = vpack.c.b16 %v2271, %v2271
  %v2322 = vpack.c.b16 %v2272, %v2272
  %v2323 = vpack.c.b16 %v2273, %v2273
  %v2324 = vpack.c.b16 %v2274, %v2274
  %v2325 = vpack.c.b16 %v2275, %v2275
  %v2326 = vpack.c.b16 %v2276, %v2276
  %v2327 = vpack.c.b16 %v2277, %v2277
  %v2328 = vpack.c.b16 %v2278, %v2278
  %v2329 = vpack.c.b16 %v2279, %v2279
  %v2330 = vpack.c.b16 %v2280, %v2280
  %v2331 = vpack.c.b16 %v2281, %v2281
  %v2332 = vpack.c.b16 %v2282, %v2282
  %v2333 = vpack.c.b16 %v2283, %v2283
  %v2334 = vpack.c.b16 %v2284, %v2284
  %v2335 = vpack.c.b16 %v2285, %v2285
  %v2336 = vpack.c.b16 %v2286, %v2286
  %v2337 = vpack.c.b16 %v2287, %v2287
  %v2338 = vpack.c.b16 %v2288, %v2288
  %v2339 = vpack.c.b16 %v2289, %v2289
  %v2340 = vpack.c.b16 %v2290, %v2290
  %v2341 = vpack.c.b16 %v2291, %v2291
  %v2342 = vpack.c.b16 %v2292, %v2292
  %v2343 = vpack.c.b16 %v2293, %v2293
  %v2344 = vpack.c.b16 %v2294, %v2294
  %v2345 = vpack.c.b16 %v2295, %v2295
  %v2346 = vpack.c.b16 %v2296, %v2296
  %v2347 = vpack.c.b16 %v2297, %v2297
  %v2348 = vpack.c.b16 %v2298, %v2298
  %v2349 = vpack.c.b16 %v2299, %v2299
  %v2350 = vpack.c.b16 %v2300, %v2300
  %v2351 = vpack.c.b16 %v2301, %v2301
  %v2352 = vpack.c.b16 %v2302, %v2302
  %v2353 = vpack.c.b16 %v2303, %v2303
  %v2354 = vpack.c.b16 %v2304, %v2304
  %v2355 = vpack.c.b16 %v2305, %v2305
  %v2356 = vpack.c.b16 %v2306, %v2306
  %v2357 = vpack.c.b16 %v2307, %v2307
  %v2358 = vpack.c.b16 %v2308, %v2308
  %v2359 = vpack.c.b16 %v2309, %v2309
  %v2360 = vpack.c.b16 %v2310, %v2310
  %v2361 = vpack.c.b16 %v2311, %v2311
  %v2362 = vpack.c.b16 %v2312, %v2312
  %v2363 = vpack.c.b16 %v2313, %v2313
  %v2364 = vpack.c.b16 %v2314, %v2314
  %v2365 = vpack.c.b16 %v2315, %v2315
  %v2366 = vpack.c.b16 %v2316, %v2316
  %v2367 = vpack.c.b16 %v2317, %v2317
  %vm2418 = vcmask 257024
  %2419 = vst.msk [vmem:[%s3] sm:$0xf] %vm2418, %v2318
  %2420 = vst.msk [vmem:[%s3 + $0x4] sm:$0xf] %vm2418, %v2319
  %2421 = vst.msk [vmem:[%s3 + $0x8] sm:$0xf] %vm2418, %v2320
  %2422 = vst.msk [vmem:[%s3 + $0xc] sm:$0xf] %vm2418, %v2321
  %2423 = vst.msk [vmem:[%s3 + $0x10] sm:$0xf] %vm2418, %v2322
  %2424 = vst.msk [vmem:[%s3 + $0x14] sm:$0xf] %vm2418, %v2323
  %2425 = vst.msk [vmem:[%s3 + $0x18] sm:$0xf] %vm2418, %v2324
  %2426 = vst.msk [vmem:[%s3 + $0x1c] sm:$0xf] %vm2418, %v2325
  %2427 = vst.msk [vmem:[%s3 + $0x20] sm:$0xf] %vm2418, %v2326
  %2428 = vst.msk [vmem:[%s3 + $0x24] sm:$0xf] %vm2418, %v2327
  %2429 = vst.msk [vmem:[%s3 + $0x28] sm:$0xf] %vm2418, %v2328
  %2430 = vst.msk [vmem:[%s3 + $0x2c] sm:$0xf] %vm2418, %v2329
  %2431 = vst.msk [vmem:[%s3 + $0x30] sm:$0xf] %vm2418, %v2330
  %2432 = vst.msk [vmem:[%s3 + $0x34] sm:$0xf] %vm2418, %v2331
  %2433 = vst.msk [vmem:[%s3 + $0x38] sm:$0xf] %vm2418, %v2332
  %2434 = vst.msk [vmem:[%s3 + $0x3c] sm:$0xf] %vm2418, %v2333
  %2435 = vst.msk [vmem:[%s3 + $0x40] sm:$0xf] %vm2418, %v2334
  %2436 = vst.msk [vmem:[%s3 + $0x44] sm:$0xf] %vm2418, %v2335
  %2437 = vst.msk [vmem:[%s3 + $0x48] sm:$0xf] %vm2418, %v2336
  %2438 = vst.msk [vmem:[%s3 + $0x4c] sm:$0xf] %vm2418, %v2337
  %2439 = vst.msk [vmem:[%s3 + $0x50] sm:$0xf] %vm2418, %v2338
  %2440 = vst.msk [vmem:[%s3 + $0x54] sm:$0xf] %vm2418, %v2339
  %2441 = vst.msk [vmem:[%s3 + $0x58] sm:$0xf] %vm2418, %v2340
  %2442 = vst.msk [vmem:[%s3 + $0x5c] sm:$0xf] %vm2418, %v2341
  %2443 = vst.msk [vmem:[%s3 + $0x60] sm:$0xf] %vm2418, %v2342
  %2444 = vst.msk [vmem:[%s3 + $0x64] sm:$0xf] %vm2418, %v2343
  %2445 = vst.msk [vmem:[%s3 + $0x68] sm:$0xf] %vm2418, %v2344
  %2446 = vst.msk [vmem:[%s3 + $0x6c] sm:$0xf] %vm2418, %v2345
  %2447 = vst.msk [vmem:[%s3 + $0x70] sm:$0xf] %vm2418, %v2346
  %2448 = vst.msk [vmem:[%s3 + $0x74] sm:$0xf] %vm2418, %v2347
  %2449 = vst.msk [vmem:[%s3 + $0x78] sm:$0xf] %vm2418, %v2348
  %2450 = vst.msk [vmem:[%s3 + $0x7c] sm:$0xf] %vm2418, %v2349
  %2451 = vst.msk [vmem:[%s3 + $0x80] sm:$0xf] %vm2418, %v2350
  %2452 = vst.msk [vmem:[%s3 + $0x84] sm:$0xf] %vm2418, %v2351
  %2453 = vst.msk [vmem:[%s3 + $0x88] sm:$0xf] %vm2418, %v2352
  %2454 = vst.msk [vmem:[%s3 + $0x8c] sm:$0xf] %vm2418, %v2353
  %2455 = vst.msk [vmem:[%s3 + $0x90] sm:$0xf] %vm2418, %v2354
  %2456 = vst.msk [vmem:[%s3 + $0x94] sm:$0xf] %vm2418, %v2355
  %2457 = vst.msk [vmem:[%s3 + $0x98] sm:$0xf] %vm2418, %v2356
  %2458 = vst.msk [vmem:[%s3 + $0x9c] sm:$0xf] %vm2418, %v2357
  %2459 = vst.msk [vmem:[%s3 + $0xa0] sm:$0xf] %vm2418, %v2358
  %2460 = vst.msk [vmem:[%s3 + $0xa4] sm:$0xf] %vm2418, %v2359
  %2461 = vst.msk [vmem:[%s3 + $0xa8] sm:$0xf] %vm2418, %v2360
  %2462 = vst.msk [vmem:[%s3 + $0xac] sm:$0xf] %vm2418, %v2361
  %2463 = vst.msk [vmem:[%s3 + $0xb0] sm:$0xf] %vm2418, %v2362
  %2464 = vst.msk [vmem:[%s3 + $0xb4] sm:$0xf] %vm2418, %v2363
  %2465 = vst.msk [vmem:[%s3 + $0xb8] sm:$0xf] %vm2418, %v2364
  %2466 = vst.msk [vmem:[%s3 + $0xbc] sm:$0xf] %vm2418, %v2365
  %2467 = vst.msk [vmem:[%s3 + $0xc0] sm:$0xf] %vm2418, %v2366
  %2468 = vst.msk [vmem:[%s3 + $0xc4] sm:$0xf] %vm2418, %v2367
  // Predicated region
  $region14: #{quantized_cnn_forward.3} parent=0 // pred_check
    _
  $region15: #{quantized_cnn_forward.3} parent=0 // pred_check_branch
    %2470 = sbr.rel (0) target = $region17
  $region16: #{quantized_cnn_forward.3} parent=0 // pred_region
    _
  $region17: #{quantized_cnn_forward.3} parent=0 // pred_fallthru
    _
  // Predicated region
  $region18: #{quantized_cnn_forward.3} parent=0 // pred_check
    _
  $region19: #{quantized_cnn_forward.3} parent=0 // pred_check_branch
    %2472 = sbr.rel (0) target = $region21
  $region20: #{quantized_cnn_forward.3} parent=0 // pred_region
    _
  $region21: #{quantized_cnn_forward.3} parent=0 // pred_fallthru
    _

// kernel: quantized_cnn_forward.4
$region0: #{quantized_cnn_forward.4}
  #allocation0 [shape = 'u32[]', space=smem, size = 0x4, offset = 0x4, fixed_abs, tag = 'smem constant byte address 0x4 - core index']
  #allocation1 [shape = 'u32[144,128]{1,0:T(1,128)}', space=vmem, size = 0x12000, scoped, tag = 'internal scratch']
  #allocation2 [shape = 'f32[1]{0:T(128)S(6)}', space=smem, size = 0x200, scoped, tag = 'scoped memory for quantized_cnn_forward.4']
  %s0 = inlined_call_operand.vmem [shape: bf16[4,80,288], index: 0, kind: input, shape index: {}]
  %s1 = inlined_call_operand.vmem [shape: bf16[288,64], index: 1, kind: input, shape index: {}]
  %s2 = inlined_call_operand.<no memory space> [shape: f32[1], index: 2, kind: input, shape index: {}]
  %s3 = inlined_call_operand.vmem [shape: bf16[80,64], index: 3, kind: output, shape index: {}]
  %s4 = sld [smem:[#allocation0]]
  $region22: #{quantized_cnn_forward.4} parent=0
    _
  %s6 = ssub.s32 1, %s4
  %s7 = scalar_select 0, %s6, %s4
  %8 = sst [smem:[#allocation2]] %s2
  // Predicated region
  $region2: #{quantized_cnn_forward.4} parent=0 // pred_check
    _
  $region3: #{quantized_cnn_forward.4} parent=0 // pred_check_branch
    %10 = sbr.rel (0) target = $region5
  $region4: #{quantized_cnn_forward.4} parent=0 // pred_region
    _
  $region5: #{quantized_cnn_forward.4} parent=0 // pred_fallthru
    _
  // Predicated region
  $region6: #{quantized_cnn_forward.4} parent=0 // pred_check
    _
  $region7: #{quantized_cnn_forward.4} parent=0 // pred_check_branch
    %12 = sbr.rel (0) target = $region9
  $region8: #{quantized_cnn_forward.4} parent=0 // pred_region
    _
  $region9: #{quantized_cnn_forward.4} parent=0 // pred_fallthru
    _
  // Predicated region
  $region10: #{quantized_cnn_forward.4} parent=0 // pred_check
    _
  $region11: #{quantized_cnn_forward.4} parent=0 // pred_check_branch
    %14 = sbr.rel (0) target = $region13
  $region12: #{quantized_cnn_forward.4} parent=0 // pred_region
    _
  $region13: #{quantized_cnn_forward.4} parent=0 // pred_fallthru
    _
  %v16 = vld [vmem:[%s1] sm:$0xf]
  %v17 = vld [vmem:[%s1 + $0x4] sm:$0xf]
  %v18 = vld [vmem:[%s1 + $0x8] sm:$0xf]
  %v19 = vld [vmem:[%s1 + $0xc] sm:$0xf]
  %v20 = vld [vmem:[%s1 + $0x10] sm:$0xf]
  %v21 = vld [vmem:[%s1 + $0x14] sm:$0xf]
  %v22 = vld [vmem:[%s1 + $0x18] sm:$0xf]
  %v23 = vld [vmem:[%s1 + $0x1c] sm:$0xf]
  %v24 = vld [vmem:[%s1 + $0x20] sm:$0xf]
  %v25 = vld [vmem:[%s1 + $0x24] sm:$0xf]
  %v26 = vld [vmem:[%s1 + $0x28] sm:$0xf]
  %v27 = vld [vmem:[%s1 + $0x2c] sm:$0xf]
  %v28 = vld [vmem:[%s1 + $0x30] sm:$0xf]
  %v29 = vld [vmem:[%s1 + $0x34] sm:$0xf]
  %v30 = vld [vmem:[%s1 + $0x38] sm:$0xf]
  %v31 = vld [vmem:[%s1 + $0x3c] sm:$0xf]
  %v32 = vld [vmem:[%s1 + $0x40] sm:$0xf]
  %v33 = vld [vmem:[%s1 + $0x44] sm:$0xf]
  %v34 = vld [vmem:[%s1 + $0x48] sm:$0xf]
  %v35 = vld [vmem:[%s1 + $0x4c] sm:$0xf]
  %v36 = vld [vmem:[%s1 + $0x50] sm:$0xf]
  %v37 = vld [vmem:[%s1 + $0x54] sm:$0xf]
  %v38 = vld [vmem:[%s1 + $0x58] sm:$0xf]
  %v39 = vld [vmem:[%s1 + $0x5c] sm:$0xf]
  %v40 = vld [vmem:[%s1 + $0x60] sm:$0xf]
  %v41 = vld [vmem:[%s1 + $0x64] sm:$0xf]
  %v42 = vld [vmem:[%s1 + $0x68] sm:$0xf]
  %v43 = vld [vmem:[%s1 + $0x6c] sm:$0xf]
  %v44 = vld [vmem:[%s1 + $0x70] sm:$0xf]
  %v45 = vld [vmem:[%s1 + $0x74] sm:$0xf]
  %v46 = vld [vmem:[%s1 + $0x78] sm:$0xf]
  %v47 = vld [vmem:[%s1 + $0x7c] sm:$0xf]
  %v48 = vld [vmem:[%s1 + $0x80] sm:$0xf]
  %v49 = vld [vmem:[%s1 + $0x84] sm:$0xf]
  %v50 = vld [vmem:[%s1 + $0x88] sm:$0xf]
  %v51 = vld [vmem:[%s1 + $0x8c] sm:$0xf]
  %v52 = vld [vmem:[%s0] sm:$0xff]
  %v53 = vld [vmem:[%s0 + $0x8] sm:$0xf]
  %v54 = vld [vmem:[%s0 + $0xc] sm:$0xff]
  %v55 = vld [vmem:[%s0 + $0x14] sm:$0xf]
  %v56 = vld [vmem:[%s0 + $0x18] sm:$0xff]
  %v57 = vld [vmem:[%s0 + $0x20] sm:$0xf]
  %v58 = vld [vmem:[%s0 + $0x24] sm:$0xff]
  %v59 = vld [vmem:[%s0 + $0x2c] sm:$0xf]
  %v60 = vld [vmem:[%s0 + $0x30] sm:$0xff]
  %v61 = vld [vmem:[%s0 + $0x38] sm:$0xf]
  %v62 = vld [vmem:[%s0 + $0x3c] sm:$0xff]
  %v63 = vld [vmem:[%s0 + $0x44] sm:$0xf]
  %v64 = vld [vmem:[%s0 + $0x48] sm:$0xff]
  %v65 = vld [vmem:[%s0 + $0x50] sm:$0xf]
  %v66 = vld [vmem:[%s0 + $0x54] sm:$0xff]
  %v67 = vld [vmem:[%s0 + $0x5c] sm:$0xf]
  %v68 = vld [vmem:[%s0 + $0x60] sm:$0xff]
  %v69 = vld [vmem:[%s0 + $0x68] sm:$0xf]
  %v70 = vld [vmem:[%s0 + $0x6c] sm:$0xff]
  %v71 = vld [vmem:[%s0 + $0x74] sm:$0xf]
  %v92 = vunpack.c.l.b16 %v52
  %v93 = vunpack.c.h.b16 %v52
  %v94 = vunpack.c.l.b16 %v53
  %v95 = vunpack.c.l.b16 %v54
  %v96 = vunpack.c.h.b16 %v54
  %v97 = vunpack.c.l.b16 %v55
  %v98 = vunpack.c.l.b16 %v56
  %v99 = vunpack.c.h.b16 %v56
  %v100 = vunpack.c.l.b16 %v57
  %v101 = vunpack.c.l.b16 %v58
  %v102 = vunpack.c.h.b16 %v58
  %v103 = vunpack.c.l.b16 %v59
  %v104 = vunpack.c.l.b16 %v60
  %v105 = vunpack.c.h.b16 %v60
  %v106 = vunpack.c.l.b16 %v61
  %v107 = vunpack.c.l.b16 %v62
  %v108 = vunpack.c.h.b16 %v62
  %v109 = vunpack.c.l.b16 %v63
  %v110 = vunpack.c.l.b16 %v64
  %v111 = vunpack.c.h.b16 %v64
  %v112 = vunpack.c.l.b16 %v65
  %v113 = vunpack.c.l.b16 %v66
  %v114 = vunpack.c.h.b16 %v66
  %v115 = vunpack.c.l.b16 %v67
  %v116 = vunpack.c.l.b16 %v68
  %v117 = vunpack.c.h.b16 %v68
  %v118 = vunpack.c.l.b16 %v69
  %v119 = vunpack.c.l.b16 %v70
  %v120 = vunpack.c.h.b16 %v70
  %v121 = vunpack.c.l.b16 %v71
  %v122 = vpack.c.b16 %v95, %v92
  %v123 = vpack.c.b16 %v96, %v93
  %v124 = vpack.c.b16 %v97, %v94
  %v125 = vpack.c.b16 %v101, %v98
  %v126 = vpack.c.b16 %v102, %v99
  %v127 = vpack.c.b16 %v103, %v100
  %v128 = vpack.c.b16 %v107, %v104
  %v129 = vpack.c.b16 %v108, %v105
  %v130 = vpack.c.b16 %v109, %v106
  %v131 = vpack.c.b16 %v113, %v110
  %v132 = vpack.c.b16 %v114, %v111
  %v133 = vpack.c.b16 %v115, %v112
  %v134 = vpack.c.b16 %v119, %v116
  %v135 = vpack.c.b16 %v120, %v117
  %v136 = vpack.c.b16 %v121, %v118
  %v183 = vunpack.c.l.b16 %v16
  %v184 = vunpack.c.l.b16 %v17
  %v185 = vunpack.c.l.b16 %v18
  %v186 = vunpack.c.l.b16 %v19
  %v187 = vunpack.c.l.b16 %v20
  %v188 = vunpack.c.l.b16 %v21
  %v189 = vunpack.c.l.b16 %v22
  %v190 = vunpack.c.l.b16 %v23
  %v191 = vunpack.c.l.b16 %v24
  %v192 = vunpack.c.l.b16 %v25
  %v193 = vunpack.c.l.b16 %v26
  %v194 = vunpack.c.l.b16 %v27
  %v195 = vunpack.c.l.b16 %v28
  %v196 = vunpack.c.l.b16 %v29
  %v197 = vunpack.c.l.b16 %v30
  %v198 = vunpack.c.l.b16 %v31
  %v199 = vunpack.c.l.b16 %v32
  %v200 = vunpack.c.l.b16 %v33
  %v201 = vunpack.c.l.b16 %v34
  %v202 = vunpack.c.l.b16 %v35
  %v203 = vunpack.c.l.b16 %v36
  %v204 = vunpack.c.l.b16 %v37
  %v205 = vunpack.c.l.b16 %v38
  %v206 = vunpack.c.l.b16 %v39
  %v207 = vunpack.c.l.b16 %v40
  %v208 = vunpack.c.l.b16 %v41
  %v209 = vunpack.c.l.b16 %v42
  %v210 = vunpack.c.l.b16 %v43
  %v211 = vunpack.c.l.b16 %v44
  %v212 = vunpack.c.l.b16 %v45
  %v213 = vunpack.c.l.b16 %v46
  %v214 = vunpack.c.l.b16 %v47
  %v215 = vunpack.c.l.b16 %v48
  %v216 = vunpack.c.l.b16 %v49
  %v217 = vunpack.c.l.b16 %v50
  %v218 = vunpack.c.l.b16 %v51
  %v219 = vpack.c.b16 %v184, %v183
  %v220 = vpack.c.b16 %v186, %v185
  %v221 = vpack.c.b16 %v188, %v187
  %v222 = vpack.c.b16 %v190, %v189
  %v223 = vpack.c.b16 %v192, %v191
  %v224 = vpack.c.b16 %v194, %v193
  %v225 = vpack.c.b16 %v196, %v195
  %v226 = vpack.c.b16 %v198, %v197
  %v227 = vpack.c.b16 %v200, %v199
  %v228 = vpack.c.b16 %v202, %v201
  %v229 = vpack.c.b16 %v204, %v203
  %v230 = vpack.c.b16 %v206, %v205
  %v231 = vpack.c.b16 %v208, %v207
  %v232 = vpack.c.b16 %v210, %v209
  %v233 = vpack.c.b16 %v212, %v211
  %v234 = vpack.c.b16 %v214, %v213
  %v235 = vpack.c.b16 %v216, %v215
  %v236 = vpack.c.b16 %v218, %v217
  %vm255 = vcmask 261120
  %v257 = vsel %vm255, %v124, 0
  %v260 = vsel %vm255, %v127, 0
  %v263 = vsel %vm255, %v130, 0
  %v266 = vsel %vm255, %v133, 0
  %v269 = vsel %vm255, %v136, 0
  %271 = vmatprep.subr.bf16.mxu0 0
  %272 = vmatpush1.bf16.msra.mxu0 %v219
  %273 = vmatprep.subr.bf16.mxu0 0
  %274 = vmatpush1.bf16.msra.mxu0 %v220
  %275 = vmatprep.subr.bf16.mxu0 0
  %276 = vmatpush1.bf16.msra.mxu0 %v221
  %277 = vmatprep.subr.bf16.mxu0 0
  %278 = vmatpush1.bf16.msra.mxu0 %v222
  %279 = vmatprep.subr.bf16.mxu0 0
  %280 = vmatpush1.bf16.msra.mxu0 %v223
  %281 = vmatprep.subr.bf16.mxu0 0
  %282 = vmatpush1.bf16.msra.mxu0 %v224
  %283 = vmatprep.subr.bf16.mxu0 0
  %284 = vmatpush1.bf16.msra.mxu0 %v225
  %285 = vmatprep.subr.bf16.mxu0 0
  %286 = vmatpush1.bf16.msra.mxu0 %v226
  %287 = vmatprep.subr.bf16.mxu0 0
  %288 = vmatpush1.bf16.msra.mxu0 %v227
  %289 = vmatprep.subr.bf16.mxu0 0
  %290 = vmatpush1.bf16.msra.mxu0 %v228
  %291 = vmatprep.subr.bf16.mxu0 0
  %292 = vmatpush1.bf16.msra.mxu0 %v229
  %293 = vmatprep.subr.bf16.mxu0 0
  %294 = vmatpush1.bf16.msra.mxu0 %v230
  %295 = vmatprep.subr.bf16.mxu0 0
  %296 = vmatpush1.bf16.msra.mxu0 %v231
  %297 = vmatprep.subr.bf16.mxu0 0
  %298 = vmatpush1.bf16.msra.mxu0 %v232
  %299 = vmatprep.subr.bf16.mxu0 0
  %300 = vmatpush1.bf16.msra.mxu0 %v233
  %301 = vmatprep.subr.bf16.mxu0 0
  %302 = vmatpush1.bf16.msra.mxu0 %v234
  %303 = vmatprep.mubr.bf16.mxu0 %v123
  %304 = vmatmul.mubr.bf16.gmra.mrb[0].mxu0 %v122
  %v305 = vpop.f32.mrb[0].mxu0
  %v306 = vadd.f32 0.0, %v305
  %v307 = vpop.f32.mrb[0].mxu0
  %v308 = vpop.f32.mrb[0].mxu0
  %v309 = vadd.f32 0.0, %v308
  %v310 = vpop.f32.mrb[0].mxu0
  %311 = vmatprep.mubr.bf16.mxu0 %v126
  %312 = vmatmul.mubr.bf16.gmra.mrb[0].mxu0 %v125
  %v313 = vpop.f32.mrb[0].mxu0
  %v314 = vadd.f32 0.0, %v313
  %v315 = vpop.f32.mrb[0].mxu0
  %v316 = vpop.f32.mrb[0].mxu0
  %v317 = vadd.f32 0.0, %v316
  %v318 = vpop.f32.mrb[0].mxu0
  %319 = vmatprep.mubr.bf16.mxu0 %v129
  %320 = vmatmul.mubr.bf16.gmra.mrb[0].mxu0 %v128
  %v321 = vpop.f32.mrb[0].mxu0
  %v322 = vadd.f32 0.0, %v321
  %v323 = vpop.f32.mrb[0].mxu0
  %v324 = vpop.f32.mrb[0].mxu0
  %v325 = vadd.f32 0.0, %v324
  %v326 = vpop.f32.mrb[0].mxu0
  %327 = vmatprep.mubr.bf16.mxu0 %v132
  %328 = vmatmul.mubr.bf16.gmra.mrb[0].mxu0 %v131
  %v329 = vpop.f32.mrb[0].mxu0
  %v330 = vadd.f32 0.0, %v329
  %v331 = vpop.f32.mrb[0].mxu0
  %v332 = vpop.f32.mrb[0].mxu0
  %v333 = vadd.f32 0.0, %v332
  %v334 = vpop.f32.mrb[0].mxu0
  %335 = vmatprep.mubr.bf16.mxu0 %v135
  %336 = vmatmul.mubr.bf16.gmra.mrb[0].mxu0 %v134
  %v337 = vpop.f32.mrb[0].mxu0
  %v338 = vadd.f32 0.0, %v337
  %v339 = vpop.f32.mrb[0].mxu0
  %v340 = vpop.f32.mrb[0].mxu0
  %v341 = vadd.f32 0.0, %v340
  %v342 = vpop.f32.mrb[0].mxu0
  %343 = vdwg.mxu0
  %344 = vmatprep.subr.bf16.mxu0 0
  %345 = vmatpush1.bf16.msra.mxu0 %v235
  %346 = vmatprep.subr.bf16.mxu0 0
  %347 = vmatpush1.bf16.msra.mxu0 %v236
  %348 = vmatprep.subr.bf16.mxu0 0
  %349 = vmatpush1.bf16.msra.mxu0 0
  %350 = vmatprep.subr.bf16.mxu0 0
  %351 = vmatpush1.bf16.msra.mxu0 0
  %352 = vmatprep.subr.bf16.mxu0 0
  %353 = vmatpush1.bf16.msra.mxu0 0
  %354 = vmatprep.subr.bf16.mxu0 0
  %355 = vmatpush1.bf16.msra.mxu0 0
  %356 = vmatprep.subr.bf16.mxu0 0
  %357 = vmatpush1.bf16.msra.mxu0 0
  %358 = vmatprep.subr.bf16.mxu0 0
  %359 = vmatpush1.bf16.msra.mxu0 0
  %360 = vmatprep.subr.bf16.mxu0 0
  %361 = vmatpush1.bf16.msra.mxu0 0
  %362 = vmatprep.subr.bf16.mxu0 0
  %363 = vmatpush1.bf16.msra.mxu0 0
  %364 = vmatprep.subr.bf16.mxu0 0
  %365 = vmatpush1.bf16.msra.mxu0 0
  %366 = vmatprep.subr.bf16.mxu0 0
  %367 = vmatpush1.bf16.msra.mxu0 0
  %368 = vmatprep.subr.bf16.mxu0 0
  %369 = vmatpush1.bf16.msra.mxu0 0
  %370 = vmatprep.subr.bf16.mxu0 0
  %371 = vmatpush1.bf16.msra.mxu0 0
  %372 = vmatprep.subr.bf16.mxu0 0
  %373 = vmatpush1.bf16.msra.mxu0 0
  %374 = vmatprep.subr.bf16.mxu0 0
  %375 = vmatpush1.bf16.msra.mxu0 0
  %376 = vmatprep.mubr.bf16.mxu0 0
  %377 = vmatmul.mubr.bf16.gmra.mrb[0].mxu0 %v257
  %v378 = vpop.f32.mrb[0].mxu0
  %v379 = vadd.f32 %v306, %v378
  %v380 = vpop.f32.mrb[0].mxu0
  %v381 = vpop.f32.mrb[0].mxu0
  %v382 = vadd.f32 %v309, %v381
  %v383 = vpop.f32.mrb[0].mxu0
  %384 = vmatprep.mubr.bf16.mxu0 0
  %385 = vmatmul.mubr.bf16.gmra.mrb[0].mxu0 %v260
  %v386 = vpop.f32.mrb[0].mxu0
  %v387 = vadd.f32 %v314, %v386
  %v388 = vpop.f32.mrb[0].mxu0
  %v389 = vpop.f32.mrb[0].mxu0
  %v390 = vadd.f32 %v317, %v389
  %v391 = vpop.f32.mrb[0].mxu0
  %392 = vmatprep.mubr.bf16.mxu0 0
  %393 = vmatmul.mubr.bf16.gmra.mrb[0].mxu0 %v263
  %v394 = vpop.f32.mrb[0].mxu0
  %v395 = vadd.f32 %v322, %v394
  %v396 = vpop.f32.mrb[0].mxu0
  %v397 = vpop.f32.mrb[0].mxu0
  %v398 = vadd.f32 %v325, %v397
  %v399 = vpop.f32.mrb[0].mxu0
  %400 = vmatprep.mubr.bf16.mxu0 0
  %401 = vmatmul.mubr.bf16.gmra.mrb[0].mxu0 %v266
  %v402 = vpop.f32.mrb[0].mxu0
  %v403 = vadd.f32 %v330, %v402
  %v404 = vpop.f32.mrb[0].mxu0
  %v405 = vpop.f32.mrb[0].mxu0
  %v406 = vadd.f32 %v333, %v405
  %v407 = vpop.f32.mrb[0].mxu0
  %408 = vmatprep.mubr.bf16.mxu0 0
  %409 = vmatmul.mubr.bf16.gmra.mrb[0].mxu0 %v269
  %v410 = vpop.f32.mrb[0].mxu0
  %v411 = vadd.f32 %v338, %v410
  %v412 = vpop.f32.mrb[0].mxu0
  %v413 = vpop.f32.mrb[0].mxu0
  %v414 = vadd.f32 %v341, %v413
  %v415 = vpop.f32.mrb[0].mxu0
  %416 = vdwg.mxu0
  %s417 = scalar_lea.vmem %s0, 120
  %v418 = vld [vmem:[%s417] sm:$0xff]
  %v419 = vld [vmem:[%s417 + $0x8] sm:$0xf]
  %v420 = vld [vmem:[%s417 + $0xc] sm:$0xff]
  %v421 = vld [vmem:[%s417 + $0x14] sm:$0xf]
  %v422 = vld [vmem:[%s417 + $0x18] sm:$0xff]
  %v423 = vld [vmem:[%s417 + $0x20] sm:$0xf]
  %v424 = vld [vmem:[%s417 + $0x24] sm:$0xff]
  %v425 = vld [vmem:[%s417 + $0x2c] sm:$0xf]
  %v426 = vld [vmem:[%s417 + $0x30] sm:$0xff]
  %v427 = vld [vmem:[%s417 + $0x38] sm:$0xf]
  %v428 = vld [vmem:[%s417 + $0x3c] sm:$0xff]
  %v429 = vld [vmem:[%s417 + $0x44] sm:$0xf]
  %v430 = vld [vmem:[%s417 + $0x48] sm:$0xff]
  %v431 = vld [vmem:[%s417 + $0x50] sm:$0xf]
  %v432 = vld [vmem:[%s417 + $0x54] sm:$0xff]
  %v433 = vld [vmem:[%s417 + $0x5c] sm:$0xf]
  %v434 = vld [vmem:[%s417 + $0x60] sm:$0xff]
  %v435 = vld [vmem:[%s417 + $0x68] sm:$0xf]
  %v436 = vld [vmem:[%s417 + $0x6c] sm:$0xff]
  %v437 = vld [vmem:[%s417 + $0x74] sm:$0xf]
  %v458 = vunpack.c.l.b16 %v418
  %v459 = vunpack.c.h.b16 %v418
  %v460 = vunpack.c.l.b16 %v419
  %v461 = vunpack.c.l.b16 %v420
  %v462 = vunpack.c.h.b16 %v420
  %v463 = vunpack.c.l.b16 %v421
  %v464 = vunpack.c.l.b16 %v422
  %v465 = vunpack.c.h.b16 %v422
  %v466 = vunpack.c.l.b16 %v423
  %v467 = vunpack.c.l.b16 %v424
  %v468 = vunpack.c.h.b16 %v424
  %v469 = vunpack.c.l.b16 %v425
  %v470 = vunpack.c.l.b16 %v426
  %v471 = vunpack.c.h.b16 %v426
  %v472 = vunpack.c.l.b16 %v427
  %v473 = vunpack.c.l.b16 %v428
  %v474 = vunpack.c.h.b16 %v428
  %v475 = vunpack.c.l.b16 %v429
  %v476 = vunpack.c.l.b16 %v430
  %v477 = vunpack.c.h.b16 %v430
  %v478 = vunpack.c.l.b16 %v431
  %v479 = vunpack.c.l.b16 %v432
  %v480 = vunpack.c.h.b16 %v432
  %v481 = vunpack.c.l.b16 %v433
  %v482 = vunpack.c.l.b16 %v434
  %v483 = vunpack.c.h.b16 %v434
  %v484 = vunpack.c.l.b16 %v435
  %v485 = vunpack.c.l.b16 %v436
  %v486 = vunpack.c.h.b16 %v436
  %v487 = vunpack.c.l.b16 %v437
  %v488 = vpack.c.b16 %v461, %v458
  %v489 = vpack.c.b16 %v462, %v459
  %v490 = vpack.c.b16 %v463, %v460
  %v491 = vpack.c.b16 %v467, %v464
  %v492 = vpack.c.b16 %v468, %v465
  %v493 = vpack.c.b16 %v469, %v466
  %v494 = vpack.c.b16 %v473, %v470
  %v495 = vpack.c.b16 %v474, %v471
  %v496 = vpack.c.b16 %v475, %v472
  %v497 = vpack.c.b16 %v479, %v476
  %v498 = vpack.c.b16 %v480, %v477
  %v499 = vpack.c.b16 %v481, %v478
  %v500 = vpack.c.b16 %v485, %v482
  %v501 = vpack.c.b16 %v486, %v483
  %v502 = vpack.c.b16 %v487, %v484
  %v514 = vsel %vm255, %v490, 0
  %v517 = vsel %vm255, %v493, 0
  %v520 = vsel %vm255, %v496, 0
  %v523 = vsel %vm255, %v499, 0
  %v526 = vsel %vm255, %v502, 0
  %528 = vmatprep.subr.bf16.mxu0 0
  %529 = vmatpush1.bf16.msra.mxu0 %v219
  %530 = vmatprep.subr.bf16.mxu0 0
  %531 = vmatpush1.bf16.msra.mxu0 %v220
  %532 = vmatprep.subr.bf16.mxu0 0
  %533 = vmatpush1.bf16.msra.mxu0 %v221
  %534 = vmatprep.subr.bf16.mxu0 0
  %535 = vmatpush1.bf16.msra.mxu0 %v222
  %536 = vmatprep.subr.bf16.mxu0 0
  %537 = vmatpush1.bf16.msra.mxu0 %v223
  %538 = vmatprep.subr.bf16.mxu0 0
  %539 = vmatpush1.bf16.msra.mxu0 %v224
  %540 = vmatprep.subr.bf16.mxu0 0
  %541 = vmatpush1.bf16.msra.mxu0 %v225
  %542 = vmatprep.subr.bf16.mxu0 0
  %543 = vmatpush1.bf16.msra.mxu0 %v226
  %544 = vmatprep.subr.bf16.mxu0 0
  %545 = vmatpush1.bf16.msra.mxu0 %v227
  %546 = vmatprep.subr.bf16.mxu0 0
  %547 = vmatpush1.bf16.msra.mxu0 %v228
  %548 = vmatprep.subr.bf16.mxu0 0
  %549 = vmatpush1.bf16.msra.mxu0 %v229
  %550 = vmatprep.subr.bf16.mxu0 0
  %551 = vmatpush1.bf16.msra.mxu0 %v230
  %552 = vmatprep.subr.bf16.mxu0 0
  %553 = vmatpush1.bf16.msra.mxu0 %v231
  %554 = vmatprep.subr.bf16.mxu0 0
  %555 = vmatpush1.bf16.msra.mxu0 %v232
  %556 = vmatprep.subr.bf16.mxu0 0
  %557 = vmatpush1.bf16.msra.mxu0 %v233
  %558 = vmatprep.subr.bf16.mxu0 0
  %559 = vmatpush1.bf16.msra.mxu0 %v234
  %560 = vmatprep.mubr.bf16.mxu0 %v489
  %561 = vmatmul.mubr.bf16.gmra.mrb[0].mxu0 %v488
  %v562 = vpop.f32.mrb[0].mxu0
  %v563 = vadd.f32 0.0, %v562
  %v564 = vpop.f32.mrb[0].mxu0
  %v565 = vpop.f32.mrb[0].mxu0
  %v566 = vadd.f32 0.0, %v565
  %v567 = vpop.f32.mrb[0].mxu0
  %568 = vmatprep.mubr.bf16.mxu0 %v492
  %569 = vmatmul.mubr.bf16.gmra.mrb[0].mxu0 %v491
  %v570 = vpop.f32.mrb[0].mxu0
  %v571 = vadd.f32 0.0, %v570
  %v572 = vpop.f32.mrb[0].mxu0
  %v573 = vpop.f32.mrb[0].mxu0
  %v574 = vadd.f32 0.0, %v573
  %v575 = vpop.f32.mrb[0].mxu0
  %576 = vmatprep.mubr.bf16.mxu0 %v495
  %577 = vmatmul.mubr.bf16.gmra.mrb[0].mxu0 %v494
  %v578 = vpop.f32.mrb[0].mxu0
  %v579 = vadd.f32 0.0, %v578
  %v580 = vpop.f32.mrb[0].mxu0
  %v581 = vpop.f32.mrb[0].mxu0
  %v582 = vadd.f32 0.0, %v581
  %v583 = vpop.f32.mrb[0].mxu0
  %584 = vmatprep.mubr.bf16.mxu0 %v498
  %585 = vmatmul.mubr.bf16.gmra.mrb[0].mxu0 %v497
  %v586 = vpop.f32.mrb[0].mxu0
  %v587 = vadd.f32 0.0, %v586
  %v588 = vpop.f32.mrb[0].mxu0
  %v589 = vpop.f32.mrb[0].mxu0
  %v590 = vadd.f32 0.0, %v589
  %v591 = vpop.f32.mrb[0].mxu0
  %592 = vmatprep.mubr.bf16.mxu0 %v501
  %593 = vmatmul.mubr.bf16.gmra.mrb[0].mxu0 %v500
  %v594 = vpop.f32.mrb[0].mxu0
  %v595 = vadd.f32 0.0, %v594
  %v596 = vpop.f32.mrb[0].mxu0
  %v597 = vpop.f32.mrb[0].mxu0
  %v598 = vadd.f32 0.0, %v597
  %v599 = vpop.f32.mrb[0].mxu0
  %600 = vdwg.mxu0
  %601 = vmatprep.subr.bf16.mxu0 0
  %602 = vmatpush1.bf16.msra.mxu0 %v235
  %603 = vmatprep.subr.bf16.mxu0 0
  %604 = vmatpush1.bf16.msra.mxu0 %v236
  %605 = vmatprep.subr.bf16.mxu0 0
  %606 = vmatpush1.bf16.msra.mxu0 0
  %607 = vmatprep.subr.bf16.mxu0 0
  %608 = vmatpush1.bf16.msra.mxu0 0
  %609 = vmatprep.subr.bf16.mxu0 0
  %610 = vmatpush1.bf16.msra.mxu0 0
  %611 = vmatprep.subr.bf16.mxu0 0
  %612 = vmatpush1.bf16.msra.mxu0 0
  %613 = vmatprep.subr.bf16.mxu0 0
  %614 = vmatpush1.bf16.msra.mxu0 0
  %615 = vmatprep.subr.bf16.mxu0 0
  %616 = vmatpush1.bf16.msra.mxu0 0
  %617 = vmatprep.subr.bf16.mxu0 0
  %618 = vmatpush1.bf16.msra.mxu0 0
  %619 = vmatprep.subr.bf16.mxu0 0
  %620 = vmatpush1.bf16.msra.mxu0 0
  %621 = vmatprep.subr.bf16.mxu0 0
  %622 = vmatpush1.bf16.msra.mxu0 0
  %623 = vmatprep.subr.bf16.mxu0 0
  %624 = vmatpush1.bf16.msra.mxu0 0
  %625 = vmatprep.subr.bf16.mxu0 0
  %626 = vmatpush1.bf16.msra.mxu0 0
  %627 = vmatprep.subr.bf16.mxu0 0
  %628 = vmatpush1.bf16.msra.mxu0 0
  %629 = vmatprep.subr.bf16.mxu0 0
  %630 = vmatpush1.bf16.msra.mxu0 0
  %631 = vmatprep.subr.bf16.mxu0 0
  %632 = vmatpush1.bf16.msra.mxu0 0
  %633 = vmatprep.mubr.bf16.mxu0 0
  %634 = vmatmul.mubr.bf16.gmra.mrb[0].mxu0 %v514
  %v635 = vpop.f32.mrb[0].mxu0
  %v636 = vadd.f32 %v563, %v635
  %v637 = vpop.f32.mrb[0].mxu0
  %v638 = vpop.f32.mrb[0].mxu0
  %v639 = vadd.f32 %v566, %v638
  %v640 = vpop.f32.mrb[0].mxu0
  %641 = vmatprep.mubr.bf16.mxu0 0
  %642 = vmatmul.mubr.bf16.gmra.mrb[0].mxu0 %v517
  %v643 = vpop.f32.mrb[0].mxu0
  %v644 = vadd.f32 %v571, %v643
  %v645 = vpop.f32.mrb[0].mxu0
  %v646 = vpop.f32.mrb[0].mxu0
  %v647 = vadd.f32 %v574, %v646
  %v648 = vpop.f32.mrb[0].mxu0
  %649 = vmatprep.mubr.bf16.mxu0 0
  %650 = vmatmul.mubr.bf16.gmra.mrb[0].mxu0 %v520
  %v651 = vpop.f32.mrb[0].mxu0
  %v652 = vadd.f32 %v579, %v651
  %v653 = vpop.f32.mrb[0].mxu0
  %v654 = vpop.f32.mrb[0].mxu0
  %v655 = vadd.f32 %v582, %v654
  %v656 = vpop.f32.mrb[0].mxu0
  %657 = vmatprep.mubr.bf16.mxu0 0
  %658 = vmatmul.mubr.bf16.gmra.mrb[0].mxu0 %v523
  %v659 = vpop.f32.mrb[0].mxu0
  %v660 = vadd.f32 %v587, %v659
  %v661 = vpop.f32.mrb[0].mxu0
  %v662 = vpop.f32.mrb[0].mxu0
  %v663 = vadd.f32 %v590, %v662
  %v664 = vpop.f32.mrb[0].mxu0
  %665 = vmatprep.mubr.bf16.mxu0 0
  %666 = vmatmul.mubr.bf16.gmra.mrb[0].mxu0 %v526
  %v667 = vpop.f32.mrb[0].mxu0
  %v668 = vadd.f32 %v595, %v667
  %v669 = vpop.f32.mrb[0].mxu0
  %v670 = vpop.f32.mrb[0].mxu0
  %v671 = vadd.f32 %v598, %v670
  %v672 = vpop.f32.mrb[0].mxu0
  %673 = vdwg.mxu0
  %s674 = scalar_lea.vmem %s0, 240
  %v675 = vld [vmem:[%s674] sm:$0xff]
  %v676 = vld [vmem:[%s674 + $0x8] sm:$0xf]
  %v677 = vld [vmem:[%s674 + $0xc] sm:$0xff]
  %v678 = vld [vmem:[%s674 + $0x14] sm:$0xf]
  %v679 = vld [vmem:[%s674 + $0x18] sm:$0xff]
  %v680 = vld [vmem:[%s674 + $0x20] sm:$0xf]
  %v681 = vld [vmem:[%s674 + $0x24] sm:$0xff]
  %v682 = vld [vmem:[%s674 + $0x2c] sm:$0xf]
  %v683 = vld [vmem:[%s674 + $0x30] sm:$0xff]
  %v684 = vld [vmem:[%s674 + $0x38] sm:$0xf]
  %v685 = vld [vmem:[%s674 + $0x3c] sm:$0xff]
  %v686 = vld [vmem:[%s674 + $0x44] sm:$0xf]
  %v687 = vld [vmem:[%s674 + $0x48] sm:$0xff]
  %v688 = vld [vmem:[%s674 + $0x50] sm:$0xf]
  %v689 = vld [vmem:[%s674 + $0x54] sm:$0xff]
  %v690 = vld [vmem:[%s674 + $0x5c] sm:$0xf]
  %v691 = vld [vmem:[%s674 + $0x60] sm:$0xff]
  %v692 = vld [vmem:[%s674 + $0x68] sm:$0xf]
  %v693 = vld [vmem:[%s674 + $0x6c] sm:$0xff]
  %v694 = vld [vmem:[%s674 + $0x74] sm:$0xf]
  %v715 = vunpack.c.l.b16 %v675
  %v716 = vunpack.c.h.b16 %v675
  %v717 = vunpack.c.l.b16 %v676
  %v718 = vunpack.c.l.b16 %v677
  %v719 = vunpack.c.h.b16 %v677
  %v720 = vunpack.c.l.b16 %v678
  %v721 = vunpack.c.l.b16 %v679
  %v722 = vunpack.c.h.b16 %v679
  %v723 = vunpack.c.l.b16 %v680
  %v724 = vunpack.c.l.b16 %v681
  %v725 = vunpack.c.h.b16 %v681
  %v726 = vunpack.c.l.b16 %v682
  %v727 = vunpack.c.l.b16 %v683
  %v728 = vunpack.c.h.b16 %v683
  %v729 = vunpack.c.l.b16 %v684
  %v730 = vunpack.c.l.b16 %v685
  %v731 = vunpack.c.h.b16 %v685
  %v732 = vunpack.c.l.b16 %v686
  %v733 = vunpack.c.l.b16 %v687
  %v734 = vunpack.c.h.b16 %v687
  %v735 = vunpack.c.l.b16 %v688
  %v736 = vunpack.c.l.b16 %v689
  %v737 = vunpack.c.h.b16 %v689
  %v738 = vunpack.c.l.b16 %v690
  %v739 = vunpack.c.l.b16 %v691
  %v740 = vunpack.c.h.b16 %v691
  %v741 = vunpack.c.l.b16 %v692
  %v742 = vunpack.c.l.b16 %v693
  %v743 = vunpack.c.h.b16 %v693
  %v744 = vunpack.c.l.b16 %v694
  %v745 = vpack.c.b16 %v718, %v715
  %v746 = vpack.c.b16 %v719, %v716
  %v747 = vpack.c.b16 %v720, %v717
  %v748 = vpack.c.b16 %v724, %v721
  %v749 = vpack.c.b16 %v725, %v722
  %v750 = vpack.c.b16 %v726, %v723
  %v751 = vpack.c.b16 %v730, %v727
  %v752 = vpack.c.b16 %v731, %v728
  %v753 = vpack.c.b16 %v732, %v729
  %v754 = vpack.c.b16 %v736, %v733
  %v755 = vpack.c.b16 %v737, %v734
  %v756 = vpack.c.b16 %v738, %v735
  %v757 = vpack.c.b16 %v742, %v739
  %v758 = vpack.c.b16 %v743, %v740
  %v759 = vpack.c.b16 %v744, %v741
  %v771 = vsel %vm255, %v747, 0
  %v774 = vsel %vm255, %v750, 0
  %v777 = vsel %vm255, %v753, 0
  %v780 = vsel %vm255, %v756, 0
  %v783 = vsel %vm255, %v759, 0
  %785 = vmatprep.subr.bf16.mxu0 0
  %786 = vmatpush1.bf16.msra.mxu0 %v219
  %787 = vmatprep.subr.bf16.mxu0 0
  %788 = vmatpush1.bf16.msra.mxu0 %v220
  %789 = vmatprep.subr.bf16.mxu0 0
  %790 = vmatpush1.bf16.msra.mxu0 %v221
  %791 = vmatprep.subr.bf16.mxu0 0
  %792 = vmatpush1.bf16.msra.mxu0 %v222
  %793 = vmatprep.subr.bf16.mxu0 0
  %794 = vmatpush1.bf16.msra.mxu0 %v223
  %795 = vmatprep.subr.bf16.mxu0 0
  %796 = vmatpush1.bf16.msra.mxu0 %v224
  %797 = vmatprep.subr.bf16.mxu0 0
  %798 = vmatpush1.bf16.msra.mxu0 %v225
  %799 = vmatprep.subr.bf16.mxu0 0
  %800 = vmatpush1.bf16.msra.mxu0 %v226
  %801 = vmatprep.subr.bf16.mxu0 0
  %802 = vmatpush1.bf16.msra.mxu0 %v227
  %803 = vmatprep.subr.bf16.mxu0 0
  %804 = vmatpush1.bf16.msra.mxu0 %v228
  %805 = vmatprep.subr.bf16.mxu0 0
  %806 = vmatpush1.bf16.msra.mxu0 %v229
  %807 = vmatprep.subr.bf16.mxu0 0
  %808 = vmatpush1.bf16.msra.mxu0 %v230
  %809 = vmatprep.subr.bf16.mxu0 0
  %810 = vmatpush1.bf16.msra.mxu0 %v231
  %811 = vmatprep.subr.bf16.mxu0 0
  %812 = vmatpush1.bf16.msra.mxu0 %v232
  %813 = vmatprep.subr.bf16.mxu0 0
  %814 = vmatpush1.bf16.msra.mxu0 %v233
  %815 = vmatprep.subr.bf16.mxu0 0
  %816 = vmatpush1.bf16.msra.mxu0 %v234
  %817 = vmatprep.mubr.bf16.mxu0 %v746
  %818 = vmatmul.mubr.bf16.gmra.mrb[0].mxu0 %v745
  %v819 = vpop.f32.mrb[0].mxu0
  %v820 = vadd.f32 0.0, %v819
  %v821 = vpop.f32.mrb[0].mxu0
  %v822 = vpop.f32.mrb[0].mxu0
  %v823 = vadd.f32 0.0, %v822
  %v824 = vpop.f32.mrb[0].mxu0
  %825 = vmatprep.mubr.bf16.mxu0 %v749
  %826 = vmatmul.mubr.bf16.gmra.mrb[0].mxu0 %v748
  %v827 = vpop.f32.mrb[0].mxu0
  %v828 = vadd.f32 0.0, %v827
  %v829 = vpop.f32.mrb[0].mxu0
  %v830 = vpop.f32.mrb[0].mxu0
  %v831 = vadd.f32 0.0, %v830
  %v832 = vpop.f32.mrb[0].mxu0
  %833 = vmatprep.mubr.bf16.mxu0 %v752
  %834 = vmatmul.mubr.bf16.gmra.mrb[0].mxu0 %v751
  %v835 = vpop.f32.mrb[0].mxu0
  %v836 = vadd.f32 0.0, %v835
  %v837 = vpop.f32.mrb[0].mxu0
  %v838 = vpop.f32.mrb[0].mxu0
  %v839 = vadd.f32 0.0, %v838
  %v840 = vpop.f32.mrb[0].mxu0
  %841 = vmatprep.mubr.bf16.mxu0 %v755
  %842 = vmatmul.mubr.bf16.gmra.mrb[0].mxu0 %v754
  %v843 = vpop.f32.mrb[0].mxu0
  %v844 = vadd.f32 0.0, %v843
  %v845 = vpop.f32.mrb[0].mxu0
  %v846 = vpop.f32.mrb[0].mxu0
  %v847 = vadd.f32 0.0, %v846
  %v848 = vpop.f32.mrb[0].mxu0
  %849 = vmatprep.mubr.bf16.mxu0 %v758
  %850 = vmatmul.mubr.bf16.gmra.mrb[0].mxu0 %v757
  %v851 = vpop.f32.mrb[0].mxu0
  %v852 = vadd.f32 0.0, %v851
  %v853 = vpop.f32.mrb[0].mxu0
  %v854 = vpop.f32.mrb[0].mxu0
  %v855 = vadd.f32 0.0, %v854
  %v856 = vpop.f32.mrb[0].mxu0
  %857 = vdwg.mxu0
  %858 = vmatprep.subr.bf16.mxu0 0
  %859 = vmatpush1.bf16.msra.mxu0 %v235
  %860 = vmatprep.subr.bf16.mxu0 0
  %861 = vmatpush1.bf16.msra.mxu0 %v236
  %862 = vmatprep.subr.bf16.mxu0 0
  %863 = vmatpush1.bf16.msra.mxu0 0
  %864 = vmatprep.subr.bf16.mxu0 0
  %865 = vmatpush1.bf16.msra.mxu0 0
  %866 = vmatprep.subr.bf16.mxu0 0
  %867 = vmatpush1.bf16.msra.mxu0 0
  %868 = vmatprep.subr.bf16.mxu0 0
  %869 = vmatpush1.bf16.msra.mxu0 0
  %870 = vmatprep.subr.bf16.mxu0 0
  %871 = vmatpush1.bf16.msra.mxu0 0
  %872 = vmatprep.subr.bf16.mxu0 0
  %873 = vmatpush1.bf16.msra.mxu0 0
  %874 = vmatprep.subr.bf16.mxu0 0
  %875 = vmatpush1.bf16.msra.mxu0 0
  %876 = vmatprep.subr.bf16.mxu0 0
  %877 = vmatpush1.bf16.msra.mxu0 0
  %878 = vmatprep.subr.bf16.mxu0 0
  %879 = vmatpush1.bf16.msra.mxu0 0
  %880 = vmatprep.subr.bf16.mxu0 0
  %881 = vmatpush1.bf16.msra.mxu0 0
  %882 = vmatprep.subr.bf16.mxu0 0
  %883 = vmatpush1.bf16.msra.mxu0 0
  %884 = vmatprep.subr.bf16.mxu0 0
  %885 = vmatpush1.bf16.msra.mxu0 0
  %886 = vmatprep.subr.bf16.mxu0 0
  %887 = vmatpush1.bf16.msra.mxu0 0
  %888 = vmatprep.subr.bf16.mxu0 0
  %889 = vmatpush1.bf16.msra.mxu0 0
  %890 = vmatprep.mubr.bf16.mxu0 0
  %891 = vmatmul.mubr.bf16.gmra.mrb[0].mxu0 %v771
  %v892 = vpop.f32.mrb[0].mxu0
  %v893 = vadd.f32 %v820, %v892
  %v894 = vpop.f32.mrb[0].mxu0
  %v895 = vpop.f32.mrb[0].mxu0
  %v896 = vadd.f32 %v823, %v895
  %v897 = vpop.f32.mrb[0].mxu0
  %898 = vmatprep.mubr.bf16.mxu0 0
  %899 = vmatmul.mubr.bf16.gmra.mrb[0].mxu0 %v774
  %v900 = vpop.f32.mrb[0].mxu0
  %v901 = vadd.f32 %v828, %v900
  %v902 = vpop.f32.mrb[0].mxu0
  %v903 = vpop.f32.mrb[0].mxu0
  %v904 = vadd.f32 %v831, %v903
  %v905 = vpop.f32.mrb[0].mxu0
  %906 = vmatprep.mubr.bf16.mxu0 0
  %907 = vmatmul.mubr.bf16.gmra.mrb[0].mxu0 %v777
  %v908 = vpop.f32.mrb[0].mxu0
  %v909 = vadd.f32 %v836, %v908
  %v910 = vpop.f32.mrb[0].mxu0
  %v911 = vpop.f32.mrb[0].mxu0
  %v912 = vadd.f32 %v839, %v911
  %v913 = vpop.f32.mrb[0].mxu0
  %914 = vmatprep.mubr.bf16.mxu0 0
  %915 = vmatmul.mubr.bf16.gmra.mrb[0].mxu0 %v780
  %v916 = vpop.f32.mrb[0].mxu0
  %v917 = vadd.f32 %v844, %v916
  %v918 = vpop.f32.mrb[0].mxu0
  %v919 = vpop.f32.mrb[0].mxu0
  %v920 = vadd.f32 %v847, %v919
  %v921 = vpop.f32.mrb[0].mxu0
  %922 = vmatprep.mubr.bf16.mxu0 0
  %923 = vmatmul.mubr.bf16.gmra.mrb[0].mxu0 %v783
  %v924 = vpop.f32.mrb[0].mxu0
  %v925 = vadd.f32 %v852, %v924
  %v926 = vpop.f32.mrb[0].mxu0
  %v927 = vpop.f32.mrb[0].mxu0
  %v928 = vadd.f32 %v855, %v927
  %v929 = vpop.f32.mrb[0].mxu0
  %930 = vdwg.mxu0
  %s931 = scalar_lea.vmem %s0, 360
  %v932 = vld [vmem:[%s931] sm:$0xff]
  %v933 = vld [vmem:[%s931 + $0x8] sm:$0xf]
  %v934 = vld [vmem:[%s931 + $0xc] sm:$0xff]
  %v935 = vld [vmem:[%s931 + $0x14] sm:$0xf]
  %v936 = vld [vmem:[%s931 + $0x18] sm:$0xff]
  %v937 = vld [vmem:[%s931 + $0x20] sm:$0xf]
  %v938 = vld [vmem:[%s931 + $0x24] sm:$0xff]
  %v939 = vld [vmem:[%s931 + $0x2c] sm:$0xf]
  %v940 = vld [vmem:[%s931 + $0x30] sm:$0xff]
  %v941 = vld [vmem:[%s931 + $0x38] sm:$0xf]
  %v942 = vld [vmem:[%s931 + $0x3c] sm:$0xff]
  %v943 = vld [vmem:[%s931 + $0x44] sm:$0xf]
  %v944 = vld [vmem:[%s931 + $0x48] sm:$0xff]
  %v945 = vld [vmem:[%s931 + $0x50] sm:$0xf]
  %v946 = vld [vmem:[%s931 + $0x54] sm:$0xff]
  %v947 = vld [vmem:[%s931 + $0x5c] sm:$0xf]
  %v948 = vld [vmem:[%s931 + $0x60] sm:$0xff]
  %v949 = vld [vmem:[%s931 + $0x68] sm:$0xf]
  %v950 = vld [vmem:[%s931 + $0x6c] sm:$0xff]
  %v951 = vld [vmem:[%s931 + $0x74] sm:$0xf]
  %v972 = vunpack.c.l.b16 %v932
  %v973 = vunpack.c.h.b16 %v932
  %v974 = vunpack.c.l.b16 %v933
  %v975 = vunpack.c.l.b16 %v934
  %v976 = vunpack.c.h.b16 %v934
  %v977 = vunpack.c.l.b16 %v935
  %v978 = vunpack.c.l.b16 %v936
  %v979 = vunpack.c.h.b16 %v936
  %v980 = vunpack.c.l.b16 %v937
  %v981 = vunpack.c.l.b16 %v938
  %v982 = vunpack.c.h.b16 %v938
  %v983 = vunpack.c.l.b16 %v939
  %v984 = vunpack.c.l.b16 %v940
  %v985 = vunpack.c.h.b16 %v940
  %v986 = vunpack.c.l.b16 %v941
  %v987 = vunpack.c.l.b16 %v942
  %v988 = vunpack.c.h.b16 %v942
  %v989 = vunpack.c.l.b16 %v943
  %v990 = vunpack.c.l.b16 %v944
  %v991 = vunpack.c.h.b16 %v944
  %v992 = vunpack.c.l.b16 %v945
  %v993 = vunpack.c.l.b16 %v946
  %v994 = vunpack.c.h.b16 %v946
  %v995 = vunpack.c.l.b16 %v947
  %v996 = vunpack.c.l.b16 %v948
  %v997 = vunpack.c.h.b16 %v948
  %v998 = vunpack.c.l.b16 %v949
  %v999 = vunpack.c.l.b16 %v950
  %v1000 = vunpack.c.h.b16 %v950
  %v1001 = vunpack.c.l.b16 %v951
  %v1002 = vpack.c.b16 %v975, %v972
  %v1003 = vpack.c.b16 %v976, %v973
  %v1004 = vpack.c.b16 %v977, %v974
  %v1005 = vpack.c.b16 %v981, %v978
  %v1006 = vpack.c.b16 %v982, %v979
  %v1007 = vpack.c.b16 %v983, %v980
  %v1008 = vpack.c.b16 %v987, %v984
  %v1009 = vpack.c.b16 %v988, %v985
  %v1010 = vpack.c.b16 %v989, %v986
  %v1011 = vpack.c.b16 %v993, %v990
  %v1012 = vpack.c.b16 %v994, %v991
  %v1013 = vpack.c.b16 %v995, %v992
  %v1014 = vpack.c.b16 %v999, %v996
  %v1015 = vpack.c.b16 %v1000, %v997
  %v1016 = vpack.c.b16 %v1001, %v998
  %v1028 = vsel %vm255, %v1004, 0
  %v1031 = vsel %vm255, %v1007, 0
  %v1034 = vsel %vm255, %v1010, 0
  %v1037 = vsel %vm255, %v1013, 0
  %v1040 = vsel %vm255, %v1016, 0
  %1042 = vmatprep.subr.bf16.mxu0 0
  %1043 = vmatpush1.bf16.msra.mxu0 %v219
  %1044 = vmatprep.subr.bf16.mxu0 0
  %1045 = vmatpush1.bf16.msra.mxu0 %v220
  %1046 = vmatprep.subr.bf16.mxu0 0
  %1047 = vmatpush1.bf16.msra.mxu0 %v221
  %1048 = vmatprep.subr.bf16.mxu0 0
  %1049 = vmatpush1.bf16.msra.mxu0 %v222
  %1050 = vmatprep.subr.bf16.mxu0 0
  %1051 = vmatpush1.bf16.msra.mxu0 %v223
  %1052 = vmatprep.subr.bf16.mxu0 0
  %1053 = vmatpush1.bf16.msra.mxu0 %v224
  %1054 = vmatprep.subr.bf16.mxu0 0
  %1055 = vmatpush1.bf16.msra.mxu0 %v225
  %1056 = vmatprep.subr.bf16.mxu0 0
  %1057 = vmatpush1.bf16.msra.mxu0 %v226
  %1058 = vmatprep.subr.bf16.mxu0 0
  %1059 = vmatpush1.bf16.msra.mxu0 %v227
  %1060 = vmatprep.subr.bf16.mxu0 0
  %1061 = vmatpush1.bf16.msra.mxu0 %v228
  %1062 = vmatprep.subr.bf16.mxu0 0
  %1063 = vmatpush1.bf16.msra.mxu0 %v229
  %1064 = vmatprep.subr.bf16.mxu0 0
  %1065 = vmatpush1.bf16.msra.mxu0 %v230
  %1066 = vmatprep.subr.bf16.mxu0 0
  %1067 = vmatpush1.bf16.msra.mxu0 %v231
  %1068 = vmatprep.subr.bf16.mxu0 0
  %1069 = vmatpush1.bf16.msra.mxu0 %v232
  %1070 = vmatprep.subr.bf16.mxu0 0
  %1071 = vmatpush1.bf16.msra.mxu0 %v233
  %1072 = vmatprep.subr.bf16.mxu0 0
  %1073 = vmatpush1.bf16.msra.mxu0 %v234
  %1074 = vmatprep.mubr.bf16.mxu0 %v1003
  %1075 = vmatmul.mubr.bf16.gmra.mrb[0].mxu0 %v1002
  %v1076 = vpop.f32.mrb[0].mxu0
  %v1077 = vadd.f32 0.0, %v1076
  %v1078 = vpop.f32.mrb[0].mxu0
  %v1079 = vpop.f32.mrb[0].mxu0
  %v1080 = vadd.f32 0.0, %v1079
  %v1081 = vpop.f32.mrb[0].mxu0
  %1082 = vmatprep.mubr.bf16.mxu0 %v1006
  %1083 = vmatmul.mubr.bf16.gmra.mrb[0].mxu0 %v1005
  %v1084 = vpop.f32.mrb[0].mxu0
  %v1085 = vadd.f32 0.0, %v1084
  %v1086 = vpop.f32.mrb[0].mxu0
  %v1087 = vpop.f32.mrb[0].mxu0
  %v1088 = vadd.f32 0.0, %v1087
  %v1089 = vpop.f32.mrb[0].mxu0
  %1090 = vmatprep.mubr.bf16.mxu0 %v1009
  %1091 = vmatmul.mubr.bf16.gmra.mrb[0].mxu0 %v1008
  %v1092 = vpop.f32.mrb[0].mxu0
  %v1093 = vadd.f32 0.0, %v1092
  %v1094 = vpop.f32.mrb[0].mxu0
  %v1095 = vpop.f32.mrb[0].mxu0
  %v1096 = vadd.f32 0.0, %v1095
  %v1097 = vpop.f32.mrb[0].mxu0
  %1098 = vmatprep.mubr.bf16.mxu0 %v1012
  %1099 = vmatmul.mubr.bf16.gmra.mrb[0].mxu0 %v1011
  %v1100 = vpop.f32.mrb[0].mxu0
  %v1101 = vadd.f32 0.0, %v1100
  %v1102 = vpop.f32.mrb[0].mxu0
  %v1103 = vpop.f32.mrb[0].mxu0
  %v1104 = vadd.f32 0.0, %v1103
  %v1105 = vpop.f32.mrb[0].mxu0
  %1106 = vmatprep.mubr.bf16.mxu0 %v1015
  %1107 = vmatmul.mubr.bf16.gmra.mrb[0].mxu0 %v1014
  %v1108 = vpop.f32.mrb[0].mxu0
  %v1109 = vadd.f32 0.0, %v1108
  %v1110 = vpop.f32.mrb[0].mxu0
  %v1111 = vpop.f32.mrb[0].mxu0
  %v1112 = vadd.f32 0.0, %v1111
  %v1113 = vpop.f32.mrb[0].mxu0
  %1114 = vdwg.mxu0
  %1115 = vmatprep.subr.bf16.mxu0 0
  %1116 = vmatpush1.bf16.msra.mxu0 %v235
  %1117 = vmatprep.subr.bf16.mxu0 0
  %1118 = vmatpush1.bf16.msra.mxu0 %v236
  %1119 = vmatprep.subr.bf16.mxu0 0
  %1120 = vmatpush1.bf16.msra.mxu0 0
  %1121 = vmatprep.subr.bf16.mxu0 0
  %1122 = vmatpush1.bf16.msra.mxu0 0
  %1123 = vmatprep.subr.bf16.mxu0 0
  %1124 = vmatpush1.bf16.msra.mxu0 0
  %1125 = vmatprep.subr.bf16.mxu0 0
  %1126 = vmatpush1.bf16.msra.mxu0 0
  %1127 = vmatprep.subr.bf16.mxu0 0
  %1128 = vmatpush1.bf16.msra.mxu0 0
  %1129 = vmatprep.subr.bf16.mxu0 0
  %1130 = vmatpush1.bf16.msra.mxu0 0
  %1131 = vmatprep.subr.bf16.mxu0 0
  %1132 = vmatpush1.bf16.msra.mxu0 0
  %1133 = vmatprep.subr.bf16.mxu0 0
  %1134 = vmatpush1.bf16.msra.mxu0 0
  %1135 = vmatprep.subr.bf16.mxu0 0
  %1136 = vmatpush1.bf16.msra.mxu0 0
  %1137 = vmatprep.subr.bf16.mxu0 0
  %1138 = vmatpush1.bf16.msra.mxu0 0
  %1139 = vmatprep.subr.bf16.mxu0 0
  %1140 = vmatpush1.bf16.msra.mxu0 0
  %1141 = vmatprep.subr.bf16.mxu0 0
  %1142 = vmatpush1.bf16.msra.mxu0 0
  %1143 = vmatprep.subr.bf16.mxu0 0
  %1144 = vmatpush1.bf16.msra.mxu0 0
  %1145 = vmatprep.subr.bf16.mxu0 0
  %1146 = vmatpush1.bf16.msra.mxu0 0
  %1147 = vmatprep.mubr.bf16.mxu0 0
  %1148 = vmatmul.mubr.bf16.gmra.mrb[0].mxu0 %v1028
  %v1149 = vpop.f32.mrb[0].mxu0
  %v1150 = vadd.f32 %v1077, %v1149
  %v1151 = vpop.f32.mrb[0].mxu0
  %v1152 = vpop.f32.mrb[0].mxu0
  %v1153 = vadd.f32 %v1080, %v1152
  %v1154 = vpop.f32.mrb[0].mxu0
  %1155 = vmatprep.mubr.bf16.mxu0 0
  %1156 = vmatmul.mubr.bf16.gmra.mrb[0].mxu0 %v1031
  %v1157 = vpop.f32.mrb[0].mxu0
  %v1158 = vadd.f32 %v1085, %v1157
  %v1159 = vpop.f32.mrb[0].mxu0
  %v1160 = vpop.f32.mrb[0].mxu0
  %v1161 = vadd.f32 %v1088, %v1160
  %v1162 = vpop.f32.mrb[0].mxu0
  %1163 = vmatprep.mubr.bf16.mxu0 0
  %1164 = vmatmul.mubr.bf16.gmra.mrb[0].mxu0 %v1034
  %v1165 = vpop.f32.mrb[0].mxu0
  %v1166 = vadd.f32 %v1093, %v1165
  %v1167 = vpop.f32.mrb[0].mxu0
  %v1168 = vpop.f32.mrb[0].mxu0
  %v1169 = vadd.f32 %v1096, %v1168
  %v1170 = vpop.f32.mrb[0].mxu0
  %1171 = vmatprep.mubr.bf16.mxu0 0
  %1172 = vmatmul.mubr.bf16.gmra.mrb[0].mxu0 %v1037
  %v1173 = vpop.f32.mrb[0].mxu0
  %v1174 = vadd.f32 %v1101, %v1173
  %v1175 = vpop.f32.mrb[0].mxu0
  %v1176 = vpop.f32.mrb[0].mxu0
  %v1177 = vadd.f32 %v1104, %v1176
  %v1178 = vpop.f32.mrb[0].mxu0
  %1179 = vmatprep.mubr.bf16.mxu0 0
  %1180 = vmatmul.mubr.bf16.gmra.mrb[0].mxu0 %v1040
  %v1181 = vpop.f32.mrb[0].mxu0
  %v1182 = vadd.f32 %v1109, %v1181
  %v1183 = vpop.f32.mrb[0].mxu0
  %v1184 = vpop.f32.mrb[0].mxu0
  %v1185 = vadd.f32 %v1112, %v1184
  %v1186 = vpop.f32.mrb[0].mxu0
  %1187 = vdwg.mxu0
  %v1188 = vmax.f32 %v379, %v636
  %v1189 = vmax.f32 %v382, %v639
  %v1190 = vmax.f32 %v387, %v644
  %v1191 = vmax.f32 %v390, %v647
  %v1192 = vmax.f32 %v395, %v652
  %v1193 = vmax.f32 %v398, %v655
  %v1194 = vmax.f32 %v403, %v660
  %v1195 = vmax.f32 %v406, %v663
  %v1196 = vmax.f32 %v411, %v668
  %v1197 = vmax.f32 %v414, %v671
  %v1198 = vmax.f32 %v893, %v1150
  %v1199 = vmax.f32 %v896, %v1153
  %v1200 = vmax.f32 %v901, %v1158
  %v1201 = vmax.f32 %v904, %v1161
  %v1202 = vmax.f32 %v909, %v1166
  %v1203 = vmax.f32 %v912, %v1169
  %v1204 = vmax.f32 %v917, %v1174
  %v1205 = vmax.f32 %v920, %v1177
  %v1206 = vmax.f32 %v925, %v1182
  %v1207 = vmax.f32 %v928, %v1185
  %v1208 = vmax.f32 %v1188, %v1198
  %v1209 = vmax.f32 %v1189, %v1199
  %v1210 = vmax.f32 %v1190, %v1200
  %v1211 = vmax.f32 %v1191, %v1201
  %v1212 = vmax.f32 %v1192, %v1202
  %v1213 = vmax.f32 %v1193, %v1203
  %v1214 = vmax.f32 %v1194, %v1204
  %v1215 = vmax.f32 %v1195, %v1205
  %v1216 = vmax.f32 %v1196, %v1206
  %v1217 = vmax.f32 %v1197, %v1207
  %v1218 = vmax.f32 %v1208, 0.0
  %v1219 = vmax.f32 %v1209, 0.0
  %v1220 = vmax.f32 %v1210, 0.0
  %v1221 = vmax.f32 %v1211, 0.0
  %v1222 = vmax.f32 %v1212, 0.0
  %v1223 = vmax.f32 %v1213, 0.0
  %v1224 = vmax.f32 %v1214, 0.0
  %v1225 = vmax.f32 %v1215, 0.0
  %v1226 = vmax.f32 %v1216, 0.0
  %v1227 = vmax.f32 %v1217, 0.0
  %s1228 = sld [smem:[#allocation2]]
  %v1229 = vstv %s1228
  %v1230 = vmul.f32 %v1218, %v1229
  %v1231 = vmul.f32 %v1219, %v1229
  %v1232 = vmul.f32 %v1220, %v1229
  %v1233 = vmul.f32 %v1221, %v1229
  %v1234 = vmul.f32 %v1222, %v1229
  %v1235 = vmul.f32 %v1223, %v1229
  %v1236 = vmul.f32 %v1224, %v1229
  %v1237 = vmul.f32 %v1225, %v1229
  %v1238 = vmul.f32 %v1226, %v1229
  %v1239 = vmul.f32 %v1227, %v1229
  %v1240 = vpack.c.bf16 %v1231, %v1230
  %v1241 = vpack.c.bf16 %v1233, %v1232
  %v1242 = vpack.c.bf16 %v1235, %v1234
  %v1243 = vpack.c.bf16 %v1237, %v1236
  %v1244 = vpack.c.bf16 %v1239, %v1238
  %v1250 = vunpack.c.l.b16 %v1240
  %v1251 = vunpack.c.h.b16 %v1240
  %v1252 = vunpack.c.l.b16 %v1241
  %v1253 = vunpack.c.h.b16 %v1241
  %v1254 = vunpack.c.l.b16 %v1242
  %v1255 = vunpack.c.h.b16 %v1242
  %v1256 = vunpack.c.l.b16 %v1243
  %v1257 = vunpack.c.h.b16 %v1243
  %v1258 = vunpack.c.l.b16 %v1244
  %v1259 = vunpack.c.h.b16 %v1244
  %v1260 = vpack.c.b16 %v1250, %v1250
  %v1261 = vpack.c.b16 %v1251, %v1251
  %v1262 = vpack.c.b16 %v1252, %v1252
  %v1263 = vpack.c.b16 %v1253, %v1253
  %v1264 = vpack.c.b16 %v1254, %v1254
  %v1265 = vpack.c.b16 %v1255, %v1255
  %v1266 = vpack.c.b16 %v1256, %v1256
  %v1267 = vpack.c.b16 %v1257, %v1257
  %v1268 = vpack.c.b16 %v1258, %v1258
  %v1269 = vpack.c.b16 %v1259, %v1259
  %vm1280 = vcmask 519168
  %1281 = vst.msk [vmem:[%s3] sm:$0xf] %vm1280, %v1260
  %1282 = vst.msk [vmem:[%s3 + $0x4] sm:$0xf] %vm1280, %v1261
  %1283 = vst.msk [vmem:[%s3 + $0x8] sm:$0xf] %vm1280, %v1262
  %1284 = vst.msk [vmem:[%s3 + $0xc] sm:$0xf] %vm1280, %v1263
  %1285 = vst.msk [vmem:[%s3 + $0x10] sm:$0xf] %vm1280, %v1264
  %1286 = vst.msk [vmem:[%s3 + $0x14] sm:$0xf] %vm1280, %v1265
  %1287 = vst.msk [vmem:[%s3 + $0x18] sm:$0xf] %vm1280, %v1266
  %1288 = vst.msk [vmem:[%s3 + $0x1c] sm:$0xf] %vm1280, %v1267
  %1289 = vst.msk [vmem:[%s3 + $0x20] sm:$0xf] %vm1280, %v1268
  %1290 = vst.msk [vmem:[%s3 + $0x24] sm:$0xf] %vm1280, %v1269
  // Predicated region
  $region14: #{quantized_cnn_forward.4} parent=0 // pred_check
    _
  $region15: #{quantized_cnn_forward.4} parent=0 // pred_check_branch
    %1292 = sbr.rel (0) target = $region17
  $region16: #{quantized_cnn_forward.4} parent=0 // pred_region
    _
  $region17: #{quantized_cnn_forward.4} parent=0 // pred_fallthru
    _
  // Predicated region
  $region18: #{quantized_cnn_forward.4} parent=0 // pred_check
    _
  $region19: #{quantized_cnn_forward.4} parent=0 // pred_check_branch
    %1294 = sbr.rel (0) target = $region21
  $region20: #{quantized_cnn_forward.4} parent=0 // pred_region
    _
  $region21: #{quantized_cnn_forward.4} parent=0 // pred_fallthru
    _

// kernel: quantized_cnn_forward.5
$region0: #{quantized_cnn_forward.5}
  #allocation0 [shape = 'u32[]', space=smem, size = 0x4, offset = 0x4, fixed_abs, tag = 'smem constant byte address 0x4 - core index']
  #allocation1 [shape = 'u32[144,128]{1,0:T(1,128)}', space=vmem, size = 0x12000, scoped, tag = 'internal scratch']
  #allocation2 [shape = 'f32[1]{0:T(128)S(6)}', space=smem, size = 0x200, scoped, tag = 'scoped memory for quantized_cnn_forward.5']
  #allocation3 [shape = 'f32[1]{0:T(128)S(6)}', space=smem, size = 0x200, scoped, tag = 'scoped memory for quantized_cnn_forward.5']
  %s0 = inlined_call_operand.vmem [shape: bf16[2,2304], index: 0, kind: input, shape index: {}]
  %s1 = inlined_call_operand.vmem [shape: s8[2304,1024], index: 1, kind: input, shape index: {}]
  %s2 = inlined_call_operand.vmem [shape: s8[1024,128], index: 2, kind: input, shape index: {}]
  %s3 = inlined_call_operand.<no memory space> [shape: f32[1], index: 3, kind: input, shape index: {}]
  %s4 = inlined_call_operand.<no memory space> [shape: f32[1], index: 4, kind: input, shape index: {}]
  %s5 = inlined_call_operand.vmem [shape: f32[2,2,128], index: 5, kind: output, shape index: {}]
  %s6 = sld [smem:[#allocation0]]
  $region76: #{quantized_cnn_forward.5} parent=0
    _
  %s8 = ssub.s32 1, %s6
  %s9 = scalar_select 0, %s8, %s6
  %10 = sst [smem:[#allocation2]] %s3
  %11 = sst [smem:[#allocation3]] %s4
  $region1: #{quantized_cnn_forward.5} parent=0
    #allocation4 [shape = 'u8[2359296]{0}', space=vmem, size = 0x240000, scoped, tag = 'input window, operand 1']
    loop: start=0, step=1, limit=4
    $region2: #{quantized_cnn_forward.5} parent=1 // loop_pre_header
      _
    $region3: #{quantized_cnn_forward.5} parent=1 // loop_header
      %s13 = sphi 0, %s17
      %p14 = scmp.ge.s32.totalorder %s13, 4
      %s21 = sphi 0, %s21
      %s23 = sphi 0, %s21
      %s24 = sphi 0, %s23
      %s38 = sphi 0, %s24
      %s44 = sphi 0, %s46
      %s47 = sphi 0, %s44
      %s48 = sphi 0, %s47
      %s64 = sphi 0, %s48
      %s70 = sphi 0, %s72
      %s73 = sphi 0, %s70
      %s74 = sphi 0, %s73
      %s90 = sphi 0, %s74
      %s94 = sphi 0, %s94
      %s96 = sphi 0, %s94
      %s97 = sphi 0, %s96
      %s111 = sphi 0, %s97
      %s115 = sphi 0, %s115
      %s117 = sphi 0, %s115
      %s118 = sphi 0, %s117
      %s132 = sphi 0, %s118
      %s138 = sphi 0, %s140
      %s141 = sphi 0, %s138
      %s142 = sphi 0, %s141
      %s158 = sphi 0, %s142
    $region4: #{quantized_cnn_forward.5} parent=1 // loop_header_branch
      %16 = sbr.rel (%p14) target = $region8
    $region5: #{quantized_cnn_forward.5} parent=1 // loop_body
      %s18 = ssub.s32 %s13, 1
      %s19 = ssub.s32 %s13, 2
      %s20 = sadd.s32 %s13, 1
      %s22 = sadd.s32 %s21, 1
      %p25 = scmp.eq.s32.totalorder %s13, 1
      %p26 = scmp.ne.s32.totalorder %s21, %s23
      %p27 = scmp.eq.s32.totalorder %s13, 0
      %p28 = por %p26, %p27
      %p29 = scmp.ne.s32.totalorder %s21, %s23
      %p30 = scmp.eq.s32.totalorder %s18, 1
      %p31 = por %p29, %p30
      %p32 = scmp.ne.s32.totalorder %s23, %s24
      %p33 = scmp.eq.s32.totalorder %s18, 0
      %p34 = por %p32, %p33
      %p35 = scmp.ne.s32.totalorder %s23, %s24
      %p36 = scmp.eq.s32.totalorder %s19, 1
      %p37 = por %p35, %p36
      %p39 = scmp.ne.s32.totalorder %s24, %s38
      %p40 = scmp.eq.s32.totalorder %s19, 0
      %p41 = por %p39, %p40
      %s42 = ssub.s32 %s13, %s20
      %p43 = scmp.eq.s32.totalorder %s42, 0
      %s45 = sadd.s32 %s44, 1
      %s46 = scalar_select %p43, %s44, %s45
      %p49 = pneg %p43
      %p50 = scmp.eq.s32.totalorder %s13, 1
      %p51 = por %p49, %p50
      %p52 = scmp.ne.s32.totalorder %s44, %s47
      %p53 = scmp.eq.s32.totalorder %s13, 0
      %p54 = por %p52, %p53
      %p55 = scmp.ne.s32.totalorder %s44, %s47
      %p56 = scmp.eq.s32.totalorder %s18, 1
      %p57 = por %p55, %p56
      %p58 = scmp.ne.s32.totalorder %s47, %s48
      %p59 = scmp.eq.s32.totalorder %s18, 0
      %p60 = por %p58, %p59
      %p61 = scmp.ne.s32.totalorder %s47, %s48
      %p62 = scmp.eq.s32.totalorder %s19, 1
      %p63 = por %p61, %p62
      %p65 = scmp.ne.s32.totalorder %s48, %s64
      %p66 = scmp.eq.s32.totalorder %s19, 0
      %p67 = por %p65, %p66
      %s68 = ssub.s32 %s13, %s20
      %p69 = scmp.eq.s32.totalorder %s68, 0
      %s71 = sadd.s32 %s70, 1
      %s72 = scalar_select %p69, %s70, %s71
      %p75 = pneg %p69
      %p76 = scmp.eq.s32.totalorder %s13, 1
      %p77 = por %p75, %p76
      %p78 = scmp.ne.s32.totalorder %s70, %s73
      %p79 = scmp.eq.s32.totalorder %s13, 0
      %p80 = por %p78, %p79
      %p81 = scmp.ne.s32.totalorder %s70, %s73
      %p82 = scmp.eq.s32.totalorder %s18, 1
      %p83 = por %p81, %p82
      %p84 = scmp.ne.s32.totalorder %s73, %s74
      %p85 = scmp.eq.s32.totalorder %s18, 0
      %p86 = por %p84, %p85
      %p87 = scmp.ne.s32.totalorder %s73, %s74
      %p88 = scmp.eq.s32.totalorder %s19, 1
      %p89 = por %p87, %p88
      %p91 = scmp.ne.s32.totalorder %s74, %s90
      %p92 = scmp.eq.s32.totalorder %s19, 0
      %p93 = por %p91, %p92
      %s95 = sadd.s32 %s94, 1
      %p98 = scmp.eq.s32.totalorder %s13, 1
      %p99 = scmp.ne.s32.totalorder %s94, %s96
      %p100 = scmp.eq.s32.totalorder %s13, 0
      %p101 = por %p99, %p100
      %p102 = scmp.ne.s32.totalorder %s94, %s96
      %p103 = scmp.eq.s32.totalorder %s18, 1
      %p104 = por %p102, %p103
      %p105 = scmp.ne.s32.totalorder %s96, %s97
      %p106 = scmp.eq.s32.totalorder %s18, 0
      %p107 = por %p105, %p106
      %p108 = scmp.ne.s32.totalorder %s96, %s97
      %p109 = scmp.eq.s32.totalorder %s19, 1
      %p110 = por %p108, %p109
      %p112 = scmp.ne.s32.totalorder %s97, %s111
      %p113 = scmp.eq.s32.totalorder %s19, 0
      %p114 = por %p112, %p113
      %s116 = sadd.s32 %s115, 1
      %p119 = scmp.eq.s32.totalorder %s13, 1
      %p120 = scmp.ne.s32.totalorder %s115, %s117
      %p121 = scmp.eq.s32.totalorder %s13, 0
      %p122 = por %p120, %p121
      %p123 = scmp.ne.s32.totalorder %s115, %s117
      %p124 = scmp.eq.s32.totalorder %s18, 1
      %p125 = por %p123, %p124
      %p126 = scmp.ne.s32.totalorder %s117, %s118
      %p127 = scmp.eq.s32.totalorder %s18, 0
      %p128 = por %p126, %p127
      %p129 = scmp.ne.s32.totalorder %s117, %s118
      %p130 = scmp.eq.s32.totalorder %s19, 1
      %p131 = por %p129, %p130
      %p133 = scmp.ne.s32.totalorder %s118, %s132
      %p134 = scmp.eq.s32.totalorder %s19, 0
      %p135 = por %p133, %p134
      %s136 = ssub.s32 %s13, %s20
      %p137 = scmp.eq.s32.totalorder %s136, 0
      %s139 = sadd.s32 %s138, 1
      %s140 = scalar_select %p137, %s138, %s139
      %p143 = pneg %p137
      %p144 = scmp.eq.s32.totalorder %s13, 1
      %p145 = por %p143, %p144
      %p146 = scmp.ne.s32.totalorder %s138, %s141
      %p147 = scmp.eq.s32.totalorder %s13, 0
      %p148 = por %p146, %p147
      %p149 = scmp.ne.s32.totalorder %s138, %s141
      %p150 = scmp.eq.s32.totalorder %s18, 1
      %p151 = por %p149, %p150
      %p152 = scmp.ne.s32.totalorder %s141, %s142
      %p153 = scmp.eq.s32.totalorder %s18, 0
      %p154 = por %p152, %p153
      %p155 = scmp.ne.s32.totalorder %s141, %s142
      %p156 = scmp.eq.s32.totalorder %s19, 1
      %p157 = por %p155, %p156
      %p159 = scmp.ne.s32.totalorder %s142, %s158
      %p160 = scmp.eq.s32.totalorder %s19, 0
      %p161 = por %p159, %p160
      %p162 = scmp.le.s32.totalorder 1, %s13
      %p163 = scmp.lt.s32.totalorder %s13, 3
      %p164 = pnand %p162, %p163
      %p165 = pneg %p164
      // Predicated region
      $region9: #{quantized_cnn_forward.5} parent=5 // pred_check
        _
      $region10: #{quantized_cnn_forward.5} parent=5 // pred_check_branch
        %167 = sbr.rel (%p164) target = $region12
      $region11: #{quantized_cnn_forward.5} parent=5 // pred_region
        %s168 = ssub.s32 %s13, 1
        // Predicated region
        $region13: #{quantized_cnn_forward.5} parent=11 // pred_check
          %p169 = pneg %p34
        $region14: #{quantized_cnn_forward.5} parent=11 // pred_check_branch
          %171 = sbr.rel (%p169) target = $region16
        $region15: #{quantized_cnn_forward.5} parent=11 // pred_region
          _
        $region16: #{quantized_cnn_forward.5} parent=11 // pred_fallthru
          _
        // Predicated region
        $region17: #{quantized_cnn_forward.5} parent=11 // pred_check
          %p172 = pneg %p107
        $region18: #{quantized_cnn_forward.5} parent=11 // pred_check_branch
          %174 = sbr.rel (%p172) target = $region20
        $region19: #{quantized_cnn_forward.5} parent=11 // pred_region
          _
        $region20: #{quantized_cnn_forward.5} parent=11 // pred_fallthru
          _
        // Predicated region
        $region21: #{quantized_cnn_forward.5} parent=11 // pred_check
          %p175 = pneg %p128
        $region22: #{quantized_cnn_forward.5} parent=11 // pred_check_branch
          %177 = sbr.rel (%p175) target = $region24
        $region23: #{quantized_cnn_forward.5} parent=11 // pred_region
          _
        $region24: #{quantized_cnn_forward.5} parent=11 // pred_fallthru
          _
      $region12: #{quantized_cnn_forward.5} parent=5 // pred_fallthru
        _
      %p178 = scmp.lt.s32.totalorder %s13, 2
      // Predicated region
      $region25: #{quantized_cnn_forward.5} parent=5 // pred_check
        %p179 = pneg %p178
      $region26: #{quantized_cnn_forward.5} parent=5 // pred_check_branch
        %181 = sbr.rel (%p179) target = $region28
      $region27: #{quantized_cnn_forward.5} parent=5 // pred_region
        // Predicated region
        $region29: #{quantized_cnn_forward.5} parent=27 // pred_check
          %p182 = pneg %p54
        $region30: #{quantized_cnn_forward.5} parent=27 // pred_check_branch
          %184 = sbr.rel (%p182) target = $region32
        $region31: #{quantized_cnn_forward.5} parent=27 // pred_region
          %s185 = sand.u32 %s44, 1
          %s186 = sand.u32 %s44, 1
          %s187 = smul.addr %s186, 2304
          %s188 = scalar_lea.vmem [#allocation4], %s187
          %s189 = smul.u32 4, %s13
          %s190 = smul.addr %s189, 8
          %s191 = scalar_lea.vmem %s1, %s190
          // Predicated region
          $region33: #{quantized_cnn_forward.5} parent=31 // pred_check
            _
          $region34: #{quantized_cnn_forward.5} parent=31 // pred_check_branch
            %193 = sbr.rel (0) target = $region36
          $region35: #{quantized_cnn_forward.5} parent=31 // pred_region
            // Predicated region
            $region37: #{quantized_cnn_forward.5} parent=35 // pred_check
              _
            $region38: #{quantized_cnn_forward.5} parent=35 // pred_check_branch
              %195 = sbr.rel (0) target = $region40
            $region39: #{quantized_cnn_forward.5} parent=35 // pred_region
              loop: start=0, step=1, limit=1
              $region41: #{quantized_cnn_forward.5} parent=39 // loop_pre_header
                _
              $region42: #{quantized_cnn_forward.5} parent=39 // loop_header
                %s197 = sphi 0, %s201
                %p198 = scmp.ge.s32.totalorder %s197, 1
                %s202 = sphi %s191, %s191
                %s203 = sphi %s188, %s188
              $region43: #{quantized_cnn_forward.5} parent=39 // loop_header_branch
                %200 = sbr.rel (%p198) target = $region47
              $region44: #{quantized_cnn_forward.5} parent=39 // loop_body
                %v204 = vld [vmem:[%s202] sm:$0xff]
                %205 = vst [vmem:[%s203] sm:$0xff] %v204
                %v206 = vld [vmem:[%s202 + $0x8] sm:$0xff]
                %207 = vst [vmem:[%s203 + $0x8] sm:$0xff] %v206
                %v208 = vld [vmem:[%s202 + $0x10] sm:$0xff]
                %209 = vst [vmem:[%s203 + $0x10] sm:$0xff] %v208
                %v210 = vld [vmem:[%s202 + $0x18] sm:$0xff]
                %211 = vst [vmem:[%s203 + $0x18] sm:$0xff] %v210
                %v212 = vld [vmem:[%s202 + $0x40] sm:$0xff]
                %213 = vst [vmem:[%s203 + $0x20] sm:$0xff] %v212
                %v214 = vld [vmem:[%s202 + $0x48] sm:$0xff]
                %215 = vst [vmem:[%s203 + $0x28] sm:$0xff] %v214
                %v216 = vld [vmem:[%s202 + $0x50] sm:$0xff]
                %217 = vst [vmem:[%s203 + $0x30] sm:$0xff] %v216
                %v218 = vld [vmem:[%s202 + $0x58] sm:$0xff]
                %219 = vst [vmem:[%s203 + $0x38] sm:$0xff] %v218
                %v220 = vld [vmem:[%s202 + $0x80] sm:$0xff]
                %221 = vst [vmem:[%s203 + $0x40] sm:$0xff] %v220
                %v222 = vld [vmem:[%s202 + $0x88] sm:$0xff]
                %223 = vst [vmem:[%s203 + $0x48] sm:$0xff] %v222
                %v224 = vld [vmem:[%s202 + $0x90] sm:$0xff]
                %225 = vst [vmem:[%s203 + $0x50] sm:$0xff] %v224
                %v226 = vld [vmem:[%s202 + $0x98] sm:$0xff]
                %227 = vst [vmem:[%s203 + $0x58] sm:$0xff] %v226
                %v228 = vld [vmem:[%s202 + $0xc0] sm:$0xff]
                %229 = vst [vmem:[%s203 + $0x60] sm:$0xff] %v228
                %v230 = vld [vmem:[%s202 + $0xc8] sm:$0xff]
                %231 = vst [vmem:[%s203 + $0x68] sm:$0xff] %v230
                %v232 = vld [vmem:[%s202 + $0xd0] sm:$0xff]
                %233 = vst [vmem:[%s203 + $0x70] sm:$0xff] %v232
                %v234 = vld [vmem:[%s202 + $0xd8] sm:$0xff]
                %235 = vst [vmem:[%s203 + $0x78] sm:$0xff] %v234
                %v236 = vld [vmem:[%s202 + $0x100] sm:$0xff]
                %237 = vst [vmem:[%s203 + $0x80] sm:$0xff] %v236
                %v238 = vld [vmem:[%s202 + $0x108] sm:$0xff]
                %239 = vst [vmem:[%s203 + $0x88] sm:$0xff] %v238
                %v240 = vld [vmem:[%s202 + $0x110] sm:$0xff]
                %241 = vst [vmem:[%s203 + $0x90] sm:$0xff] %v240
                %v242 = vld [vmem:[%s202 + $0x118] sm:$0xff]
                %243 = vst [vmem:[%s203 + $0x98] sm:$0xff] %v242
                %v244 = vld [vmem:[%s202 + $0x140] sm:$0xff]
                %245 = vst [vmem:[%s203 + $0xa0] sm:$0xff] %v244
                %v246 = vld [vmem:[%s202 + $0x148] sm:$0xff]
                %247 = vst [vmem:[%s203 + $0xa8] sm:$0xff] %v246
                %v248 = vld [vmem:[%s202 + $0x150] sm:$0xff]
                %249 = vst [vmem:[%s203 + $0xb0] sm:$0xff] %v248
                %v250 = vld [vmem:[%s202 + $0x158] sm:$0xff]
                %251 = vst [vmem:[%s203 + $0xb8] sm:$0xff] %v250
                %v252 = vld [vmem:[%s202 + $0x180] sm:$0xff]
                %253 = vst [vmem:[%s203 + $0xc0] sm:$0xff] %v252
                %v254 = vld [vmem:[%s202 + $0x188] sm:$0xff]
                %255 = vst [vmem:[%s203 + $0xc8] sm:$0xff] %v254
                %v256 = vld [vmem:[%s202 + $0x190] sm:$0xff]
                %257 = vst [vmem:[%s203 + $0xd0] sm:$0xff] %v256
                %v258 = vld [vmem:[%s202 + $0x198] sm:$0xff]
                %259 = vst [vmem:[%s203 + $0xd8] sm:$0xff] %v258
                %v260 = vld [vmem:[%s202 + $0x1c0] sm:$0xff]
                %261 = vst [vmem:[%s203 + $0xe0] sm:$0xff] %v260
                %v262 = vld [vmem:[%s202 + $0x1c8] sm:$0xff]
                %263 = vst [vmem:[%s203 + $0xe8] sm:$0xff] %v262
                %v264 = vld [vmem:[%s202 + $0x1d0] sm:$0xff]
                %265 = vst [vmem:[%s203 + $0xf0] sm:$0xff] %v264
                %v266 = vld [vmem:[%s202 + $0x1d8] sm:$0xff]
                %267 = vst [vmem:[%s203 + $0xf8] sm:$0xff] %v266
                %v268 = vld [vmem:[%s202 + $0x200] sm:$0xff]
                %269 = vst [vmem:[%s203 + $0x100] sm:$0xff] %v268
                %v270 = vld [vmem:[%s202 + $0x208] sm:$0xff]
                %271 = vst [vmem:[%s203 + $0x108] sm:$0xff] %v270
                %v272 = vld [vmem:[%s202 + $0x210] sm:$0xff]
                %273 = vst [vmem:[%s203 + $0x110] sm:$0xff] %v272
                %v274 = vld [vmem:[%s202 + $0x218] sm:$0xff]
                %275 = vst [vmem:[%s203 + $0x118] sm:$0xff] %v274
                %v276 = vld [vmem:[%s202 + $0x240] sm:$0xff]
                %277 = vst [vmem:[%s203 + $0x120] sm:$0xff] %v276
                %v278 = vld [vmem:[%s202 + $0x248] sm:$0xff]
                %279 = vst [vmem:[%s203 + $0x128] sm:$0xff] %v278
                %v280 = vld [vmem:[%s202 + $0x250] sm:$0xff]
                %281 = vst [vmem:[%s203 + $0x130] sm:$0xff] %v280
                %v282 = vld [vmem:[%s202 + $0x258] sm:$0xff]
                %283 = vst [vmem:[%s203 + $0x138] sm:$0xff] %v282
                %v284 = vld [vmem:[%s202 + $0x280] sm:$0xff]
                %285 = vst [vmem:[%s203 + $0x140] sm:$0xff] %v284
                %v286 = vld [vmem:[%s202 + $0x288] sm:$0xff]
                %287 = vst [vmem:[%s203 + $0x148] sm:$0xff] %v286
                %v288 = vld [vmem:[%s202 + $0x290] sm:$0xff]
                %289 = vst [vmem:[%s203 + $0x150] sm:$0xff] %v288
                %v290 = vld [vmem:[%s202 + $0x298] sm:$0xff]
                %291 = vst [vmem:[%s203 + $0x158] sm:$0xff] %v290
                %v292 = vld [vmem:[%s202 + $0x2c0] sm:$0xff]
                %293 = vst [vmem:[%s203 + $0x160] sm:$0xff] %v292
                %v294 = vld [vmem:[%s202 + $0x2c8] sm:$0xff]
                %295 = vst [vmem:[%s203 + $0x168] sm:$0xff] %v294
                %v296 = vld [vmem:[%s202 + $0x2d0] sm:$0xff]
                %297 = vst [vmem:[%s203 + $0x170] sm:$0xff] %v296
                %v298 = vld [vmem:[%s202 + $0x2d8] sm:$0xff]
                %299 = vst [vmem:[%s203 + $0x178] sm:$0xff] %v298
                %v300 = vld [vmem:[%s202 + $0x300] sm:$0xff]
                %301 = vst [vmem:[%s203 + $0x180] sm:$0xff] %v300
                %v302 = vld [vmem:[%s202 + $0x308] sm:$0xff]
                %303 = vst [vmem:[%s203 + $0x188] sm:$0xff] %v302
                %v304 = vld [vmem:[%s202 + $0x310] sm:$0xff]
                %305 = vst [vmem:[%s203 + $0x190] sm:$0xff] %v304
                %v306 = vld [vmem:[%s202 + $0x318] sm:$0xff]
                %307 = vst [vmem:[%s203 + $0x198] sm:$0xff] %v306
                %v308 = vld [vmem:[%s202 + $0x340] sm:$0xff]
                %309 = vst [vmem:[%s203 + $0x1a0] sm:$0xff] %v308
                %v310 = vld [vmem:[%s202 + $0x348] sm:$0xff]
                %311 = vst [vmem:[%s203 + $0x1a8] sm:$0xff] %v310
                %v312 = vld [vmem:[%s202 + $0x350] sm:$0xff]
                %313 = vst [vmem:[%s203 + $0x1b0] sm:$0xff] %v312
                %v314 = vld [vmem:[%s202 + $0x358] sm:$0xff]
                %315 = vst [vmem:[%s203 + $0x1b8] sm:$0xff] %v314
                %v316 = vld [vmem:[%s202 + $0x380] sm:$0xff]
                %317 = vst [vmem:[%s203 + $0x1c0] sm:$0xff] %v316
                %v318 = vld [vmem:[%s202 + $0x388] sm:$0xff]
                %319 = vst [vmem:[%s203 + $0x1c8] sm:$0xff] %v318
                %v320 = vld [vmem:[%s202 + $0x390] sm:$0xff]
                %321 = vst [vmem:[%s203 + $0x1d0] sm:$0xff] %v320
                %v322 = vld [vmem:[%s202 + $0x398] sm:$0xff]
                %323 = vst [vmem:[%s203 + $0x1d8] sm:$0xff] %v322
                %v324 = vld [vmem:[%s202 + $0x3c0] sm:$0xff]
                %325 = vst [vmem:[%s203 + $0x1e0] sm:$0xff] %v324
                %v326 = vld [vmem:[%s202 + $0x3c8] sm:$0xff]
                %327 = vst [vmem:[%s203 + $0x1e8] sm:$0xff] %v326
                %v328 = vld [vmem:[%s202 + $0x3d0] sm:$0xff]
                %329 = vst [vmem:[%s203 + $0x1f0] sm:$0xff] %v328
                %v330 = vld [vmem:[%s202 + $0x3d8] sm:$0xff]
                %331 = vst [vmem:[%s203 + $0x1f8] sm:$0xff] %v330
                %v332 = vld [vmem:[%s202 + $0x400] sm:$0xff]
                %333 = vst [vmem:[%s203 + $0x200] sm:$0xff] %v332
                %v334 = vld [vmem:[%s202 + $0x408] sm:$0xff]
                %335 = vst [vmem:[%s203 + $0x208] sm:$0xff] %v334
                %v336 = vld [vmem:[%s202 + $0x410] sm:$0xff]
                %337 = vst [vmem:[%s203 + $0x210] sm:$0xff] %v336
                %v338 = vld [vmem:[%s202 + $0x418] sm:$0xff]
                %339 = vst [vmem:[%s203 + $0x218] sm:$0xff] %v338
                %v340 = vld [vmem:[%s202 + $0x440] sm:$0xff]
                %341 = vst [vmem:[%s203 + $0x220] sm:$0xff] %v340
                %v342 = vld [vmem:[%s202 + $0x448] sm:$0xff]
                %343 = vst [vmem:[%s203 + $0x228] sm:$0xff] %v342
                %v344 = vld [vmem:[%s202 + $0x450] sm:$0xff]
                %345 = vst [vmem:[%s203 + $0x230] sm:$0xff] %v344
                %v346 = vld [vmem:[%s202 + $0x458] sm:$0xff]
                %347 = vst [vmem:[%s203 + $0x238] sm:$0xff] %v346
                %v348 = vld [vmem:[%s202 + $0x480] sm:$0xff]
                %349 = vst [vmem:[%s203 + $0x240] sm:$0xff] %v348
                %v350 = vld [vmem:[%s202 + $0x488] sm:$0xff]
                %351 = vst [vmem:[%s203 + $0x248] sm:$0xff] %v350
                %v352 = vld [vmem:[%s202 + $0x490] sm:$0xff]
                %353 = vst [vmem:[%s203 + $0x250] sm:$0xff] %v352
                %v354 = vld [vmem:[%s202 + $0x498] sm:$0xff]
                %355 = vst [vmem:[%s203 + $0x258] sm:$0xff] %v354
                %v356 = vld [vmem:[%s202 + $0x4c0] sm:$0xff]
                %357 = vst [vmem:[%s203 + $0x260] sm:$0xff] %v356
                %v358 = vld [vmem:[%s202 + $0x4c8] sm:$0xff]
                %359 = vst [vmem:[%s203 + $0x268] sm:$0xff] %v358
                %v360 = vld [vmem:[%s202 + $0x4d0] sm:$0xff]
                %361 = vst [vmem:[%s203 + $0x270] sm:$0xff] %v360
                %v362 = vld [vmem:[%s202 + $0x4d8] sm:$0xff]
                %363 = vst [vmem:[%s203 + $0x278] sm:$0xff] %v362
                %v364 = vld [vmem:[%s202 + $0x500] sm:$0xff]
                %365 = vst [vmem:[%s203 + $0x280] sm:$0xff] %v364
                %v366 = vld [vmem:[%s202 + $0x508] sm:$0xff]
                %367 = vst [vmem:[%s203 + $0x288] sm:$0xff] %v366
                %v368 = vld [vmem:[%s202 + $0x510] sm:$0xff]
                %369 = vst [vmem:[%s203 + $0x290] sm:$0xff] %v368
                %v370 = vld [vmem:[%s202 + $0x518] sm:$0xff]
                %371 = vst [vmem:[%s203 + $0x298] sm:$0xff] %v370
                %v372 = vld [vmem:[%s202 + $0x540] sm:$0xff]
                %373 = vst [vmem:[%s203 + $0x2a0] sm:$0xff] %v372
                %v374 = vld [vmem:[%s202 + $0x548] sm:$0xff]
                %375 = vst [vmem:[%s203 + $0x2a8] sm:$0xff] %v374
                %v376 = vld [vmem:[%s202 + $0x550] sm:$0xff]
                %377 = vst [vmem:[%s203 + $0x2b0] sm:$0xff] %v376
                %v378 = vld [vmem:[%s202 + $0x558] sm:$0xff]
                %379 = vst [vmem:[%s203 + $0x2b8] sm:$0xff] %v378
                %v380 = vld [vmem:[%s202 + $0x580] sm:$0xff]
                %381 = vst [vmem:[%s203 + $0x2c0] sm:$0xff] %v380
                %v382 = vld [vmem:[%s202 + $0x588] sm:$0xff]
                %383 = vst [vmem:[%s203 + $0x2c8] sm:$0xff] %v382
                %v384 = vld [vmem:[%s202 + $0x590] sm:$0xff]
                %385 = vst [vmem:[%s203 + $0x2d0] sm:$0xff] %v384
                %v386 = vld [vmem:[%s202 + $0x598] sm:$0xff]
                %387 = vst [vmem:[%s203 + $0x2d8] sm:$0xff] %v386
                %v388 = vld [vmem:[%s202 + $0x5c0] sm:$0xff]
                %389 = vst [vmem:[%s203 + $0x2e0] sm:$0xff] %v388
                %v390 = vld [vmem:[%s202 + $0x5c8] sm:$0xff]
                %391 = vst [vmem:[%s203 + $0x2e8] sm:$0xff] %v390
                %v392 = vld [vmem:[%s202 + $0x5d0] sm:$0xff]
                %393 = vst [vmem:[%s203 + $0x2f0] sm:$0xff] %v392
                %v394 = vld [vmem:[%s202 + $0x5d8] sm:$0xff]
                %395 = vst [vmem:[%s203 + $0x2f8] sm:$0xff] %v394
                %v396 = vld [vmem:[%s202 + $0x600] sm:$0xff]
                %397 = vst [vmem:[%s203 + $0x300] sm:$0xff] %v396
                %v398 = vld [vmem:[%s202 + $0x608] sm:$0xff]
                %399 = vst [vmem:[%s203 + $0x308] sm:$0xff] %v398
                %v400 = vld [vmem:[%s202 + $0x610] sm:$0xff]
                %401 = vst [vmem:[%s203 + $0x310] sm:$0xff] %v400
                %v402 = vld [vmem:[%s202 + $0x618] sm:$0xff]
                %403 = vst [vmem:[%s203 + $0x318] sm:$0xff] %v402
                %v404 = vld [vmem:[%s202 + $0x640] sm:$0xff]
                %405 = vst [vmem:[%s203 + $0x320] sm:$0xff] %v404
                %v406 = vld [vmem:[%s202 + $0x648] sm:$0xff]
                %407 = vst [vmem:[%s203 + $0x328] sm:$0xff] %v406
                %v408 = vld [vmem:[%s202 + $0x650] sm:$0xff]
                %409 = vst [vmem:[%s203 + $0x330] sm:$0xff] %v408
                %v410 = vld [vmem:[%s202 + $0x658] sm:$0xff]
                %411 = vst [vmem:[%s203 + $0x338] sm:$0xff] %v410
                %v412 = vld [vmem:[%s202 + $0x680] sm:$0xff]
                %413 = vst [vmem:[%s203 + $0x340] sm:$0xff] %v412
                %v414 = vld [vmem:[%s202 + $0x688] sm:$0xff]
                %415 = vst [vmem:[%s203 + $0x348] sm:$0xff] %v414
                %v416 = vld [vmem:[%s202 + $0x690] sm:$0xff]
                %417 = vst [vmem:[%s203 + $0x350] sm:$0xff] %v416
                %v418 = vld [vmem:[%s202 + $0x698] sm:$0xff]
                %419 = vst [vmem:[%s203 + $0x358] sm:$0xff] %v418
                %v420 = vld [vmem:[%s202 + $0x6c0] sm:$0xff]
                %421 = vst [vmem:[%s203 + $0x360] sm:$0xff] %v420
                %v422 = vld [vmem:[%s202 + $0x6c8] sm:$0xff]
                %423 = vst [vmem:[%s203 + $0x368] sm:$0xff] %v422
                %v424 = vld [vmem:[%s202 + $0x6d0] sm:$0xff]
                %425 = vst [vmem:[%s203 + $0x370] sm:$0xff] %v424
                %v426 = vld [vmem:[%s202 + $0x6d8] sm:$0xff]
                %427 = vst [vmem:[%s203 + $0x378] sm:$0xff] %v426
                %v428 = vld [vmem:[%s202 + $0x700] sm:$0xff]
                %429 = vst [vmem:[%s203 + $0x380] sm:$0xff] %v428
                %v430 = vld [vmem:[%s202 + $0x708] sm:$0xff]
                %431 = vst [vmem:[%s203 + $0x388] sm:$0xff] %v430
                %v432 = vld [vmem:[%s202 + $0x710] sm:$0xff]
                %433 = vst [vmem:[%s203 + $0x390] sm:$0xff] %v432
                %v434 = vld [vmem:[%s202 + $0x718] sm:$0xff]
                %435 = vst [vmem:[%s203 + $0x398] sm:$0xff] %v434
                %v436 = vld [vmem:[%s202 + $0x740] sm:$0xff]
                %437 = vst [vmem:[%s203 + $0x3a0] sm:$0xff] %v436
                %v438 = vld [vmem:[%s202 + $0x748] sm:$0xff]
                %439 = vst [vmem:[%s203 + $0x3a8] sm:$0xff] %v438
                %v440 = vld [vmem:[%s202 + $0x750] sm:$0xff]
                %441 = vst [vmem:[%s203 + $0x3b0] sm:$0xff] %v440
                %v442 = vld [vmem:[%s202 + $0x758] sm:$0xff]
                %443 = vst [vmem:[%s203 + $0x3b8] sm:$0xff] %v442
                %v444 = vld [vmem:[%s202 + $0x780] sm:$0xff]
                %445 = vst [vmem:[%s203 + $0x3c0] sm:$0xff] %v444
                %v446 = vld [vmem:[%s202 + $0x788] sm:$0xff]
                %447 = vst [vmem:[%s203 + $0x3c8] sm:$0xff] %v446
                %v448 = vld [vmem:[%s202 + $0x790] sm:$0xff]
                %449 = vst [vmem:[%s203 + $0x3d0] sm:$0xff] %v448
                %v450 = vld [vmem:[%s202 + $0x798] sm:$0xff]
                %451 = vst [vmem:[%s203 + $0x3d8] sm:$0xff] %v450
                %v452 = vld [vmem:[%s202 + $0x7c0] sm:$0xff]
                %453 = vst [vmem:[%s203 + $0x3e0] sm:$0xff] %v452
                %v454 = vld [vmem:[%s202 + $0x7c8] sm:$0xff]
                %455 = vst [vmem:[%s203 + $0x3e8] sm:$0xff] %v454
                %v456 = vld [vmem:[%s202 + $0x7d0] sm:$0xff]
                %457 = vst [vmem:[%s203 + $0x3f0] sm:$0xff] %v456
                %v458 = vld [vmem:[%s202 + $0x7d8] sm:$0xff]
                %459 = vst [vmem:[%s203 + $0x3f8] sm:$0xff] %v458
                %v460 = vld [vmem:[%s202 + $0x800] sm:$0xff]
                %461 = vst [vmem:[%s203 + $0x400] sm:$0xff] %v460
                %v462 = vld [vmem:[%s202 + $0x808] sm:$0xff]
                %463 = vst [vmem:[%s203 + $0x408] sm:$0xff] %v462
                %v464 = vld [vmem:[%s202 + $0x810] sm:$0xff]
                %465 = vst [vmem:[%s203 + $0x410] sm:$0xff] %v464
                %v466 = vld [vmem:[%s202 + $0x818] sm:$0xff]
                %467 = vst [vmem:[%s203 + $0x418] sm:$0xff] %v466
                %v468 = vld [vmem:[%s202 + $0x840] sm:$0xff]
                %469 = vst [vmem:[%s203 + $0x420] sm:$0xff] %v468
                %v470 = vld [vmem:[%s202 + $0x848] sm:$0xff]
                %471 = vst [vmem:[%s203 + $0x428] sm:$0xff] %v470
                %v472 = vld [vmem:[%s202 + $0x850] sm:$0xff]
                %473 = vst [vmem:[%s203 + $0x430] sm:$0xff] %v472
                %v474 = vld [vmem:[%s202 + $0x858] sm:$0xff]
                %475 = vst [vmem:[%s203 + $0x438] sm:$0xff] %v474
                %v476 = vld [vmem:[%s202 + $0x880] sm:$0xff]
                %477 = vst [vmem:[%s203 + $0x440] sm:$0xff] %v476
                %v478 = vld [vmem:[%s202 + $0x888] sm:$0xff]
                %479 = vst [vmem:[%s203 + $0x448] sm:$0xff] %v478
                %v480 = vld [vmem:[%s202 + $0x890] sm:$0xff]
                %481 = vst [vmem:[%s203 + $0x450] sm:$0xff] %v480
                %v482 = vld [vmem:[%s202 + $0x898] sm:$0xff]
                %483 = vst [vmem:[%s203 + $0x458] sm:$0xff] %v482
                %v484 = vld [vmem:[%s202 + $0x8c0] sm:$0xff]
                %485 = vst [vmem:[%s203 + $0x460] sm:$0xff] %v484
                %v486 = vld [vmem:[%s202 + $0x8c8] sm:$0xff]
                %487 = vst [vmem:[%s203 + $0x468] sm:$0xff] %v486
                %v488 = vld [vmem:[%s202 + $0x8d0] sm:$0xff]
                %489 = vst [vmem:[%s203 + $0x470] sm:$0xff] %v488
                %v490 = vld [vmem:[%s202 + $0x8d8] sm:$0xff]
                %491 = vst [vmem:[%s203 + $0x478] sm:$0xff] %v490
                %v492 = vld [vmem:[%s202 + $0x900] sm:$0xff]
                %493 = vst [vmem:[%s203 + $0x480] sm:$0xff] %v492
                %v494 = vld [vmem:[%s202 + $0x908] sm:$0xff]
                %495 = vst [vmem:[%s203 + $0x488] sm:$0xff] %v494
                %v496 = vld [vmem:[%s202 + $0x910] sm:$0xff]
                %497 = vst [vmem:[%s203 + $0x490] sm:$0xff] %v496
                %v498 = vld [vmem:[%s202 + $0x918] sm:$0xff]
                %499 = vst [vmem:[%s203 + $0x498] sm:$0xff] %v498
                %v500 = vld [vmem:[%s202 + $0x940] sm:$0xff]
                %501 = vst [vmem:[%s203 + $0x4a0] sm:$0xff] %v500
                %v502 = vld [vmem:[%s202 + $0x948] sm:$0xff]
                %503 = vst [vmem:[%s203 + $0x4a8] sm:$0xff] %v502
                %v504 = vld [vmem:[%s202 + $0x950] sm:$0xff]
                %505 = vst [vmem:[%s203 + $0x4b0] sm:$0xff] %v504
                %v506 = vld [vmem:[%s202 + $0x958] sm:$0xff]
                %507 = vst [vmem:[%s203 + $0x4b8] sm:$0xff] %v506
                %v508 = vld [vmem:[%s202 + $0x980] sm:$0xff]
                %509 = vst [vmem:[%s203 + $0x4c0] sm:$0xff] %v508
                %v510 = vld [vmem:[%s202 + $0x988] sm:$0xff]
                %511 = vst [vmem:[%s203 + $0x4c8] sm:$0xff] %v510
                %v512 = vld [vmem:[%s202 + $0x990] sm:$0xff]
                %513 = vst [vmem:[%s203 + $0x4d0] sm:$0xff] %v512
                %v514 = vld [vmem:[%s202 + $0x998] sm:$0xff]
                %515 = vst [vmem:[%s203 + $0x4d8] sm:$0xff] %v514
                %v516 = vld [vmem:[%s202 + $0x9c0] sm:$0xff]
                %517 = vst [vmem:[%s203 + $0x4e0] sm:$0xff] %v516
                %v518 = vld [vmem:[%s202 + $0x9c8] sm:$0xff]
                %519 = vst [vmem:[%s203 + $0x4e8] sm:$0xff] %v518
                %v520 = vld [vmem:[%s202 + $0x9d0] sm:$0xff]
                %521 = vst [vmem:[%s203 + $0x4f0] sm:$0xff] %v520
                %v522 = vld [vmem:[%s202 + $0x9d8] sm:$0xff]
                %523 = vst [vmem:[%s203 + $0x4f8] sm:$0xff] %v522
                %v524 = vld [vmem:[%s202 + $0xa00] sm:$0xff]
                %525 = vst [vmem:[%s203 + $0x500] sm:$0xff] %v524
                %v526 = vld [vmem:[%s202 + $0xa08] sm:$0xff]
                %527 = vst [vmem:[%s203 + $0x508] sm:$0xff] %v526
                %v528 = vld [vmem:[%s202 + $0xa10] sm:$0xff]
                %529 = vst [vmem:[%s203 + $0x510] sm:$0xff] %v528
                %v530 = vld [vmem:[%s202 + $0xa18] sm:$0xff]
                %531 = vst [vmem:[%s203 + $0x518] sm:$0xff] %v530
                %v532 = vld [vmem:[%s202 + $0xa40] sm:$0xff]
                %533 = vst [vmem:[%s203 + $0x520] sm:$0xff] %v532
                %v534 = vld [vmem:[%s202 + $0xa48] sm:$0xff]
                %535 = vst [vmem:[%s203 + $0x528] sm:$0xff] %v534
                %v536 = vld [vmem:[%s202 + $0xa50] sm:$0xff]
                %537 = vst [vmem:[%s203 + $0x530] sm:$0xff] %v536
                %v538 = vld [vmem:[%s202 + $0xa58] sm:$0xff]
                %539 = vst [vmem:[%s203 + $0x538] sm:$0xff] %v538
                %v540 = vld [vmem:[%s202 + $0xa80] sm:$0xff]
                %541 = vst [vmem:[%s203 + $0x540] sm:$0xff] %v540
                %v542 = vld [vmem:[%s202 + $0xa88] sm:$0xff]
                %543 = vst [vmem:[%s203 + $0x548] sm:$0xff] %v542
                %v544 = vld [vmem:[%s202 + $0xa90] sm:$0xff]
                %545 = vst [vmem:[%s203 + $0x550] sm:$0xff] %v544
                %v546 = vld [vmem:[%s202 + $0xa98] sm:$0xff]
                %547 = vst [vmem:[%s203 + $0x558] sm:$0xff] %v546
                %v548 = vld [vmem:[%s202 + $0xac0] sm:$0xff]
                %549 = vst [vmem:[%s203 + $0x560] sm:$0xff] %v548
                %v550 = vld [vmem:[%s202 + $0xac8] sm:$0xff]
                %551 = vst [vmem:[%s203 + $0x568] sm:$0xff] %v550
                %v552 = vld [vmem:[%s202 + $0xad0] sm:$0xff]
                %553 = vst [vmem:[%s203 + $0x570] sm:$0xff] %v552
                %v554 = vld [vmem:[%s202 + $0xad8] sm:$0xff]
                %555 = vst [vmem:[%s203 + $0x578] sm:$0xff] %v554
                %v556 = vld [vmem:[%s202 + $0xb00] sm:$0xff]
                %557 = vst [vmem:[%s203 + $0x580] sm:$0xff] %v556
                %v558 = vld [vmem:[%s202 + $0xb08] sm:$0xff]
                %559 = vst [vmem:[%s203 + $0x588] sm:$0xff] %v558
                %v560 = vld [vmem:[%s202 + $0xb10] sm:$0xff]
                %561 = vst [vmem:[%s203 + $0x590] sm:$0xff] %v560
                %v562 = vld [vmem:[%s202 + $0xb18] sm:$0xff]
                %563 = vst [vmem:[%s203 + $0x598] sm:$0xff] %v562
                %v564 = vld [vmem:[%s202 + $0xb40] sm:$0xff]
                %565 = vst [vmem:[%s203 + $0x5a0] sm:$0xff] %v564
                %v566 = vld [vmem:[%s202 + $0xb48] sm:$0xff]
                %567 = vst [vmem:[%s203 + $0x5a8] sm:$0xff] %v566
                %v568 = vld [vmem:[%s202 + $0xb50] sm:$0xff]
                %569 = vst [vmem:[%s203 + $0x5b0] sm:$0xff] %v568
                %v570 = vld [vmem:[%s202 + $0xb58] sm:$0xff]
                %571 = vst [vmem:[%s203 + $0x5b8] sm:$0xff] %v570
                %v572 = vld [vmem:[%s202 + $0xb80] sm:$0xff]
                %573 = vst [vmem:[%s203 + $0x5c0] sm:$0xff] %v572
                %v574 = vld [vmem:[%s202 + $0xb88] sm:$0xff]
                %575 = vst [vmem:[%s203 + $0x5c8] sm:$0xff] %v574
                %v576 = vld [vmem:[%s202 + $0xb90] sm:$0xff]
                %577 = vst [vmem:[%s203 + $0x5d0] sm:$0xff] %v576
                %v578 = vld [vmem:[%s202 + $0xb98] sm:$0xff]
                %579 = vst [vmem:[%s203 + $0x5d8] sm:$0xff] %v578
                %v580 = vld [vmem:[%s202 + $0xbc0] sm:$0xff]
                %581 = vst [vmem:[%s203 + $0x5e0] sm:$0xff] %v580
                %v582 = vld [vmem:[%s202 + $0xbc8] sm:$0xff]
                %583 = vst [vmem:[%s203 + $0x5e8] sm:$0xff] %v582
                %v584 = vld [vmem:[%s202 + $0xbd0] sm:$0xff]
                %585 = vst [vmem:[%s203 + $0x5f0] sm:$0xff] %v584
                %v586 = vld [vmem:[%s202 + $0xbd8] sm:$0xff]
                %587 = vst [vmem:[%s203 + $0x5f8] sm:$0xff] %v586
                %v588 = vld [vmem:[%s202 + $0xc00] sm:$0xff]
                %589 = vst [vmem:[%s203 + $0x600] sm:$0xff] %v588
                %v590 = vld [vmem:[%s202 + $0xc08] sm:$0xff]
                %591 = vst [vmem:[%s203 + $0x608] sm:$0xff] %v590
                %v592 = vld [vmem:[%s202 + $0xc10] sm:$0xff]
                %593 = vst [vmem:[%s203 + $0x610] sm:$0xff] %v592
                %v594 = vld [vmem:[%s202 + $0xc18] sm:$0xff]
                %595 = vst [vmem:[%s203 + $0x618] sm:$0xff] %v594
                %v596 = vld [vmem:[%s202 + $0xc40] sm:$0xff]
                %597 = vst [vmem:[%s203 + $0x620] sm:$0xff] %v596
                %v598 = vld [vmem:[%s202 + $0xc48] sm:$0xff]
                %599 = vst [vmem:[%s203 + $0x628] sm:$0xff] %v598
                %v600 = vld [vmem:[%s202 + $0xc50] sm:$0xff]
                %601 = vst [vmem:[%s203 + $0x630] sm:$0xff] %v600
                %v602 = vld [vmem:[%s202 + $0xc58] sm:$0xff]
                %603 = vst [vmem:[%s203 + $0x638] sm:$0xff] %v602
                %v604 = vld [vmem:[%s202 + $0xc80] sm:$0xff]
                %605 = vst [vmem:[%s203 + $0x640] sm:$0xff] %v604
                %v606 = vld [vmem:[%s202 + $0xc88] sm:$0xff]
                %607 = vst [vmem:[%s203 + $0x648] sm:$0xff] %v606
                %v608 = vld [vmem:[%s202 + $0xc90] sm:$0xff]
                %609 = vst [vmem:[%s203 + $0x650] sm:$0xff] %v608
                %v610 = vld [vmem:[%s202 + $0xc98] sm:$0xff]
                %611 = vst [vmem:[%s203 + $0x658] sm:$0xff] %v610
                %v612 = vld [vmem:[%s202 + $0xcc0] sm:$0xff]
                %613 = vst [vmem:[%s203 + $0x660] sm:$0xff] %v612
                %v614 = vld [vmem:[%s202 + $0xcc8] sm:$0xff]
                %615 = vst [vmem:[%s203 + $0x668] sm:$0xff] %v614
                %v616 = vld [vmem:[%s202 + $0xcd0] sm:$0xff]
                %617 = vst [vmem:[%s203 + $0x670] sm:$0xff] %v616
                %v618 = vld [vmem:[%s202 + $0xcd8] sm:$0xff]
                %619 = vst [vmem:[%s203 + $0x678] sm:$0xff] %v618
                %v620 = vld [vmem:[%s202 + $0xd00] sm:$0xff]
                %621 = vst [vmem:[%s203 + $0x680] sm:$0xff] %v620
                %v622 = vld [vmem:[%s202 + $0xd08] sm:$0xff]
                %623 = vst [vmem:[%s203 + $0x688] sm:$0xff] %v622
                %v624 = vld [vmem:[%s202 + $0xd10] sm:$0xff]
                %625 = vst [vmem:[%s203 + $0x690] sm:$0xff] %v624
                %v626 = vld [vmem:[%s202 + $0xd18] sm:$0xff]
                %627 = vst [vmem:[%s203 + $0x698] sm:$0xff] %v626
                %v628 = vld [vmem:[%s202 + $0xd40] sm:$0xff]
                %629 = vst [vmem:[%s203 + $0x6a0] sm:$0xff] %v628
                %v630 = vld [vmem:[%s202 + $0xd48] sm:$0xff]
                %631 = vst [vmem:[%s203 + $0x6a8] sm:$0xff] %v630
                %v632 = vld [vmem:[%s202 + $0xd50] sm:$0xff]
                %633 = vst [vmem:[%s203 + $0x6b0] sm:$0xff] %v632
                %v634 = vld [vmem:[%s202 + $0xd58] sm:$0xff]
                %635 = vst [vmem:[%s203 + $0x6b8] sm:$0xff] %v634
                %v636 = vld [vmem:[%s202 + $0xd80] sm:$0xff]
                %637 = vst [vmem:[%s203 + $0x6c0] sm:$0xff] %v636
                %v638 = vld [vmem:[%s202 + $0xd88] sm:$0xff]
                %639 = vst [vmem:[%s203 + $0x6c8] sm:$0xff] %v638
                %v640 = vld [vmem:[%s202 + $0xd90] sm:$0xff]
                %641 = vst [vmem:[%s203 + $0x6d0] sm:$0xff] %v640
                %v642 = vld [vmem:[%s202 + $0xd98] sm:$0xff]
                %643 = vst [vmem:[%s203 + $0x6d8] sm:$0xff] %v642
                %v644 = vld [vmem:[%s202 + $0xdc0] sm:$0xff]
                %645 = vst [vmem:[%s203 + $0x6e0] sm:$0xff] %v644
                %v646 = vld [vmem:[%s202 + $0xdc8] sm:$0xff]
                %647 = vst [vmem:[%s203 + $0x6e8] sm:$0xff] %v646
                %v648 = vld [vmem:[%s202 + $0xdd0] sm:$0xff]
                %649 = vst [vmem:[%s203 + $0x6f0] sm:$0xff] %v648
                %v650 = vld [vmem:[%s202 + $0xdd8] sm:$0xff]
                %651 = vst [vmem:[%s203 + $0x6f8] sm:$0xff] %v650
                %v652 = vld [vmem:[%s202 + $0xe00] sm:$0xff]
                %653 = vst [vmem:[%s203 + $0x700] sm:$0xff] %v652
                %v654 = vld [vmem:[%s202 + $0xe08] sm:$0xff]
                %655 = vst [vmem:[%s203 + $0x708] sm:$0xff] %v654
                %v656 = vld [vmem:[%s202 + $0xe10] sm:$0xff]
                %657 = vst [vmem:[%s203 + $0x710] sm:$0xff] %v656
                %v658 = vld [vmem:[%s202 + $0xe18] sm:$0xff]
                %659 = vst [vmem:[%s203 + $0x718] sm:$0xff] %v658
                %v660 = vld [vmem:[%s202 + $0xe40] sm:$0xff]
                %661 = vst [vmem:[%s203 + $0x720] sm:$0xff] %v660
                %v662 = vld [vmem:[%s202 + $0xe48] sm:$0xff]
                %663 = vst [vmem:[%s203 + $0x728] sm:$0xff] %v662
                %v664 = vld [vmem:[%s202 + $0xe50] sm:$0xff]
                %665 = vst [vmem:[%s203 + $0x730] sm:$0xff] %v664
                %v666 = vld [vmem:[%s202 + $0xe58] sm:$0xff]
                %667 = vst [vmem:[%s203 + $0x738] sm:$0xff] %v666
                %v668 = vld [vmem:[%s202 + $0xe80] sm:$0xff]
                %669 = vst [vmem:[%s203 + $0x740] sm:$0xff] %v668
                %v670 = vld [vmem:[%s202 + $0xe88] sm:$0xff]
                %671 = vst [vmem:[%s203 + $0x748] sm:$0xff] %v670
                %v672 = vld [vmem:[%s202 + $0xe90] sm:$0xff]
                %673 = vst [vmem:[%s203 + $0x750] sm:$0xff] %v672
                %v674 = vld [vmem:[%s202 + $0xe98] sm:$0xff]
                %675 = vst [vmem:[%s203 + $0x758] sm:$0xff] %v674
                %v676 = vld [vmem:[%s202 + $0xec0] sm:$0xff]
                %677 = vst [vmem:[%s203 + $0x760] sm:$0xff] %v676
                %v678 = vld [vmem:[%s202 + $0xec8] sm:$0xff]
                %679 = vst [vmem:[%s203 + $0x768] sm:$0xff] %v678
                %v680 = vld [vmem:[%s202 + $0xed0] sm:$0xff]
                %681 = vst [vmem:[%s203 + $0x770] sm:$0xff] %v680
                %v682 = vld [vmem:[%s202 + $0xed8] sm:$0xff]
                %683 = vst [vmem:[%s203 + $0x778] sm:$0xff] %v682
                %v684 = vld [vmem:[%s202 + $0xf00] sm:$0xff]
                %685 = vst [vmem:[%s203 + $0x780] sm:$0xff] %v684
                %v686 = vld [vmem:[%s202 + $0xf08] sm:$0xff]
                %687 = vst [vmem:[%s203 + $0x788] sm:$0xff] %v686
                %v688 = vld [vmem:[%s202 + $0xf10] sm:$0xff]
                %689 = vst [vmem:[%s203 + $0x790] sm:$0xff] %v688
                %v690 = vld [vmem:[%s202 + $0xf18] sm:$0xff]
                %691 = vst [vmem:[%s203 + $0x798] sm:$0xff] %v690
                %v692 = vld [vmem:[%s202 + $0xf40] sm:$0xff]
                %693 = vst [vmem:[%s203 + $0x7a0] sm:$0xff] %v692
                %v694 = vld [vmem:[%s202 + $0xf48] sm:$0xff]
                %695 = vst [vmem:[%s203 + $0x7a8] sm:$0xff] %v694
                %v696 = vld [vmem:[%s202 + $0xf50] sm:$0xff]
                %697 = vst [vmem:[%s203 + $0x7b0] sm:$0xff] %v696
                %v698 = vld [vmem:[%s202 + $0xf58] sm:$0xff]
                %699 = vst [vmem:[%s203 + $0x7b8] sm:$0xff] %v698
                %v700 = vld [vmem:[%s202 + $0xf80] sm:$0xff]
                %701 = vst [vmem:[%s203 + $0x7c0] sm:$0xff] %v700
                %v702 = vld [vmem:[%s202 + $0xf88] sm:$0xff]
                %703 = vst [vmem:[%s203 + $0x7c8] sm:$0xff] %v702
                %v704 = vld [vmem:[%s202 + $0xf90] sm:$0xff]
                %705 = vst [vmem:[%s203 + $0x7d0] sm:$0xff] %v704
                %v706 = vld [vmem:[%s202 + $0xf98] sm:$0xff]
                %707 = vst [vmem:[%s203 + $0x7d8] sm:$0xff] %v706
                %v708 = vld [vmem:[%s202 + $0xfc0] sm:$0xff]
                %709 = vst [vmem:[%s203 + $0x7e0] sm:$0xff] %v708
                %v710 = vld [vmem:[%s202 + $0xfc8] sm:$0xff]
                %711 = vst [vmem:[%s203 + $0x7e8] sm:$0xff] %v710
                %v712 = vld [vmem:[%s202 + $0xfd0] sm:$0xff]
                %713 = vst [vmem:[%s203 + $0x7f0] sm:$0xff] %v712
                %v714 = vld [vmem:[%s202 + $0xfd8] sm:$0xff]
                %715 = vst [vmem:[%s203 + $0x7f8] sm:$0xff] %v714
                %v716 = vld [vmem:[%s202 + $0x1000] sm:$0xff]
                %717 = vst [vmem:[%s203 + $0x800] sm:$0xff] %v716
                %v718 = vld [vmem:[%s202 + $0x1008] sm:$0xff]
                %719 = vst [vmem:[%s203 + $0x808] sm:$0xff] %v718
                %v720 = vld [vmem:[%s202 + $0x1010] sm:$0xff]
                %721 = vst [vmem:[%s203 + $0x810] sm:$0xff] %v720
                %v722 = vld [vmem:[%s202 + $0x1018] sm:$0xff]
                %723 = vst [vmem:[%s203 + $0x818] sm:$0xff] %v722
                %v724 = vld [vmem:[%s202 + $0x1040] sm:$0xff]
                %725 = vst [vmem:[%s203 + $0x820] sm:$0xff] %v724
                %v726 = vld [vmem:[%s202 + $0x1048] sm:$0xff]
                %727 = vst [vmem:[%s203 + $0x828] sm:$0xff] %v726
                %v728 = vld [vmem:[%s202 + $0x1050] sm:$0xff]
                %729 = vst [vmem:[%s203 + $0x830] sm:$0xff] %v728
                %v730 = vld [vmem:[%s202 + $0x1058] sm:$0xff]
                %731 = vst [vmem:[%s203 + $0x838] sm:$0xff] %v730
                %v732 = vld [vmem:[%s202 + $0x1080] sm:$0xff]
                %733 = vst [vmem:[%s203 + $0x840] sm:$0xff] %v732
                %v734 = vld [vmem:[%s202 + $0x1088] sm:$0xff]
                %735 = vst [vmem:[%s203 + $0x848] sm:$0xff] %v734
                %v736 = vld [vmem:[%s202 + $0x1090] sm:$0xff]
                %737 = vst [vmem:[%s203 + $0x850] sm:$0xff] %v736
                %v738 = vld [vmem:[%s202 + $0x1098] sm:$0xff]
                %739 = vst [vmem:[%s203 + $0x858] sm:$0xff] %v738
                %v740 = vld [vmem:[%s202 + $0x10c0] sm:$0xff]
                %741 = vst [vmem:[%s203 + $0x860] sm:$0xff] %v740
                %v742 = vld [vmem:[%s202 + $0x10c8] sm:$0xff]
                %743 = vst [vmem:[%s203 + $0x868] sm:$0xff] %v742
                %v744 = vld [vmem:[%s202 + $0x10d0] sm:$0xff]
                %745 = vst [vmem:[%s203 + $0x870] sm:$0xff] %v744
                %v746 = vld [vmem:[%s202 + $0x10d8] sm:$0xff]
                %747 = vst [vmem:[%s203 + $0x878] sm:$0xff] %v746
                %v748 = vld [vmem:[%s202 + $0x1100] sm:$0xff]
                %749 = vst [vmem:[%s203 + $0x880] sm:$0xff] %v748
                %v750 = vld [vmem:[%s202 + $0x1108] sm:$0xff]
                %751 = vst [vmem:[%s203 + $0x888] sm:$0xff] %v750
                %v752 = vld [vmem:[%s202 + $0x1110] sm:$0xff]
                %753 = vst [vmem:[%s203 + $0x890] sm:$0xff] %v752
                %v754 = vld [vmem:[%s202 + $0x1118] sm:$0xff]
                %755 = vst [vmem:[%s203 + $0x898] sm:$0xff] %v754
                %v756 = vld [vmem:[%s202 + $0x1140] sm:$0xff]
                %757 = vst [vmem:[%s203 + $0x8a0] sm:$0xff] %v756
                %v758 = vld [vmem:[%s202 + $0x1148] sm:$0xff]
                %759 = vst [vmem:[%s203 + $0x8a8] sm:$0xff] %v758
                %v760 = vld [vmem:[%s202 + $0x1150] sm:$0xff]
                %761 = vst [vmem:[%s203 + $0x8b0] sm:$0xff] %v760
                %v762 = vld [vmem:[%s202 + $0x1158] sm:$0xff]
                %763 = vst [vmem:[%s203 + $0x8b8] sm:$0xff] %v762
                %v764 = vld [vmem:[%s202 + $0x1180] sm:$0xff]
                %765 = vst [vmem:[%s203 + $0x8c0] sm:$0xff] %v764
                %v766 = vld [vmem:[%s202 + $0x1188] sm:$0xff]
                %767 = vst [vmem:[%s203 + $0x8c8] sm:$0xff] %v766
                %v768 = vld [vmem:[%s202 + $0x1190] sm:$0xff]
                %769 = vst [vmem:[%s203 + $0x8d0] sm:$0xff] %v768
                %v770 = vld [vmem:[%s202 + $0x1198] sm:$0xff]
                %771 = vst [vmem:[%s203 + $0x8d8] sm:$0xff] %v770
                %v772 = vld [vmem:[%s202 + $0x11c0] sm:$0xff]
                %773 = vst [vmem:[%s203 + $0x8e0] sm:$0xff] %v772
                %v774 = vld [vmem:[%s202 + $0x11c8] sm:$0xff]
                %775 = vst [vmem:[%s203 + $0x8e8] sm:$0xff] %v774
                %v776 = vld [vmem:[%s202 + $0x11d0] sm:$0xff]
                %777 = vst [vmem:[%s203 + $0x8f0] sm:$0xff] %v776
                %v778 = vld [vmem:[%s202 + $0x11d8] sm:$0xff]
                %779 = vst [vmem:[%s203 + $0x8f8] sm:$0xff] %v778
              $region45: #{quantized_cnn_forward.5} parent=39 // loop_footer
                %s201 = sadd.s32 1, %s197
              $region46: #{quantized_cnn_forward.5} parent=39 // loop_footer_branch
                %196 = sbr.rel target = $region42
              $region47: #{quantized_cnn_forward.5} parent=39 // loop_exit
                _
            $region40: #{quantized_cnn_forward.5} parent=35 // pred_fallthru
              _
            // Predicated region
            $region48: #{quantized_cnn_forward.5} parent=35 // pred_check
              _
            $region49: #{quantized_cnn_forward.5} parent=35 // pred_check_branch
              %781 = sbr.rel target = $region51
            $region50: #{quantized_cnn_forward.5} parent=35 // pred_region
              _
            $region51: #{quantized_cnn_forward.5} parent=35 // pred_fallthru
              _
          $region36: #{quantized_cnn_forward.5} parent=31 // pred_fallthru
            _
          %782 = vnop
        $region32: #{quantized_cnn_forward.5} parent=27 // pred_fallthru
          _
        // Predicated region
        $region52: #{quantized_cnn_forward.5} parent=27 // pred_check
          %p783 = pneg %p80
        $region53: #{quantized_cnn_forward.5} parent=27 // pred_check_branch
          %785 = sbr.rel (%p783) target = $region55
        $region54: #{quantized_cnn_forward.5} parent=27 // pred_region
          %s786 = smul.u32 16, %s13
          %p787 = scmp.lt.s32.totalorder %s786, 31
          %s788 = scalar_select %p787, %s786, 31
          %s789 = smul.addr %s788, 8
          %s790 = scalar_lea.vmem %s2, %s789
          %s791 = smul.u32 16, %s13
        $region55: #{quantized_cnn_forward.5} parent=27 // pred_fallthru
          _
      $region28: #{quantized_cnn_forward.5} parent=5 // pred_fallthru
        _
      %p792 = scmp.le.s32.totalorder 1, %s13
      %p793 = scmp.lt.s32.totalorder %s13, 3
      %p794 = pnand %p792, %p793
      %p795 = pneg %p794
      // Predicated region
      $region56: #{quantized_cnn_forward.5} parent=5 // pred_check
        _
      $region57: #{quantized_cnn_forward.5} parent=5 // pred_check_branch
        %797 = sbr.rel (%p794) target = $region59
      $region58: #{quantized_cnn_forward.5} parent=5 // pred_region
        %s798 = ssub.s32 %s13, 1
        %s799 = sand.u32 %s47, 1
        %s800 = sand.u32 %s47, 1
        %s801 = smul.addr %s800, 2304
        %s802 = scalar_lea.vmem [#allocation4], %s801
        // Predicated region
        $region60: #{quantized_cnn_forward.5} parent=58 // pred_check
          %p803 = pneg %p60
        $region61: #{quantized_cnn_forward.5} parent=58 // pred_check_branch
          %805 = sbr.rel (%p803) target = $region63
        $region62: #{quantized_cnn_forward.5} parent=58 // pred_region
          _
        $region63: #{quantized_cnn_forward.5} parent=58 // pred_fallthru
          _
        %p806 = pneg %p34
        %p807 = pneg %p31
        %s808 = sand.u32 %s47, 1
        %s809 = sand.u32 %s47, 1
        %s810 = smul.addr %s809, 2304
        %s811 = scalar_lea.vmem [#allocation4], %s810
        %p812 = pneg %p60
        %p813 = pneg %p57
        %s814 = smul.u32 16, %s18
        %p815 = scmp.lt.s32.totalorder %s814, 31
        %s816 = scalar_select %p815, %s814, 31
        %s817 = smul.addr %s816, 8
        %s818 = scalar_lea.vmem %s2, %s817
        %p819 = pneg %p86
        %p820 = pneg %p83
        %p821 = pneg %p107
        %p822 = pneg %p104
        %p823 = pneg %p128
        %p824 = pneg %p125
        %p825 = pneg %p154
        %p826 = pneg %p151
        %p827 = scmp.lt.s32.totalorder %s18, 1
        %s828 = scalar_select %p827, %s18, 1
        %s829 = smul.addr %s828, 2
        %s830 = scalar_lea.vmem %s5, %s829
        %s831 = smul.u32 4, %s18
        %s832 = smul.u32 16, %s18
        %p833 = scmp.lt.s32.totalorder %s832, 31
        %s834 = scalar_select %p833, %s832, 31
        %s835 = smul.addr %s834, 8
        %s836 = scalar_lea.vmem %s2, %s835
        %s837 = smul.u32 16, %s18
        %p838 = scmp.lt.s32.totalorder %s18, 1
        %s839 = scalar_select %p838, %s18, 1
        %s840 = smul.addr %s839, 2
        %s841 = scalar_lea.vmem %s5, %s840
        %v843 = vld [vmem:[%s802] sm:$0xff]
        %v844 = vld [vmem:[%s802 + $0x8] sm:$0xff]
        %v845 = vld [vmem:[%s802 + $0x10] sm:$0xff]
        %v846 = vld [vmem:[%s802 + $0x18] sm:$0xff]
        %v847 = vld [vmem:[%s802 + $0x20] sm:$0xff]
        %v848 = vld [vmem:[%s802 + $0x28] sm:$0xff]
        %v849 = vld [vmem:[%s802 + $0x30] sm:$0xff]
        %v850 = vld [vmem:[%s802 + $0x38] sm:$0xff]
        %v851 = vld [vmem:[%s802 + $0x40] sm:$0xff]
        %v852 = vld [vmem:[%s802 + $0x48] sm:$0xff]
        %v853 = vld [vmem:[%s802 + $0x50] sm:$0xff]
        %v854 = vld [vmem:[%s802 + $0x58] sm:$0xff]
        %v855 = vld [vmem:[%s802 + $0x60] sm:$0xff]
        %v856 = vld [vmem:[%s802 + $0x68] sm:$0xff]
        %v857 = vld [vmem:[%s802 + $0x70] sm:$0xff]
        %v858 = vld [vmem:[%s802 + $0x78] sm:$0xff]
        %v859 = vld [vmem:[%s802 + $0x80] sm:$0xff]
        %v860 = vld [vmem:[%s802 + $0x88] sm:$0xff]
        %v861 = vld [vmem:[%s802 + $0x90] sm:$0xff]
        %v862 = vld [vmem:[%s802 + $0x98] sm:$0xff]
        %v863 = vld [vmem:[%s802 + $0xa0] sm:$0xff]
        %v864 = vld [vmem:[%s802 + $0xa8] sm:$0xff]
        %v865 = vld [vmem:[%s802 + $0xb0] sm:$0xff]
        %v866 = vld [vmem:[%s802 + $0xb8] sm:$0xff]
        %v867 = vld [vmem:[%s802 + $0xc0] sm:$0xff]
        %v868 = vld [vmem:[%s802 + $0xc8] sm:$0xff]
        %v869 = vld [vmem:[%s802 + $0xd0] sm:$0xff]
        %v870 = vld [vmem:[%s802 + $0xd8] sm:$0xff]
        %v871 = vld [vmem:[%s802 + $0xe0] sm:$0xff]
        %v872 = vld [vmem:[%s802 + $0xe8] sm:$0xff]
        %v873 = vld [vmem:[%s802 + $0xf0] sm:$0xff]
        %v874 = vld [vmem:[%s802 + $0xf8] sm:$0xff]
        %v875 = vld [vmem:[%s802 + $0x100] sm:$0xff]
        %v876 = vld [vmem:[%s802 + $0x108] sm:$0xff]
        %v877 = vld [vmem:[%s802 + $0x110] sm:$0xff]
        %v878 = vld [vmem:[%s802 + $0x118] sm:$0xff]
        %v879 = vld [vmem:[%s802 + $0x120] sm:$0xff]
        %v880 = vld [vmem:[%s802 + $0x128] sm:$0xff]
        %v881 = vld [vmem:[%s802 + $0x130] sm:$0xff]
        %v882 = vld [vmem:[%s802 + $0x138] sm:$0xff]
        %v883 = vld [vmem:[%s802 + $0x140] sm:$0xff]
        %v884 = vld [vmem:[%s802 + $0x148] sm:$0xff]
        %v885 = vld [vmem:[%s802 + $0x150] sm:$0xff]
        %v886 = vld [vmem:[%s802 + $0x158] sm:$0xff]
        %v887 = vld [vmem:[%s802 + $0x160] sm:$0xff]
        %v888 = vld [vmem:[%s802 + $0x168] sm:$0xff]
        %v889 = vld [vmem:[%s802 + $0x170] sm:$0xff]
        %v890 = vld [vmem:[%s802 + $0x178] sm:$0xff]
        %v891 = vld [vmem:[%s802 + $0x180] sm:$0xff]
        %v892 = vld [vmem:[%s802 + $0x188] sm:$0xff]
        %v893 = vld [vmem:[%s802 + $0x190] sm:$0xff]
        %v894 = vld [vmem:[%s802 + $0x198] sm:$0xff]
        %v895 = vld [vmem:[%s802 + $0x1a0] sm:$0xff]
        %v896 = vld [vmem:[%s802 + $0x1a8] sm:$0xff]
        %v897 = vld [vmem:[%s802 + $0x1b0] sm:$0xff]
        %v898 = vld [vmem:[%s802 + $0x1b8] sm:$0xff]
        %v899 = vld [vmem:[%s802 + $0x1c0] sm:$0xff]
        %v900 = vld [vmem:[%s802 + $0x1c8] sm:$0xff]
        %v901 = vld [vmem:[%s802 + $0x1d0] sm:$0xff]
        %v902 = vld [vmem:[%s802 + $0x1d8] sm:$0xff]
        %v903 = vld [vmem:[%s802 + $0x1e0] sm:$0xff]
        %v904 = vld [vmem:[%s802 + $0x1e8] sm:$0xff]
        %v905 = vld [vmem:[%s802 + $0x1f0] sm:$0xff]
        %v906 = vld [vmem:[%s802 + $0x1f8] sm:$0xff]
        %v907 = vld [vmem:[%s802 + $0x200] sm:$0xff]
        %v908 = vld [vmem:[%s802 + $0x208] sm:$0xff]
        %v909 = vld [vmem:[%s802 + $0x210] sm:$0xff]
        %v910 = vld [vmem:[%s802 + $0x218] sm:$0xff]
        %v911 = vld [vmem:[%s802 + $0x220] sm:$0xff]
        %v912 = vld [vmem:[%s802 + $0x228] sm:$0xff]
        %v913 = vld [vmem:[%s802 + $0x230] sm:$0xff]
        %v914 = vld [vmem:[%s802 + $0x238] sm:$0xff]
        %v915 = vld [vmem:[%s802 + $0x240] sm:$0xff]
        %v916 = vld [vmem:[%s802 + $0x248] sm:$0xff]
        %v917 = vld [vmem:[%s802 + $0x250] sm:$0xff]
        %v918 = vld [vmem:[%s802 + $0x258] sm:$0xff]
        %v919 = vld [vmem:[%s802 + $0x260] sm:$0xff]
        %v920 = vld [vmem:[%s802 + $0x268] sm:$0xff]
        %v921 = vld [vmem:[%s802 + $0x270] sm:$0xff]
        %v922 = vld [vmem:[%s802 + $0x278] sm:$0xff]
        %v923 = vld [vmem:[%s802 + $0x280] sm:$0xff]
        %v924 = vld [vmem:[%s802 + $0x288] sm:$0xff]
        %v925 = vld [vmem:[%s802 + $0x290] sm:$0xff]
        %v926 = vld [vmem:[%s802 + $0x298] sm:$0xff]
        %v927 = vld [vmem:[%s802 + $0x2a0] sm:$0xff]
        %v928 = vld [vmem:[%s802 + $0x2a8] sm:$0xff]
        %v929 = vld [vmem:[%s802 + $0x2b0] sm:$0xff]
        %v930 = vld [vmem:[%s802 + $0x2b8] sm:$0xff]
        %v931 = vld [vmem:[%s802 + $0x2c0] sm:$0xff]
        %v932 = vld [vmem:[%s802 + $0x2c8] sm:$0xff]
        %v933 = vld [vmem:[%s802 + $0x2d0] sm:$0xff]
        %v934 = vld [vmem:[%s802 + $0x2d8] sm:$0xff]
        %v935 = vld [vmem:[%s802 + $0x2e0] sm:$0xff]
        %v936 = vld [vmem:[%s802 + $0x2e8] sm:$0xff]
        %v937 = vld [vmem:[%s802 + $0x2f0] sm:$0xff]
        %v938 = vld [vmem:[%s802 + $0x2f8] sm:$0xff]
        %v939 = vld [vmem:[%s802 + $0x300] sm:$0xff]
        %v940 = vld [vmem:[%s802 + $0x308] sm:$0xff]
        %v941 = vld [vmem:[%s802 + $0x310] sm:$0xff]
        %v942 = vld [vmem:[%s802 + $0x318] sm:$0xff]
        %v943 = vld [vmem:[%s802 + $0x320] sm:$0xff]
        %v944 = vld [vmem:[%s802 + $0x328] sm:$0xff]
        %v945 = vld [vmem:[%s802 + $0x330] sm:$0xff]
        %v946 = vld [vmem:[%s802 + $0x338] sm:$0xff]
        %v947 = vld [vmem:[%s802 + $0x340] sm:$0xff]
        %v948 = vld [vmem:[%s802 + $0x348] sm:$0xff]
        %v949 = vld [vmem:[%s802 + $0x350] sm:$0xff]
        %v950 = vld [vmem:[%s802 + $0x358] sm:$0xff]
        %v951 = vld [vmem:[%s802 + $0x360] sm:$0xff]
        %v952 = vld [vmem:[%s802 + $0x368] sm:$0xff]
        %v953 = vld [vmem:[%s802 + $0x370] sm:$0xff]
        %v954 = vld [vmem:[%s802 + $0x378] sm:$0xff]
        %v955 = vld [vmem:[%s802 + $0x380] sm:$0xff]
        %v956 = vld [vmem:[%s802 + $0x388] sm:$0xff]
        %v957 = vld [vmem:[%s802 + $0x390] sm:$0xff]
        %v958 = vld [vmem:[%s802 + $0x398] sm:$0xff]
        %v959 = vld [vmem:[%s802 + $0x3a0] sm:$0xff]
        %v960 = vld [vmem:[%s802 + $0x3a8] sm:$0xff]
        %v961 = vld [vmem:[%s802 + $0x3b0] sm:$0xff]
        %v962 = vld [vmem:[%s802 + $0x3b8] sm:$0xff]
        %v963 = vld [vmem:[%s802 + $0x3c0] sm:$0xff]
        %v964 = vld [vmem:[%s802 + $0x3c8] sm:$0xff]
        %v965 = vld [vmem:[%s802 + $0x3d0] sm:$0xff]
        %v966 = vld [vmem:[%s802 + $0x3d8] sm:$0xff]
        %v967 = vld [vmem:[%s802 + $0x3e0] sm:$0xff]
        %v968 = vld [vmem:[%s802 + $0x3e8] sm:$0xff]
        %v969 = vld [vmem:[%s802 + $0x3f0] sm:$0xff]
        %v970 = vld [vmem:[%s802 + $0x3f8] sm:$0xff]
        %v971 = vld [vmem:[%s802 + $0x400] sm:$0xff]
        %v972 = vld [vmem:[%s802 + $0x408] sm:$0xff]
        %v973 = vld [vmem:[%s802 + $0x410] sm:$0xff]
        %v974 = vld [vmem:[%s802 + $0x418] sm:$0xff]
        %v975 = vld [vmem:[%s802 + $0x420] sm:$0xff]
        %v976 = vld [vmem:[%s802 + $0x428] sm:$0xff]
        %v977 = vld [vmem:[%s802 + $0x430] sm:$0xff]
        %v978 = vld [vmem:[%s802 + $0x438] sm:$0xff]
        %v979 = vld [vmem:[%s802 + $0x440] sm:$0xff]
        %v980 = vld [vmem:[%s802 + $0x448] sm:$0xff]
        %v981 = vld [vmem:[%s802 + $0x450] sm:$0xff]
        %v982 = vld [vmem:[%s802 + $0x458] sm:$0xff]
        %v983 = vld [vmem:[%s802 + $0x460] sm:$0xff]
        %v984 = vld [vmem:[%s802 + $0x468] sm:$0xff]
        %v985 = vld [vmem:[%s802 + $0x470] sm:$0xff]
        %v986 = vld [vmem:[%s802 + $0x478] sm:$0xff]
        %v987 = vld [vmem:[%s802 + $0x480] sm:$0xff]
        %v988 = vld [vmem:[%s802 + $0x488] sm:$0xff]
        %v989 = vld [vmem:[%s802 + $0x490] sm:$0xff]
        %v990 = vld [vmem:[%s802 + $0x498] sm:$0xff]
        %v991 = vld [vmem:[%s802 + $0x4a0] sm:$0xff]
        %v992 = vld [vmem:[%s802 + $0x4a8] sm:$0xff]
        %v993 = vld [vmem:[%s802 + $0x4b0] sm:$0xff]
        %v994 = vld [vmem:[%s802 + $0x4b8] sm:$0xff]
        %v995 = vld [vmem:[%s802 + $0x4c0] sm:$0xff]
        %v996 = vld [vmem:[%s802 + $0x4c8] sm:$0xff]
        %v997 = vld [vmem:[%s802 + $0x4d0] sm:$0xff]
        %v998 = vld [vmem:[%s802 + $0x4d8] sm:$0xff]
        %v999 = vld [vmem:[%s802 + $0x4e0] sm:$0xff]
        %v1000 = vld [vmem:[%s802 + $0x4e8] sm:$0xff]
        %v1001 = vld [vmem:[%s802 + $0x4f0] sm:$0xff]
        %v1002 = vld [vmem:[%s802 + $0x4f8] sm:$0xff]
        %v1003 = vld [vmem:[%s802 + $0x500] sm:$0xff]
        %v1004 = vld [vmem:[%s802 + $0x508] sm:$0xff]
        %v1005 = vld [vmem:[%s802 + $0x510] sm:$0xff]
        %v1006 = vld [vmem:[%s802 + $0x518] sm:$0xff]
        %v1007 = vld [vmem:[%s802 + $0x520] sm:$0xff]
        %v1008 = vld [vmem:[%s802 + $0x528] sm:$0xff]
        %v1009 = vld [vmem:[%s802 + $0x530] sm:$0xff]
        %v1010 = vld [vmem:[%s802 + $0x538] sm:$0xff]
        %v1011 = vld [vmem:[%s802 + $0x540] sm:$0xff]
        %v1012 = vld [vmem:[%s802 + $0x548] sm:$0xff]
        %v1013 = vld [vmem:[%s802 + $0x550] sm:$0xff]
        %v1014 = vld [vmem:[%s802 + $0x558] sm:$0xff]
        %v1015 = vld [vmem:[%s802 + $0x560] sm:$0xff]
        %v1016 = vld [vmem:[%s802 + $0x568] sm:$0xff]
        %v1017 = vld [vmem:[%s802 + $0x570] sm:$0xff]
        %v1018 = vld [vmem:[%s802 + $0x578] sm:$0xff]
        %v1019 = vld [vmem:[%s802 + $0x580] sm:$0xff]
        %v1020 = vld [vmem:[%s802 + $0x588] sm:$0xff]
        %v1021 = vld [vmem:[%s802 + $0x590] sm:$0xff]
        %v1022 = vld [vmem:[%s802 + $0x598] sm:$0xff]
        %v1023 = vld [vmem:[%s802 + $0x5a0] sm:$0xff]
        %v1024 = vld [vmem:[%s802 + $0x5a8] sm:$0xff]
        %v1025 = vld [vmem:[%s802 + $0x5b0] sm:$0xff]
        %v1026 = vld [vmem:[%s802 + $0x5b8] sm:$0xff]
        %v1027 = vld [vmem:[%s802 + $0x5c0] sm:$0xff]
        %v1028 = vld [vmem:[%s802 + $0x5c8] sm:$0xff]
        %v1029 = vld [vmem:[%s802 + $0x5d0] sm:$0xff]
        %v1030 = vld [vmem:[%s802 + $0x5d8] sm:$0xff]
        %v1031 = vld [vmem:[%s802 + $0x5e0] sm:$0xff]
        %v1032 = vld [vmem:[%s802 + $0x5e8] sm:$0xff]
        %v1033 = vld [vmem:[%s802 + $0x5f0] sm:$0xff]
        %v1034 = vld [vmem:[%s802 + $0x5f8] sm:$0xff]
        %v1035 = vld [vmem:[%s802 + $0x600] sm:$0xff]
        %v1036 = vld [vmem:[%s802 + $0x608] sm:$0xff]
        %v1037 = vld [vmem:[%s802 + $0x610] sm:$0xff]
        %v1038 = vld [vmem:[%s802 + $0x618] sm:$0xff]
        %v1039 = vld [vmem:[%s802 + $0x620] sm:$0xff]
        %v1040 = vld [vmem:[%s802 + $0x628] sm:$0xff]
        %v1041 = vld [vmem:[%s802 + $0x630] sm:$0xff]
        %v1042 = vld [vmem:[%s802 + $0x638] sm:$0xff]
        %v1043 = vld [vmem:[%s802 + $0x640] sm:$0xff]
        %v1044 = vld [vmem:[%s802 + $0x648] sm:$0xff]
        %v1045 = vld [vmem:[%s802 + $0x650] sm:$0xff]
        %v1046 = vld [vmem:[%s802 + $0x658] sm:$0xff]
        %v1047 = vld [vmem:[%s802 + $0x660] sm:$0xff]
        %v1048 = vld [vmem:[%s802 + $0x668] sm:$0xff]
        %v1049 = vld [vmem:[%s802 + $0x670] sm:$0xff]
        %v1050 = vld [vmem:[%s802 + $0x678] sm:$0xff]
        %v1051 = vld [vmem:[%s802 + $0x680] sm:$0xff]
        %v1052 = vld [vmem:[%s802 + $0x688] sm:$0xff]
        %v1053 = vld [vmem:[%s802 + $0x690] sm:$0xff]
        %v1054 = vld [vmem:[%s802 + $0x698] sm:$0xff]
        %v1055 = vld [vmem:[%s802 + $0x6a0] sm:$0xff]
        %v1056 = vld [vmem:[%s802 + $0x6a8] sm:$0xff]
        %v1057 = vld [vmem:[%s802 + $0x6b0] sm:$0xff]
        %v1058 = vld [vmem:[%s802 + $0x6b8] sm:$0xff]
        %v1059 = vld [vmem:[%s802 + $0x6c0] sm:$0xff]
        %v1060 = vld [vmem:[%s802 + $0x6c8] sm:$0xff]
        %v1061 = vld [vmem:[%s802 + $0x6d0] sm:$0xff]
        %v1062 = vld [vmem:[%s802 + $0x6d8] sm:$0xff]
        %v1063 = vld [vmem:[%s802 + $0x6e0] sm:$0xff]
        %v1064 = vld [vmem:[%s802 + $0x6e8] sm:$0xff]
        %v1065 = vld [vmem:[%s802 + $0x6f0] sm:$0xff]
        %v1066 = vld [vmem:[%s802 + $0x6f8] sm:$0xff]
        %v1067 = vld [vmem:[%s802 + $0x700] sm:$0xff]
        %v1068 = vld [vmem:[%s802 + $0x708] sm:$0xff]
        %v1069 = vld [vmem:[%s802 + $0x710] sm:$0xff]
        %v1070 = vld [vmem:[%s802 + $0x718] sm:$0xff]
        %v1071 = vld [vmem:[%s802 + $0x720] sm:$0xff]
        %v1072 = vld [vmem:[%s802 + $0x728] sm:$0xff]
        %v1073 = vld [vmem:[%s802 + $0x730] sm:$0xff]
        %v1074 = vld [vmem:[%s802 + $0x738] sm:$0xff]
        %v1075 = vld [vmem:[%s802 + $0x740] sm:$0xff]
        %v1076 = vld [vmem:[%s802 + $0x748] sm:$0xff]
        %v1077 = vld [vmem:[%s802 + $0x750] sm:$0xff]
        %v1078 = vld [vmem:[%s802 + $0x758] sm:$0xff]
        %v1079 = vld [vmem:[%s802 + $0x760] sm:$0xff]
        %v1080 = vld [vmem:[%s802 + $0x768] sm:$0xff]
        %v1081 = vld [vmem:[%s802 + $0x770] sm:$0xff]
        %v1082 = vld [vmem:[%s802 + $0x778] sm:$0xff]
        %v1083 = vld [vmem:[%s802 + $0x780] sm:$0xff]
        %v1084 = vld [vmem:[%s802 + $0x788] sm:$0xff]
        %v1085 = vld [vmem:[%s802 + $0x790] sm:$0xff]
        %v1086 = vld [vmem:[%s802 + $0x798] sm:$0xff]
        %v1087 = vld [vmem:[%s802 + $0x7a0] sm:$0xff]
        %v1088 = vld [vmem:[%s802 + $0x7a8] sm:$0xff]
        %v1089 = vld [vmem:[%s802 + $0x7b0] sm:$0xff]
        %v1090 = vld [vmem:[%s802 + $0x7b8] sm:$0xff]
        %v1091 = vld [vmem:[%s802 + $0x7c0] sm:$0xff]
        %v1092 = vld [vmem:[%s802 + $0x7c8] sm:$0xff]
        %v1093 = vld [vmem:[%s802 + $0x7d0] sm:$0xff]
        %v1094 = vld [vmem:[%s802 + $0x7d8] sm:$0xff]
        %v1095 = vld [vmem:[%s802 + $0x7e0] sm:$0xff]
        %v1096 = vld [vmem:[%s802 + $0x7e8] sm:$0xff]
        %v1097 = vld [vmem:[%s802 + $0x7f0] sm:$0xff]
        %v1098 = vld [vmem:[%s802 + $0x7f8] sm:$0xff]
        %v1099 = vld [vmem:[%s802 + $0x800] sm:$0xff]
        %v1100 = vld [vmem:[%s802 + $0x808] sm:$0xff]
        %v1101 = vld [vmem:[%s802 + $0x810] sm:$0xff]
        %v1102 = vld [vmem:[%s802 + $0x818] sm:$0xff]
        %v1103 = vld [vmem:[%s802 + $0x820] sm:$0xff]
        %v1104 = vld [vmem:[%s802 + $0x828] sm:$0xff]
        %v1105 = vld [vmem:[%s802 + $0x830] sm:$0xff]
        %v1106 = vld [vmem:[%s802 + $0x838] sm:$0xff]
        %v1107 = vld [vmem:[%s802 + $0x840] sm:$0xff]
        %v1108 = vld [vmem:[%s802 + $0x848] sm:$0xff]
        %v1109 = vld [vmem:[%s802 + $0x850] sm:$0xff]
        %v1110 = vld [vmem:[%s802 + $0x858] sm:$0xff]
        %v1111 = vld [vmem:[%s802 + $0x860] sm:$0xff]
        %v1112 = vld [vmem:[%s802 + $0x868] sm:$0xff]
        %v1113 = vld [vmem:[%s802 + $0x870] sm:$0xff]
        %v1114 = vld [vmem:[%s802 + $0x878] sm:$0xff]
        %v1115 = vld [vmem:[%s802 + $0x880] sm:$0xff]
        %v1116 = vld [vmem:[%s802 + $0x888] sm:$0xff]
        %v1117 = vld [vmem:[%s802 + $0x890] sm:$0xff]
        %v1118 = vld [vmem:[%s802 + $0x898] sm:$0xff]
        %v1119 = vld [vmem:[%s802 + $0x8a0] sm:$0xff]
        %v1120 = vld [vmem:[%s802 + $0x8a8] sm:$0xff]
        %v1121 = vld [vmem:[%s802 + $0x8b0] sm:$0xff]
        %v1122 = vld [vmem:[%s802 + $0x8b8] sm:$0xff]
        %v1123 = vld [vmem:[%s802 + $0x8c0] sm:$0xff]
        %v1124 = vld [vmem:[%s802 + $0x8c8] sm:$0xff]
        %v1125 = vld [vmem:[%s802 + $0x8d0] sm:$0xff]
        %v1126 = vld [vmem:[%s802 + $0x8d8] sm:$0xff]
        %v1127 = vld [vmem:[%s802 + $0x8e0] sm:$0xff]
        %v1128 = vld [vmem:[%s802 + $0x8e8] sm:$0xff]
        %v1129 = vld [vmem:[%s802 + $0x8f0] sm:$0xff]
        %v1130 = vld [vmem:[%s802 + $0x8f8] sm:$0xff]
        %v1131 = vunpack.c.l.s8.bf16 %v843
        %v1132 = vunpack.c.l.s8.bf16 %v844
        %v1133 = vunpack.c.l.s8.bf16 %v845
        %v1134 = vunpack.c.l.s8.bf16 %v846
        %v1135 = vunpack.c.h.s8.bf16 %v843
        %v1136 = vunpack.c.h.s8.bf16 %v844
        %v1137 = vunpack.c.h.s8.bf16 %v845
        %v1138 = vunpack.c.h.s8.bf16 %v846
        %v1139 = vunpack.c.l.s8.bf16 %v847
        %v1140 = vunpack.c.l.s8.bf16 %v848
        %v1141 = vunpack.c.l.s8.bf16 %v849
        %v1142 = vunpack.c.l.s8.bf16 %v850
        %v1143 = vunpack.c.h.s8.bf16 %v847
        %v1144 = vunpack.c.h.s8.bf16 %v848
        %v1145 = vunpack.c.h.s8.bf16 %v849
        %v1146 = vunpack.c.h.s8.bf16 %v850
        %v1147 = vunpack.c.l.s8.bf16 %v851
        %v1148 = vunpack.c.l.s8.bf16 %v852
        %v1149 = vunpack.c.l.s8.bf16 %v853
        %v1150 = vunpack.c.l.s8.bf16 %v854
        %v1151 = vunpack.c.h.s8.bf16 %v851
        %v1152 = vunpack.c.h.s8.bf16 %v852
        %v1153 = vunpack.c.h.s8.bf16 %v853
        %v1154 = vunpack.c.h.s8.bf16 %v854
        %v1155 = vunpack.c.l.s8.bf16 %v855
        %v1156 = vunpack.c.l.s8.bf16 %v856
        %v1157 = vunpack.c.l.s8.bf16 %v857
        %v1158 = vunpack.c.l.s8.bf16 %v858
        %v1159 = vunpack.c.h.s8.bf16 %v855
        %v1160 = vunpack.c.h.s8.bf16 %v856
        %v1161 = vunpack.c.h.s8.bf16 %v857
        %v1162 = vunpack.c.h.s8.bf16 %v858
        %v1163 = vunpack.c.l.s8.bf16 %v859
        %v1164 = vunpack.c.l.s8.bf16 %v860
        %v1165 = vunpack.c.l.s8.bf16 %v861
        %v1166 = vunpack.c.l.s8.bf16 %v862
        %v1167 = vunpack.c.h.s8.bf16 %v859
        %v1168 = vunpack.c.h.s8.bf16 %v860
        %v1169 = vunpack.c.h.s8.bf16 %v861
        %v1170 = vunpack.c.h.s8.bf16 %v862
        %v1171 = vunpack.c.l.s8.bf16 %v863
        %v1172 = vunpack.c.l.s8.bf16 %v864
        %v1173 = vunpack.c.l.s8.bf16 %v865
        %v1174 = vunpack.c.l.s8.bf16 %v866
        %v1175 = vunpack.c.h.s8.bf16 %v863
        %v1176 = vunpack.c.h.s8.bf16 %v864
        %v1177 = vunpack.c.h.s8.bf16 %v865
        %v1178 = vunpack.c.h.s8.bf16 %v866
        %v1179 = vunpack.c.l.s8.bf16 %v867
        %v1180 = vunpack.c.l.s8.bf16 %v868
        %v1181 = vunpack.c.l.s8.bf16 %v869
        %v1182 = vunpack.c.l.s8.bf16 %v870
        %v1183 = vunpack.c.h.s8.bf16 %v867
        %v1184 = vunpack.c.h.s8.bf16 %v868
        %v1185 = vunpack.c.h.s8.bf16 %v869
        %v1186 = vunpack.c.h.s8.bf16 %v870
        %v1187 = vunpack.c.l.s8.bf16 %v871
        %v1188 = vunpack.c.l.s8.bf16 %v872
        %v1189 = vunpack.c.l.s8.bf16 %v873
        %v1190 = vunpack.c.l.s8.bf16 %v874
        %v1191 = vunpack.c.h.s8.bf16 %v871
        %v1192 = vunpack.c.h.s8.bf16 %v872
        %v1193 = vunpack.c.h.s8.bf16 %v873
        %v1194 = vunpack.c.h.s8.bf16 %v874
        %v1195 = vunpack.c.l.s8.bf16 %v875
        %v1196 = vunpack.c.l.s8.bf16 %v876
        %v1197 = vunpack.c.l.s8.bf16 %v877
        %v1198 = vunpack.c.l.s8.bf16 %v878
        %v1199 = vunpack.c.h.s8.bf16 %v875
        %v1200 = vunpack.c.h.s8.bf16 %v876
        %v1201 = vunpack.c.h.s8.bf16 %v877
        %v1202 = vunpack.c.h.s8.bf16 %v878
        %v1203 = vunpack.c.l.s8.bf16 %v879
        %v1204 = vunpack.c.l.s8.bf16 %v880
        %v1205 = vunpack.c.l.s8.bf16 %v881
        %v1206 = vunpack.c.l.s8.bf16 %v882
        %v1207 = vunpack.c.h.s8.bf16 %v879
        %v1208 = vunpack.c.h.s8.bf16 %v880
        %v1209 = vunpack.c.h.s8.bf16 %v881
        %v1210 = vunpack.c.h.s8.bf16 %v882
        %v1211 = vunpack.c.l.s8.bf16 %v883
        %v1212 = vunpack.c.l.s8.bf16 %v884
        %v1213 = vunpack.c.l.s8.bf16 %v885
        %v1214 = vunpack.c.l.s8.bf16 %v886
        %v1215 = vunpack.c.h.s8.bf16 %v883
        %v1216 = vunpack.c.h.s8.bf16 %v884
        %v1217 = vunpack.c.h.s8.bf16 %v885
        %v1218 = vunpack.c.h.s8.bf16 %v886
        %v1219 = vunpack.c.l.s8.bf16 %v887
        %v1220 = vunpack.c.l.s8.bf16 %v888
        %v1221 = vunpack.c.l.s8.bf16 %v889
        %v1222 = vunpack.c.l.s8.bf16 %v890
        %v1223 = vunpack.c.h.s8.bf16 %v887
        %v1224 = vunpack.c.h.s8.bf16 %v888
        %v1225 = vunpack.c.h.s8.bf16 %v889
        %v1226 = vunpack.c.h.s8.bf16 %v890
        %v1227 = vunpack.c.l.s8.bf16 %v891
        %v1228 = vunpack.c.l.s8.bf16 %v892
        %v1229 = vunpack.c.l.s8.bf16 %v893
        %v1230 = vunpack.c.l.s8.bf16 %v894
        %v1231 = vunpack.c.h.s8.bf16 %v891
        %v1232 = vunpack.c.h.s8.bf16 %v892
        %v1233 = vunpack.c.h.s8.bf16 %v893
        %v1234 = vunpack.c.h.s8.bf16 %v894
        %v1235 = vunpack.c.l.s8.bf16 %v895
        %v1236 = vunpack.c.l.s8.bf16 %v896
        %v1237 = vunpack.c.l.s8.bf16 %v897
        %v1238 = vunpack.c.l.s8.bf16 %v898
        %v1239 = vunpack.c.h.s8.bf16 %v895
        %v1240 = vunpack.c.h.s8.bf16 %v896
        %v1241 = vunpack.c.h.s8.bf16 %v897
        %v1242 = vunpack.c.h.s8.bf16 %v898
        %v1243 = vunpack.c.l.s8.bf16 %v899
        %v1244 = vunpack.c.l.s8.bf16 %v900
        %v1245 = vunpack.c.l.s8.bf16 %v901
        %v1246 = vunpack.c.l.s8.bf16 %v902
        %v1247 = vunpack.c.h.s8.bf16 %v899
        %v1248 = vunpack.c.h.s8.bf16 %v900
        %v1249 = vunpack.c.h.s8.bf16 %v901
        %v1250 = vunpack.c.h.s8.bf16 %v902
        %v1251 = vunpack.c.l.s8.bf16 %v903
        %v1252 = vunpack.c.l.s8.bf16 %v904
        %v1253 = vunpack.c.l.s8.bf16 %v905
        %v1254 = vunpack.c.l.s8.bf16 %v906
        %v1255 = vunpack.c.h.s8.bf16 %v903
        %v1256 = vunpack.c.h.s8.bf16 %v904
        %v1257 = vunpack.c.h.s8.bf16 %v905
        %v1258 = vunpack.c.h.s8.bf16 %v906
        %v1259 = vunpack.c.l.s8.bf16 %v907
        %v1260 = vunpack.c.l.s8.bf16 %v908
        %v1261 = vunpack.c.l.s8.bf16 %v909
        %v1262 = vunpack.c.l.s8.bf16 %v910
        %v1263 = vunpack.c.h.s8.bf16 %v907
        %v1264 = vunpack.c.h.s8.bf16 %v908
        %v1265 = vunpack.c.h.s8.bf16 %v909
        %v1266 = vunpack.c.h.s8.bf16 %v910
        %v1267 = vunpack.c.l.s8.bf16 %v911
        %v1268 = vunpack.c.l.s8.bf16 %v912
        %v1269 = vunpack.c.l.s8.bf16 %v913
        %v1270 = vunpack.c.l.s8.bf16 %v914
        %v1271 = vunpack.c.h.s8.bf16 %v911
        %v1272 = vunpack.c.h.s8.bf16 %v912
        %v1273 = vunpack.c.h.s8.bf16 %v913
        %v1274 = vunpack.c.h.s8.bf16 %v914
        %v1275 = vunpack.c.l.s8.bf16 %v915
        %v1276 = vunpack.c.l.s8.bf16 %v916
        %v1277 = vunpack.c.l.s8.bf16 %v917
        %v1278 = vunpack.c.l.s8.bf16 %v918
        %v1279 = vunpack.c.h.s8.bf16 %v915
        %v1280 = vunpack.c.h.s8.bf16 %v916
        %v1281 = vunpack.c.h.s8.bf16 %v917
        %v1282 = vunpack.c.h.s8.bf16 %v918
        %v1283 = vunpack.c.l.s8.bf16 %v919
        %v1284 = vunpack.c.l.s8.bf16 %v920
        %v1285 = vunpack.c.l.s8.bf16 %v921
        %v1286 = vunpack.c.l.s8.bf16 %v922
        %v1287 = vunpack.c.h.s8.bf16 %v919
        %v1288 = vunpack.c.h.s8.bf16 %v920
        %v1289 = vunpack.c.h.s8.bf16 %v921
        %v1290 = vunpack.c.h.s8.bf16 %v922
        %v1291 = vunpack.c.l.s8.bf16 %v923
        %v1292 = vunpack.c.l.s8.bf16 %v924
        %v1293 = vunpack.c.l.s8.bf16 %v925
        %v1294 = vunpack.c.l.s8.bf16 %v926
        %v1295 = vunpack.c.h.s8.bf16 %v923
        %v1296 = vunpack.c.h.s8.bf16 %v924
        %v1297 = vunpack.c.h.s8.bf16 %v925
        %v1298 = vunpack.c.h.s8.bf16 %v926
        %v1299 = vunpack.c.l.s8.bf16 %v927
        %v1300 = vunpack.c.l.s8.bf16 %v928
        %v1301 = vunpack.c.l.s8.bf16 %v929
        %v1302 = vunpack.c.l.s8.bf16 %v930
        %v1303 = vunpack.c.h.s8.bf16 %v927
        %v1304 = vunpack.c.h.s8.bf16 %v928
        %v1305 = vunpack.c.h.s8.bf16 %v929
        %v1306 = vunpack.c.h.s8.bf16 %v930
        %v1307 = vunpack.c.l.s8.bf16 %v931
        %v1308 = vunpack.c.l.s8.bf16 %v932
        %v1309 = vunpack.c.l.s8.bf16 %v933
        %v1310 = vunpack.c.l.s8.bf16 %v934
        %v1311 = vunpack.c.h.s8.bf16 %v931
        %v1312 = vunpack.c.h.s8.bf16 %v932
        %v1313 = vunpack.c.h.s8.bf16 %v933
        %v1314 = vunpack.c.h.s8.bf16 %v934
        %v1315 = vunpack.c.l.s8.bf16 %v935
        %v1316 = vunpack.c.l.s8.bf16 %v936
        %v1317 = vunpack.c.l.s8.bf16 %v937
        %v1318 = vunpack.c.l.s8.bf16 %v938
        %v1319 = vunpack.c.h.s8.bf16 %v935
        %v1320 = vunpack.c.h.s8.bf16 %v936
        %v1321 = vunpack.c.h.s8.bf16 %v937
        %v1322 = vunpack.c.h.s8.bf16 %v938
        %v1323 = vunpack.c.l.s8.bf16 %v939
        %v1324 = vunpack.c.l.s8.bf16 %v940
        %v1325 = vunpack.c.l.s8.bf16 %v941
        %v1326 = vunpack.c.l.s8.bf16 %v942
        %v1327 = vunpack.c.h.s8.bf16 %v939
        %v1328 = vunpack.c.h.s8.bf16 %v940
        %v1329 = vunpack.c.h.s8.bf16 %v941
        %v1330 = vunpack.c.h.s8.bf16 %v942
        %v1331 = vunpack.c.l.s8.bf16 %v943
        %v1332 = vunpack.c.l.s8.bf16 %v944
        %v1333 = vunpack.c.l.s8.bf16 %v945
        %v1334 = vunpack.c.l.s8.bf16 %v946
        %v1335 = vunpack.c.h.s8.bf16 %v943
        %v1336 = vunpack.c.h.s8.bf16 %v944
        %v1337 = vunpack.c.h.s8.bf16 %v945
        %v1338 = vunpack.c.h.s8.bf16 %v946
        %v1339 = vunpack.c.l.s8.bf16 %v947
        %v1340 = vunpack.c.l.s8.bf16 %v948
        %v1341 = vunpack.c.l.s8.bf16 %v949
        %v1342 = vunpack.c.l.s8.bf16 %v950
        %v1343 = vunpack.c.h.s8.bf16 %v947
        %v1344 = vunpack.c.h.s8.bf16 %v948
        %v1345 = vunpack.c.h.s8.bf16 %v949
        %v1346 = vunpack.c.h.s8.bf16 %v950
        %v1347 = vunpack.c.l.s8.bf16 %v951
        %v1348 = vunpack.c.l.s8.bf16 %v952
        %v1349 = vunpack.c.l.s8.bf16 %v953
        %v1350 = vunpack.c.l.s8.bf16 %v954
        %v1351 = vunpack.c.h.s8.bf16 %v951
        %v1352 = vunpack.c.h.s8.bf16 %v952
        %v1353 = vunpack.c.h.s8.bf16 %v953
        %v1354 = vunpack.c.h.s8.bf16 %v954
        %v1355 = vunpack.c.l.s8.bf16 %v955
        %v1356 = vunpack.c.l.s8.bf16 %v956
        %v1357 = vunpack.c.l.s8.bf16 %v957
        %v1358 = vunpack.c.l.s8.bf16 %v958
        %v1359 = vunpack.c.h.s8.bf16 %v955
        %v1360 = vunpack.c.h.s8.bf16 %v956
        %v1361 = vunpack.c.h.s8.bf16 %v957
        %v1362 = vunpack.c.h.s8.bf16 %v958
        %v1363 = vunpack.c.l.s8.bf16 %v959
        %v1364 = vunpack.c.l.s8.bf16 %v960
        %v1365 = vunpack.c.l.s8.bf16 %v961
        %v1366 = vunpack.c.l.s8.bf16 %v962
        %v1367 = vunpack.c.h.s8.bf16 %v959
        %v1368 = vunpack.c.h.s8.bf16 %v960
        %v1369 = vunpack.c.h.s8.bf16 %v961
        %v1370 = vunpack.c.h.s8.bf16 %v962
        %v1371 = vunpack.c.l.s8.bf16 %v963
        %v1372 = vunpack.c.l.s8.bf16 %v964
        %v1373 = vunpack.c.l.s8.bf16 %v965
        %v1374 = vunpack.c.l.s8.bf16 %v966
        %v1375 = vunpack.c.h.s8.bf16 %v963
        %v1376 = vunpack.c.h.s8.bf16 %v964
        %v1377 = vunpack.c.h.s8.bf16 %v965
        %v1378 = vunpack.c.h.s8.bf16 %v966
        %v1379 = vunpack.c.l.s8.bf16 %v967
        %v1380 = vunpack.c.l.s8.bf16 %v968
        %v1381 = vunpack.c.l.s8.bf16 %v969
        %v1382 = vunpack.c.l.s8.bf16 %v970
        %v1383 = vunpack.c.h.s8.bf16 %v967
        %v1384 = vunpack.c.h.s8.bf16 %v968
        %v1385 = vunpack.c.h.s8.bf16 %v969
        %v1386 = vunpack.c.h.s8.bf16 %v970
        %v1387 = vunpack.c.l.s8.bf16 %v971
        %v1388 = vunpack.c.l.s8.bf16 %v972
        %v1389 = vunpack.c.l.s8.bf16 %v973
        %v1390 = vunpack.c.l.s8.bf16 %v974
        %v1391 = vunpack.c.h.s8.bf16 %v971
        %v1392 = vunpack.c.h.s8.bf16 %v972
        %v1393 = vunpack.c.h.s8.bf16 %v973
        %v1394 = vunpack.c.h.s8.bf16 %v974
        %v1395 = vunpack.c.l.s8.bf16 %v975
        %v1396 = vunpack.c.l.s8.bf16 %v976
        %v1397 = vunpack.c.l.s8.bf16 %v977
        %v1398 = vunpack.c.l.s8.bf16 %v978
        %v1399 = vunpack.c.h.s8.bf16 %v975
        %v1400 = vunpack.c.h.s8.bf16 %v976
        %v1401 = vunpack.c.h.s8.bf16 %v977
        %v1402 = vunpack.c.h.s8.bf16 %v978
        %v1403 = vunpack.c.l.s8.bf16 %v979
        %v1404 = vunpack.c.l.s8.bf16 %v980
        %v1405 = vunpack.c.l.s8.bf16 %v981
        %v1406 = vunpack.c.l.s8.bf16 %v982
        %v1407 = vunpack.c.h.s8.bf16 %v979
        %v1408 = vunpack.c.h.s8.bf16 %v980
        %v1409 = vunpack.c.h.s8.bf16 %v981
        %v1410 = vunpack.c.h.s8.bf16 %v982
        %v1411 = vunpack.c.l.s8.bf16 %v983
        %v1412 = vunpack.c.l.s8.bf16 %v984
        %v1413 = vunpack.c.l.s8.bf16 %v985
        %v1414 = vunpack.c.l.s8.bf16 %v986
        %v1415 = vunpack.c.h.s8.bf16 %v983
        %v1416 = vunpack.c.h.s8.bf16 %v984
        %v1417 = vunpack.c.h.s8.bf16 %v985
        %v1418 = vunpack.c.h.s8.bf16 %v986
        %v1419 = vunpack.c.l.s8.bf16 %v987
        %v1420 = vunpack.c.l.s8.bf16 %v988
        %v1421 = vunpack.c.l.s8.bf16 %v989
        %v1422 = vunpack.c.l.s8.bf16 %v990
        %v1423 = vunpack.c.h.s8.bf16 %v987
        %v1424 = vunpack.c.h.s8.bf16 %v988
        %v1425 = vunpack.c.h.s8.bf16 %v989
        %v1426 = vunpack.c.h.s8.bf16 %v990
        %v1427 = vunpack.c.l.s8.bf16 %v991
        %v1428 = vunpack.c.l.s8.bf16 %v992
        %v1429 = vunpack.c.l.s8.bf16 %v993
        %v1430 = vunpack.c.l.s8.bf16 %v994
        %v1431 = vunpack.c.h.s8.bf16 %v991
        %v1432 = vunpack.c.h.s8.bf16 %v992
        %v1433 = vunpack.c.h.s8.bf16 %v993
        %v1434 = vunpack.c.h.s8.bf16 %v994
        %v1435 = vunpack.c.l.s8.bf16 %v995
        %v1436 = vunpack.c.l.s8.bf16 %v996
        %v1437 = vunpack.c.l.s8.bf16 %v997
        %v1438 = vunpack.c.l.s8.bf16 %v998
        %v1439 = vunpack.c.h.s8.bf16 %v995
        %v1440 = vunpack.c.h.s8.bf16 %v996
        %v1441 = vunpack.c.h.s8.bf16 %v997
        %v1442 = vunpack.c.h.s8.bf16 %v998
        %v1443 = vunpack.c.l.s8.bf16 %v999
        %v1444 = vunpack.c.l.s8.bf16 %v1000
        %v1445 = vunpack.c.l.s8.bf16 %v1001
        %v1446 = vunpack.c.l.s8.bf16 %v1002
        %v1447 = vunpack.c.h.s8.bf16 %v999
        %v1448 = vunpack.c.h.s8.bf16 %v1000
        %v1449 = vunpack.c.h.s8.bf16 %v1001
        %v1450 = vunpack.c.h.s8.bf16 %v1002
        %v1451 = vunpack.c.l.s8.bf16 %v1003
        %v1452 = vunpack.c.l.s8.bf16 %v1004
        %v1453 = vunpack.c.l.s8.bf16 %v1005
        %v1454 = vunpack.c.l.s8.bf16 %v1006
        %v1455 = vunpack.c.h.s8.bf16 %v1003
        %v1456 = vunpack.c.h.s8.bf16 %v1004
        %v1457 = vunpack.c.h.s8.bf16 %v1005
        %v1458 = vunpack.c.h.s8.bf16 %v1006
        %v1459 = vunpack.c.l.s8.bf16 %v1007
        %v1460 = vunpack.c.l.s8.bf16 %v1008
        %v1461 = vunpack.c.l.s8.bf16 %v1009
        %v1462 = vunpack.c.l.s8.bf16 %v1010
        %v1463 = vunpack.c.h.s8.bf16 %v1007
        %v1464 = vunpack.c.h.s8.bf16 %v1008
        %v1465 = vunpack.c.h.s8.bf16 %v1009
        %v1466 = vunpack.c.h.s8.bf16 %v1010
        %v1467 = vunpack.c.l.s8.bf16 %v1011
        %v1468 = vunpack.c.l.s8.bf16 %v1012
        %v1469 = vunpack.c.l.s8.bf16 %v1013
        %v1470 = vunpack.c.l.s8.bf16 %v1014
        %v1471 = vunpack.c.h.s8.bf16 %v1011
        %v1472 = vunpack.c.h.s8.bf16 %v1012
        %v1473 = vunpack.c.h.s8.bf16 %v1013
        %v1474 = vunpack.c.h.s8.bf16 %v1014
        %v1475 = vunpack.c.l.s8.bf16 %v1015
        %v1476 = vunpack.c.l.s8.bf16 %v1016
        %v1477 = vunpack.c.l.s8.bf16 %v1017
        %v1478 = vunpack.c.l.s8.bf16 %v1018
        %v1479 = vunpack.c.h.s8.bf16 %v1015
        %v1480 = vunpack.c.h.s8.bf16 %v1016
        %v1481 = vunpack.c.h.s8.bf16 %v1017
        %v1482 = vunpack.c.h.s8.bf16 %v1018
        %v1483 = vunpack.c.l.s8.bf16 %v1019
        %v1484 = vunpack.c.l.s8.bf16 %v1020
        %v1485 = vunpack.c.l.s8.bf16 %v1021
        %v1486 = vunpack.c.l.s8.bf16 %v1022
        %v1487 = vunpack.c.h.s8.bf16 %v1019
        %v1488 = vunpack.c.h.s8.bf16 %v1020
        %v1489 = vunpack.c.h.s8.bf16 %v1021
        %v1490 = vunpack.c.h.s8.bf16 %v1022
        %v1491 = vunpack.c.l.s8.bf16 %v1023
        %v1492 = vunpack.c.l.s8.bf16 %v1024
        %v1493 = vunpack.c.l.s8.bf16 %v1025
        %v1494 = vunpack.c.l.s8.bf16 %v1026
        %v1495 = vunpack.c.h.s8.bf16 %v1023
        %v1496 = vunpack.c.h.s8.bf16 %v1024
        %v1497 = vunpack.c.h.s8.bf16 %v1025
        %v1498 = vunpack.c.h.s8.bf16 %v1026
        %v1499 = vunpack.c.l.s8.bf16 %v1027
        %v1500 = vunpack.c.l.s8.bf16 %v1028
        %v1501 = vunpack.c.l.s8.bf16 %v1029
        %v1502 = vunpack.c.l.s8.bf16 %v1030
        %v1503 = vunpack.c.h.s8.bf16 %v1027
        %v1504 = vunpack.c.h.s8.bf16 %v1028
        %v1505 = vunpack.c.h.s8.bf16 %v1029
        %v1506 = vunpack.c.h.s8.bf16 %v1030
        %v1507 = vunpack.c.l.s8.bf16 %v1031
        %v1508 = vunpack.c.l.s8.bf16 %v1032
        %v1509 = vunpack.c.l.s8.bf16 %v1033
        %v1510 = vunpack.c.l.s8.bf16 %v1034
        %v1511 = vunpack.c.h.s8.bf16 %v1031
        %v1512 = vunpack.c.h.s8.bf16 %v1032
        %v1513 = vunpack.c.h.s8.bf16 %v1033
        %v1514 = vunpack.c.h.s8.bf16 %v1034
        %v1515 = vunpack.c.l.s8.bf16 %v1035
        %v1516 = vunpack.c.l.s8.bf16 %v1036
        %v1517 = vunpack.c.l.s8.bf16 %v1037
        %v1518 = vunpack.c.l.s8.bf16 %v1038
        %v1519 = vunpack.c.h.s8.bf16 %v1035
        %v1520 = vunpack.c.h.s8.bf16 %v1036
        %v1521 = vunpack.c.h.s8.bf16 %v1037
        %v1522 = vunpack.c.h.s8.bf16 %v1038
        %v1523 = vunpack.c.l.s8.bf16 %v1039
        %v1524 = vunpack.c.l.s8.bf16 %v1040
        %v1525 = vunpack.c.l.s8.bf16 %v1041
        %v1526 = vunpack.c.l.s8.bf16 %v1042
        %v1527 = vunpack.c.h.s8.bf16 %v1039
        %v1528 = vunpack.c.h.s8.bf16 %v1040
        %v1529 = vunpack.c.h.s8.bf16 %v1041
        %v1530 = vunpack.c.h.s8.bf16 %v1042
        %v1531 = vunpack.c.l.s8.bf16 %v1043
        %v1532 = vunpack.c.l.s8.bf16 %v1044
        %v1533 = vunpack.c.l.s8.bf16 %v1045
        %v1534 = vunpack.c.l.s8.bf16 %v1046
        %v1535 = vunpack.c.h.s8.bf16 %v1043
        %v1536 = vunpack.c.h.s8.bf16 %v1044
        %v1537 = vunpack.c.h.s8.bf16 %v1045
        %v1538 = vunpack.c.h.s8.bf16 %v1046
        %v1539 = vunpack.c.l.s8.bf16 %v1047
        %v1540 = vunpack.c.l.s8.bf16 %v1048
        %v1541 = vunpack.c.l.s8.bf16 %v1049
        %v1542 = vunpack.c.l.s8.bf16 %v1050
        %v1543 = vunpack.c.h.s8.bf16 %v1047
        %v1544 = vunpack.c.h.s8.bf16 %v1048
        %v1545 = vunpack.c.h.s8.bf16 %v1049
        %v1546 = vunpack.c.h.s8.bf16 %v1050
        %v1547 = vunpack.c.l.s8.bf16 %v1051
        %v1548 = vunpack.c.l.s8.bf16 %v1052
        %v1549 = vunpack.c.l.s8.bf16 %v1053
        %v1550 = vunpack.c.l.s8.bf16 %v1054
        %v1551 = vunpack.c.h.s8.bf16 %v1051
        %v1552 = vunpack.c.h.s8.bf16 %v1052
        %v1553 = vunpack.c.h.s8.bf16 %v1053
        %v1554 = vunpack.c.h.s8.bf16 %v1054
        %v1555 = vunpack.c.l.s8.bf16 %v1055
        %v1556 = vunpack.c.l.s8.bf16 %v1056
        %v1557 = vunpack.c.l.s8.bf16 %v1057
        %v1558 = vunpack.c.l.s8.bf16 %v1058
        %v1559 = vunpack.c.h.s8.bf16 %v1055
        %v1560 = vunpack.c.h.s8.bf16 %v1056
        %v1561 = vunpack.c.h.s8.bf16 %v1057
        %v1562 = vunpack.c.h.s8.bf16 %v1058
        %v1563 = vunpack.c.l.s8.bf16 %v1059
        %v1564 = vunpack.c.l.s8.bf16 %v1060
        %v1565 = vunpack.c.l.s8.bf16 %v1061
        %v1566 = vunpack.c.l.s8.bf16 %v1062
        %v1567 = vunpack.c.h.s8.bf16 %v1059
        %v1568 = vunpack.c.h.s8.bf16 %v1060
        %v1569 = vunpack.c.h.s8.bf16 %v1061
        %v1570 = vunpack.c.h.s8.bf16 %v1062
        %v1571 = vunpack.c.l.s8.bf16 %v1063
        %v1572 = vunpack.c.l.s8.bf16 %v1064
        %v1573 = vunpack.c.l.s8.bf16 %v1065
        %v1574 = vunpack.c.l.s8.bf16 %v1066
        %v1575 = vunpack.c.h.s8.bf16 %v1063
        %v1576 = vunpack.c.h.s8.bf16 %v1064
        %v1577 = vunpack.c.h.s8.bf16 %v1065
        %v1578 = vunpack.c.h.s8.bf16 %v1066
        %v1579 = vunpack.c.l.s8.bf16 %v1067
        %v1580 = vunpack.c.l.s8.bf16 %v1068
        %v1581 = vunpack.c.l.s8.bf16 %v1069
        %v1582 = vunpack.c.l.s8.bf16 %v1070
        %v1583 = vunpack.c.h.s8.bf16 %v1067
        %v1584 = vunpack.c.h.s8.bf16 %v1068
        %v1585 = vunpack.c.h.s8.bf16 %v1069
        %v1586 = vunpack.c.h.s8.bf16 %v1070
        %v1587 = vunpack.c.l.s8.bf16 %v1071
        %v1588 = vunpack.c.l.s8.bf16 %v1072
        %v1589 = vunpack.c.l.s8.bf16 %v1073
        %v1590 = vunpack.c.l.s8.bf16 %v1074
        %v1591 = vunpack.c.h.s8.bf16 %v1071
        %v1592 = vunpack.c.h.s8.bf16 %v1072
        %v1593 = vunpack.c.h.s8.bf16 %v1073
        %v1594 = vunpack.c.h.s8.bf16 %v1074
        %v1595 = vunpack.c.l.s8.bf16 %v1075
        %v1596 = vunpack.c.l.s8.bf16 %v1076
        %v1597 = vunpack.c.l.s8.bf16 %v1077
        %v1598 = vunpack.c.l.s8.bf16 %v1078
        %v1599 = vunpack.c.h.s8.bf16 %v1075
        %v1600 = vunpack.c.h.s8.bf16 %v1076
        %v1601 = vunpack.c.h.s8.bf16 %v1077
        %v1602 = vunpack.c.h.s8.bf16 %v1078
        %v1603 = vunpack.c.l.s8.bf16 %v1079
        %v1604 = vunpack.c.l.s8.bf16 %v1080
        %v1605 = vunpack.c.l.s8.bf16 %v1081
        %v1606 = vunpack.c.l.s8.bf16 %v1082
        %v1607 = vunpack.c.h.s8.bf16 %v1079
        %v1608 = vunpack.c.h.s8.bf16 %v1080
        %v1609 = vunpack.c.h.s8.bf16 %v1081
        %v1610 = vunpack.c.h.s8.bf16 %v1082
        %v1611 = vunpack.c.l.s8.bf16 %v1083
        %v1612 = vunpack.c.l.s8.bf16 %v1084
        %v1613 = vunpack.c.l.s8.bf16 %v1085
        %v1614 = vunpack.c.l.s8.bf16 %v1086
        %v1615 = vunpack.c.h.s8.bf16 %v1083
        %v1616 = vunpack.c.h.s8.bf16 %v1084
        %v1617 = vunpack.c.h.s8.bf16 %v1085
        %v1618 = vunpack.c.h.s8.bf16 %v1086
        %v1619 = vunpack.c.l.s8.bf16 %v1087
        %v1620 = vunpack.c.l.s8.bf16 %v1088
        %v1621 = vunpack.c.l.s8.bf16 %v1089
        %v1622 = vunpack.c.l.s8.bf16 %v1090
        %v1623 = vunpack.c.h.s8.bf16 %v1087
        %v1624 = vunpack.c.h.s8.bf16 %v1088
        %v1625 = vunpack.c.h.s8.bf16 %v1089
        %v1626 = vunpack.c.h.s8.bf16 %v1090
        %v1627 = vunpack.c.l.s8.bf16 %v1091
        %v1628 = vunpack.c.l.s8.bf16 %v1092
        %v1629 = vunpack.c.l.s8.bf16 %v1093
        %v1630 = vunpack.c.l.s8.bf16 %v1094
        %v1631 = vunpack.c.h.s8.bf16 %v1091
        %v1632 = vunpack.c.h.s8.bf16 %v1092
        %v1633 = vunpack.c.h.s8.bf16 %v1093
        %v1634 = vunpack.c.h.s8.bf16 %v1094
        %v1635 = vunpack.c.l.s8.bf16 %v1095
        %v1636 = vunpack.c.l.s8.bf16 %v1096
        %v1637 = vunpack.c.l.s8.bf16 %v1097
        %v1638 = vunpack.c.l.s8.bf16 %v1098
        %v1639 = vunpack.c.h.s8.bf16 %v1095
        %v1640 = vunpack.c.h.s8.bf16 %v1096
        %v1641 = vunpack.c.h.s8.bf16 %v1097
        %v1642 = vunpack.c.h.s8.bf16 %v1098
        %v1643 = vunpack.c.l.s8.bf16 %v1099
        %v1644 = vunpack.c.l.s8.bf16 %v1100
        %v1645 = vunpack.c.l.s8.bf16 %v1101
        %v1646 = vunpack.c.l.s8.bf16 %v1102
        %v1647 = vunpack.c.h.s8.bf16 %v1099
        %v1648 = vunpack.c.h.s8.bf16 %v1100
        %v1649 = vunpack.c.h.s8.bf16 %v1101
        %v1650 = vunpack.c.h.s8.bf16 %v1102
        %v1651 = vunpack.c.l.s8.bf16 %v1103
        %v1652 = vunpack.c.l.s8.bf16 %v1104
        %v1653 = vunpack.c.l.s8.bf16 %v1105
        %v1654 = vunpack.c.l.s8.bf16 %v1106
        %v1655 = vunpack.c.h.s8.bf16 %v1103
        %v1656 = vunpack.c.h.s8.bf16 %v1104
        %v1657 = vunpack.c.h.s8.bf16 %v1105
        %v1658 = vunpack.c.h.s8.bf16 %v1106
        %v1659 = vunpack.c.l.s8.bf16 %v1107
        %v1660 = vunpack.c.l.s8.bf16 %v1108
        %v1661 = vunpack.c.l.s8.bf16 %v1109
        %v1662 = vunpack.c.l.s8.bf16 %v1110
        %v1663 = vunpack.c.h.s8.bf16 %v1107
        %v1664 = vunpack.c.h.s8.bf16 %v1108
        %v1665 = vunpack.c.h.s8.bf16 %v1109
        %v1666 = vunpack.c.h.s8.bf16 %v1110
        %v1667 = vunpack.c.l.s8.bf16 %v1111
        %v1668 = vunpack.c.l.s8.bf16 %v1112
        %v1669 = vunpack.c.l.s8.bf16 %v1113
        %v1670 = vunpack.c.l.s8.bf16 %v1114
        %v1671 = vunpack.c.h.s8.bf16 %v1111
        %v1672 = vunpack.c.h.s8.bf16 %v1112
        %v1673 = vunpack.c.h.s8.bf16 %v1113
        %v1674 = vunpack.c.h.s8.bf16 %v1114
        %v1675 = vunpack.c.l.s8.bf16 %v1115
        %v1676 = vunpack.c.l.s8.bf16 %v1116
        %v1677 = vunpack.c.l.s8.bf16 %v1117
        %v1678 = vunpack.c.l.s8.bf16 %v1118
        %v1679 = vunpack.c.h.s8.bf16 %v1115
        %v1680 = vunpack.c.h.s8.bf16 %v1116
        %v1681 = vunpack.c.h.s8.bf16 %v1117
        %v1682 = vunpack.c.h.s8.bf16 %v1118
        %v1683 = vunpack.c.l.s8.bf16 %v1119
        %v1684 = vunpack.c.l.s8.bf16 %v1120
        %v1685 = vunpack.c.l.s8.bf16 %v1121
        %v1686 = vunpack.c.l.s8.bf16 %v1122
        %v1687 = vunpack.c.h.s8.bf16 %v1119
        %v1688 = vunpack.c.h.s8.bf16 %v1120
        %v1689 = vunpack.c.h.s8.bf16 %v1121
        %v1690 = vunpack.c.h.s8.bf16 %v1122
        %v1691 = vunpack.c.l.s8.bf16 %v1123
        %v1692 = vunpack.c.l.s8.bf16 %v1124
        %v1693 = vunpack.c.l.s8.bf16 %v1125
        %v1694 = vunpack.c.l.s8.bf16 %v1126
        %v1695 = vunpack.c.h.s8.bf16 %v1123
        %v1696 = vunpack.c.h.s8.bf16 %v1124
        %v1697 = vunpack.c.h.s8.bf16 %v1125
        %v1698 = vunpack.c.h.s8.bf16 %v1126
        %v1699 = vunpack.c.l.s8.bf16 %v1127
        %v1700 = vunpack.c.l.s8.bf16 %v1128
        %v1701 = vunpack.c.l.s8.bf16 %v1129
        %v1702 = vunpack.c.l.s8.bf16 %v1130
        %v1703 = vunpack.c.h.s8.bf16 %v1127
        %v1704 = vunpack.c.h.s8.bf16 %v1128
        %v1705 = vunpack.c.h.s8.bf16 %v1129
        %v1706 = vunpack.c.h.s8.bf16 %v1130
        %v1707 = vld [vmem:[%s0] sm:$0xff]
        %v1708 = vld [vmem:[%s0 + $0x8] sm:$0xff]
        %v1709 = vld [vmem:[%s0 + $0x10] sm:$0x3]
        %v1713 = vcombine.high %v1707, %v1707
        %v1715 = vunpack.c.l.s4 1966171168
        %v1716 = vunpack.c.0.s8 %v1715
        %v1717 = vlaneseq
        %v1718 = vshrl.u32 %v1717, 7
        %v1719 = vsub.s32 %v1716, %v1718
        %v1720 = vrot.slane %v1707, %v1719
        %v1722 = vunpack.c.l.s4 1966171168
        %v1723 = vunpack.c.0.s8 %v1722
        %v1724 = vlaneseq
        %v1725 = vshrl.u32 %v1724, 7
        %v1726 = vsub.s32 %v1723, %v1725
        %v1727 = vrot.slane %v1713, %v1726
        %v1728 = vcombine.high %v1720, %v1720
        %v1729 = vcombine.high %v1727, %v1727
        %v1731 = vunpack.c.l.s4 1966171168
        %v1732 = vunpack.c.0.s8 %v1731
        %v1733 = vlaneseq
        %v1734 = vshrl.u32 %v1733, 7
        %v1735 = vsub.s32 %v1732, %v1734
        %v1736 = vrot.slane %v1720, %v1735
        %v1738 = vunpack.c.l.s4 1966171168
        %v1739 = vunpack.c.0.s8 %v1738
        %v1740 = vlaneseq
        %v1741 = vshrl.u32 %v1740, 7
        %v1742 = vsub.s32 %v1739, %v1741
        %v1743 = vrot.slane %v1727, %v1742
        %v1745 = vunpack.c.l.s4 1966171168
        %v1746 = vunpack.c.0.s8 %v1745
        %v1747 = vlaneseq
        %v1748 = vshrl.u32 %v1747, 7
        %v1749 = vsub.s32 %v1746, %v1748
        %v1750 = vrot.slane %v1728, %v1749
        %v1752 = vunpack.c.l.s4 1966171168
        %v1753 = vunpack.c.0.s8 %v1752
        %v1754 = vlaneseq
        %v1755 = vshrl.u32 %v1754, 7
        %v1756 = vsub.s32 %v1753, %v1755
        %v1757 = vrot.slane %v1729, %v1756
        %v1758 = vcombine.high %v1736, %v1736
        %v1759 = vcombine.high %v1743, %v1743
        %v1760 = vcombine.high %v1750, %v1750
        %v1761 = vcombine.high %v1757, %v1757
        %v1762 = vcombine.high %v1708, %v1708
        %v1764 = vunpack.c.l.s4 1966171168
        %v1765 = vunpack.c.0.s8 %v1764
        %v1766 = vlaneseq
        %v1767 = vshrl.u32 %v1766, 7
        %v1768 = vsub.s32 %v1765, %v1767
        %v1769 = vrot.slane %v1708, %v1768
        %v1771 = vunpack.c.l.s4 1966171168
        %v1772 = vunpack.c.0.s8 %v1771
        %v1773 = vlaneseq
        %v1774 = vshrl.u32 %v1773, 7
        %v1775 = vsub.s32 %v1772, %v1774
        %v1776 = vrot.slane %v1762, %v1775
        %v1777 = vcombine.high %v1769, %v1769
        %v1778 = vcombine.high %v1776, %v1776
        %v1780 = vunpack.c.l.s4 1966171168
        %v1781 = vunpack.c.0.s8 %v1780
        %v1782 = vlaneseq
        %v1783 = vshrl.u32 %v1782, 7
        %v1784 = vsub.s32 %v1781, %v1783
        %v1785 = vrot.slane %v1769, %v1784
        %v1787 = vunpack.c.l.s4 1966171168
        %v1788 = vunpack.c.0.s8 %v1787
        %v1789 = vlaneseq
        %v1790 = vshrl.u32 %v1789, 7
        %v1791 = vsub.s32 %v1788, %v1790
        %v1792 = vrot.slane %v1776, %v1791
        %v1794 = vunpack.c.l.s4 1966171168
        %v1795 = vunpack.c.0.s8 %v1794
        %v1796 = vlaneseq
        %v1797 = vshrl.u32 %v1796, 7
        %v1798 = vsub.s32 %v1795, %v1797
        %v1799 = vrot.slane %v1777, %v1798
        %v1801 = vunpack.c.l.s4 1966171168
        %v1802 = vunpack.c.0.s8 %v1801
        %v1803 = vlaneseq
        %v1804 = vshrl.u32 %v1803, 7
        %v1805 = vsub.s32 %v1802, %v1804
        %v1806 = vrot.slane %v1778, %v1805
        %v1807 = vcombine.high %v1785, %v1785
        %v1808 = vcombine.high %v1792, %v1792
        %v1809 = vcombine.high %v1799, %v1799
        %v1810 = vcombine.high %v1806, %v1806
        %v1812 = vunpack.c.l.s4 1966171168
        %v1813 = vunpack.c.0.s8 %v1812
        %v1814 = vlaneseq
        %v1815 = vshrl.u32 %v1814, 7
        %v1816 = vsub.s32 %v1813, %v1815
        %v1817 = vrot.slane %v1709, %v1816
        %v1818 = vcombine.high %v1817, %v1817
        %v1820 = vunpack.c.l.s4 1966171168
        %v1821 = vunpack.c.0.s8 %v1820
        %v1822 = vlaneseq
        %v1823 = vshrl.u32 %v1822, 7
        %v1824 = vsub.s32 %v1821, %v1823
        %v1825 = vrot.slane %v1817, %v1824
        %v1827 = vunpack.c.l.s4 1966171168
        %v1828 = vunpack.c.0.s8 %v1827
        %v1829 = vlaneseq
        %v1830 = vshrl.u32 %v1829, 7
        %v1831 = vsub.s32 %v1828, %v1830
        %v1832 = vrot.slane %v1818, %v1831
        %1851 = vmatprep.subr.bf16.mxu0 %v1132
        %1852 = vmatpush1.bf16.msra.mxu0 %v1131
        %1853 = vmatprep.subr.bf16.mxu0 %v1136
        %1854 = vmatpush1.bf16.msra.mxu0 %v1135
        %1855 = vmatprep.subr.bf16.mxu0 %v1140
        %1856 = vmatpush1.bf16.msra.mxu0 %v1139
        %1857 = vmatprep.subr.bf16.mxu0 %v1144
        %1858 = vmatpush1.bf16.msra.mxu0 %v1143
        %1859 = vmatprep.subr.bf16.mxu0 %v1148
        %1860 = vmatpush1.bf16.msra.mxu0 %v1147
        %1861 = vmatprep.subr.bf16.mxu0 %v1152
        %1862 = vmatpush1.bf16.msra.mxu0 %v1151
        %1863 = vmatprep.subr.bf16.mxu0 %v1156
        %1864 = vmatpush1.bf16.msra.mxu0 %v1155
        %1865 = vmatprep.subr.bf16.mxu0 %v1160
        %1866 = vmatpush1.bf16.msra.mxu0 %v1159
        %1867 = vmatprep.subr.bf16.mxu0 %v1164
        %1868 = vmatpush1.bf16.msra.mxu0 %v1163
        %1869 = vmatprep.subr.bf16.mxu0 %v1168
        %1870 = vmatpush1.bf16.msra.mxu0 %v1167
        %1871 = vmatprep.subr.bf16.mxu0 %v1172
        %1872 = vmatpush1.bf16.msra.mxu0 %v1171
        %1873 = vmatprep.subr.bf16.mxu0 %v1176
        %1874 = vmatpush1.bf16.msra.mxu0 %v1175
        %1875 = vmatprep.subr.bf16.mxu0 %v1180
        %1876 = vmatpush1.bf16.msra.mxu0 %v1179
        %1877 = vmatprep.subr.bf16.mxu0 %v1184
        %1878 = vmatpush1.bf16.msra.mxu0 %v1183
        %1879 = vmatprep.subr.bf16.mxu0 %v1188
        %1880 = vmatpush1.bf16.msra.mxu0 %v1187
        %1881 = vmatprep.subr.bf16.mxu0 %v1192
        %1882 = vmatpush1.bf16.msra.mxu0 %v1191
        %1883 = vmatprep.mubr.bf16.mxu0 %v1750
        %1884 = vmatmul.mubr.bf16.gmra.mrb[0].mxu0 %v1736
        %v1885 = vpop.f32.mrb[0].mxu0
        %v1886 = vadd.f32 0.0, %v1885
        %v1887 = vpop.f32.mrb[0].mxu0
        %v1888 = vadd.f32 0.0, %v1887
        %v1889 = vpop.f32.mrb[0].mxu0
        %v1890 = vpop.f32.mrb[0].mxu0
        %1891 = vdwg.mxu0
        %1892 = vmatprep.subr.bf16.mxu0 %v1196
        %1893 = vmatpush1.bf16.msra.mxu0 %v1195
        %1894 = vmatprep.subr.bf16.mxu0 %v1200
        %1895 = vmatpush1.bf16.msra.mxu0 %v1199
        %1896 = vmatprep.subr.bf16.mxu0 %v1204
        %1897 = vmatpush1.bf16.msra.mxu0 %v1203
        %1898 = vmatprep.subr.bf16.mxu0 %v1208
        %1899 = vmatpush1.bf16.msra.mxu0 %v1207
        %1900 = vmatprep.subr.bf16.mxu0 %v1212
        %1901 = vmatpush1.bf16.msra.mxu0 %v1211
        %1902 = vmatprep.subr.bf16.mxu0 %v1216
        %1903 = vmatpush1.bf16.msra.mxu0 %v1215
        %1904 = vmatprep.subr.bf16.mxu0 %v1220
        %1905 = vmatpush1.bf16.msra.mxu0 %v1219
        %1906 = vmatprep.subr.bf16.mxu0 %v1224
        %1907 = vmatpush1.bf16.msra.mxu0 %v1223
        %1908 = vmatprep.subr.bf16.mxu0 %v1228
        %1909 = vmatpush1.bf16.msra.mxu0 %v1227
        %1910 = vmatprep.subr.bf16.mxu0 %v1232
        %1911 = vmatpush1.bf16.msra.mxu0 %v1231
        %1912 = vmatprep.subr.bf16.mxu0 %v1236
        %1913 = vmatpush1.bf16.msra.mxu0 %v1235
        %1914 = vmatprep.subr.bf16.mxu0 %v1240
        %1915 = vmatpush1.bf16.msra.mxu0 %v1239
        %1916 = vmatprep.subr.bf16.mxu0 %v1244
        %1917 = vmatpush1.bf16.msra.mxu0 %v1243
        %1918 = vmatprep.subr.bf16.mxu0 %v1248
        %1919 = vmatpush1.bf16.msra.mxu0 %v1247
        %1920 = vmatprep.subr.bf16.mxu0 %v1252
        %1921 = vmatpush1.bf16.msra.mxu0 %v1251
        %1922 = vmatprep.subr.bf16.mxu0 %v1256
        %1923 = vmatpush1.bf16.msra.mxu0 %v1255
        %1924 = vmatprep.mubr.bf16.mxu0 %v1760
        %1925 = vmatmul.mubr.bf16.gmra.mrb[0].mxu0 %v1758
        %v1926 = vpop.f32.mrb[0].mxu0
        %v1927 = vadd.f32 %v1886, %v1926
        %v1928 = vpop.f32.mrb[0].mxu0
        %v1929 = vadd.f32 %v1888, %v1928
        %v1930 = vpop.f32.mrb[0].mxu0
        %v1931 = vpop.f32.mrb[0].mxu0
        %1932 = vdwg.mxu0
        %1933 = vmatprep.subr.bf16.mxu0 %v1260
        %1934 = vmatpush1.bf16.msra.mxu0 %v1259
        %1935 = vmatprep.subr.bf16.mxu0 %v1264
        %1936 = vmatpush1.bf16.msra.mxu0 %v1263
        %1937 = vmatprep.subr.bf16.mxu0 %v1268
        %1938 = vmatpush1.bf16.msra.mxu0 %v1267
        %1939 = vmatprep.subr.bf16.mxu0 %v1272
        %1940 = vmatpush1.bf16.msra.mxu0 %v1271
        %1941 = vmatprep.subr.bf16.mxu0 %v1276
        %1942 = vmatpush1.bf16.msra.mxu0 %v1275
        %1943 = vmatprep.subr.bf16.mxu0 %v1280
        %1944 = vmatpush1.bf16.msra.mxu0 %v1279
        %1945 = vmatprep.subr.bf16.mxu0 %v1284
        %1946 = vmatpush1.bf16.msra.mxu0 %v1283
        %1947 = vmatprep.subr.bf16.mxu0 %v1288
        %1948 = vmatpush1.bf16.msra.mxu0 %v1287
        %1949 = vmatprep.subr.bf16.mxu0 %v1292
        %1950 = vmatpush1.bf16.msra.mxu0 %v1291
        %1951 = vmatprep.subr.bf16.mxu0 %v1296
        %1952 = vmatpush1.bf16.msra.mxu0 %v1295
        %1953 = vmatprep.subr.bf16.mxu0 %v1300
        %1954 = vmatpush1.bf16.msra.mxu0 %v1299
        %1955 = vmatprep.subr.bf16.mxu0 %v1304
        %1956 = vmatpush1.bf16.msra.mxu0 %v1303
        %1957 = vmatprep.subr.bf16.mxu0 %v1308
        %1958 = vmatpush1.bf16.msra.mxu0 %v1307
        %1959 = vmatprep.subr.bf16.mxu0 %v1312
        %1960 = vmatpush1.bf16.msra.mxu0 %v1311
        %1961 = vmatprep.subr.bf16.mxu0 %v1316
        %1962 = vmatpush1.bf16.msra.mxu0 %v1315
        %1963 = vmatprep.subr.bf16.mxu0 %v1320
        %1964 = vmatpush1.bf16.msra.mxu0 %v1319
        %1965 = vmatprep.mubr.bf16.mxu0 %v1757
        %1966 = vmatmul.mubr.bf16.gmra.mrb[0].mxu0 %v1743
        %v1967 = vpop.f32.mrb[0].mxu0
        %v1968 = vadd.f32 %v1927, %v1967
        %v1969 = vpop.f32.mrb[0].mxu0
        %v1970 = vadd.f32 %v1929, %v1969
        %v1971 = vpop.f32.mrb[0].mxu0
        %v1972 = vpop.f32.mrb[0].mxu0
        %1973 = vdwg.mxu0
        %1974 = vmatprep.subr.bf16.mxu0 %v1324
        %1975 = vmatpush1.bf16.msra.mxu0 %v1323
        %1976 = vmatprep.subr.bf16.mxu0 %v1328
        %1977 = vmatpush1.bf16.msra.mxu0 %v1327
        %1978 = vmatprep.subr.bf16.mxu0 %v1332
        %1979 = vmatpush1.bf16.msra.mxu0 %v1331
        %1980 = vmatprep.subr.bf16.mxu0 %v1336
        %1981 = vmatpush1.bf16.msra.mxu0 %v1335
        %1982 = vmatprep.subr.bf16.mxu0 %v1340
        %1983 = vmatpush1.bf16.msra.mxu0 %v1339
        %1984 = vmatprep.subr.bf16.mxu0 %v1344
        %1985 = vmatpush1.bf16.msra.mxu0 %v1343
        %1986 = vmatprep.subr.bf16.mxu0 %v1348
        %1987 = vmatpush1.bf16.msra.mxu0 %v1347
        %1988 = vmatprep.subr.bf16.mxu0 %v1352
        %1989 = vmatpush1.bf16.msra.mxu0 %v1351
        %1990 = vmatprep.subr.bf16.mxu0 %v1356
        %1991 = vmatpush1.bf16.msra.mxu0 %v1355
        %1992 = vmatprep.subr.bf16.mxu0 %v1360
        %1993 = vmatpush1.bf16.msra.mxu0 %v1359
        %1994 = vmatprep.subr.bf16.mxu0 %v1364
        %1995 = vmatpush1.bf16.msra.mxu0 %v1363
        %1996 = vmatprep.subr.bf16.mxu0 %v1368
        %1997 = vmatpush1.bf16.msra.mxu0 %v1367
        %1998 = vmatprep.subr.bf16.mxu0 %v1372
        %1999 = vmatpush1.bf16.msra.mxu0 %v1371
        %2000 = vmatprep.subr.bf16.mxu0 %v1376
        %2001 = vmatpush1.bf16.msra.mxu0 %v1375
        %2002 = vmatprep.subr.bf16.mxu0 %v1380
        %2003 = vmatpush1.bf16.msra.mxu0 %v1379
        %2004 = vmatprep.subr.bf16.mxu0 %v1384
        %2005 = vmatpush1.bf16.msra.mxu0 %v1383
        %2006 = vmatprep.mubr.bf16.mxu0 %v1761
        %2007 = vmatmul.mubr.bf16.gmra.mrb[0].mxu0 %v1759
        %v2008 = vpop.f32.mrb[0].mxu0
        %v2009 = vadd.f32 %v1968, %v2008
        %v2010 = vpop.f32.mrb[0].mxu0
        %v2011 = vadd.f32 %v1970, %v2010
        %v2012 = vpop.f32.mrb[0].mxu0
        %v2013 = vpop.f32.mrb[0].mxu0
        %2014 = vdwg.mxu0
        %2015 = vmatprep.subr.bf16.mxu0 %v1388
        %2016 = vmatpush1.bf16.msra.mxu0 %v1387
        %2017 = vmatprep.subr.bf16.mxu0 %v1392
        %2018 = vmatpush1.bf16.msra.mxu0 %v1391
        %2019 = vmatprep.subr.bf16.mxu0 %v1396
        %2020 = vmatpush1.bf16.msra.mxu0 %v1395
        %2021 = vmatprep.subr.bf16.mxu0 %v1400
        %2022 = vmatpush1.bf16.msra.mxu0 %v1399
        %2023 = vmatprep.subr.bf16.mxu0 %v1404
        %2024 = vmatpush1.bf16.msra.mxu0 %v1403
        %2025 = vmatprep.subr.bf16.mxu0 %v1408
        %2026 = vmatpush1.bf16.msra.mxu0 %v1407
        %2027 = vmatprep.subr.bf16.mxu0 %v1412
        %2028 = vmatpush1.bf16.msra.mxu0 %v1411
        %2029 = vmatprep.subr.bf16.mxu0 %v1416
        %2030 = vmatpush1.bf16.msra.mxu0 %v1415
        %2031 = vmatprep.subr.bf16.mxu0 %v1420
        %2032 = vmatpush1.bf16.msra.mxu0 %v1419
        %2033 = vmatprep.subr.bf16.mxu0 %v1424
        %2034 = vmatpush1.bf16.msra.mxu0 %v1423
        %2035 = vmatprep.subr.bf16.mxu0 %v1428
        %2036 = vmatpush1.bf16.msra.mxu0 %v1427
        %2037 = vmatprep.subr.bf16.mxu0 %v1432
        %2038 = vmatpush1.bf16.msra.mxu0 %v1431
        %2039 = vmatprep.subr.bf16.mxu0 %v1436
        %2040 = vmatpush1.bf16.msra.mxu0 %v1435
        %2041 = vmatprep.subr.bf16.mxu0 %v1440
        %2042 = vmatpush1.bf16.msra.mxu0 %v1439
        %2043 = vmatprep.subr.bf16.mxu0 %v1444
        %2044 = vmatpush1.bf16.msra.mxu0 %v1443
        %2045 = vmatprep.subr.bf16.mxu0 %v1448
        %2046 = vmatpush1.bf16.msra.mxu0 %v1447
        %2047 = vmatprep.mubr.bf16.mxu0 %v1799
        %2048 = vmatmul.mubr.bf16.gmra.mrb[0].mxu0 %v1785
        %v2049 = vpop.f32.mrb[0].mxu0
        %v2050 = vadd.f32 %v2009, %v2049
        %v2051 = vpop.f32.mrb[0].mxu0
        %v2052 = vadd.f32 %v2011, %v2051
        %v2053 = vpop.f32.mrb[0].mxu0
        %v2054 = vpop.f32.mrb[0].mxu0
        %2055 = vdwg.mxu0
        %2056 = vmatprep.subr.bf16.mxu0 %v1452
        %2057 = vmatpush1.bf16.msra.mxu0 %v1451
        %2058 = vmatprep.subr.bf16.mxu0 %v1456
        %2059 = vmatpush1.bf16.msra.mxu0 %v1455
        %2060 = vmatprep.subr.bf16.mxu0 %v1460
        %2061 = vmatpush1.bf16.msra.mxu0 %v1459
        %2062 = vmatprep.subr.bf16.mxu0 %v1464
        %2063 = vmatpush1.bf16.msra.mxu0 %v1463
        %2064 = vmatprep.subr.bf16.mxu0 %v1468
        %2065 = vmatpush1.bf16.msra.mxu0 %v1467
        %2066 = vmatprep.subr.bf16.mxu0 %v1472
        %2067 = vmatpush1.bf16.msra.mxu0 %v1471
        %2068 = vmatprep.subr.bf16.mxu0 %v1476
        %2069 = vmatpush1.bf16.msra.mxu0 %v1475
        %2070 = vmatprep.subr.bf16.mxu0 %v1480
        %2071 = vmatpush1.bf16.msra.mxu0 %v1479
        %2072 = vmatprep.subr.bf16.mxu0 %v1484
        %2073 = vmatpush1.bf16.msra.mxu0 %v1483
        %2074 = vmatprep.subr.bf16.mxu0 %v1488
        %2075 = vmatpush1.bf16.msra.mxu0 %v1487
        %2076 = vmatprep.subr.bf16.mxu0 %v1492
        %2077 = vmatpush1.bf16.msra.mxu0 %v1491
        %2078 = vmatprep.subr.bf16.mxu0 %v1496
        %2079 = vmatpush1.bf16.msra.mxu0 %v1495
        %2080 = vmatprep.subr.bf16.mxu0 %v1500
        %2081 = vmatpush1.bf16.msra.mxu0 %v1499
        %2082 = vmatprep.subr.bf16.mxu0 %v1504
        %2083 = vmatpush1.bf16.msra.mxu0 %v1503
        %2084 = vmatprep.subr.bf16.mxu0 %v1508
        %2085 = vmatpush1.bf16.msra.mxu0 %v1507
        %2086 = vmatprep.subr.bf16.mxu0 %v1512
        %2087 = vmatpush1.bf16.msra.mxu0 %v1511
        %2088 = vmatprep.mubr.bf16.mxu0 %v1809
        %2089 = vmatmul.mubr.bf16.gmra.mrb[0].mxu0 %v1807
        %v2090 = vpop.f32.mrb[0].mxu0
        %v2091 = vadd.f32 %v2050, %v2090
        %v2092 = vpop.f32.mrb[0].mxu0
        %v2093 = vadd.f32 %v2052, %v2092
        %v2094 = vpop.f32.mrb[0].mxu0
        %v2095 = vpop.f32.mrb[0].mxu0
        %2096 = vdwg.mxu0
        %2097 = vmatprep.subr.bf16.mxu0 %v1516
        %2098 = vmatpush1.bf16.msra.mxu0 %v1515
        %2099 = vmatprep.subr.bf16.mxu0 %v1520
        %2100 = vmatpush1.bf16.msra.mxu0 %v1519
        %2101 = vmatprep.subr.bf16.mxu0 %v1524
        %2102 = vmatpush1.bf16.msra.mxu0 %v1523
        %2103 = vmatprep.subr.bf16.mxu0 %v1528
        %2104 = vmatpush1.bf16.msra.mxu0 %v1527
        %2105 = vmatprep.subr.bf16.mxu0 %v1532
        %2106 = vmatpush1.bf16.msra.mxu0 %v1531
        %2107 = vmatprep.subr.bf16.mxu0 %v1536
        %2108 = vmatpush1.bf16.msra.mxu0 %v1535
        %2109 = vmatprep.subr.bf16.mxu0 %v1540
        %2110 = vmatpush1.bf16.msra.mxu0 %v1539
        %2111 = vmatprep.subr.bf16.mxu0 %v1544
        %2112 = vmatpush1.bf16.msra.mxu0 %v1543
        %2113 = vmatprep.subr.bf16.mxu0 %v1548
        %2114 = vmatpush1.bf16.msra.mxu0 %v1547
        %2115 = vmatprep.subr.bf16.mxu0 %v1552
        %2116 = vmatpush1.bf16.msra.mxu0 %v1551
        %2117 = vmatprep.subr.bf16.mxu0 %v1556
        %2118 = vmatpush1.bf16.msra.mxu0 %v1555
        %2119 = vmatprep.subr.bf16.mxu0 %v1560
        %2120 = vmatpush1.bf16.msra.mxu0 %v1559
        %2121 = vmatprep.subr.bf16.mxu0 %v1564
        %2122 = vmatpush1.bf16.msra.mxu0 %v1563
        %2123 = vmatprep.subr.bf16.mxu0 %v1568
        %2124 = vmatpush1.bf16.msra.mxu0 %v1567
        %2125 = vmatprep.subr.bf16.mxu0 %v1572
        %2126 = vmatpush1.bf16.msra.mxu0 %v1571
        %2127 = vmatprep.subr.bf16.mxu0 %v1576
        %2128 = vmatpush1.bf16.msra.mxu0 %v1575
        %2129 = vmatprep.mubr.bf16.mxu0 %v1806
        %2130 = vmatmul.mubr.bf16.gmra.mrb[0].mxu0 %v1792
        %v2131 = vpop.f32.mrb[0].mxu0
        %v2132 = vadd.f32 %v2091, %v2131
        %v2133 = vpop.f32.mrb[0].mxu0
        %v2134 = vadd.f32 %v2093, %v2133
        %v2135 = vpop.f32.mrb[0].mxu0
        %v2136 = vpop.f32.mrb[0].mxu0
        %2137 = vdwg.mxu0
        %2138 = vmatprep.subr.bf16.mxu0 %v1580
        %2139 = vmatpush1.bf16.msra.mxu0 %v1579
        %2140 = vmatprep.subr.bf16.mxu0 %v1584
        %2141 = vmatpush1.bf16.msra.mxu0 %v1583
        %2142 = vmatprep.subr.bf16.mxu0 %v1588
        %2143 = vmatpush1.bf16.msra.mxu0 %v1587
        %2144 = vmatprep.subr.bf16.mxu0 %v1592
        %2145 = vmatpush1.bf16.msra.mxu0 %v1591
        %2146 = vmatprep.subr.bf16.mxu0 %v1596
        %2147 = vmatpush1.bf16.msra.mxu0 %v1595
        %2148 = vmatprep.subr.bf16.mxu0 %v1600
        %2149 = vmatpush1.bf16.msra.mxu0 %v1599
        %2150 = vmatprep.subr.bf16.mxu0 %v1604
        %2151 = vmatpush1.bf16.msra.mxu0 %v1603
        %2152 = vmatprep.subr.bf16.mxu0 %v1608
        %2153 = vmatpush1.bf16.msra.mxu0 %v1607
        %2154 = vmatprep.subr.bf16.mxu0 %v1612
        %2155 = vmatpush1.bf16.msra.mxu0 %v1611
        %2156 = vmatprep.subr.bf16.mxu0 %v1616
        %2157 = vmatpush1.bf16.msra.mxu0 %v1615
        %2158 = vmatprep.subr.bf16.mxu0 %v1620
        %2159 = vmatpush1.bf16.msra.mxu0 %v1619
        %2160 = vmatprep.subr.bf16.mxu0 %v1624
        %2161 = vmatpush1.bf16.msra.mxu0 %v1623
        %2162 = vmatprep.subr.bf16.mxu0 %v1628
        %2163 = vmatpush1.bf16.msra.mxu0 %v1627
        %2164 = vmatprep.subr.bf16.mxu0 %v1632
        %2165 = vmatpush1.bf16.msra.mxu0 %v1631
        %2166 = vmatprep.subr.bf16.mxu0 %v1636
        %2167 = vmatpush1.bf16.msra.mxu0 %v1635
        %2168 = vmatprep.subr.bf16.mxu0 %v1640
        %2169 = vmatpush1.bf16.msra.mxu0 %v1639
        %2170 = vmatprep.mubr.bf16.mxu0 %v1810
        %2171 = vmatmul.mubr.bf16.gmra.mrb[0].mxu0 %v1808
        %v2172 = vpop.f32.mrb[0].mxu0
        %v2173 = vadd.f32 %v2132, %v2172
        %v2174 = vpop.f32.mrb[0].mxu0
        %v2175 = vadd.f32 %v2134, %v2174
        %v2176 = vpop.f32.mrb[0].mxu0
        %v2177 = vpop.f32.mrb[0].mxu0
        %2178 = vdwg.mxu0
        %2179 = vmatprep.subr.bf16.mxu0 %v1644
        %2180 = vmatpush1.bf16.msra.mxu0 %v1643
        %2181 = vmatprep.subr.bf16.mxu0 %v1648
        %2182 = vmatpush1.bf16.msra.mxu0 %v1647
        %2183 = vmatprep.subr.bf16.mxu0 %v1652
        %2184 = vmatpush1.bf16.msra.mxu0 %v1651
        %2185 = vmatprep.subr.bf16.mxu0 %v1656
        %2186 = vmatpush1.bf16.msra.mxu0 %v1655
        %2187 = vmatprep.subr.bf16.mxu0 %v1660
        %2188 = vmatpush1.bf16.msra.mxu0 %v1659
        %2189 = vmatprep.subr.bf16.mxu0 %v1664
        %2190 = vmatpush1.bf16.msra.mxu0 %v1663
        %2191 = vmatprep.subr.bf16.mxu0 %v1668
        %2192 = vmatpush1.bf16.msra.mxu0 %v1667
        %2193 = vmatprep.subr.bf16.mxu0 %v1672
        %2194 = vmatpush1.bf16.msra.mxu0 %v1671
        %2195 = vmatprep.subr.bf16.mxu0 %v1676
        %2196 = vmatpush1.bf16.msra.mxu0 %v1675
        %2197 = vmatprep.subr.bf16.mxu0 %v1680
        %2198 = vmatpush1.bf16.msra.mxu0 %v1679
        %2199 = vmatprep.subr.bf16.mxu0 %v1684
        %2200 = vmatpush1.bf16.msra.mxu0 %v1683
        %2201 = vmatprep.subr.bf16.mxu0 %v1688
        %2202 = vmatpush1.bf16.msra.mxu0 %v1687
        %2203 = vmatprep.subr.bf16.mxu0 %v1692
        %2204 = vmatpush1.bf16.msra.mxu0 %v1691
        %2205 = vmatprep.subr.bf16.mxu0 %v1696
        %2206 = vmatpush1.bf16.msra.mxu0 %v1695
        %2207 = vmatprep.subr.bf16.mxu0 %v1700
        %2208 = vmatpush1.bf16.msra.mxu0 %v1699
        %2209 = vmatprep.subr.bf16.mxu0 %v1704
        %2210 = vmatpush1.bf16.msra.mxu0 %v1703
        %2211 = vmatprep.mubr.bf16.mxu0 %v1832
        %2212 = vmatmul.mubr.bf16.gmra.mrb[0].mxu0 %v1825
        %v2213 = vpop.f32.mrb[0].mxu0
        %v2214 = vadd.f32 %v2173, %v2213
        %v2215 = vpop.f32.mrb[0].mxu0
        %v2216 = vadd.f32 %v2175, %v2215
        %v2217 = vpop.f32.mrb[0].mxu0
        %v2218 = vpop.f32.mrb[0].mxu0
        %2219 = vdwg.mxu0
        %2220 = vmatprep.subr.bf16.mxu0 %v1134
        %2221 = vmatpush1.bf16.msra.mxu0 %v1133
        %2222 = vmatprep.subr.bf16.mxu0 %v1138
        %2223 = vmatpush1.bf16.msra.mxu0 %v1137
        %2224 = vmatprep.subr.bf16.mxu0 %v1142
        %2225 = vmatpush1.bf16.msra.mxu0 %v1141
        %2226 = vmatprep.subr.bf16.mxu0 %v1146
        %2227 = vmatpush1.bf16.msra.mxu0 %v1145
        %2228 = vmatprep.subr.bf16.mxu0 %v1150
        %2229 = vmatpush1.bf16.msra.mxu0 %v1149
        %2230 = vmatprep.subr.bf16.mxu0 %v1154
        %2231 = vmatpush1.bf16.msra.mxu0 %v1153
        %2232 = vmatprep.subr.bf16.mxu0 %v1158
        %2233 = vmatpush1.bf16.msra.mxu0 %v1157
        %2234 = vmatprep.subr.bf16.mxu0 %v1162
        %2235 = vmatpush1.bf16.msra.mxu0 %v1161
        %2236 = vmatprep.subr.bf16.mxu0 %v1166
        %2237 = vmatpush1.bf16.msra.mxu0 %v1165
        %2238 = vmatprep.subr.bf16.mxu0 %v1170
        %2239 = vmatpush1.bf16.msra.mxu0 %v1169
        %2240 = vmatprep.subr.bf16.mxu0 %v1174
        %2241 = vmatpush1.bf16.msra.mxu0 %v1173
        %2242 = vmatprep.subr.bf16.mxu0 %v1178
        %2243 = vmatpush1.bf16.msra.mxu0 %v1177
        %2244 = vmatprep.subr.bf16.mxu0 %v1182
        %2245 = vmatpush1.bf16.msra.mxu0 %v1181
        %2246 = vmatprep.subr.bf16.mxu0 %v1186
        %2247 = vmatpush1.bf16.msra.mxu0 %v1185
        %2248 = vmatprep.subr.bf16.mxu0 %v1190
        %2249 = vmatpush1.bf16.msra.mxu0 %v1189
        %2250 = vmatprep.subr.bf16.mxu0 %v1194
        %2251 = vmatpush1.bf16.msra.mxu0 %v1193
        %2252 = vmatprep.mubr.bf16.mxu0 %v1750
        %2253 = vmatmul.mubr.bf16.gmra.mrb[0].mxu0 %v1736
        %v2254 = vpop.f32.mrb[0].mxu0
        %v2255 = vadd.f32 0.0, %v2254
        %v2256 = vpop.f32.mrb[0].mxu0
        %v2257 = vadd.f32 0.0, %v2256
        %v2258 = vpop.f32.mrb[0].mxu0
        %v2259 = vpop.f32.mrb[0].mxu0
        %2260 = vdwg.mxu0
        %2261 = vmatprep.subr.bf16.mxu0 %v1198
        %2262 = vmatpush1.bf16.msra.mxu0 %v1197
        %2263 = vmatprep.subr.bf16.mxu0 %v1202
        %2264 = vmatpush1.bf16.msra.mxu0 %v1201
        %2265 = vmatprep.subr.bf16.mxu0 %v1206
        %2266 = vmatpush1.bf16.msra.mxu0 %v1205
        %2267 = vmatprep.subr.bf16.mxu0 %v1210
        %2268 = vmatpush1.bf16.msra.mxu0 %v1209
        %2269 = vmatprep.subr.bf16.mxu0 %v1214
        %2270 = vmatpush1.bf16.msra.mxu0 %v1213
        %2271 = vmatprep.subr.bf16.mxu0 %v1218
        %2272 = vmatpush1.bf16.msra.mxu0 %v1217
        %2273 = vmatprep.subr.bf16.mxu0 %v1222
        %2274 = vmatpush1.bf16.msra.mxu0 %v1221
        %2275 = vmatprep.subr.bf16.mxu0 %v1226
        %2276 = vmatpush1.bf16.msra.mxu0 %v1225
        %2277 = vmatprep.subr.bf16.mxu0 %v1230
        %2278 = vmatpush1.bf16.msra.mxu0 %v1229
        %2279 = vmatprep.subr.bf16.mxu0 %v1234
        %2280 = vmatpush1.bf16.msra.mxu0 %v1233
        %2281 = vmatprep.subr.bf16.mxu0 %v1238
        %2282 = vmatpush1.bf16.msra.mxu0 %v1237
        %2283 = vmatprep.subr.bf16.mxu0 %v1242
        %2284 = vmatpush1.bf16.msra.mxu0 %v1241
        %2285 = vmatprep.subr.bf16.mxu0 %v1246
        %2286 = vmatpush1.bf16.msra.mxu0 %v1245
        %2287 = vmatprep.subr.bf16.mxu0 %v1250
        %2288 = vmatpush1.bf16.msra.mxu0 %v1249
        %2289 = vmatprep.subr.bf16.mxu0 %v1254
        %2290 = vmatpush1.bf16.msra.mxu0 %v1253
        %2291 = vmatprep.subr.bf16.mxu0 %v1258
        %2292 = vmatpush1.bf16.msra.mxu0 %v1257
        %2293 = vmatprep.mubr.bf16.mxu0 %v1760
        %2294 = vmatmul.mubr.bf16.gmra.mrb[0].mxu0 %v1758
        %v2295 = vpop.f32.mrb[0].mxu0
        %v2296 = vadd.f32 %v2255, %v2295
        %v2297 = vpop.f32.mrb[0].mxu0
        %v2298 = vadd.f32 %v2257, %v2297
        %v2299 = vpop.f32.mrb[0].mxu0
        %v2300 = vpop.f32.mrb[0].mxu0
        %2301 = vdwg.mxu0
        %2302 = vmatprep.subr.bf16.mxu0 %v1262
        %2303 = vmatpush1.bf16.msra.mxu0 %v1261
        %2304 = vmatprep.subr.bf16.mxu0 %v1266
        %2305 = vmatpush1.bf16.msra.mxu0 %v1265
        %2306 = vmatprep.subr.bf16.mxu0 %v1270
        %2307 = vmatpush1.bf16.msra.mxu0 %v1269
        %2308 = vmatprep.subr.bf16.mxu0 %v1274
        %2309 = vmatpush1.bf16.msra.mxu0 %v1273
        %2310 = vmatprep.subr.bf16.mxu0 %v1278
        %2311 = vmatpush1.bf16.msra.mxu0 %v1277
        %2312 = vmatprep.subr.bf16.mxu0 %v1282
        %2313 = vmatpush1.bf16.msra.mxu0 %v1281
        %2314 = vmatprep.subr.bf16.mxu0 %v1286
        %2315 = vmatpush1.bf16.msra.mxu0 %v1285
        %2316 = vmatprep.subr.bf16.mxu0 %v1290
        %2317 = vmatpush1.bf16.msra.mxu0 %v1289
        %2318 = vmatprep.subr.bf16.mxu0 %v1294
        %2319 = vmatpush1.bf16.msra.mxu0 %v1293
        %2320 = vmatprep.subr.bf16.mxu0 %v1298
        %2321 = vmatpush1.bf16.msra.mxu0 %v1297
        %2322 = vmatprep.subr.bf16.mxu0 %v1302
        %2323 = vmatpush1.bf16.msra.mxu0 %v1301
        %2324 = vmatprep.subr.bf16.mxu0 %v1306
        %2325 = vmatpush1.bf16.msra.mxu0 %v1305
        %2326 = vmatprep.subr.bf16.mxu0 %v1310
        %2327 = vmatpush1.bf16.msra.mxu0 %v1309
        %2328 = vmatprep.subr.bf16.mxu0 %v1314
        %2329 = vmatpush1.bf16.msra.mxu0 %v1313
        %2330 = vmatprep.subr.bf16.mxu0 %v1318
        %2331 = vmatpush1.bf16.msra.mxu0 %v1317
        %2332 = vmatprep.subr.bf16.mxu0 %v1322
        %2333 = vmatpush1.bf16.msra.mxu0 %v1321
        %2334 = vmatprep.mubr.bf16.mxu0 %v1757
        %2335 = vmatmul.mubr.bf16.gmra.mrb[0].mxu0 %v1743
        %v2336 = vpop.f32.mrb[0].mxu0
        %v2337 = vadd.f32 %v2296, %v2336
        %v2338 = vpop.f32.mrb[0].mxu0
        %v2339 = vadd.f32 %v2298, %v2338
        %v2340 = vpop.f32.mrb[0].mxu0
        %v2341 = vpop.f32.mrb[0].mxu0
        %2342 = vdwg.mxu0
        %2343 = vmatprep.subr.bf16.mxu0 %v1326
        %2344 = vmatpush1.bf16.msra.mxu0 %v1325
        %2345 = vmatprep.subr.bf16.mxu0 %v1330
        %2346 = vmatpush1.bf16.msra.mxu0 %v1329
        %2347 = vmatprep.subr.bf16.mxu0 %v1334
        %2348 = vmatpush1.bf16.msra.mxu0 %v1333
        %2349 = vmatprep.subr.bf16.mxu0 %v1338
        %2350 = vmatpush1.bf16.msra.mxu0 %v1337
        %2351 = vmatprep.subr.bf16.mxu0 %v1342
        %2352 = vmatpush1.bf16.msra.mxu0 %v1341
        %2353 = vmatprep.subr.bf16.mxu0 %v1346
        %2354 = vmatpush1.bf16.msra.mxu0 %v1345
        %2355 = vmatprep.subr.bf16.mxu0 %v1350
        %2356 = vmatpush1.bf16.msra.mxu0 %v1349
        %2357 = vmatprep.subr.bf16.mxu0 %v1354
        %2358 = vmatpush1.bf16.msra.mxu0 %v1353
        %2359 = vmatprep.subr.bf16.mxu0 %v1358
        %2360 = vmatpush1.bf16.msra.mxu0 %v1357
        %2361 = vmatprep.subr.bf16.mxu0 %v1362
        %2362 = vmatpush1.bf16.msra.mxu0 %v1361
        %2363 = vmatprep.subr.bf16.mxu0 %v1366
        %2364 = vmatpush1.bf16.msra.mxu0 %v1365
        %2365 = vmatprep.subr.bf16.mxu0 %v1370
        %2366 = vmatpush1.bf16.msra.mxu0 %v1369
        %2367 = vmatprep.subr.bf16.mxu0 %v1374
        %2368 = vmatpush1.bf16.msra.mxu0 %v1373
        %2369 = vmatprep.subr.bf16.mxu0 %v1378
        %2370 = vmatpush1.bf16.msra.mxu0 %v1377
        %2371 = vmatprep.subr.bf16.mxu0 %v1382
        %2372 = vmatpush1.bf16.msra.mxu0 %v1381
        %2373 = vmatprep.subr.bf16.mxu0 %v1386
        %2374 = vmatpush1.bf16.msra.mxu0 %v1385
        %2375 = vmatprep.mubr.bf16.mxu0 %v1761
        %2376 = vmatmul.mubr.bf16.gmra.mrb[0].mxu0 %v1759
        %v2377 = vpop.f32.mrb[0].mxu0
        %v2378 = vadd.f32 %v2337, %v2377
        %v2379 = vpop.f32.mrb[0].mxu0
        %v2380 = vadd.f32 %v2339, %v2379
        %v2381 = vpop.f32.mrb[0].mxu0
        %v2382 = vpop.f32.mrb[0].mxu0
        %2383 = vdwg.mxu0
        %2384 = vmatprep.subr.bf16.mxu0 %v1390
        %2385 = vmatpush1.bf16.msra.mxu0 %v1389
        %2386 = vmatprep.subr.bf16.mxu0 %v1394
        %2387 = vmatpush1.bf16.msra.mxu0 %v1393
        %2388 = vmatprep.subr.bf16.mxu0 %v1398
        %2389 = vmatpush1.bf16.msra.mxu0 %v1397
        %2390 = vmatprep.subr.bf16.mxu0 %v1402
        %2391 = vmatpush1.bf16.msra.mxu0 %v1401
        %2392 = vmatprep.subr.bf16.mxu0 %v1406
        %2393 = vmatpush1.bf16.msra.mxu0 %v1405
        %2394 = vmatprep.subr.bf16.mxu0 %v1410
        %2395 = vmatpush1.bf16.msra.mxu0 %v1409
        %2396 = vmatprep.subr.bf16.mxu0 %v1414
        %2397 = vmatpush1.bf16.msra.mxu0 %v1413
        %2398 = vmatprep.subr.bf16.mxu0 %v1418
        %2399 = vmatpush1.bf16.msra.mxu0 %v1417
        %2400 = vmatprep.subr.bf16.mxu0 %v1422
        %2401 = vmatpush1.bf16.msra.mxu0 %v1421
        %2402 = vmatprep.subr.bf16.mxu0 %v1426
        %2403 = vmatpush1.bf16.msra.mxu0 %v1425
        %2404 = vmatprep.subr.bf16.mxu0 %v1430
        %2405 = vmatpush1.bf16.msra.mxu0 %v1429
        %2406 = vmatprep.subr.bf16.mxu0 %v1434
        %2407 = vmatpush1.bf16.msra.mxu0 %v1433
        %2408 = vmatprep.subr.bf16.mxu0 %v1438
        %2409 = vmatpush1.bf16.msra.mxu0 %v1437
        %2410 = vmatprep.subr.bf16.mxu0 %v1442
        %2411 = vmatpush1.bf16.msra.mxu0 %v1441
        %2412 = vmatprep.subr.bf16.mxu0 %v1446
        %2413 = vmatpush1.bf16.msra.mxu0 %v1445
        %2414 = vmatprep.subr.bf16.mxu0 %v1450
        %2415 = vmatpush1.bf16.msra.mxu0 %v1449
        %2416 = vmatprep.mubr.bf16.mxu0 %v1799
        %2417 = vmatmul.mubr.bf16.gmra.mrb[0].mxu0 %v1785
        %v2418 = vpop.f32.mrb[0].mxu0
        %v2419 = vadd.f32 %v2378, %v2418
        %v2420 = vpop.f32.mrb[0].mxu0
        %v2421 = vadd.f32 %v2380, %v2420
        %v2422 = vpop.f32.mrb[0].mxu0
        %v2423 = vpop.f32.mrb[0].mxu0
        %2424 = vdwg.mxu0
        %2425 = vmatprep.subr.bf16.mxu0 %v1454
        %2426 = vmatpush1.bf16.msra.mxu0 %v1453
        %2427 = vmatprep.subr.bf16.mxu0 %v1458
        %2428 = vmatpush1.bf16.msra.mxu0 %v1457
        %2429 = vmatprep.subr.bf16.mxu0 %v1462
        %2430 = vmatpush1.bf16.msra.mxu0 %v1461
        %2431 = vmatprep.subr.bf16.mxu0 %v1466
        %2432 = vmatpush1.bf16.msra.mxu0 %v1465
        %2433 = vmatprep.subr.bf16.mxu0 %v1470
        %2434 = vmatpush1.bf16.msra.mxu0 %v1469
        %2435 = vmatprep.subr.bf16.mxu0 %v1474
        %2436 = vmatpush1.bf16.msra.mxu0 %v1473
        %2437 = vmatprep.subr.bf16.mxu0 %v1478
        %2438 = vmatpush1.bf16.msra.mxu0 %v1477
        %2439 = vmatprep.subr.bf16.mxu0 %v1482
        %2440 = vmatpush1.bf16.msra.mxu0 %v1481
        %2441 = vmatprep.subr.bf16.mxu0 %v1486
        %2442 = vmatpush1.bf16.msra.mxu0 %v1485
        %2443 = vmatprep.subr.bf16.mxu0 %v1490
        %2444 = vmatpush1.bf16.msra.mxu0 %v1489
        %2445 = vmatprep.subr.bf16.mxu0 %v1494
        %2446 = vmatpush1.bf16.msra.mxu0 %v1493
        %2447 = vmatprep.subr.bf16.mxu0 %v1498
        %2448 = vmatpush1.bf16.msra.mxu0 %v1497
        %2449 = vmatprep.subr.bf16.mxu0 %v1502
        %2450 = vmatpush1.bf16.msra.mxu0 %v1501
        %2451 = vmatprep.subr.bf16.mxu0 %v1506
        %2452 = vmatpush1.bf16.msra.mxu0 %v1505
        %2453 = vmatprep.subr.bf16.mxu0 %v1510
        %2454 = vmatpush1.bf16.msra.mxu0 %v1509
        %2455 = vmatprep.subr.bf16.mxu0 %v1514
        %2456 = vmatpush1.bf16.msra.mxu0 %v1513
        %2457 = vmatprep.mubr.bf16.mxu0 %v1809
        %2458 = vmatmul.mubr.bf16.gmra.mrb[0].mxu0 %v1807
        %v2459 = vpop.f32.mrb[0].mxu0
        %v2460 = vadd.f32 %v2419, %v2459
        %v2461 = vpop.f32.mrb[0].mxu0
        %v2462 = vadd.f32 %v2421, %v2461
        %v2463 = vpop.f32.mrb[0].mxu0
        %v2464 = vpop.f32.mrb[0].mxu0
        %2465 = vdwg.mxu0
        %2466 = vmatprep.subr.bf16.mxu0 %v1518
        %2467 = vmatpush1.bf16.msra.mxu0 %v1517
        %2468 = vmatprep.subr.bf16.mxu0 %v1522
        %2469 = vmatpush1.bf16.msra.mxu0 %v1521
        %2470 = vmatprep.subr.bf16.mxu0 %v1526
        %2471 = vmatpush1.bf16.msra.mxu0 %v1525
        %2472 = vmatprep.subr.bf16.mxu0 %v1530
        %2473 = vmatpush1.bf16.msra.mxu0 %v1529
        %2474 = vmatprep.subr.bf16.mxu0 %v1534
        %2475 = vmatpush1.bf16.msra.mxu0 %v1533
        %2476 = vmatprep.subr.bf16.mxu0 %v1538
        %2477 = vmatpush1.bf16.msra.mxu0 %v1537
        %2478 = vmatprep.subr.bf16.mxu0 %v1542
        %2479 = vmatpush1.bf16.msra.mxu0 %v1541
        %2480 = vmatprep.subr.bf16.mxu0 %v1546
        %2481 = vmatpush1.bf16.msra.mxu0 %v1545
        %2482 = vmatprep.subr.bf16.mxu0 %v1550
        %2483 = vmatpush1.bf16.msra.mxu0 %v1549
        %2484 = vmatprep.subr.bf16.mxu0 %v1554
        %2485 = vmatpush1.bf16.msra.mxu0 %v1553
        %2486 = vmatprep.subr.bf16.mxu0 %v1558
        %2487 = vmatpush1.bf16.msra.mxu0 %v1557
        %2488 = vmatprep.subr.bf16.mxu0 %v1562
        %2489 = vmatpush1.bf16.msra.mxu0 %v1561
        %2490 = vmatprep.subr.bf16.mxu0 %v1566
        %2491 = vmatpush1.bf16.msra.mxu0 %v1565
        %2492 = vmatprep.subr.bf16.mxu0 %v1570
        %2493 = vmatpush1.bf16.msra.mxu0 %v1569
        %2494 = vmatprep.subr.bf16.mxu0 %v1574
        %2495 = vmatpush1.bf16.msra.mxu0 %v1573
        %2496 = vmatprep.subr.bf16.mxu0 %v1578
        %2497 = vmatpush1.bf16.msra.mxu0 %v1577
        %2498 = vmatprep.mubr.bf16.mxu0 %v1806
        %2499 = vmatmul.mubr.bf16.gmra.mrb[0].mxu0 %v1792
        %v2500 = vpop.f32.mrb[0].mxu0
        %v2501 = vadd.f32 %v2460, %v2500
        %v2502 = vpop.f32.mrb[0].mxu0
        %v2503 = vadd.f32 %v2462, %v2502
        %v2504 = vpop.f32.mrb[0].mxu0
        %v2505 = vpop.f32.mrb[0].mxu0
        %2506 = vdwg.mxu0
        %2507 = vmatprep.subr.bf16.mxu0 %v1582
        %2508 = vmatpush1.bf16.msra.mxu0 %v1581
        %2509 = vmatprep.subr.bf16.mxu0 %v1586
        %2510 = vmatpush1.bf16.msra.mxu0 %v1585
        %2511 = vmatprep.subr.bf16.mxu0 %v1590
        %2512 = vmatpush1.bf16.msra.mxu0 %v1589
        %2513 = vmatprep.subr.bf16.mxu0 %v1594
        %2514 = vmatpush1.bf16.msra.mxu0 %v1593
        %2515 = vmatprep.subr.bf16.mxu0 %v1598
        %2516 = vmatpush1.bf16.msra.mxu0 %v1597
        %2517 = vmatprep.subr.bf16.mxu0 %v1602
        %2518 = vmatpush1.bf16.msra.mxu0 %v1601
        %2519 = vmatprep.subr.bf16.mxu0 %v1606
        %2520 = vmatpush1.bf16.msra.mxu0 %v1605
        %2521 = vmatprep.subr.bf16.mxu0 %v1610
        %2522 = vmatpush1.bf16.msra.mxu0 %v1609
        %2523 = vmatprep.subr.bf16.mxu0 %v1614
        %2524 = vmatpush1.bf16.msra.mxu0 %v1613
        %2525 = vmatprep.subr.bf16.mxu0 %v1618
        %2526 = vmatpush1.bf16.msra.mxu0 %v1617
        %2527 = vmatprep.subr.bf16.mxu0 %v1622
        %2528 = vmatpush1.bf16.msra.mxu0 %v1621
        %2529 = vmatprep.subr.bf16.mxu0 %v1626
        %2530 = vmatpush1.bf16.msra.mxu0 %v1625
        %2531 = vmatprep.subr.bf16.mxu0 %v1630
        %2532 = vmatpush1.bf16.msra.mxu0 %v1629
        %2533 = vmatprep.subr.bf16.mxu0 %v1634
        %2534 = vmatpush1.bf16.msra.mxu0 %v1633
        %2535 = vmatprep.subr.bf16.mxu0 %v1638
        %2536 = vmatpush1.bf16.msra.mxu0 %v1637
        %2537 = vmatprep.subr.bf16.mxu0 %v1642
        %2538 = vmatpush1.bf16.msra.mxu0 %v1641
        %2539 = vmatprep.mubr.bf16.mxu0 %v1810
        %2540 = vmatmul.mubr.bf16.gmra.mrb[0].mxu0 %v1808
        %v2541 = vpop.f32.mrb[0].mxu0
        %v2542 = vadd.f32 %v2501, %v2541
        %v2543 = vpop.f32.mrb[0].mxu0
        %v2544 = vadd.f32 %v2503, %v2543
        %v2545 = vpop.f32.mrb[0].mxu0
        %v2546 = vpop.f32.mrb[0].mxu0
        %2547 = vdwg.mxu0
        %2548 = vmatprep.subr.bf16.mxu0 %v1646
        %2549 = vmatpush1.bf16.msra.mxu0 %v1645
        %2550 = vmatprep.subr.bf16.mxu0 %v1650
        %2551 = vmatpush1.bf16.msra.mxu0 %v1649
        %2552 = vmatprep.subr.bf16.mxu0 %v1654
        %2553 = vmatpush1.bf16.msra.mxu0 %v1653
        %2554 = vmatprep.subr.bf16.mxu0 %v1658
        %2555 = vmatpush1.bf16.msra.mxu0 %v1657
        %2556 = vmatprep.subr.bf16.mxu0 %v1662
        %2557 = vmatpush1.bf16.msra.mxu0 %v1661
        %2558 = vmatprep.subr.bf16.mxu0 %v1666
        %2559 = vmatpush1.bf16.msra.mxu0 %v1665
        %2560 = vmatprep.subr.bf16.mxu0 %v1670
        %2561 = vmatpush1.bf16.msra.mxu0 %v1669
        %2562 = vmatprep.subr.bf16.mxu0 %v1674
        %2563 = vmatpush1.bf16.msra.mxu0 %v1673
        %2564 = vmatprep.subr.bf16.mxu0 %v1678
        %2565 = vmatpush1.bf16.msra.mxu0 %v1677
        %2566 = vmatprep.subr.bf16.mxu0 %v1682
        %2567 = vmatpush1.bf16.msra.mxu0 %v1681
        %2568 = vmatprep.subr.bf16.mxu0 %v1686
        %2569 = vmatpush1.bf16.msra.mxu0 %v1685
        %2570 = vmatprep.subr.bf16.mxu0 %v1690
        %2571 = vmatpush1.bf16.msra.mxu0 %v1689
        %2572 = vmatprep.subr.bf16.mxu0 %v1694
        %2573 = vmatpush1.bf16.msra.mxu0 %v1693
        %2574 = vmatprep.subr.bf16.mxu0 %v1698
        %2575 = vmatpush1.bf16.msra.mxu0 %v1697
        %2576 = vmatprep.subr.bf16.mxu0 %v1702
        %2577 = vmatpush1.bf16.msra.mxu0 %v1701
        %2578 = vmatprep.subr.bf16.mxu0 %v1706
        %2579 = vmatpush1.bf16.msra.mxu0 %v1705
        %2580 = vmatprep.mubr.bf16.mxu0 %v1832
        %2581 = vmatmul.mubr.bf16.gmra.mrb[0].mxu0 %v1825
        %v2582 = vpop.f32.mrb[0].mxu0
        %v2583 = vadd.f32 %v2542, %v2582
        %v2584 = vpop.f32.mrb[0].mxu0
        %v2585 = vadd.f32 %v2544, %v2584
        %v2586 = vpop.f32.mrb[0].mxu0
        %v2587 = vpop.f32.mrb[0].mxu0
        %2588 = vdwg.mxu0
        %s2589 = sld [smem:[#allocation2]]
        %v2590 = vstv %s2589
        %v2591 = vmul.f32 %v2214, %v2590
        %v2592 = vmul.f32 %v2216, %v2590
        %v2593 = vmul.f32 %v2583, %v2590
        %v2594 = vmul.f32 %v2585, %v2590
        %v2595 = vpack.c.bf16 %v2591, %v2591
        %v2596 = vpack.c.bf16 %v2592, %v2592
        %v2597 = vpack.c.bf16 %v2593, %v2593
        %v2598 = vpack.c.bf16 %v2594, %v2594
        %v2599 = vld [vmem:[%s836] sm:$0xff]
        %v2600 = vld [vmem:[%s836 + $0x8] sm:$0xff]
        %v2601 = vld [vmem:[%s836 + $0x10] sm:$0xff]
        %v2602 = vld [vmem:[%s836 + $0x18] sm:$0xff]
        %v2603 = vld [vmem:[%s836 + $0x20] sm:$0xff]
        %v2604 = vld [vmem:[%s836 + $0x28] sm:$0xff]
        %v2605 = vld [vmem:[%s836 + $0x30] sm:$0xff]
        %v2606 = vld [vmem:[%s836 + $0x38] sm:$0xff]
        %v2607 = vld [vmem:[%s836 + $0x40] sm:$0xff]
        %v2608 = vld [vmem:[%s836 + $0x48] sm:$0xff]
        %v2609 = vld [vmem:[%s836 + $0x50] sm:$0xff]
        %v2610 = vld [vmem:[%s836 + $0x58] sm:$0xff]
        %v2611 = vld [vmem:[%s836 + $0x60] sm:$0xff]
        %v2612 = vld [vmem:[%s836 + $0x68] sm:$0xff]
        %v2613 = vld [vmem:[%s836 + $0x70] sm:$0xff]
        %v2614 = vld [vmem:[%s836 + $0x78] sm:$0xff]
        %v2615 = vunpack.c.l.s8.bf16 %v2599
        %v2616 = vunpack.c.h.s8.bf16 %v2599
        %v2617 = vunpack.c.l.s8.bf16 %v2600
        %v2618 = vunpack.c.h.s8.bf16 %v2600
        %v2619 = vunpack.c.l.s8.bf16 %v2601
        %v2620 = vunpack.c.h.s8.bf16 %v2601
        %v2621 = vunpack.c.l.s8.bf16 %v2602
        %v2622 = vunpack.c.h.s8.bf16 %v2602
        %v2623 = vunpack.c.l.s8.bf16 %v2603
        %v2624 = vunpack.c.h.s8.bf16 %v2603
        %v2625 = vunpack.c.l.s8.bf16 %v2604
        %v2626 = vunpack.c.h.s8.bf16 %v2604
        %v2627 = vunpack.c.l.s8.bf16 %v2605
        %v2628 = vunpack.c.h.s8.bf16 %v2605
        %v2629 = vunpack.c.l.s8.bf16 %v2606
        %v2630 = vunpack.c.h.s8.bf16 %v2606
        %v2631 = vunpack.c.l.s8.bf16 %v2607
        %v2632 = vunpack.c.h.s8.bf16 %v2607
        %v2633 = vunpack.c.l.s8.bf16 %v2608
        %v2634 = vunpack.c.h.s8.bf16 %v2608
        %v2635 = vunpack.c.l.s8.bf16 %v2609
        %v2636 = vunpack.c.h.s8.bf16 %v2609
        %v2637 = vunpack.c.l.s8.bf16 %v2610
        %v2638 = vunpack.c.h.s8.bf16 %v2610
        %v2639 = vunpack.c.l.s8.bf16 %v2611
        %v2640 = vunpack.c.h.s8.bf16 %v2611
        %v2641 = vunpack.c.l.s8.bf16 %v2612
        %v2642 = vunpack.c.h.s8.bf16 %v2612
        %v2643 = vunpack.c.l.s8.bf16 %v2613
        %v2644 = vunpack.c.h.s8.bf16 %v2613
        %v2645 = vunpack.c.l.s8.bf16 %v2614
        %v2646 = vunpack.c.h.s8.bf16 %v2614
        %2647 = vmatprep.subr.bf16.mxu0 0
        %2648 = vmatpush1.bf16.msra.mxu0 %v2615
        %2649 = vmatprep.subr.bf16.mxu0 0
        %2650 = vmatpush1.bf16.msra.mxu0 %v2616
        %2651 = vmatprep.subr.bf16.mxu0 0
        %2652 = vmatpush1.bf16.msra.mxu0 %v2617
        %2653 = vmatprep.subr.bf16.mxu0 0
        %2654 = vmatpush1.bf16.msra.mxu0 %v2618
        %2655 = vmatprep.subr.bf16.mxu0 0
        %2656 = vmatpush1.bf16.msra.mxu0 %v2619
        %2657 = vmatprep.subr.bf16.mxu0 0
        %2658 = vmatpush1.bf16.msra.mxu0 %v2620
        %2659 = vmatprep.subr.bf16.mxu0 0
        %2660 = vmatpush1.bf16.msra.mxu0 %v2621
        %2661 = vmatprep.subr.bf16.mxu0 0
        %2662 = vmatpush1.bf16.msra.mxu0 %v2622
        %2663 = vmatprep.subr.bf16.mxu0 0
        %2664 = vmatpush1.bf16.msra.mxu0 %v2623
        %2665 = vmatprep.subr.bf16.mxu0 0
        %2666 = vmatpush1.bf16.msra.mxu0 %v2624
        %2667 = vmatprep.subr.bf16.mxu0 0
        %2668 = vmatpush1.bf16.msra.mxu0 %v2625
        %2669 = vmatprep.subr.bf16.mxu0 0
        %2670 = vmatpush1.bf16.msra.mxu0 %v2626
        %2671 = vmatprep.subr.bf16.mxu0 0
        %2672 = vmatpush1.bf16.msra.mxu0 %v2627
        %2673 = vmatprep.subr.bf16.mxu0 0
        %2674 = vmatpush1.bf16.msra.mxu0 %v2628
        %2675 = vmatprep.subr.bf16.mxu0 0
        %2676 = vmatpush1.bf16.msra.mxu0 %v2629
        %2677 = vmatprep.subr.bf16.mxu0 0
        %2678 = vmatpush1.bf16.msra.mxu0 %v2630
        %2679 = vmatprep.mubr.bf16.mxu0 %v2596
        %2680 = vmatmul.mubr.bf16.gmra.mrb[0].mxu0 %v2595
        %v2681 = vpop.f32.mrb[0].mxu0
        %v2682 = vadd.f32 0.0, %v2681
        %v2683 = vpop.f32.mrb[0].mxu0
        %v2684 = vpop.f32.mrb[0].mxu0
        %v2685 = vpop.f32.mrb[0].mxu0
        %2686 = vdwg.mxu0
        %2687 = vmatprep.subr.bf16.mxu0 0
        %2688 = vmatpush1.bf16.msra.mxu0 %v2631
        %2689 = vmatprep.subr.bf16.mxu0 0
        %2690 = vmatpush1.bf16.msra.mxu0 %v2632
        %2691 = vmatprep.subr.bf16.mxu0 0
        %2692 = vmatpush1.bf16.msra.mxu0 %v2633
        %2693 = vmatprep.subr.bf16.mxu0 0
        %2694 = vmatpush1.bf16.msra.mxu0 %v2634
        %2695 = vmatprep.subr.bf16.mxu0 0
        %2696 = vmatpush1.bf16.msra.mxu0 %v2635
        %2697 = vmatprep.subr.bf16.mxu0 0
        %2698 = vmatpush1.bf16.msra.mxu0 %v2636
        %2699 = vmatprep.subr.bf16.mxu0 0
        %2700 = vmatpush1.bf16.msra.mxu0 %v2637
        %2701 = vmatprep.subr.bf16.mxu0 0
        %2702 = vmatpush1.bf16.msra.mxu0 %v2638
        %2703 = vmatprep.subr.bf16.mxu0 0
        %2704 = vmatpush1.bf16.msra.mxu0 %v2639
        %2705 = vmatprep.subr.bf16.mxu0 0
        %2706 = vmatpush1.bf16.msra.mxu0 %v2640
        %2707 = vmatprep.subr.bf16.mxu0 0
        %2708 = vmatpush1.bf16.msra.mxu0 %v2641
        %2709 = vmatprep.subr.bf16.mxu0 0
        %2710 = vmatpush1.bf16.msra.mxu0 %v2642
        %2711 = vmatprep.subr.bf16.mxu0 0
        %2712 = vmatpush1.bf16.msra.mxu0 %v2643
        %2713 = vmatprep.subr.bf16.mxu0 0
        %2714 = vmatpush1.bf16.msra.mxu0 %v2644
        %2715 = vmatprep.subr.bf16.mxu0 0
        %2716 = vmatpush1.bf16.msra.mxu0 %v2645
        %2717 = vmatprep.subr.bf16.mxu0 0
        %2718 = vmatpush1.bf16.msra.mxu0 %v2646
        %2719 = vmatprep.mubr.bf16.mxu0 %v2598
        %2720 = vmatmul.mubr.bf16.gmra.mrb[0].mxu0 %v2597
        %v2721 = vpop.f32.mrb[0].mxu0
        %v2722 = vadd.f32 %v2682, %v2721
        %v2723 = vpop.f32.mrb[0].mxu0
        %v2724 = vpop.f32.mrb[0].mxu0
        %v2725 = vpop.f32.mrb[0].mxu0
        %2726 = vdwg.mxu0
        %s2727 = sld [smem:[#allocation3]]
        %v2728 = vstv %s2727
        %v2729 = vmul.f32 %v2722, %v2728
        %2730 = vst [vmem:[%s841] sm:$0x3] %v2729
        %p2731 = scmp.lt.s32.totalorder %s18, 1
        %s2732 = scalar_select %p2731, %s18, 1
        %s2733 = smul.addr %s2732, 2
        %s2734 = scalar_lea.vmem %s5, %s2733
        // Predicated region
        $region64: #{quantized_cnn_forward.5} parent=58 // pred_check
          %p2735 = pneg %p151
        $region65: #{quantized_cnn_forward.5} parent=58 // pred_check_branch
          %2737 = sbr.rel (%p2735) target = $region67
        $region66: #{quantized_cnn_forward.5} parent=58 // pred_region
          _
        $region67: #{quantized_cnn_forward.5} parent=58 // pred_fallthru
          _
      $region59: #{quantized_cnn_forward.5} parent=5 // pred_fallthru
        _
      %p2738 = scmp.le.s32.totalorder 2, %s13
      // Predicated region
      $region68: #{quantized_cnn_forward.5} parent=5 // pred_check
        %p2739 = pneg %p2738
      $region69: #{quantized_cnn_forward.5} parent=5 // pred_check_branch
        %2741 = sbr.rel (%p2739) target = $region71
      $region70: #{quantized_cnn_forward.5} parent=5 // pred_region
        %s2742 = ssub.s32 %s13, 2
        // Predicated region
        $region72: #{quantized_cnn_forward.5} parent=70 // pred_check
          %p2743 = pneg %p157
        $region73: #{quantized_cnn_forward.5} parent=70 // pred_check_branch
          %2745 = sbr.rel (%p2743) target = $region75
        $region74: #{quantized_cnn_forward.5} parent=70 // pred_region
          %p2746 = scmp.lt.s32.totalorder %s19, 1
          %s2747 = scalar_select %p2746, %s19, 1
          %s2748 = smul.addr %s2747, 2
          %s2749 = scalar_lea.vmem %s5, %s2748
        $region75: #{quantized_cnn_forward.5} parent=70 // pred_fallthru
          _
      $region71: #{quantized_cnn_forward.5} parent=5 // pred_fallthru
        _
    $region6: #{quantized_cnn_forward.5} parent=1 // loop_footer
      %s17 = sadd.s32 1, %s13
    $region7: #{quantized_cnn_forward.5} parent=1 // loop_footer_branch
      %12 = sbr.rel target = $region3
    $region8: #{quantized_cnn_forward.5} parent=1 // loop_exit
      _

</llo_original>
